<compile_context>
chip_gen: v7x
topology: tpu7x:2x2x1
jax: 0.10.0
libtpu: 0.0.40
codegen_flags: <defaults>
</compile_context>

<pallas_src>
import numpy as np
import jax
import jax.numpy as jnp
from jax.experimental import pallas as pl
from jax.experimental.pallas import tpu as pltpu


# ---------------------------------------------------------------------------
# Kernel
# ---------------------------------------------------------------------------
def cnn_bigru_kernel(x_ref, weo_ref, beo_ref, wih_ref, bih_ref,
                     whh_ref, bhh_ref, wfc_ref, bfc_ref, wout_ref, bout_ref,
                     out_ref, xg_ref):
    f32 = jnp.float32
    H2, G6 = whh_ref.shape                 # 2*hidden_dim, 6*hidden_dim
    T = xg_ref.shape[1] // G6              # pooled sequence length
    TF = weo_ref.shape[1] // 2             # T * cnn_filters (pooled lane width)

    # Conv1d(1,F,K,pad=K//2) + MaxPool1d(2,2) + ReLU as one dense matmul on the
    # host-expanded weight whose columns are [conv @ even positions | odd positions].
    y = jnp.dot(x_ref[...], weo_ref[...], preferred_element_type=f32) + beo_ref[...]
    pooled = jnp.maximum(jnp.maximum(y[:, :TF], y[:, TF:]), 0.0)     # (B, T*F)
    # dropout1: identity at inference.

    # BiGRU input projections for BOTH directions and ALL time steps in one matmul.
    # Column block s already holds [fwd gates @ time s | bwd gates @ time T-1-s],
    # gate-grouped [r_f r_b | z_f z_b | n_f n_b].  Staged in VMEM scratch so the
    # unrolled recurrence does not keep a 48-vreg value live.
    xg_ref[...] = (jnp.dot(pooled, wih_ref[...], preferred_element_type=f32)
                   + bih_ref[...])                                   # (B, T*6H)

    whh = whh_ref[...]                     # (2H, 6H) block-diagonal fused recurrence
    bhh = bhh_ref[...]                     # (1, 6H)

    h = jnp.zeros((x_ref.shape[0], H2), f32)        # [h_fwd | h_bwd]
    acc = jnp.zeros_like(h)
    for s in range(T):                              # T == 8, static unroll
        gx = xg_ref[:, s * G6:(s + 1) * G6]                         # (B, 6H)
        gh = jnp.dot(h, whh, preferred_element_type=f32) + bhh      # (B, 6H)
        r = jax.nn.sigmoid(gx[:, 0:H2] + gh[:, 0:H2])
        z = jax.nn.sigmoid(gx[:, H2:2 * H2] + gh[:, H2:2 * H2])
        n = jnp.tanh(gx[:, 2 * H2:3 * H2] + r * gh[:, 2 * H2:3 * H2])
        h = (1.0 - z) * n + z * h
        acc = acc + h

    # AdaptiveAvgPool1d(1) over time == mean over t (order-invariant, so the
    # reversed-order accumulation of the backward half is equivalent).
    feat = acc * (1.0 / T)                                           # (B, 2H)

    # fc -> ReLU -> (dropout2 identity) -> Linear(FC,1) as VPU lane-reduce -> sigmoid
    hfc = jnp.maximum(jnp.dot(feat, wfc_ref[...], preferred_element_type=f32)
                      + bfc_ref[...], 0.0)
    logits = jnp.sum(hfc * wout_ref[...], axis=-1, keepdims=True) + bout_ref[0, 0]
    out_ref[...] = jax.nn.sigmoid(logits)                            # (B, 1)


# ---------------------------------------------------------------------------
# Host-side parameter synthesis / rearrangement (one-time, not per call)
# ---------------------------------------------------------------------------
def init_raw_params(key, cnn_filters=16, kernel_size=3, hidden_dim=8, fc_units=16):
    """Deterministic synthetic parameters in PyTorch-equivalent (transposed) layout."""
    F, K, H, FC = cnn_filters, kernel_size, hidden_dim, fc_units
    ks = jax.random.split(key, 14)
    scale = 0.25
    rnd = lambda k, shape: jax.random.normal(k, shape, jnp.float32) * scale
    raw = {
        "w_conv": rnd(ks[0], (K, F)),      # Conv1d weight (F,1,K) stored as (K,F)
        "b_conv": rnd(ks[1], (F,)),
        "w_ih_f": rnd(ks[2], (F, 3 * H)), "w_hh_f": rnd(ks[3], (H, 3 * H)),
        "b_ih_f": rnd(ks[4], (3 * H,)),   "b_hh_f": rnd(ks[5], (3 * H,)),
        "w_ih_b": rnd(ks[6], (F, 3 * H)), "w_hh_b": rnd(ks[7], (H, 3 * H)),
        "b_ih_b": rnd(ks[8], (3 * H,)),   "b_hh_b": rnd(ks[9], (3 * H,)),
        "w_fc":  rnd(ks[10], (2 * H, FC)), "b_fc": rnd(ks[11], (FC,)),
        "w_out": rnd(ks[12], (1, FC)),     "b_out": rnd(ks[13], (1,)),
    }
    return {k: np.asarray(v, np.float32) for k, v in raw.items()}


def prepare_params(raw, seq_len):
    """Rearrange parameters into the fused / lane-flattened layouts the kernel uses."""
    L = seq_len
    K, F = raw["w_conv"].shape
    H = raw["w_hh_f"].shape[0]
    FC = raw["w_fc"].shape[1]
    assert L % 2 == 0, "MaxPool1d(2,2) path assumes an even sequence length"
    T, pad, H2, G6 = L // 2, K // 2, 2 * H, 6 * H

    # ---- Conv1d as a dense (L, L, F) linear map, split into even/odd outputs ----
    wc, bc = raw["w_conv"], raw["b_conv"]
    li = np.arange(L)[:, None]           # input position
    lo = np.arange(L)[None, :]           # output position
    k = li - lo + pad
    valid = (k >= 0) & (k < K)
    W_full = np.where(valid[:, :, None], wc[np.clip(k, 0, K - 1)], 0.0)  # (L, L, F)
    W_even = W_full[:, 0::2, :].reshape(L, T * F)
    W_odd = W_full[:, 1::2, :].reshape(L, T * F)
    w_eo = np.concatenate([W_even, W_odd], axis=1)                       # (L, 2*T*F)
    b_eo = np.tile(bc, 2 * T).reshape(1, 2 * T * F)

    # ---- Time-expanded, gate-grouped fused input projection (T*F, T*6H) ----
    # Column block s: [r_f r_b | z_f z_b | n_f n_b]; fwd half reads pooled time s,
    # bwd half reads pooled time T-1-s.
    w_ih = np.zeros((T * F, T * G6), np.float32)
    b_ih = np.zeros((1, T * G6), np.float32)
    for s in range(T):
        tb = T - 1 - s
        for g in range(3):
            c0 = s * G6 + g * H2
            w_ih[s * F:(s + 1) * F, c0:c0 + H] = raw["w_ih_f"][:, g * H:(g + 1) * H]
            w_ih[tb * F:(tb + 1) * F, c0 + H:c0 + H2] = raw["w_ih_b"][:, g * H:(g + 1) * H]
            b_ih[0, c0:c0 + H] = raw["b_ih_f"][g * H:(g + 1) * H]
            b_ih[0, c0 + H:c0 + H2] = raw["b_ih_b"][g * H:(g + 1) * H]

    # ---- Block-diagonal fused recurrence (2H, 6H), gate-grouped ----
    w_hh = np.zeros((H2, G6), np.float32)
    b_hh = np.zeros((1, G6), np.float32)
    for g in range(3):
        c0 = g * H2
        w_hh[0:H, c0:c0 + H] = raw["w_hh_f"][:, g * H:(g + 1) * H]
        w_hh[H:H2, c0 + H:c0 + H2] = raw["w_hh_b"][:, g * H:(g + 1) * H]
        b_hh[0, c0:c0 + H] = raw["b_hh_f"][g * H:(g + 1) * H]
        b_hh[0, c0 + H:c0 + H2] = raw["b_hh_b"][g * H:(g + 1) * H]

    to = lambda a: jnp.asarray(a, jnp.float32)
    return {
        "w_eo": to(w_eo), "b_eo": to(b_eo),
        "w_ih": to(w_ih), "b_ih": to(b_ih),
        "w_hh": to(w_hh), "b_hh": to(b_hh),
        "w_fc": to(raw["w_fc"]), "b_fc": to(raw["b_fc"].reshape(1, FC)),
        "w_out": to(raw["w_out"]), "b_out": to(raw["b_out"].reshape(1, 1)),
    }


# ---------------------------------------------------------------------------
# Wrapper
# ---------------------------------------------------------------------------
def _round_up(n, m):
    return ((n + m - 1) // m) * m


def cnn_bigru_forward(x, params, b_tile=128):
    """x: (B, L, 1) or (B, L) float32  ->  (B, 1) sigmoid probabilities."""
    if x.ndim == 3:
        x = x[:, :, 0]                      # squeeze the size-1 channel
    x = x.astype(jnp.float32)
    B, L = x.shape
    bt = min(b_tile, _round_up(B, 8))       # sublane-dense batch tile
    Bp = _round_up(B, bt)
    if Bp != B:
        x = jnp.pad(x, ((0, Bp - B), (0, 0)))

    TG6 = params["w_ih"].shape[1]           # T * 6H (scratch width)
    args = (x, params["w_eo"], params["b_eo"], params["w_ih"], params["b_ih"],
            params["w_hh"], params["b_hh"], params["w_fc"], params["b_fc"],
            params["w_out"], params["b_out"])

    full = lambda a: pl.BlockSpec(a.shape, lambda i: (0, 0))   # VMEM-resident weights
    in_specs = [pl.BlockSpec((bt, L), lambda i: (i, 0))]
    in_specs += [full(a) for a in args[1:-1]]
    in_specs += [pl.BlockSpec(memory_space=pltpu.MemorySpace.SMEM)]  # scalar b_out

    out = pl.pallas_call(
        cnn_bigru_kernel,
        out_shape=jax.ShapeDtypeStruct((Bp, 1), jnp.float32),
        grid=(Bp // bt,),
        in_specs=in_specs,
        out_specs=pl.BlockSpec((bt, 1), lambda i: (i, 0)),
        scratch_shapes=[pltpu.VMEM((bt, TG6), jnp.float32)],
        compiler_params=pltpu.CompilerParams(dimension_semantics=("parallel",)),
    )(*args)
    return out[:B]


# ---------------------------------------------------------------------------
# Pure NumPy reference (mirrors the PyTorch module, inference mode)
# ---------------------------------------------------------------------------
def reference_forward(x, raw):
    B, L = x.shape
    K, F = raw["w_conv"].shape
    H = raw["w_hh_f"].shape[0]
    pad, T = K // 2, L // 2
    sig = lambda v: 1.0 / (1.0 + np.exp(-v))

    xp = np.pad(x, ((0, 0), (pad, pad)))
    conv = np.zeros((B, L, F), np.float32)
    for l in range(L):
        conv[:, l, :] = xp[:, l:l + K] @ raw["w_conv"] + raw["b_conv"]
    conv = np.maximum(conv, 0.0)                                      # ReLU
    pooled = np.maximum(conv[:, 0:2 * T:2, :], conv[:, 1:2 * T:2, :])  # MaxPool1d(2,2)

    def gru(inp, w_ih, w_hh, b_ih, b_hh):
        h = np.zeros((B, H), np.float32)
        outs = []
        for t in range(inp.shape[1]):
            gi = inp[:, t, :] @ w_ih + b_ih
            gh = h @ w_hh + b_hh
            r = sig(gi[:, :H] + gh[:, :H])
            z = sig(gi[:, H:2 * H] + gh[:, H:2 * H])
            n = np.tanh(gi[:, 2 * H:] + r * gh[:, 2 * H:])
            h = (1.0 - z) * n + z * h
            outs.append(h)
        return np.stack(outs, axis=1)

    out_f = gru(pooled, raw["w_ih_f"], raw["w_hh_f"], raw["b_ih_f"], raw["b_hh_f"])
    out_b = gru(pooled[:, ::-1, :], raw["w_ih_b"], raw["w_hh_b"],
                raw["b_ih_b"], raw["b_hh_b"])[:, ::-1, :]
    feat = np.concatenate([out_f, out_b], axis=-1).mean(axis=1)       # AdaptiveAvgPool1d(1)
    hfc = np.maximum(feat @ raw["w_fc"] + raw["b_fc"], 0.0)
    logit = hfc @ raw["w_out"].T + raw["b_out"]
    return sig(logit)


# ---------------------------------------------------------------------------
if __name__ == "__main__":
    # input_dim = L = 16 (the 1-channel "sequence"), cnn_filters=16, hidden_dim=8,
    # fc_units=16.  Batch is 256 (2 tiles of 128) so the parallel batch grid and
    # lane/sublane-dense layout from the perf review are actually exercised.
    B, L = 256, 16
    F, K, H, FC = 16, 3, 8, 16

    key = jax.random.PRNGKey(0)
    kx, kp = jax.random.split(key)
    x = jax.random.normal(kx, (B, L, 1), jnp.float32)

    raw = init_raw_params(kp, cnn_filters=F, kernel_size=K, hidden_dim=H, fc_units=FC)
    params = prepare_params(raw, seq_len=L)

    out = jax.block_until_ready(cnn_bigru_forward(x, params))
    assert out.shape == (B, 1)
    assert bool(jnp.all((out >= 0.0) & (out <= 1.0)))

    # Numerical check against a pure NumPy re-implementation of the module.
    ref = reference_forward(np.asarray(x[:, :, 0]), raw)
    np.testing.assert_allclose(np.asarray(out), ref, rtol=2e-2, atol=2e-3)

    # TODO(synk): dropout1/dropout2 are identity here (inference semantics).
    print("KERNEL_OK")
</pallas_src>

<mosaic_0001>
module attributes {stable_mosaic.version = 11 : i64} {
  func.func @cnn_bigru_kernel(%arg0: i32, %arg1: memref<128x16xf32, #tpu.memory_space<vmem>>, %arg2: memref<16x256xf32, #tpu.memory_space<vmem>>, %arg3: memref<1x256xf32, #tpu.memory_space<vmem>>, %arg4: memref<128x384xf32, #tpu.memory_space<vmem>>, %arg5: memref<1x384xf32, #tpu.memory_space<vmem>>, %arg6: memref<16x48xf32, #tpu.memory_space<vmem>>, %arg7: memref<1x48xf32, #tpu.memory_space<vmem>>, %arg8: memref<16x16xf32, #tpu.memory_space<vmem>>, %arg9: memref<1x16xf32, #tpu.memory_space<vmem>>, %arg10: memref<1x16xf32, #tpu.memory_space<vmem>>, %arg11: memref<1x1xf32, #tpu.memory_space<smem>>, %arg12: memref<128x1xf32, #tpu.memory_space<vmem>>, %arg13: memref<128x384xf32, #tpu.memory_space<vmem>>) attributes {dimension_semantics = [#tpu.dimension_semantics<parallel>], iteration_bounds = array<i64: 2>, scalar_prefetch = 0 : i64, scratch_operands = 1 : i64, tpu.core_type = #tpu.core_type<tc>, window_params = [{transform_indices = @transform_0, window_bounds = array<i64: 128, 16>}, {pipeline_mode = #tpu.pipeline_mode<synchronous>, transform_indices = @transform_1, window_bounds = array<i64: 16, 256>}, {pipeline_mode = #tpu.pipeline_mode<synchronous>, transform_indices = @transform_2, window_bounds = array<i64: 1, 256>}, {pipeline_mode = #tpu.pipeline_mode<synchronous>, transform_indices = @transform_3, window_bounds = array<i64: 128, 384>}, {pipeline_mode = #tpu.pipeline_mode<synchronous>, transform_indices = @transform_4, window_bounds = array<i64: 1, 384>}, {pipeline_mode = #tpu.pipeline_mode<synchronous>, transform_indices = @transform_5, window_bounds = array<i64: 16, 48>}, {pipeline_mode = #tpu.pipeline_mode<synchronous>, transform_indices = @transform_6, window_bounds = array<i64: 1, 48>}, {pipeline_mode = #tpu.pipeline_mode<synchronous>, transform_indices = @transform_7, window_bounds = array<i64: 16, 16>}, {pipeline_mode = #tpu.pipeline_mode<synchronous>, transform_indices = @transform_8, window_bounds = array<i64: 1, 16>}, {pipeline_mode = #tpu.pipeline_mode<synchronous>, transform_indices = @transform_9, window_bounds = array<i64: 1, 16>}, {transform_indices = @transform_10, window_bounds = array<i64: 1, 1>}, {transform_indices = @transform_11, window_bounds = array<i64: 128, 1>}]} {
    %c0 = arith.constant 0 : index
    %c0_0 = arith.constant 0 : index
    %0 = vector.load %arg1[%c0, %c0_0] : memref<128x16xf32, #tpu.memory_space<vmem>>, vector<128x16xf32>
    %c0_1 = arith.constant 0 : index
    %c0_2 = arith.constant 0 : index
    %1 = vector.load %arg2[%c0_1, %c0_2] : memref<16x256xf32, #tpu.memory_space<vmem>>, vector<16x256xf32>
    %cst = arith.constant dense<0.000000e+00> : vector<128x256xf32>
    %2 = tpu.matmul %0, %1, %cst {dimension_numbers = #tpu.dot_dimension_numbers<[1], [0], [0], [1], [0, 0, 1, 1], [], []>} : vector<128x16xf32>, vector<16x256xf32>, vector<128x256xf32> -> vector<128x256xf32>
    %c0_3 = arith.constant 0 : index
    %c0_4 = arith.constant 0 : index
    %3 = vector.load %arg3[%c0_3, %c0_4] : memref<1x256xf32, #tpu.memory_space<vmem>>, vector<1x256xf32>
    %4 = vector.broadcast %3 : vector<1x256xf32> to vector<128x256xf32>
    %5 = arith.addf %2, %4 : vector<128x256xf32>
    %6 = vector.extract_strided_slice %5 {offsets = [0, 0], sizes = [128, 128], strides = [1, 1]} : vector<128x256xf32> to vector<128x128xf32>
    %7 = vector.extract_strided_slice %5 {offsets = [0, 128], sizes = [128, 128], strides = [1, 1]} : vector<128x256xf32> to vector<128x128xf32>
    %8 = arith.maximumf %6, %7 : vector<128x128xf32>
    %cst_5 = arith.constant 0.000000e+00 : f32
    %9 = vector.broadcast %cst_5 : f32 to vector<128x128xf32>
    %10 = arith.maximumf %8, %9 : vector<128x128xf32>
    %c0_6 = arith.constant 0 : index
    %c0_7 = arith.constant 0 : index
    %11 = vector.load %arg4[%c0_6, %c0_7] : memref<128x384xf32, #tpu.memory_space<vmem>>, vector<128x384xf32>
    %cst_8 = arith.constant dense<0.000000e+00> : vector<128x384xf32>
    %12 = tpu.matmul %10, %11, %cst_8 {dimension_numbers = #tpu.dot_dimension_numbers<[1], [0], [0], [1], [0, 0, 1, 1], [], []>} : vector<128x128xf32>, vector<128x384xf32>, vector<128x384xf32> -> vector<128x384xf32>
    %c0_9 = arith.constant 0 : index
    %c0_10 = arith.constant 0 : index
    %13 = vector.load %arg5[%c0_9, %c0_10] : memref<1x384xf32, #tpu.memory_space<vmem>>, vector<1x384xf32>
    %14 = vector.broadcast %13 : vector<1x384xf32> to vector<128x384xf32>
    %15 = arith.addf %12, %14 : vector<128x384xf32>
    %c0_11 = arith.constant 0 : index
    %c0_12 = arith.constant 0 : index
    %16 = vector.load %arg13[%c0_11, %c0_12] : memref<128x384xf32, #tpu.memory_space<vmem>>, vector<128x384xf32>
    tpu.vector_store %arg13[%c0_11, %c0_12], %15 {strides = array<i32>} : memref<128x384xf32, #tpu.memory_space<vmem>>, vector<128x384xf32>,
    %c0_13 = arith.constant 0 : index
    %c0_14 = arith.constant 0 : index
    %17 = vector.load %arg6[%c0_13, %c0_14] : memref<16x48xf32, #tpu.memory_space<vmem>>, vector<16x48xf32>
    %c0_15 = arith.constant 0 : index
    %c0_16 = arith.constant 0 : index
    %18 = vector.load %arg7[%c0_15, %c0_16] : memref<1x48xf32, #tpu.memory_space<vmem>>, vector<1x48xf32>
    %cst_17 = arith.constant 0.000000e+00 : f32
    %19 = vector.broadcast %cst_17 : f32 to vector<128x16xf32>
    %cst_18 = arith.constant 0.000000e+00 : f32
    %20 = vector.broadcast %cst_18 : f32 to vector<128x16xf32>
    %c0_19 = arith.constant 0 : index
    %c0_20 = arith.constant 0 : index
    %21 = vector.load %arg13[%c0_19, %c0_20] : memref<128x384xf32, #tpu.memory_space<vmem>>, vector<128x48xf32>
    %cst_21 = arith.constant dense<0.000000e+00> : vector<128x48xf32>
    %22 = tpu.matmul %19, %17, %cst_21 {dimension_numbers = #tpu.dot_dimension_numbers<[1], [0], [0], [1], [0, 0, 1, 1], [], []>} : vector<128x16xf32>, vector<16x48xf32>, vector<128x48xf32> -> vector<128x48xf32>
    %23 = vector.broadcast %18 : vector<1x48xf32> to vector<128x48xf32>
    %24 = arith.addf %22, %23 : vector<128x48xf32>
    %25 = vector.extract_strided_slice %21 {offsets = [0, 0], sizes = [128, 16], strides = [1, 1]} : vector<128x48xf32> to vector<128x16xf32>
    %26 = vector.extract_strided_slice %24 {offsets = [0, 0], sizes = [128, 16], strides = [1, 1]} : vector<128x48xf32> to vector<128x16xf32>
    %27 = arith.addf %25, %26 : vector<128x16xf32>
    %28 = arith.negf %27 : vector<128x16xf32>
    %29 = math.exp %28 : vector<128x16xf32>
    %cst_22 = arith.constant 1.000000e+00 : f32
    %30 = vector.broadcast %cst_22 : f32 to vector<128x16xf32>
    %31 = arith.addf %30, %29 : vector<128x16xf32>
    %32 = arith.divf %30, %31 : vector<128x16xf32>
    %33 = vector.extract_strided_slice %21 {offsets = [0, 16], sizes = [128, 16], strides = [1, 1]} : vector<128x48xf32> to vector<128x16xf32>
    %34 = vector.extract_strided_slice %24 {offsets = [0, 16], sizes = [128, 16], strides = [1, 1]} : vector<128x48xf32> to vector<128x16xf32>
    %35 = arith.addf %33, %34 : vector<128x16xf32>
    %36 = arith.negf %35 : vector<128x16xf32>
    %37 = math.exp %36 : vector<128x16xf32>
    %cst_23 = arith.constant 1.000000e+00 : f32
    %38 = vector.broadcast %cst_23 : f32 to vector<128x16xf32>
    %39 = arith.addf %38, %37 : vector<128x16xf32>
    %40 = arith.divf %38, %39 : vector<128x16xf32>
    %41 = vector.extract_strided_slice %21 {offsets = [0, 32], sizes = [128, 16], strides = [1, 1]} : vector<128x48xf32> to vector<128x16xf32>
    %42 = vector.extract_strided_slice %24 {offsets = [0, 32], sizes = [128, 16], strides = [1, 1]} : vector<128x48xf32> to vector<128x16xf32>
    %43 = arith.mulf %32, %42 : vector<128x16xf32>
    %44 = arith.addf %41, %43 : vector<128x16xf32>
    %45 = math.tanh %44 : vector<128x16xf32>
    %cst_24 = arith.constant 1.000000e+00 : f32
    %46 = vector.broadcast %cst_24 : f32 to vector<128x16xf32>
    %47 = arith.subf %46, %40 : vector<128x16xf32>
    %48 = arith.mulf %47, %45 : vector<128x16xf32>
    %49 = arith.mulf %40, %19 : vector<128x16xf32>
    %50 = arith.addf %48, %49 : vector<128x16xf32>
    %51 = arith.addf %20, %50 : vector<128x16xf32>
    %c0_25 = arith.constant 0 : index
    %c48 = arith.constant 48 : index
    %52 = vector.load %arg13[%c0_25, %c48] : memref<128x384xf32, #tpu.memory_space<vmem>>, vector<128x48xf32>
    %cst_26 = arith.constant dense<0.000000e+00> : vector<128x48xf32>
    %53 = tpu.matmul %50, %17, %cst_26 {dimension_numbers = #tpu.dot_dimension_numbers<[1], [0], [0], [1], [0, 0, 1, 1], [], []>} : vector<128x16xf32>, vector<16x48xf32>, vector<128x48xf32> -> vector<128x48xf32>
    %54 = vector.broadcast %18 : vector<1x48xf32> to vector<128x48xf32>
    %55 = arith.addf %53, %54 : vector<128x48xf32>
    %56 = vector.extract_strided_slice %52 {offsets = [0, 0], sizes = [128, 16], strides = [1, 1]} : vector<128x48xf32> to vector<128x16xf32>
    %57 = vector.extract_strided_slice %55 {offsets = [0, 0], sizes = [128, 16], strides = [1, 1]} : vector<128x48xf32> to vector<128x16xf32>
    %58 = arith.addf %56, %57 : vector<128x16xf32>
    %59 = arith.negf %58 : vector<128x16xf32>
    %60 = math.exp %59 : vector<128x16xf32>
    %cst_27 = arith.constant 1.000000e+00 : f32
    %61 = vector.broadcast %cst_27 : f32 to vector<128x16xf32>
    %62 = arith.addf %61, %60 : vector<128x16xf32>
    %63 = arith.divf %61, %62 : vector<128x16xf32>
    %64 = vector.extract_strided_slice %52 {offsets = [0, 16], sizes = [128, 16], strides = [1, 1]} : vector<128x48xf32> to vector<128x16xf32>
    %65 = vector.extract_strided_slice %55 {offsets = [0, 16], sizes = [128, 16], strides = [1, 1]} : vector<128x48xf32> to vector<128x16xf32>
    %66 = arith.addf %64, %65 : vector<128x16xf32>
    %67 = arith.negf %66 : vector<128x16xf32>
    %68 = math.exp %67 : vector<128x16xf32>
    %cst_28 = arith.constant 1.000000e+00 : f32
    %69 = vector.broadcast %cst_28 : f32 to vector<128x16xf32>
    %70 = arith.addf %69, %68 : vector<128x16xf32>
    %71 = arith.divf %69, %70 : vector<128x16xf32>
    %72 = vector.extract_strided_slice %52 {offsets = [0, 32], sizes = [128, 16], strides = [1, 1]} : vector<128x48xf32> to vector<128x16xf32>
    %73 = vector.extract_strided_slice %55 {offsets = [0, 32], sizes = [128, 16], strides = [1, 1]} : vector<128x48xf32> to vector<128x16xf32>
    %74 = arith.mulf %63, %73 : vector<128x16xf32>
    %75 = arith.addf %72, %74 : vector<128x16xf32>
    %76 = math.tanh %75 : vector<128x16xf32>
    %cst_29 = arith.constant 1.000000e+00 : f32
    %77 = vector.broadcast %cst_29 : f32 to vector<128x16xf32>
    %78 = arith.subf %77, %71 : vector<128x16xf32>
    %79 = arith.mulf %78, %76 : vector<128x16xf32>
    %80 = arith.mulf %71, %50 : vector<128x16xf32>
    %81 = arith.addf %79, %80 : vector<128x16xf32>
    %82 = arith.addf %51, %81 : vector<128x16xf32>
    %c0_30 = arith.constant 0 : index
    %c96 = arith.constant 96 : index
    %83 = vector.load %arg13[%c0_30, %c96] : memref<128x384xf32, #tpu.memory_space<vmem>>, vector<128x48xf32>
    %cst_31 = arith.constant dense<0.000000e+00> : vector<128x48xf32>
    %84 = tpu.matmul %81, %17, %cst_31 {dimension_numbers = #tpu.dot_dimension_numbers<[1], [0], [0], [1], [0, 0, 1, 1], [], []>} : vector<128x16xf32>, vector<16x48xf32>, vector<128x48xf32> -> vector<128x48xf32>
    %85 = vector.broadcast %18 : vector<1x48xf32> to vector<128x48xf32>
    %86 = arith.addf %84, %85 : vector<128x48xf32>
    %87 = vector.extract_strided_slice %83 {offsets = [0, 0], sizes = [128, 16], strides = [1, 1]} : vector<128x48xf32> to vector<128x16xf32>
    %88 = vector.extract_strided_slice %86 {offsets = [0, 0], sizes = [128, 16], strides = [1, 1]} : vector<128x48xf32> to vector<128x16xf32>
    %89 = arith.addf %87, %88 : vector<128x16xf32>
    %90 = arith.negf %89 : vector<128x16xf32>
    %91 = math.exp %90 : vector<128x16xf32>
    %cst_32 = arith.constant 1.000000e+00 : f32
    %92 = vector.broadcast %cst_32 : f32 to vector<128x16xf32>
    %93 = arith.addf %92, %91 : vector<128x16xf32>
    %94 = arith.divf %92, %93 : vector<128x16xf32>
    %95 = vector.extract_strided_slice %83 {offsets = [0, 16], sizes = [128, 16], strides = [1, 1]} : vector<128x48xf32> to vector<128x16xf32>
    %96 = vector.extract_strided_slice %86 {offsets = [0, 16], sizes = [128, 16], strides = [1, 1]} : vector<128x48xf32> to vector<128x16xf32>
    %97 = arith.addf %95, %96 : vector<128x16xf32>
    %98 = arith.negf %97 : vector<128x16xf32>
    %99 = math.exp %98 : vector<128x16xf32>
    %cst_33 = arith.constant 1.000000e+00 : f32
    %100 = vector.broadcast %cst_33 : f32 to vector<128x16xf32>
    %101 = arith.addf %100, %99 : vector<128x16xf32>
    %102 = arith.divf %100, %101 : vector<128x16xf32>
    %103 = vector.extract_strided_slice %83 {offsets = [0, 32], sizes = [128, 16], strides = [1, 1]} : vector<128x48xf32> to vector<128x16xf32>
    %104 = vector.extract_strided_slice %86 {offsets = [0, 32], sizes = [128, 16], strides = [1, 1]} : vector<128x48xf32> to vector<128x16xf32>
    %105 = arith.mulf %94, %104 : vector<128x16xf32>
    %106 = arith.addf %103, %105 : vector<128x16xf32>
    %107 = math.tanh %106 : vector<128x16xf32>
    %cst_34 = arith.constant 1.000000e+00 : f32
    %108 = vector.broadcast %cst_34 : f32 to vector<128x16xf32>
    %109 = arith.subf %108, %102 : vector<128x16xf32>
    %110 = arith.mulf %109, %107 : vector<128x16xf32>
    %111 = arith.mulf %102, %81 : vector<128x16xf32>
    %112 = arith.addf %110, %111 : vector<128x16xf32>
    %113 = arith.addf %82, %112 : vector<128x16xf32>
    %c0_35 = arith.constant 0 : index
    %c144 = arith.constant 144 : index
    %114 = vector.load %arg13[%c0_35, %c144] : memref<128x384xf32, #tpu.memory_space<vmem>>, vector<128x48xf32>
    %cst_36 = arith.constant dense<0.000000e+00> : vector<128x48xf32>
    %115 = tpu.matmul %112, %17, %cst_36 {dimension_numbers = #tpu.dot_dimension_numbers<[1], [0], [0], [1], [0, 0, 1, 1], [], []>} : vector<128x16xf32>, vector<16x48xf32>, vector<128x48xf32> -> vector<128x48xf32>
    %116 = vector.broadcast %18 : vector<1x48xf32> to vector<128x48xf32>
    %117 = arith.addf %115, %116 : vector<128x48xf32>
    %118 = vector.extract_strided_slice %114 {offsets = [0, 0], sizes = [128, 16], strides = [1, 1]} : vector<128x48xf32> to vector<128x16xf32>
    %119 = vector.extract_strided_slice %117 {offsets = [0, 0], sizes = [128, 16], strides = [1, 1]} : vector<128x48xf32> to vector<128x16xf32>
    %120 = arith.addf %118, %119 : vector<128x16xf32>
    %121 = arith.negf %120 : vector<128x16xf32>
    %122 = math.exp %121 : vector<128x16xf32>
    %cst_37 = arith.constant 1.000000e+00 : f32
    %123 = vector.broadcast %cst_37 : f32 to vector<128x16xf32>
    %124 = arith.addf %123, %122 : vector<128x16xf32>
    %125 = arith.divf %123, %124 : vector<128x16xf32>
    %126 = vector.extract_strided_slice %114 {offsets = [0, 16], sizes = [128, 16], strides = [1, 1]} : vector<128x48xf32> to vector<128x16xf32>
    %127 = vector.extract_strided_slice %117 {offsets = [0, 16], sizes = [128, 16], strides = [1, 1]} : vector<128x48xf32> to vector<128x16xf32>
    %128 = arith.addf %126, %127 : vector<128x16xf32>
    %129 = arith.negf %128 : vector<128x16xf32>
    %130 = math.exp %129 : vector<128x16xf32>
    %cst_38 = arith.constant 1.000000e+00 : f32
    %131 = vector.broadcast %cst_38 : f32 to vector<128x16xf32>
    %132 = arith.addf %131, %130 : vector<128x16xf32>
    %133 = arith.divf %131, %132 : vector<128x16xf32>
    %134 = vector.extract_strided_slice %114 {offsets = [0, 32], sizes = [128, 16], strides = [1, 1]} : vector<128x48xf32> to vector<128x16xf32>
    %135 = vector.extract_strided_slice %117 {offsets = [0, 32], sizes = [128, 16], strides = [1, 1]} : vector<128x48xf32> to vector<128x16xf32>
    %136 = arith.mulf %125, %135 : vector<128x16xf32>
    %137 = arith.addf %134, %136 : vector<128x16xf32>
    %138 = math.tanh %137 : vector<128x16xf32>
    %cst_39 = arith.constant 1.000000e+00 : f32
    %139 = vector.broadcast %cst_39 : f32 to vector<128x16xf32>
    %140 = arith.subf %139, %133 : vector<128x16xf32>
    %141 = arith.mulf %140, %138 : vector<128x16xf32>
    %142 = arith.mulf %133, %112 : vector<128x16xf32>
    %143 = arith.addf %141, %142 : vector<128x16xf32>
    %144 = arith.addf %113, %143 : vector<128x16xf32>
    %c0_40 = arith.constant 0 : index
    %c192 = arith.constant 192 : index
    %145 = vector.load %arg13[%c0_40, %c192] : memref<128x384xf32, #tpu.memory_space<vmem>>, vector<128x48xf32>
    %cst_41 = arith.constant dense<0.000000e+00> : vector<128x48xf32>
    %146 = tpu.matmul %143, %17, %cst_41 {dimension_numbers = #tpu.dot_dimension_numbers<[1], [0], [0], [1], [0, 0, 1, 1], [], []>} : vector<128x16xf32>, vector<16x48xf32>, vector<128x48xf32> -> vector<128x48xf32>
    %147 = vector.broadcast %18 : vector<1x48xf32> to vector<128x48xf32>
    %148 = arith.addf %146, %147 : vector<128x48xf32>
    %149 = vector.extract_strided_slice %145 {offsets = [0, 0], sizes = [128, 16], strides = [1, 1]} : vector<128x48xf32> to vector<128x16xf32>
    %150 = vector.extract_strided_slice %148 {offsets = [0, 0], sizes = [128, 16], strides = [1, 1]} : vector<128x48xf32> to vector<128x16xf32>
    %151 = arith.addf %149, %150 : vector<128x16xf32>
    %152 = arith.negf %151 : vector<128x16xf32>
    %153 = math.exp %152 : vector<128x16xf32>
    %cst_42 = arith.constant 1.000000e+00 : f32
    %154 = vector.broadcast %cst_42 : f32 to vector<128x16xf32>
    %155 = arith.addf %154, %153 : vector<128x16xf32>
    %156 = arith.divf %154, %155 : vector<128x16xf32>
    %157 = vector.extract_strided_slice %145 {offsets = [0, 16], sizes = [128, 16], strides = [1, 1]} : vector<128x48xf32> to vector<128x16xf32>
    %158 = vector.extract_strided_slice %148 {offsets = [0, 16], sizes = [128, 16], strides = [1, 1]} : vector<128x48xf32> to vector<128x16xf32>
    %159 = arith.addf %157, %158 : vector<128x16xf32>
    %160 = arith.negf %159 : vector<128x16xf32>
    %161 = math.exp %160 : vector<128x16xf32>
    %cst_43 = arith.constant 1.000000e+00 : f32
    %162 = vector.broadcast %cst_43 : f32 to vector<128x16xf32>
    %163 = arith.addf %162, %161 : vector<128x16xf32>
    %164 = arith.divf %162, %163 : vector<128x16xf32>
    %165 = vector.extract_strided_slice %145 {offsets = [0, 32], sizes = [128, 16], strides = [1, 1]} : vector<128x48xf32> to vector<128x16xf32>
    %166 = vector.extract_strided_slice %148 {offsets = [0, 32], sizes = [128, 16], strides = [1, 1]} : vector<128x48xf32> to vector<128x16xf32>
    %167 = arith.mulf %156, %166 : vector<128x16xf32>
    %168 = arith.addf %165, %167 : vector<128x16xf32>
    %169 = math.tanh %168 : vector<128x16xf32>
    %cst_44 = arith.constant 1.000000e+00 : f32
    %170 = vector.broadcast %cst_44 : f32 to vector<128x16xf32>
    %171 = arith.subf %170, %164 : vector<128x16xf32>
    %172 = arith.mulf %171, %169 : vector<128x16xf32>
    %173 = arith.mulf %164, %143 : vector<128x16xf32>
    %174 = arith.addf %172, %173 : vector<128x16xf32>
    %175 = arith.addf %144, %174 : vector<128x16xf32>
    %c0_45 = arith.constant 0 : index
    %c240 = arith.constant 240 : index
    %176 = vector.load %arg13[%c0_45, %c240] : memref<128x384xf32, #tpu.memory_space<vmem>>, vector<128x48xf32>
    %cst_46 = arith.constant dense<0.000000e+00> : vector<128x48xf32>
    %177 = tpu.matmul %174, %17, %cst_46 {dimension_numbers = #tpu.dot_dimension_numbers<[1], [0], [0], [1], [0, 0, 1, 1], [], []>} : vector<128x16xf32>, vector<16x48xf32>, vector<128x48xf32> -> vector<128x48xf32>
    %178 = vector.broadcast %18 : vector<1x48xf32> to vector<128x48xf32>
    %179 = arith.addf %177, %178 : vector<128x48xf32>
    %180 = vector.extract_strided_slice %176 {offsets = [0, 0], sizes = [128, 16], strides = [1, 1]} : vector<128x48xf32> to vector<128x16xf32>
    %181 = vector.extract_strided_slice %179 {offsets = [0, 0], sizes = [128, 16], strides = [1, 1]} : vector<128x48xf32> to vector<128x16xf32>
    %182 = arith.addf %180, %181 : vector<128x16xf32>
    %183 = arith.negf %182 : vector<128x16xf32>
    %184 = math.exp %183 : vector<128x16xf32>
    %cst_47 = arith.constant 1.000000e+00 : f32
    %185 = vector.broadcast %cst_47 : f32 to vector<128x16xf32>
    %186 = arith.addf %185, %184 : vector<128x16xf32>
    %187 = arith.divf %185, %186 : vector<128x16xf32>
    %188 = vector.extract_strided_slice %176 {offsets = [0, 16], sizes = [128, 16], strides = [1, 1]} : vector<128x48xf32> to vector<128x16xf32>
    %189 = vector.extract_strided_slice %179 {offsets = [0, 16], sizes = [128, 16], strides = [1, 1]} : vector<128x48xf32> to vector<128x16xf32>
    %190 = arith.addf %188, %189 : vector<128x16xf32>
    %191 = arith.negf %190 : vector<128x16xf32>
    %192 = math.exp %191 : vector<128x16xf32>
    %cst_48 = arith.constant 1.000000e+00 : f32
    %193 = vector.broadcast %cst_48 : f32 to vector<128x16xf32>
    %194 = arith.addf %193, %192 : vector<128x16xf32>
    %195 = arith.divf %193, %194 : vector<128x16xf32>
    %196 = vector.extract_strided_slice %176 {offsets = [0, 32], sizes = [128, 16], strides = [1, 1]} : vector<128x48xf32> to vector<128x16xf32>
    %197 = vector.extract_strided_slice %179 {offsets = [0, 32], sizes = [128, 16], strides = [1, 1]} : vector<128x48xf32> to vector<128x16xf32>
    %198 = arith.mulf %187, %197 : vector<128x16xf32>
    %199 = arith.addf %196, %198 : vector<128x16xf32>
    %200 = math.tanh %199 : vector<128x16xf32>
    %cst_49 = arith.constant 1.000000e+00 : f32
    %201 = vector.broadcast %cst_49 : f32 to vector<128x16xf32>
    %202 = arith.subf %201, %195 : vector<128x16xf32>
    %203 = arith.mulf %202, %200 : vector<128x16xf32>
    %204 = arith.mulf %195, %174 : vector<128x16xf32>
    %205 = arith.addf %203, %204 : vector<128x16xf32>
    %206 = arith.addf %175, %205 : vector<128x16xf32>
    %c0_50 = arith.constant 0 : index
    %c288 = arith.constant 288 : index
    %207 = vector.load %arg13[%c0_50, %c288] : memref<128x384xf32, #tpu.memory_space<vmem>>, vector<128x48xf32>
    %cst_51 = arith.constant dense<0.000000e+00> : vector<128x48xf32>
    %208 = tpu.matmul %205, %17, %cst_51 {dimension_numbers = #tpu.dot_dimension_numbers<[1], [0], [0], [1], [0, 0, 1, 1], [], []>} : vector<128x16xf32>, vector<16x48xf32>, vector<128x48xf32> -> vector<128x48xf32>
    %209 = vector.broadcast %18 : vector<1x48xf32> to vector<128x48xf32>
    %210 = arith.addf %208, %209 : vector<128x48xf32>
    %211 = vector.extract_strided_slice %207 {offsets = [0, 0], sizes = [128, 16], strides = [1, 1]} : vector<128x48xf32> to vector<128x16xf32>
    %212 = vector.extract_strided_slice %210 {offsets = [0, 0], sizes = [128, 16], strides = [1, 1]} : vector<128x48xf32> to vector<128x16xf32>
    %213 = arith.addf %211, %212 : vector<128x16xf32>
    %214 = arith.negf %213 : vector<128x16xf32>
    %215 = math.exp %214 : vector<128x16xf32>
    %cst_52 = arith.constant 1.000000e+00 : f32
    %216 = vector.broadcast %cst_52 : f32 to vector<128x16xf32>
    %217 = arith.addf %216, %215 : vector<128x16xf32>
    %218 = arith.divf %216, %217 : vector<128x16xf32>
    %219 = vector.extract_strided_slice %207 {offsets = [0, 16], sizes = [128, 16], strides = [1, 1]} : vector<128x48xf32> to vector<128x16xf32>
    %220 = vector.extract_strided_slice %210 {offsets = [0, 16], sizes = [128, 16], strides = [1, 1]} : vector<128x48xf32> to vector<128x16xf32>
    %221 = arith.addf %219, %220 : vector<128x16xf32>
    %222 = arith.negf %221 : vector<128x16xf32>
    %223 = math.exp %222 : vector<128x16xf32>
    %cst_53 = arith.constant 1.000000e+00 : f32
    %224 = vector.broadcast %cst_53 : f32 to vector<128x16xf32>
    %225 = arith.addf %224, %223 : vector<128x16xf32>
    %226 = arith.divf %224, %225 : vector<128x16xf32>
    %227 = vector.extract_strided_slice %207 {offsets = [0, 32], sizes = [128, 16], strides = [1, 1]} : vector<128x48xf32> to vector<128x16xf32>
    %228 = vector.extract_strided_slice %210 {offsets = [0, 32], sizes = [128, 16], strides = [1, 1]} : vector<128x48xf32> to vector<128x16xf32>
    %229 = arith.mulf %218, %228 : vector<128x16xf32>
    %230 = arith.addf %227, %229 : vector<128x16xf32>
    %231 = math.tanh %230 : vector<128x16xf32>
    %cst_54 = arith.constant 1.000000e+00 : f32
    %232 = vector.broadcast %cst_54 : f32 to vector<128x16xf32>
    %233 = arith.subf %232, %226 : vector<128x16xf32>
    %234 = arith.mulf %233, %231 : vector<128x16xf32>
    %235 = arith.mulf %226, %205 : vector<128x16xf32>
    %236 = arith.addf %234, %235 : vector<128x16xf32>
    %237 = arith.addf %206, %236 : vector<128x16xf32>
    %c0_55 = arith.constant 0 : index
    %c336 = arith.constant 336 : index
    %238 = vector.load %arg13[%c0_55, %c336] : memref<128x384xf32, #tpu.memory_space<vmem>>, vector<128x48xf32>
    %cst_56 = arith.constant dense<0.000000e+00> : vector<128x48xf32>
    %239 = tpu.matmul %236, %17, %cst_56 {dimension_numbers = #tpu.dot_dimension_numbers<[1], [0], [0], [1], [0, 0, 1, 1], [], []>} : vector<128x16xf32>, vector<16x48xf32>, vector<128x48xf32> -> vector<128x48xf32>
    %240 = vector.broadcast %18 : vector<1x48xf32> to vector<128x48xf32>
    %241 = arith.addf %239, %240 : vector<128x48xf32>
    %242 = vector.extract_strided_slice %238 {offsets = [0, 0], sizes = [128, 16], strides = [1, 1]} : vector<128x48xf32> to vector<128x16xf32>
    %243 = vector.extract_strided_slice %241 {offsets = [0, 0], sizes = [128, 16], strides = [1, 1]} : vector<128x48xf32> to vector<128x16xf32>
    %244 = arith.addf %242, %243 : vector<128x16xf32>
    %245 = arith.negf %244 : vector<128x16xf32>
    %246 = math.exp %245 : vector<128x16xf32>
    %cst_57 = arith.constant 1.000000e+00 : f32
    %247 = vector.broadcast %cst_57 : f32 to vector<128x16xf32>
    %248 = arith.addf %247, %246 : vector<128x16xf32>
    %249 = arith.divf %247, %248 : vector<128x16xf32>
    %250 = vector.extract_strided_slice %238 {offsets = [0, 16], sizes = [128, 16], strides = [1, 1]} : vector<128x48xf32> to vector<128x16xf32>
    %251 = vector.extract_strided_slice %241 {offsets = [0, 16], sizes = [128, 16], strides = [1, 1]} : vector<128x48xf32> to vector<128x16xf32>
    %252 = arith.addf %250, %251 : vector<128x16xf32>
    %253 = arith.negf %252 : vector<128x16xf32>
    %254 = math.exp %253 : vector<128x16xf32>
    %cst_58 = arith.constant 1.000000e+00 : f32
    %255 = vector.broadcast %cst_58 : f32 to vector<128x16xf32>
    %256 = arith.addf %255, %254 : vector<128x16xf32>
    %257 = arith.divf %255, %256 : vector<128x16xf32>
    %258 = vector.extract_strided_slice %238 {offsets = [0, 32], sizes = [128, 16], strides = [1, 1]} : vector<128x48xf32> to vector<128x16xf32>
    %259 = vector.extract_strided_slice %241 {offsets = [0, 32], sizes = [128, 16], strides = [1, 1]} : vector<128x48xf32> to vector<128x16xf32>
    %260 = arith.mulf %249, %259 : vector<128x16xf32>
    %261 = arith.addf %258, %260 : vector<128x16xf32>
    %262 = math.tanh %261 : vector<128x16xf32>
    %cst_59 = arith.constant 1.000000e+00 : f32
    %263 = vector.broadcast %cst_59 : f32 to vector<128x16xf32>
    %264 = arith.subf %263, %257 : vector<128x16xf32>
    %265 = arith.mulf %264, %262 : vector<128x16xf32>
    %266 = arith.mulf %257, %236 : vector<128x16xf32>
    %267 = arith.addf %265, %266 : vector<128x16xf32>
    %268 = arith.addf %237, %267 : vector<128x16xf32>
    %cst_60 = arith.constant 1.250000e-01 : f32
    %269 = vector.broadcast %cst_60 : f32 to vector<128x16xf32>
    %270 = arith.mulf %268, %269 : vector<128x16xf32>
    %c0_61 = arith.constant 0 : index
    %c0_62 = arith.constant 0 : index
    %271 = vector.load %arg8[%c0_61, %c0_62] : memref<16x16xf32, #tpu.memory_space<vmem>>, vector<16x16xf32>
    %cst_63 = arith.constant dense<0.000000e+00> : vector<128x16xf32>
    %272 = tpu.matmul %270, %271, %cst_63 {dimension_numbers = #tpu.dot_dimension_numbers<[1], [0], [0], [1], [0, 0, 1, 1], [], []>} : vector<128x16xf32>, vector<16x16xf32>, vector<128x16xf32> -> vector<128x16xf32>
    %c0_64 = arith.constant 0 : index
    %c0_65 = arith.constant 0 : index
    %273 = vector.load %arg9[%c0_64, %c0_65] : memref<1x16xf32, #tpu.memory_space<vmem>>, vector<1x16xf32>
    %274 = vector.broadcast %273 : vector<1x16xf32> to vector<128x16xf32>
    %275 = arith.addf %272, %274 : vector<128x16xf32>
    %cst_66 = arith.constant 0.000000e+00 : f32
    %276 = vector.broadcast %cst_66 : f32 to vector<128x16xf32>
    %277 = arith.maximumf %275, %276 : vector<128x16xf32>
    %c0_67 = arith.constant 0 : index
    %c0_68 = arith.constant 0 : index
    %278 = vector.load %arg10[%c0_67, %c0_68] : memref<1x16xf32, #tpu.memory_space<vmem>>, vector<1x16xf32>
    %279 = vector.broadcast %278 : vector<1x16xf32> to vector<128x16xf32>
    %280 = arith.mulf %277, %279 : vector<128x16xf32>
    %cst_69 = arith.constant dense<0.000000e+00> : vector<128xf32>
    %281 = vector.multi_reduction <add>, %280, %cst_69 [1] : vector<128x16xf32> to vector<128xf32>
    %282 = vector.shape_cast %281 : vector<128xf32> to vector<128x1xf32>
    %c0_70 = arith.constant 0 : index
    %c0_71 = arith.constant 0 : index
    %283 = memref.load %arg11[%c0_70, %c0_71] : memref<1x1xf32, #tpu.memory_space<smem>>
    %284 = vector.broadcast %283 : f32 to vector<128x1xf32>
    %285 = arith.addf %282, %284 : vector<128x1xf32>
    %286 = arith.negf %285 : vector<128x1xf32>
    %287 = math.exp %286 : vector<128x1xf32>
    %cst_72 = arith.constant 1.000000e+00 : f32
    %288 = vector.broadcast %cst_72 : f32 to vector<128x1xf32>
    %289 = arith.addf %288, %287 : vector<128x1xf32>
    %290 = arith.divf %288, %289 : vector<128x1xf32>
    %c0_73 = arith.constant 0 : index
    %c0_74 = arith.constant 0 : index
    %291 = vector.load %arg12[%c0_73, %c0_74] : memref<128x1xf32, #tpu.memory_space<vmem>>, vector<128x1xf32>
    tpu.vector_store %arg12[%c0_73, %c0_74], %290 {strides = array<i32>} : memref<128x1xf32, #tpu.memory_space<vmem>>, vector<128x1xf32>,
    return
  }
  func.func @transform_0(%arg0: i32) -> (i32, i32) {
    %c0_i32 = arith.constant 0 : i32
    %c0_i32_0 = arith.constant 0 : i32
    return %arg0, %c0_i32 : i32, i32
  }
  func.func @transform_1(%arg0: i32) -> (i32, i32) {
    %c0_i32 = arith.constant 0 : i32
    %c0_i32_0 = arith.constant 0 : i32
    %c0_i32_1 = arith.constant 0 : i32
    return %c0_i32, %c0_i32_0 : i32, i32
  }
  func.func @transform_2(%arg0: i32) -> (i32, i32) {
    %c0_i32 = arith.constant 0 : i32
    %c0_i32_0 = arith.constant 0 : i32
    %c0_i32_1 = arith.constant 0 : i32
    return %c0_i32, %c0_i32_0 : i32, i32
  }
  func.func @transform_3(%arg0: i32) -> (i32, i32) {
    %c0_i32 = arith.constant 0 : i32
    %c0_i32_0 = arith.constant 0 : i32
    %c0_i32_1 = arith.constant 0 : i32
    return %c0_i32, %c0_i32_0 : i32, i32
  }
  func.func @transform_4(%arg0: i32) -> (i32, i32) {
    %c0_i32 = arith.constant 0 : i32
    %c0_i32_0 = arith.constant 0 : i32
    %c0_i32_1 = arith.constant 0 : i32
    return %c0_i32, %c0_i32_0 : i32, i32
  }
  func.func @transform_5(%arg0: i32) -> (i32, i32) {
    %c0_i32 = arith.constant 0 : i32
    %c0_i32_0 = arith.constant 0 : i32
    %c0_i32_1 = arith.constant 0 : i32
    return %c0_i32, %c0_i32_0 : i32, i32
  }
  func.func @transform_6(%arg0: i32) -> (i32, i32) {
    %c0_i32 = arith.constant 0 : i32
    %c0_i32_0 = arith.constant 0 : i32
    %c0_i32_1 = arith.constant 0 : i32
    return %c0_i32, %c0_i32_0 : i32, i32
  }
  func.func @transform_7(%arg0: i32) -> (i32, i32) {
    %c0_i32 = arith.constant 0 : i32
    %c0_i32_0 = arith.constant 0 : i32
    %c0_i32_1 = arith.constant 0 : i32
    return %c0_i32, %c0_i32_0 : i32, i32
  }
  func.func @transform_8(%arg0: i32) -> (i32, i32) {
    %c0_i32 = arith.constant 0 : i32
    %c0_i32_0 = arith.constant 0 : i32
    %c0_i32_1 = arith.constant 0 : i32
    return %c0_i32, %c0_i32_0 : i32, i32
  }
  func.func @transform_9(%arg0: i32) -> (i32, i32) {
    %c0_i32 = arith.constant 0 : i32
    %c0_i32_0 = arith.constant 0 : i32
    %c0_i32_1 = arith.constant 0 : i32
    return %c0_i32, %c0_i32_0 : i32, i32
  }
  func.func @transform_10(%arg0: i32) -> (i32, i32) {
    %c0_i32 = arith.constant 0 : i32
    %c0_i32_0 = arith.constant 0 : i32
    %c0_i32_1 = arith.constant 0 : i32
    return %c0_i32, %c0_i32_0 : i32, i32
  }
  func.func @transform_11(%arg0: i32) -> (i32, i32) {
    %c0_i32 = arith.constant 0 : i32
    %c0_i32_0 = arith.constant 0 : i32
    return %arg0, %c0_i32 : i32, i32
  }
}

</mosaic_0001>

<llo_original>
// kernel: tpu_custom_call.1
$region0: #{tpu_custom_call.1}
  #allocation0 [shape = 'u32[]', space=smem, size = 0x4, offset = 0x4, fixed_abs, tag = 'smem constant byte address 0x4 - core index']
  #allocation1 [shape = 'u32[144,128]{1,0:T(1,128)}', space=vmem, size = 0x12000, scoped, tag = 'internal scratch']
  #allocation2 [shape = 'f32[128,384]{1,0:T(8,128)}', space=vmem, size = 0x30000, scoped, tag = 'scratch operand']
  #allocation3 [shape = 'f32[1,1]{1,0:T(1,128)S(6)}', space=smem, size = 0x200, scoped, tag = 'scoped memory for tpu_custom_call.1']
  %s0 = inlined_call_operand.vmem [shape: f32[256,16], index: 0, kind: input, shape index: {}]
  %s1 = inlined_call_operand.vmem [shape: f32[16,256], index: 1, kind: input, shape index: {}]
  %s2 = inlined_call_operand.vmem [shape: f32[1,256], index: 2, kind: input, shape index: {}]
  %s3 = inlined_call_operand.hbm [shape: f32[128,384], index: 3, kind: input, shape index: {}]
  %s4 = inlined_call_operand.vmem [shape: f32[1,384], index: 4, kind: input, shape index: {}]
  %s5 = inlined_call_operand.vmem [shape: f32[16,48], index: 5, kind: input, shape index: {}]
  %s6 = inlined_call_operand.vmem [shape: f32[1,48], index: 6, kind: input, shape index: {}]
  %s7 = inlined_call_operand.vmem [shape: f32[16,16], index: 7, kind: input, shape index: {}]
  %s8 = inlined_call_operand.vmem [shape: f32[1,16], index: 8, kind: input, shape index: {}]
  %s9 = inlined_call_operand.vmem [shape: f32[1,16], index: 9, kind: input, shape index: {}]
  %s10 = inlined_call_operand.<no memory space> [shape: f32[1,1], index: 10, kind: input, shape index: {}]
  %s11 = inlined_call_operand.vmem [shape: f32[256,1], index: 11, kind: output, shape index: {}]
  %s12 = sld [smem:[#allocation0]]
  $region81: #{tpu_custom_call.1} parent=0
    _
  %s14 = ssub.s32 1, %s12
  %s15 = scalar_select 0, %s14, %s12
  %16 = sst [smem:[#allocation3]] %s10
  $region1: #{tpu_custom_call.1} parent=0
    #allocation4 [shape = 'u8[196608]{0}', space=vmem, size = 0x30000, scoped, tag = 'input window, operand 3, single buffered']
    #allocation5 [shape = 's32[2]{0}', space=sflag, size = 0x8, scoped, tag = 'scoped memory for tpu_custom_call.1']
    %17 = vsyncpa [#allocation5], 0
    loop: start=0, step=1, limit=4
    $region2: #{tpu_custom_call.1} parent=1 // loop_pre_header
      _
    $region3: #{tpu_custom_call.1} parent=1 // loop_header
      %s19 = sphi 0, %s23
      %p20 = scmp.ge.s32.totalorder %s19, 4
      %s29 = sphi 0, %s31
      %s32 = sphi 0, %s29
      %s33 = sphi 0, %s32
      %s49 = sphi 0, %s33
      %s53 = sphi 0, %s53
      %s55 = sphi 0, %s53
      %s56 = sphi 0, %s55
      %s70 = sphi 0, %s56
      %s74 = sphi 0, %s74
      %s76 = sphi 0, %s74
      %s77 = sphi 0, %s76
      %s91 = sphi 0, %s77
      %s95 = sphi 0, %s95
      %s97 = sphi 0, %s95
      %s98 = sphi 0, %s97
      %s112 = sphi 0, %s98
      %s116 = sphi 0, %s116
      %s118 = sphi 0, %s116
      %s119 = sphi 0, %s118
      %s133 = sphi 0, %s119
      %s137 = sphi 0, %s137
      %s139 = sphi 0, %s137
      %s140 = sphi 0, %s139
      %s154 = sphi 0, %s140
      %s158 = sphi 0, %s158
      %s160 = sphi 0, %s158
      %s161 = sphi 0, %s160
      %s175 = sphi 0, %s161
      %s179 = sphi 0, %s179
      %s181 = sphi 0, %s179
      %s182 = sphi 0, %s181
      %s196 = sphi 0, %s182
      %s200 = sphi 0, %s200
      %s202 = sphi 0, %s200
      %s203 = sphi 0, %s202
      %s217 = sphi 0, %s203
      %s221 = sphi 0, %s221
      %s223 = sphi 0, %s221
      %s224 = sphi 0, %s223
      %s238 = sphi 0, %s224
      %s242 = sphi 0, %s242
      %s244 = sphi 0, %s242
      %s245 = sphi 0, %s244
      %s259 = sphi 0, %s245
      %s265 = sphi 0, %s267
      %s268 = sphi 0, %s265
      %s269 = sphi 0, %s268
      %s285 = sphi 0, %s269
    $region4: #{tpu_custom_call.1} parent=1 // loop_header_branch
      %22 = sbr.rel (%p20) target = $region8
    $region5: #{tpu_custom_call.1} parent=1 // loop_body
      %s24 = ssub.s32 %s19, 1
      %s25 = ssub.s32 %s19, 2
      %s26 = sadd.s32 %s19, 1
      %s27 = ssub.s32 %s19, %s26
      %p28 = scmp.eq.s32.totalorder %s27, 0
      %s30 = sadd.s32 %s29, 1
      %s31 = scalar_select %p28, %s29, %s30
      %p34 = pneg %p28
      %p35 = scmp.eq.s32.totalorder %s19, 1
      %p36 = por %p34, %p35
      %p37 = scmp.ne.s32.totalorder %s29, %s32
      %p38 = scmp.eq.s32.totalorder %s19, 0
      %p39 = por %p37, %p38
      %p40 = scmp.ne.s32.totalorder %s29, %s32
      %p41 = scmp.eq.s32.totalorder %s24, 1
      %p42 = por %p40, %p41
      %p43 = scmp.ne.s32.totalorder %s32, %s33
      %p44 = scmp.eq.s32.totalorder %s24, 0
      %p45 = por %p43, %p44
      %p46 = scmp.ne.s32.totalorder %s32, %s33
      %p47 = scmp.eq.s32.totalorder %s25, 1
      %p48 = por %p46, %p47
      %p50 = scmp.ne.s32.totalorder %s33, %s49
      %p51 = scmp.eq.s32.totalorder %s25, 0
      %p52 = por %p50, %p51
      %s54 = sadd.s32 %s53, 1
      %p57 = scmp.eq.s32.totalorder %s19, 1
      %p58 = scmp.ne.s32.totalorder %s53, %s55
      %p59 = scmp.eq.s32.totalorder %s19, 0
      %p60 = por %p58, %p59
      %p61 = scmp.ne.s32.totalorder %s53, %s55
      %p62 = scmp.eq.s32.totalorder %s24, 1
      %p63 = por %p61, %p62
      %p64 = scmp.ne.s32.totalorder %s55, %s56
      %p65 = scmp.eq.s32.totalorder %s24, 0
      %p66 = por %p64, %p65
      %p67 = scmp.ne.s32.totalorder %s55, %s56
      %p68 = scmp.eq.s32.totalorder %s25, 1
      %p69 = por %p67, %p68
      %p71 = scmp.ne.s32.totalorder %s56, %s70
      %p72 = scmp.eq.s32.totalorder %s25, 0
      %p73 = por %p71, %p72
      %s75 = sadd.s32 %s74, 1
      %p78 = scmp.eq.s32.totalorder %s19, 1
      %p79 = scmp.ne.s32.totalorder %s74, %s76
      %p80 = scmp.eq.s32.totalorder %s19, 0
      %p81 = por %p79, %p80
      %p82 = scmp.ne.s32.totalorder %s74, %s76
      %p83 = scmp.eq.s32.totalorder %s24, 1
      %p84 = por %p82, %p83
      %p85 = scmp.ne.s32.totalorder %s76, %s77
      %p86 = scmp.eq.s32.totalorder %s24, 0
      %p87 = por %p85, %p86
      %p88 = scmp.ne.s32.totalorder %s76, %s77
      %p89 = scmp.eq.s32.totalorder %s25, 1
      %p90 = por %p88, %p89
      %p92 = scmp.ne.s32.totalorder %s77, %s91
      %p93 = scmp.eq.s32.totalorder %s25, 0
      %p94 = por %p92, %p93
      %s96 = sadd.s32 %s95, 1
      %p99 = scmp.eq.s32.totalorder %s19, 1
      %p100 = scmp.ne.s32.totalorder %s95, %s97
      %p101 = scmp.eq.s32.totalorder %s19, 0
      %p102 = por %p100, %p101
      %p103 = scmp.ne.s32.totalorder %s95, %s97
      %p104 = scmp.eq.s32.totalorder %s24, 1
      %p105 = por %p103, %p104
      %p106 = scmp.ne.s32.totalorder %s97, %s98
      %p107 = scmp.eq.s32.totalorder %s24, 0
      %p108 = por %p106, %p107
      %p109 = scmp.ne.s32.totalorder %s97, %s98
      %p110 = scmp.eq.s32.totalorder %s25, 1
      %p111 = por %p109, %p110
      %p113 = scmp.ne.s32.totalorder %s98, %s112
      %p114 = scmp.eq.s32.totalorder %s25, 0
      %p115 = por %p113, %p114
      %s117 = sadd.s32 %s116, 1
      %p120 = scmp.eq.s32.totalorder %s19, 1
      %p121 = scmp.ne.s32.totalorder %s116, %s118
      %p122 = scmp.eq.s32.totalorder %s19, 0
      %p123 = por %p121, %p122
      %p124 = scmp.ne.s32.totalorder %s116, %s118
      %p125 = scmp.eq.s32.totalorder %s24, 1
      %p126 = por %p124, %p125
      %p127 = scmp.ne.s32.totalorder %s118, %s119
      %p128 = scmp.eq.s32.totalorder %s24, 0
      %p129 = por %p127, %p128
      %p130 = scmp.ne.s32.totalorder %s118, %s119
      %p131 = scmp.eq.s32.totalorder %s25, 1
      %p132 = por %p130, %p131
      %p134 = scmp.ne.s32.totalorder %s119, %s133
      %p135 = scmp.eq.s32.totalorder %s25, 0
      %p136 = por %p134, %p135
      %s138 = sadd.s32 %s137, 1
      %p141 = scmp.eq.s32.totalorder %s19, 1
      %p142 = scmp.ne.s32.totalorder %s137, %s139
      %p143 = scmp.eq.s32.totalorder %s19, 0
      %p144 = por %p142, %p143
      %p145 = scmp.ne.s32.totalorder %s137, %s139
      %p146 = scmp.eq.s32.totalorder %s24, 1
      %p147 = por %p145, %p146
      %p148 = scmp.ne.s32.totalorder %s139, %s140
      %p149 = scmp.eq.s32.totalorder %s24, 0
      %p150 = por %p148, %p149
      %p151 = scmp.ne.s32.totalorder %s139, %s140
      %p152 = scmp.eq.s32.totalorder %s25, 1
      %p153 = por %p151, %p152
      %p155 = scmp.ne.s32.totalorder %s140, %s154
      %p156 = scmp.eq.s32.totalorder %s25, 0
      %p157 = por %p155, %p156
      %s159 = sadd.s32 %s158, 1
      %p162 = scmp.eq.s32.totalorder %s19, 1
      %p163 = scmp.ne.s32.totalorder %s158, %s160
      %p164 = scmp.eq.s32.totalorder %s19, 0
      %p165 = por %p163, %p164
      %p166 = scmp.ne.s32.totalorder %s158, %s160
      %p167 = scmp.eq.s32.totalorder %s24, 1
      %p168 = por %p166, %p167
      %p169 = scmp.ne.s32.totalorder %s160, %s161
      %p170 = scmp.eq.s32.totalorder %s24, 0
      %p171 = por %p169, %p170
      %p172 = scmp.ne.s32.totalorder %s160, %s161
      %p173 = scmp.eq.s32.totalorder %s25, 1
      %p174 = por %p172, %p173
      %p176 = scmp.ne.s32.totalorder %s161, %s175
      %p177 = scmp.eq.s32.totalorder %s25, 0
      %p178 = por %p176, %p177
      %s180 = sadd.s32 %s179, 1
      %p183 = scmp.eq.s32.totalorder %s19, 1
      %p184 = scmp.ne.s32.totalorder %s179, %s181
      %p185 = scmp.eq.s32.totalorder %s19, 0
      %p186 = por %p184, %p185
      %p187 = scmp.ne.s32.totalorder %s179, %s181
      %p188 = scmp.eq.s32.totalorder %s24, 1
      %p189 = por %p187, %p188
      %p190 = scmp.ne.s32.totalorder %s181, %s182
      %p191 = scmp.eq.s32.totalorder %s24, 0
      %p192 = por %p190, %p191
      %p193 = scmp.ne.s32.totalorder %s181, %s182
      %p194 = scmp.eq.s32.totalorder %s25, 1
      %p195 = por %p193, %p194
      %p197 = scmp.ne.s32.totalorder %s182, %s196
      %p198 = scmp.eq.s32.totalorder %s25, 0
      %p199 = por %p197, %p198
      %s201 = sadd.s32 %s200, 1
      %p204 = scmp.eq.s32.totalorder %s19, 1
      %p205 = scmp.ne.s32.totalorder %s200, %s202
      %p206 = scmp.eq.s32.totalorder %s19, 0
      %p207 = por %p205, %p206
      %p208 = scmp.ne.s32.totalorder %s200, %s202
      %p209 = scmp.eq.s32.totalorder %s24, 1
      %p210 = por %p208, %p209
      %p211 = scmp.ne.s32.totalorder %s202, %s203
      %p212 = scmp.eq.s32.totalorder %s24, 0
      %p213 = por %p211, %p212
      %p214 = scmp.ne.s32.totalorder %s202, %s203
      %p215 = scmp.eq.s32.totalorder %s25, 1
      %p216 = por %p214, %p215
      %p218 = scmp.ne.s32.totalorder %s203, %s217
      %p219 = scmp.eq.s32.totalorder %s25, 0
      %p220 = por %p218, %p219
      %s222 = sadd.s32 %s221, 1
      %p225 = scmp.eq.s32.totalorder %s19, 1
      %p226 = scmp.ne.s32.totalorder %s221, %s223
      %p227 = scmp.eq.s32.totalorder %s19, 0
      %p228 = por %p226, %p227
      %p229 = scmp.ne.s32.totalorder %s221, %s223
      %p230 = scmp.eq.s32.totalorder %s24, 1
      %p231 = por %p229, %p230
      %p232 = scmp.ne.s32.totalorder %s223, %s224
      %p233 = scmp.eq.s32.totalorder %s24, 0
      %p234 = por %p232, %p233
      %p235 = scmp.ne.s32.totalorder %s223, %s224
      %p236 = scmp.eq.s32.totalorder %s25, 1
      %p237 = por %p235, %p236
      %p239 = scmp.ne.s32.totalorder %s224, %s238
      %p240 = scmp.eq.s32.totalorder %s25, 0
      %p241 = por %p239, %p240
      %s243 = sadd.s32 %s242, 1
      %p246 = scmp.eq.s32.totalorder %s19, 1
      %p247 = scmp.ne.s32.totalorder %s242, %s244
      %p248 = scmp.eq.s32.totalorder %s19, 0
      %p249 = por %p247, %p248
      %p250 = scmp.ne.s32.totalorder %s242, %s244
      %p251 = scmp.eq.s32.totalorder %s24, 1
      %p252 = por %p250, %p251
      %p253 = scmp.ne.s32.totalorder %s244, %s245
      %p254 = scmp.eq.s32.totalorder %s24, 0
      %p255 = por %p253, %p254
      %p256 = scmp.ne.s32.totalorder %s244, %s245
      %p257 = scmp.eq.s32.totalorder %s25, 1
      %p258 = por %p256, %p257
      %p260 = scmp.ne.s32.totalorder %s245, %s259
      %p261 = scmp.eq.s32.totalorder %s25, 0
      %p262 = por %p260, %p261
      %s263 = ssub.s32 %s19, %s26
      %p264 = scmp.eq.s32.totalorder %s263, 0
      %s266 = sadd.s32 %s265, 1
      %s267 = scalar_select %p264, %s265, %s266
      %p270 = pneg %p264
      %p271 = scmp.eq.s32.totalorder %s19, 1
      %p272 = por %p270, %p271
      %p273 = scmp.ne.s32.totalorder %s265, %s268
      %p274 = scmp.eq.s32.totalorder %s19, 0
      %p275 = por %p273, %p274
      %p276 = scmp.ne.s32.totalorder %s265, %s268
      %p277 = scmp.eq.s32.totalorder %s24, 1
      %p278 = por %p276, %p277
      %p279 = scmp.ne.s32.totalorder %s268, %s269
      %p280 = scmp.eq.s32.totalorder %s24, 0
      %p281 = por %p279, %p280
      %p282 = scmp.ne.s32.totalorder %s268, %s269
      %p283 = scmp.eq.s32.totalorder %s25, 1
      %p284 = por %p282, %p283
      %p286 = scmp.ne.s32.totalorder %s269, %s285
      %p287 = scmp.eq.s32.totalorder %s25, 0
      %p288 = por %p286, %p287
      %p289 = scmp.le.s32.totalorder 1, %s19
      %p290 = scmp.lt.s32.totalorder %s19, 3
      %p291 = pnand %p289, %p290
      %p292 = pneg %p291
      // Predicated region
      $region9: #{tpu_custom_call.1} parent=5 // pred_check
        _
      $region10: #{tpu_custom_call.1} parent=5 // pred_check_branch
        %294 = sbr.rel (%p291) target = $region12
      $region11: #{tpu_custom_call.1} parent=5 // pred_region
        %s295 = ssub.s32 %s19, 1
        // Predicated region
        $region13: #{tpu_custom_call.1} parent=11 // pred_check
          %p296 = pneg %p66
        $region14: #{tpu_custom_call.1} parent=11 // pred_check_branch
          %298 = sbr.rel (%p296) target = $region16
        $region15: #{tpu_custom_call.1} parent=11 // pred_region
          _
        $region16: #{tpu_custom_call.1} parent=11 // pred_fallthru
          _
        // Predicated region
        $region17: #{tpu_custom_call.1} parent=11 // pred_check
          %p299 = pneg %p87
        $region18: #{tpu_custom_call.1} parent=11 // pred_check_branch
          %301 = sbr.rel (%p299) target = $region20
        $region19: #{tpu_custom_call.1} parent=11 // pred_region
          _
        $region20: #{tpu_custom_call.1} parent=11 // pred_fallthru
          _
        // Predicated region
        $region21: #{tpu_custom_call.1} parent=11 // pred_check
          %p302 = pneg %p108
        $region22: #{tpu_custom_call.1} parent=11 // pred_check_branch
          %304 = sbr.rel (%p302) target = $region24
        $region23: #{tpu_custom_call.1} parent=11 // pred_region
          %s306 = ssub.s32 6144, 6144
          %307 = vsyncadd [#allocation5], %s306
          %s308 = sshll.u32 [#allocation4], 4
          %s309 = int_to_ptr.vmem [resolvable:$true] %s308
          %314 = dma.hbm_to_vmem [thread:$0]  %s3, 6144, %s309, [#allocation5], 384, 384, 24
        $region24: #{tpu_custom_call.1} parent=11 // pred_fallthru
          _
        // Predicated region
        $region25: #{tpu_custom_call.1} parent=11 // pred_check
          %p315 = pneg %p129
        $region26: #{tpu_custom_call.1} parent=11 // pred_check_branch
          %317 = sbr.rel (%p315) target = $region28
        $region27: #{tpu_custom_call.1} parent=11 // pred_region
          _
        $region28: #{tpu_custom_call.1} parent=11 // pred_fallthru
          _
        // Predicated region
        $region29: #{tpu_custom_call.1} parent=11 // pred_check
          %p318 = pneg %p150
        $region30: #{tpu_custom_call.1} parent=11 // pred_check_branch
          %320 = sbr.rel (%p318) target = $region32
        $region31: #{tpu_custom_call.1} parent=11 // pred_region
          _
        $region32: #{tpu_custom_call.1} parent=11 // pred_fallthru
          _
        // Predicated region
        $region33: #{tpu_custom_call.1} parent=11 // pred_check
          %p321 = pneg %p171
        $region34: #{tpu_custom_call.1} parent=11 // pred_check_branch
          %323 = sbr.rel (%p321) target = $region36
        $region35: #{tpu_custom_call.1} parent=11 // pred_region
          _
        $region36: #{tpu_custom_call.1} parent=11 // pred_fallthru
          _
        // Predicated region
        $region37: #{tpu_custom_call.1} parent=11 // pred_check
          %p324 = pneg %p192
        $region38: #{tpu_custom_call.1} parent=11 // pred_check_branch
          %326 = sbr.rel (%p324) target = $region40
        $region39: #{tpu_custom_call.1} parent=11 // pred_region
          _
        $region40: #{tpu_custom_call.1} parent=11 // pred_fallthru
          _
        // Predicated region
        $region41: #{tpu_custom_call.1} parent=11 // pred_check
          %p327 = pneg %p213
        $region42: #{tpu_custom_call.1} parent=11 // pred_check_branch
          %329 = sbr.rel (%p327) target = $region44
        $region43: #{tpu_custom_call.1} parent=11 // pred_region
          _
        $region44: #{tpu_custom_call.1} parent=11 // pred_fallthru
          _
        // Predicated region
        $region45: #{tpu_custom_call.1} parent=11 // pred_check
          %p330 = pneg %p234
        $region46: #{tpu_custom_call.1} parent=11 // pred_check_branch
          %332 = sbr.rel (%p330) target = $region48
        $region47: #{tpu_custom_call.1} parent=11 // pred_region
          _
        $region48: #{tpu_custom_call.1} parent=11 // pred_fallthru
          _
        // Predicated region
        $region49: #{tpu_custom_call.1} parent=11 // pred_check
          %p333 = pneg %p255
        $region50: #{tpu_custom_call.1} parent=11 // pred_check_branch
          %335 = sbr.rel (%p333) target = $region52
        $region51: #{tpu_custom_call.1} parent=11 // pred_region
          _
        $region52: #{tpu_custom_call.1} parent=11 // pred_fallthru
          _
      $region12: #{tpu_custom_call.1} parent=5 // pred_fallthru
        _
      %p336 = scmp.lt.s32.totalorder %s19, 2
      // Predicated region
      $region53: #{tpu_custom_call.1} parent=5 // pred_check
        %p337 = pneg %p336
      $region54: #{tpu_custom_call.1} parent=5 // pred_check_branch
        %339 = sbr.rel (%p337) target = $region56
      $region55: #{tpu_custom_call.1} parent=5 // pred_region
        // Predicated region
        $region57: #{tpu_custom_call.1} parent=55 // pred_check
          %p340 = pneg %p39
        $region58: #{tpu_custom_call.1} parent=55 // pred_check_branch
          %342 = sbr.rel (%p340) target = $region60
        $region59: #{tpu_custom_call.1} parent=55 // pred_region
          %s343 = smul.u32 16, %s19
          %p344 = scmp.lt.s32.totalorder %s343, 31
          %s345 = scalar_select %p344, %s343, 31
          %s346 = smul.addr %s345, 8
          %s347 = scalar_lea.vmem %s0, %s346
          %s348 = smul.u32 16, %s19
        $region60: #{tpu_custom_call.1} parent=55 // pred_fallthru
          _
      $region56: #{tpu_custom_call.1} parent=5 // pred_fallthru
        _
      %p349 = scmp.le.s32.totalorder 1, %s19
      %p350 = scmp.lt.s32.totalorder %s19, 3
      %p351 = pnand %p349, %p350
      %p352 = pneg %p351
      // Predicated region
      $region61: #{tpu_custom_call.1} parent=5 // pred_check
        _
      $region62: #{tpu_custom_call.1} parent=5 // pred_check_branch
        %354 = sbr.rel (%p351) target = $region64
      $region63: #{tpu_custom_call.1} parent=5 // pred_region
        %s355 = ssub.s32 %s19, 1
        // Predicated region
        $region65: #{tpu_custom_call.1} parent=63 // pred_check
          %p356 = pneg %p108
        $region66: #{tpu_custom_call.1} parent=63 // pred_check_branch
          %358 = sbr.rel (%p356) target = $region68
        $region67: #{tpu_custom_call.1} parent=63 // pred_region
          %359 = dma.done [#allocation5], 6144
        $region68: #{tpu_custom_call.1} parent=63 // pred_fallthru
          _
        %s360 = smul.u32 16, %s24
        %p361 = scmp.lt.s32.totalorder %s360, 31
        %s362 = scalar_select %p361, %s360, 31
        %s363 = smul.addr %s362, 8
        %s364 = scalar_lea.vmem %s0, %s363
        %p365 = pneg %p45
        %p366 = pneg %p42
        %p367 = pneg %p66
        %p368 = pneg %p63
        %p369 = pneg %p87
        %p370 = pneg %p84
        %p371 = pneg %p108
        %p372 = pneg %p105
        %p373 = pneg %p129
        %p374 = pneg %p126
        %p375 = pneg %p150
        %p376 = pneg %p147
        %p377 = pneg %p171
        %p378 = pneg %p168
        %p379 = pneg %p192
        %p380 = pneg %p189
        %p381 = pneg %p213
        %p382 = pneg %p210
        %p383 = pneg %p234
        %p384 = pneg %p231
        %p385 = pneg %p255
        %p386 = pneg %p252
        %p387 = pneg %p281
        %p388 = pneg %p278
        %s389 = smul.u32 16, %s24
        %p390 = scmp.lt.s32.totalorder %s389, 31
        %s391 = scalar_select %p390, %s389, 31
        %s392 = smul.addr %s391, 8
        %s393 = scalar_lea.vmem %s11, %s392
        %s394 = smul.u32 16, %s24
        %p395 = scmp.lt.s32.totalorder %s394, 31
        %s396 = scalar_select %p395, %s394, 31
        %s397 = smul.addr %s396, 8
        %s398 = scalar_lea.vmem %s0, %s397
        %s399 = smul.u32 16, %s24
        %s400 = smul.u32 16, %s24
        %p401 = scmp.lt.s32.totalorder %s400, 31
        %s402 = scalar_select %p401, %s400, 31
        %s403 = smul.addr %s402, 8
        %s404 = scalar_lea.vmem %s11, %s403
        %s405 = smul.u32 16, %s24
        %v406 = vld [vmem:[%s398] sm:$0xff]
        %v407 = vld [vmem:[%s398 + $0x8] sm:$0xff]
        %v408 = vld [vmem:[%s398 + $0x10] sm:$0xff]
        %v409 = vld [vmem:[%s398 + $0x18] sm:$0xff]
        %v410 = vld [vmem:[%s398 + $0x20] sm:$0xff]
        %v411 = vld [vmem:[%s398 + $0x28] sm:$0xff]
        %v412 = vld [vmem:[%s398 + $0x30] sm:$0xff]
        %v413 = vld [vmem:[%s398 + $0x38] sm:$0xff]
        %v414 = vld [vmem:[%s398 + $0x40] sm:$0xff]
        %v415 = vld [vmem:[%s398 + $0x48] sm:$0xff]
        %v416 = vld [vmem:[%s398 + $0x50] sm:$0xff]
        %v417 = vld [vmem:[%s398 + $0x58] sm:$0xff]
        %v418 = vld [vmem:[%s398 + $0x60] sm:$0xff]
        %v419 = vld [vmem:[%s398 + $0x68] sm:$0xff]
        %v420 = vld [vmem:[%s398 + $0x70] sm:$0xff]
        %v421 = vld [vmem:[%s398 + $0x78] sm:$0xff]
        %v422 = vld [vmem:[%s1] sm:$0xff]
        %v423 = vld [vmem:[%s1 + $0x8] sm:$0xff]
        %v424 = vld [vmem:[%s1 + $0x10] sm:$0xff]
        %v425 = vld [vmem:[%s1 + $0x18] sm:$0xff]
        %v426 = vld [vmem:[%s2] sm:$0x3]
        %v428 = vlaneseq
        %v429 = vshrl.u32 %v428, 7
        %v430 = vsub.s32 0, %v429
        %v431 = vrot.slane %v426, %v430
        %v432 = vlaneseq
        %v433 = vshrl.u32 %v432, 7
        %v434 = vsub.s32 1, %v433
        %v435 = vrot.slane %v426, %v434
        %vm438 = vcmask 130048
        %v440 = vsel %vm438, %v406, 0
        %v443 = vsel %vm438, %v407, 0
        %v446 = vsel %vm438, %v408, 0
        %v449 = vsel %vm438, %v409, 0
        %v452 = vsel %vm438, %v410, 0
        %v455 = vsel %vm438, %v411, 0
        %v458 = vsel %vm438, %v412, 0
        %v461 = vsel %vm438, %v413, 0
        %v464 = vsel %vm438, %v414, 0
        %v467 = vsel %vm438, %v415, 0
        %v470 = vsel %vm438, %v416, 0
        %v473 = vsel %vm438, %v417, 0
        %v476 = vsel %vm438, %v418, 0
        %v479 = vsel %vm438, %v419, 0
        %v482 = vsel %vm438, %v420, 0
        %v485 = vsel %vm438, %v421, 0
        %487 = vmatprep.subr.mxu0 %v423
        %488 = vmatpush1.msra.mxu0 %v422
        %489 = vmatprep.subr.mxu0 %v425
        %490 = vmatpush1.msra.mxu0 %v424
        %491 = vmatprep.subr.mxu0 0.0
        %492 = vmatpush1.msra.mxu0 0.0
        %493 = vmatprep.subr.mxu0 0.0
        %494 = vmatpush1.msra.mxu0 0.0
        %495 = vmatprep.subr.mxu0 0.0
        %496 = vmatpush1.msra.mxu0 0.0
        %497 = vmatprep.subr.mxu0 0.0
        %498 = vmatpush1.msra.mxu0 0.0
        %499 = vmatprep.subr.mxu0 0.0
        %500 = vmatpush1.msra.mxu0 0.0
        %501 = vmatprep.subr.mxu0 0.0
        %502 = vmatpush1.msra.mxu0 0.0
        %503 = vmatprep.subr.mxu0 0.0
        %504 = vmatpush1.msra.mxu0 0.0
        %505 = vmatprep.subr.mxu0 0.0
        %506 = vmatpush1.msra.mxu0 0.0
        %507 = vmatprep.subr.mxu0 0.0
        %508 = vmatpush1.msra.mxu0 0.0
        %509 = vmatprep.subr.mxu0 0.0
        %510 = vmatpush1.msra.mxu0 0.0
        %511 = vmatprep.subr.mxu0 0.0
        %512 = vmatpush1.msra.mxu0 0.0
        %513 = vmatprep.subr.mxu0 0.0
        %514 = vmatpush1.msra.mxu0 0.0
        %515 = vmatprep.subr.mxu0 0.0
        %516 = vmatpush1.msra.mxu0 0.0
        %517 = vmatprep.subr.mxu0 0.0
        %518 = vmatpush1.msra.mxu0 0.0
        %519 = vmatprep.subr.mxu0 0.0
        %520 = vmatpush1.msra.mxu0 0.0
        %521 = vmatprep.subr.mxu0 0.0
        %522 = vmatpush1.msra.mxu0 0.0
        %523 = vmatprep.subr.mxu0 0.0
        %524 = vmatpush1.msra.mxu0 0.0
        %525 = vmatprep.subr.mxu0 0.0
        %526 = vmatpush1.msra.mxu0 0.0
        %527 = vmatprep.subr.mxu0 0.0
        %528 = vmatpush1.msra.mxu0 0.0
        %529 = vmatprep.subr.mxu0 0.0
        %530 = vmatpush1.msra.mxu0 0.0
        %531 = vmatprep.subr.mxu0 0.0
        %532 = vmatpush1.msra.mxu0 0.0
        %533 = vmatprep.subr.mxu0 0.0
        %534 = vmatpush1.msra.mxu0 0.0
        %535 = vmatprep.subr.mxu0 0.0
        %536 = vmatpush1.msra.mxu0 0.0
        %537 = vmatprep.subr.mxu0 0.0
        %538 = vmatpush1.msra.mxu0 0.0
        %539 = vmatprep.subr.mxu0 0.0
        %540 = vmatpush1.msra.mxu0 0.0
        %541 = vmatprep.subr.mxu0 0.0
        %542 = vmatpush1.msra.mxu0 0.0
        %543 = vmatprep.subr.mxu0 0.0
        %544 = vmatpush1.msra.mxu0 0.0
        %545 = vmatprep.subr.mxu0 0.0
        %546 = vmatpush1.msra.mxu0 0.0
        %547 = vmatprep.subr.mxu0 0.0
        %548 = vmatpush1.msra.mxu0 0.0
        %549 = vmatprep.subr.mxu0 0.0
        %550 = vmatpush1.msra.mxu0 0.0
        %551 = vmatprep.mubr.f32.mxu0 0.0
        %552 = vmatmul.mubr.f32.gmra.mrb[0].mxu0 %v440
        %v553 = vpop.f32.mrb[0].mxu0
        %v554 = vadd.f32 %v431, %v553
        %v555 = vpop.f32.mrb[0].mxu0
        %v556 = vadd.f32 %v435, %v555
        %557 = vmatprep.mubr.f32.mxu0 0.0
        %558 = vmatmul.mubr.f32.gmra.mrb[0].mxu0 %v443
        %v559 = vpop.f32.mrb[0].mxu0
        %v560 = vadd.f32 %v431, %v559
        %v561 = vpop.f32.mrb[0].mxu0
        %v562 = vadd.f32 %v435, %v561
        %563 = vmatprep.mubr.f32.mxu0 0.0
        %564 = vmatmul.mubr.f32.gmra.mrb[0].mxu0 %v446
        %v565 = vpop.f32.mrb[0].mxu0
        %v566 = vadd.f32 %v431, %v565
        %v567 = vpop.f32.mrb[0].mxu0
        %v568 = vadd.f32 %v435, %v567
        %569 = vmatprep.mubr.f32.mxu0 0.0
        %570 = vmatmul.mubr.f32.gmra.mrb[0].mxu0 %v449
        %v571 = vpop.f32.mrb[0].mxu0
        %v572 = vadd.f32 %v431, %v571
        %v573 = vpop.f32.mrb[0].mxu0
        %v574 = vadd.f32 %v435, %v573
        %575 = vmatprep.mubr.f32.mxu0 0.0
        %576 = vmatmul.mubr.f32.gmra.mrb[0].mxu0 %v452
        %v577 = vpop.f32.mrb[0].mxu0
        %v578 = vadd.f32 %v431, %v577
        %v579 = vpop.f32.mrb[0].mxu0
        %v580 = vadd.f32 %v435, %v579
        %581 = vmatprep.mubr.f32.mxu0 0.0
        %582 = vmatmul.mubr.f32.gmra.mrb[0].mxu0 %v455
        %v583 = vpop.f32.mrb[0].mxu0
        %v584 = vadd.f32 %v431, %v583
        %v585 = vpop.f32.mrb[0].mxu0
        %v586 = vadd.f32 %v435, %v585
        %587 = vmatprep.mubr.f32.mxu0 0.0
        %588 = vmatmul.mubr.f32.gmra.mrb[0].mxu0 %v458
        %v589 = vpop.f32.mrb[0].mxu0
        %v590 = vadd.f32 %v431, %v589
        %v591 = vpop.f32.mrb[0].mxu0
        %v592 = vadd.f32 %v435, %v591
        %593 = vmatprep.mubr.f32.mxu0 0.0
        %594 = vmatmul.mubr.f32.gmra.mrb[0].mxu0 %v461
        %v595 = vpop.f32.mrb[0].mxu0
        %v596 = vadd.f32 %v431, %v595
        %v597 = vpop.f32.mrb[0].mxu0
        %v598 = vadd.f32 %v435, %v597
        %599 = vmatprep.mubr.f32.mxu0 0.0
        %600 = vmatmul.mubr.f32.gmra.mrb[0].mxu0 %v464
        %v601 = vpop.f32.mrb[0].mxu0
        %v602 = vadd.f32 %v431, %v601
        %v603 = vpop.f32.mrb[0].mxu0
        %v604 = vadd.f32 %v435, %v603
        %605 = vmatprep.mubr.f32.mxu0 0.0
        %606 = vmatmul.mubr.f32.gmra.mrb[0].mxu0 %v467
        %v607 = vpop.f32.mrb[0].mxu0
        %v608 = vadd.f32 %v431, %v607
        %v609 = vpop.f32.mrb[0].mxu0
        %v610 = vadd.f32 %v435, %v609
        %611 = vmatprep.mubr.f32.mxu0 0.0
        %612 = vmatmul.mubr.f32.gmra.mrb[0].mxu0 %v470
        %v613 = vpop.f32.mrb[0].mxu0
        %v614 = vadd.f32 %v431, %v613
        %v615 = vpop.f32.mrb[0].mxu0
        %v616 = vadd.f32 %v435, %v615
        %617 = vmatprep.mubr.f32.mxu0 0.0
        %618 = vmatmul.mubr.f32.gmra.mrb[0].mxu0 %v473
        %v619 = vpop.f32.mrb[0].mxu0
        %v620 = vadd.f32 %v431, %v619
        %v621 = vpop.f32.mrb[0].mxu0
        %v622 = vadd.f32 %v435, %v621
        %623 = vmatprep.mubr.f32.mxu0 0.0
        %624 = vmatmul.mubr.f32.gmra.mrb[0].mxu0 %v476
        %v625 = vpop.f32.mrb[0].mxu0
        %v626 = vadd.f32 %v431, %v625
        %v627 = vpop.f32.mrb[0].mxu0
        %v628 = vadd.f32 %v435, %v627
        %629 = vmatprep.mubr.f32.mxu0 0.0
        %630 = vmatmul.mubr.f32.gmra.mrb[0].mxu0 %v479
        %v631 = vpop.f32.mrb[0].mxu0
        %v632 = vadd.f32 %v431, %v631
        %v633 = vpop.f32.mrb[0].mxu0
        %v634 = vadd.f32 %v435, %v633
        %635 = vmatprep.mubr.f32.mxu0 0.0
        %636 = vmatmul.mubr.f32.gmra.mrb[0].mxu0 %v482
        %v637 = vpop.f32.mrb[0].mxu0
        %v638 = vadd.f32 %v431, %v637
        %v639 = vpop.f32.mrb[0].mxu0
        %v640 = vadd.f32 %v435, %v639
        %641 = vmatprep.mubr.f32.mxu0 0.0
        %642 = vmatmul.mubr.f32.gmra.mrb[0].mxu0 %v485
        %v643 = vpop.f32.mrb[0].mxu0
        %v644 = vadd.f32 %v431, %v643
        %v645 = vpop.f32.mrb[0].mxu0
        %v646 = vadd.f32 %v435, %v645
        %647 = vdwg.mxu0
        %v648 = vmax.f32 %v554, %v556
        %v649 = vmax.f32 %v560, %v562
        %v650 = vmax.f32 %v566, %v568
        %v651 = vmax.f32 %v572, %v574
        %v652 = vmax.f32 %v578, %v580
        %v653 = vmax.f32 %v584, %v586
        %v654 = vmax.f32 %v590, %v592
        %v655 = vmax.f32 %v596, %v598
        %v656 = vmax.f32 %v602, %v604
        %v657 = vmax.f32 %v608, %v610
        %v658 = vmax.f32 %v614, %v616
        %v659 = vmax.f32 %v620, %v622
        %v660 = vmax.f32 %v626, %v628
        %v661 = vmax.f32 %v632, %v634
        %v662 = vmax.f32 %v638, %v640
        %v663 = vmax.f32 %v644, %v646
        %v664 = vmax.f32 %v648, 0.0
        %v665 = vmax.f32 %v649, 0.0
        %v666 = vmax.f32 %v650, 0.0
        %v667 = vmax.f32 %v651, 0.0
        %v668 = vmax.f32 %v652, 0.0
        %v669 = vmax.f32 %v653, 0.0
        %v670 = vmax.f32 %v654, 0.0
        %v671 = vmax.f32 %v655, 0.0
        %v672 = vmax.f32 %v656, 0.0
        %v673 = vmax.f32 %v657, 0.0
        %v674 = vmax.f32 %v658, 0.0
        %v675 = vmax.f32 %v659, 0.0
        %v676 = vmax.f32 %v660, 0.0
        %v677 = vmax.f32 %v661, 0.0
        %v678 = vmax.f32 %v662, 0.0
        %v679 = vmax.f32 %v663, 0.0
        %v680 = vld [vmem:[#allocation4] sm:$0xff]
        %v681 = vld [vmem:[#allocation4 + $0x8] sm:$0xff]
        %v682 = vld [vmem:[#allocation4 + $0x10] sm:$0xff]
        %v683 = vld [vmem:[#allocation4 + $0x18] sm:$0xff]
        %v684 = vld [vmem:[#allocation4 + $0x20] sm:$0xff]
        %v685 = vld [vmem:[#allocation4 + $0x28] sm:$0xff]
        %v686 = vld [vmem:[#allocation4 + $0x30] sm:$0xff]
        %v687 = vld [vmem:[#allocation4 + $0x38] sm:$0xff]
        %v688 = vld [vmem:[#allocation4 + $0x40] sm:$0xff]
        %v689 = vld [vmem:[#allocation4 + $0x48] sm:$0xff]
        %v690 = vld [vmem:[#allocation4 + $0x50] sm:$0xff]
        %v691 = vld [vmem:[#allocation4 + $0x58] sm:$0xff]
        %v692 = vld [vmem:[#allocation4 + $0x60] sm:$0xff]
        %v693 = vld [vmem:[#allocation4 + $0x68] sm:$0xff]
        %v694 = vld [vmem:[#allocation4 + $0x70] sm:$0xff]
        %v695 = vld [vmem:[#allocation4 + $0x78] sm:$0xff]
        %v696 = vld [vmem:[#allocation4 + $0x80] sm:$0xff]
        %v697 = vld [vmem:[#allocation4 + $0x88] sm:$0xff]
        %v698 = vld [vmem:[#allocation4 + $0x90] sm:$0xff]
        %v699 = vld [vmem:[#allocation4 + $0x98] sm:$0xff]
        %v700 = vld [vmem:[#allocation4 + $0xa0] sm:$0xff]
        %v701 = vld [vmem:[#allocation4 + $0xa8] sm:$0xff]
        %v702 = vld [vmem:[#allocation4 + $0xb0] sm:$0xff]
        %v703 = vld [vmem:[#allocation4 + $0xb8] sm:$0xff]
        %v704 = vld [vmem:[#allocation4 + $0xc0] sm:$0xff]
        %v705 = vld [vmem:[#allocation4 + $0xc8] sm:$0xff]
        %v706 = vld [vmem:[#allocation4 + $0xd0] sm:$0xff]
        %v707 = vld [vmem:[#allocation4 + $0xd8] sm:$0xff]
        %v708 = vld [vmem:[#allocation4 + $0xe0] sm:$0xff]
        %v709 = vld [vmem:[#allocation4 + $0xe8] sm:$0xff]
        %v710 = vld [vmem:[#allocation4 + $0xf0] sm:$0xff]
        %v711 = vld [vmem:[#allocation4 + $0xf8] sm:$0xff]
        %v712 = vld [vmem:[#allocation4 + $0x100] sm:$0xff]
        %v713 = vld [vmem:[#allocation4 + $0x108] sm:$0xff]
        %v714 = vld [vmem:[#allocation4 + $0x110] sm:$0xff]
        %v715 = vld [vmem:[#allocation4 + $0x118] sm:$0xff]
        %v716 = vld [vmem:[#allocation4 + $0x120] sm:$0xff]
        %v717 = vld [vmem:[#allocation4 + $0x128] sm:$0xff]
        %v718 = vld [vmem:[#allocation4 + $0x130] sm:$0xff]
        %v719 = vld [vmem:[#allocation4 + $0x138] sm:$0xff]
        %v720 = vld [vmem:[#allocation4 + $0x140] sm:$0xff]
        %v721 = vld [vmem:[#allocation4 + $0x148] sm:$0xff]
        %v722 = vld [vmem:[#allocation4 + $0x150] sm:$0xff]
        %v723 = vld [vmem:[#allocation4 + $0x158] sm:$0xff]
        %v724 = vld [vmem:[#allocation4 + $0x160] sm:$0xff]
        %v725 = vld [vmem:[#allocation4 + $0x168] sm:$0xff]
        %v726 = vld [vmem:[#allocation4 + $0x170] sm:$0xff]
        %v727 = vld [vmem:[#allocation4 + $0x178] sm:$0xff]
        %v728 = vld [vmem:[%s4] sm:$0x7]
        %v730 = vlaneseq
        %v731 = vshrl.u32 %v730, 7
        %v732 = vsub.s32 0, %v731
        %v733 = vrot.slane %v728, %v732
        %v734 = vlaneseq
        %v735 = vshrl.u32 %v734, 7
        %v736 = vsub.s32 1, %v735
        %v737 = vrot.slane %v728, %v736
        %v738 = vlaneseq
        %v739 = vshrl.u32 %v738, 7
        %v740 = vsub.s32 2, %v739
        %v741 = vrot.slane %v728, %v740
        %745 = vmatprep.subr.mxu0 %v681
        %746 = vmatpush1.msra.mxu0 %v680
        %747 = vmatprep.subr.mxu0 %v684
        %748 = vmatpush1.msra.mxu0 %v683
        %749 = vmatprep.subr.mxu0 %v687
        %750 = vmatpush1.msra.mxu0 %v686
        %751 = vmatprep.subr.mxu0 %v690
        %752 = vmatpush1.msra.mxu0 %v689
        %753 = vmatprep.subr.mxu0 %v693
        %754 = vmatpush1.msra.mxu0 %v692
        %755 = vmatprep.subr.mxu0 %v696
        %756 = vmatpush1.msra.mxu0 %v695
        %757 = vmatprep.subr.mxu0 %v699
        %758 = vmatpush1.msra.mxu0 %v698
        %759 = vmatprep.subr.mxu0 %v702
        %760 = vmatpush1.msra.mxu0 %v701
        %761 = vmatprep.subr.mxu0 %v705
        %762 = vmatpush1.msra.mxu0 %v704
        %763 = vmatprep.subr.mxu0 %v708
        %764 = vmatpush1.msra.mxu0 %v707
        %765 = vmatprep.subr.mxu0 %v711
        %766 = vmatpush1.msra.mxu0 %v710
        %767 = vmatprep.subr.mxu0 %v714
        %768 = vmatpush1.msra.mxu0 %v713
        %769 = vmatprep.subr.mxu0 %v717
        %770 = vmatpush1.msra.mxu0 %v716
        %771 = vmatprep.subr.mxu0 %v720
        %772 = vmatpush1.msra.mxu0 %v719
        %773 = vmatprep.subr.mxu0 %v723
        %774 = vmatpush1.msra.mxu0 %v722
        %775 = vmatprep.subr.mxu0 %v726
        %776 = vmatpush1.msra.mxu0 %v725
        %777 = vmatprep.subr.mxu0 0.0
        %778 = vmatpush1.msra.mxu0 0.0
        %779 = vmatprep.subr.mxu0 0.0
        %780 = vmatpush1.msra.mxu0 0.0
        %781 = vmatprep.subr.mxu0 0.0
        %782 = vmatpush1.msra.mxu0 0.0
        %783 = vmatprep.subr.mxu0 0.0
        %784 = vmatpush1.msra.mxu0 0.0
        %785 = vmatprep.subr.mxu0 0.0
        %786 = vmatpush1.msra.mxu0 0.0
        %787 = vmatprep.subr.mxu0 0.0
        %788 = vmatpush1.msra.mxu0 0.0
        %789 = vmatprep.subr.mxu0 0.0
        %790 = vmatpush1.msra.mxu0 0.0
        %791 = vmatprep.subr.mxu0 0.0
        %792 = vmatpush1.msra.mxu0 0.0
        %793 = vmatprep.subr.mxu0 0.0
        %794 = vmatpush1.msra.mxu0 0.0
        %795 = vmatprep.subr.mxu0 0.0
        %796 = vmatpush1.msra.mxu0 0.0
        %797 = vmatprep.subr.mxu0 0.0
        %798 = vmatpush1.msra.mxu0 0.0
        %799 = vmatprep.subr.mxu0 0.0
        %800 = vmatpush1.msra.mxu0 0.0
        %801 = vmatprep.subr.mxu0 0.0
        %802 = vmatpush1.msra.mxu0 0.0
        %803 = vmatprep.subr.mxu0 0.0
        %804 = vmatpush1.msra.mxu0 0.0
        %805 = vmatprep.subr.mxu0 0.0
        %806 = vmatpush1.msra.mxu0 0.0
        %807 = vmatprep.subr.mxu0 0.0
        %808 = vmatpush1.msra.mxu0 0.0
        %809 = vmatprep.mubr.f32.mxu0 0.0
        %810 = vmatmul.mubr.f32.gmra.mrb[0].mxu0 %v664
        %v811 = vpop.f32.mrb[0].mxu0
        %v812 = vadd.f32 %v733, %v811
        %v813 = vpop.f32.mrb[0].mxu0
        %v814 = vadd.f32 %v737, %v813
        %815 = vmatprep.mubr.f32.mxu0 0.0
        %816 = vmatmul.mubr.f32.gmra.mrb[0].mxu0 %v665
        %v817 = vpop.f32.mrb[0].mxu0
        %v818 = vadd.f32 %v733, %v817
        %v819 = vpop.f32.mrb[0].mxu0
        %v820 = vadd.f32 %v737, %v819
        %821 = vmatprep.mubr.f32.mxu0 0.0
        %822 = vmatmul.mubr.f32.gmra.mrb[0].mxu0 %v666
        %v823 = vpop.f32.mrb[0].mxu0
        %v824 = vadd.f32 %v733, %v823
        %v825 = vpop.f32.mrb[0].mxu0
        %v826 = vadd.f32 %v737, %v825
        %827 = vmatprep.mubr.f32.mxu0 0.0
        %828 = vmatmul.mubr.f32.gmra.mrb[0].mxu0 %v667
        %v829 = vpop.f32.mrb[0].mxu0
        %v830 = vadd.f32 %v733, %v829
        %v831 = vpop.f32.mrb[0].mxu0
        %v832 = vadd.f32 %v737, %v831
        %833 = vmatprep.mubr.f32.mxu0 0.0
        %834 = vmatmul.mubr.f32.gmra.mrb[0].mxu0 %v668
        %v835 = vpop.f32.mrb[0].mxu0
        %v836 = vadd.f32 %v733, %v835
        %v837 = vpop.f32.mrb[0].mxu0
        %v838 = vadd.f32 %v737, %v837
        %839 = vmatprep.mubr.f32.mxu0 0.0
        %840 = vmatmul.mubr.f32.gmra.mrb[0].mxu0 %v669
        %v841 = vpop.f32.mrb[0].mxu0
        %v842 = vadd.f32 %v733, %v841
        %v843 = vpop.f32.mrb[0].mxu0
        %v844 = vadd.f32 %v737, %v843
        %845 = vmatprep.mubr.f32.mxu0 0.0
        %846 = vmatmul.mubr.f32.gmra.mrb[0].mxu0 %v670
        %v847 = vpop.f32.mrb[0].mxu0
        %v848 = vadd.f32 %v733, %v847
        %v849 = vpop.f32.mrb[0].mxu0
        %v850 = vadd.f32 %v737, %v849
        %851 = vmatprep.mubr.f32.mxu0 0.0
        %852 = vmatmul.mubr.f32.gmra.mrb[0].mxu0 %v671
        %v853 = vpop.f32.mrb[0].mxu0
        %v854 = vadd.f32 %v733, %v853
        %v855 = vpop.f32.mrb[0].mxu0
        %v856 = vadd.f32 %v737, %v855
        %857 = vmatprep.mubr.f32.mxu0 0.0
        %858 = vmatmul.mubr.f32.gmra.mrb[0].mxu0 %v672
        %v859 = vpop.f32.mrb[0].mxu0
        %v860 = vadd.f32 %v733, %v859
        %v861 = vpop.f32.mrb[0].mxu0
        %v862 = vadd.f32 %v737, %v861
        %863 = vmatprep.mubr.f32.mxu0 0.0
        %864 = vmatmul.mubr.f32.gmra.mrb[0].mxu0 %v673
        %v865 = vpop.f32.mrb[0].mxu0
        %v866 = vadd.f32 %v733, %v865
        %v867 = vpop.f32.mrb[0].mxu0
        %v868 = vadd.f32 %v737, %v867
        %869 = vmatprep.mubr.f32.mxu0 0.0
        %870 = vmatmul.mubr.f32.gmra.mrb[0].mxu0 %v674
        %v871 = vpop.f32.mrb[0].mxu0
        %v872 = vadd.f32 %v733, %v871
        %v873 = vpop.f32.mrb[0].mxu0
        %v874 = vadd.f32 %v737, %v873
        %875 = vmatprep.mubr.f32.mxu0 0.0
        %876 = vmatmul.mubr.f32.gmra.mrb[0].mxu0 %v675
        %v877 = vpop.f32.mrb[0].mxu0
        %v878 = vadd.f32 %v733, %v877
        %v879 = vpop.f32.mrb[0].mxu0
        %v880 = vadd.f32 %v737, %v879
        %881 = vmatprep.mubr.f32.mxu0 0.0
        %882 = vmatmul.mubr.f32.gmra.mrb[0].mxu0 %v676
        %v883 = vpop.f32.mrb[0].mxu0
        %v884 = vadd.f32 %v733, %v883
        %v885 = vpop.f32.mrb[0].mxu0
        %v886 = vadd.f32 %v737, %v885
        %887 = vmatprep.mubr.f32.mxu0 0.0
        %888 = vmatmul.mubr.f32.gmra.mrb[0].mxu0 %v677
        %v889 = vpop.f32.mrb[0].mxu0
        %v890 = vadd.f32 %v733, %v889
        %v891 = vpop.f32.mrb[0].mxu0
        %v892 = vadd.f32 %v737, %v891
        %893 = vmatprep.mubr.f32.mxu0 0.0
        %894 = vmatmul.mubr.f32.gmra.mrb[0].mxu0 %v678
        %v895 = vpop.f32.mrb[0].mxu0
        %v896 = vadd.f32 %v733, %v895
        %v897 = vpop.f32.mrb[0].mxu0
        %v898 = vadd.f32 %v737, %v897
        %899 = vmatprep.mubr.f32.mxu0 0.0
        %900 = vmatmul.mubr.f32.gmra.mrb[0].mxu0 %v679
        %v901 = vpop.f32.mrb[0].mxu0
        %v902 = vadd.f32 %v733, %v901
        %v903 = vpop.f32.mrb[0].mxu0
        %v904 = vadd.f32 %v737, %v903
        %905 = vdwg.mxu0
        %906 = vmatprep.subr.mxu0 0.0
        %907 = vmatpush1.msra.mxu0 %v682
        %908 = vmatprep.subr.mxu0 0.0
        %909 = vmatpush1.msra.mxu0 %v685
        %910 = vmatprep.subr.mxu0 0.0
        %911 = vmatpush1.msra.mxu0 %v688
        %912 = vmatprep.subr.mxu0 0.0
        %913 = vmatpush1.msra.mxu0 %v691
        %914 = vmatprep.subr.mxu0 0.0
        %915 = vmatpush1.msra.mxu0 %v694
        %916 = vmatprep.subr.mxu0 0.0
        %917 = vmatpush1.msra.mxu0 %v697
        %918 = vmatprep.subr.mxu0 0.0
        %919 = vmatpush1.msra.mxu0 %v700
        %920 = vmatprep.subr.mxu0 0.0
        %921 = vmatpush1.msra.mxu0 %v703
        %922 = vmatprep.subr.mxu0 0.0
        %923 = vmatpush1.msra.mxu0 %v706
        %924 = vmatprep.subr.mxu0 0.0
        %925 = vmatpush1.msra.mxu0 %v709
        %926 = vmatprep.subr.mxu0 0.0
        %927 = vmatpush1.msra.mxu0 %v712
        %928 = vmatprep.subr.mxu0 0.0
        %929 = vmatpush1.msra.mxu0 %v715
        %930 = vmatprep.subr.mxu0 0.0
        %931 = vmatpush1.msra.mxu0 %v718
        %932 = vmatprep.subr.mxu0 0.0
        %933 = vmatpush1.msra.mxu0 %v721
        %934 = vmatprep.subr.mxu0 0.0
        %935 = vmatpush1.msra.mxu0 %v724
        %936 = vmatprep.subr.mxu0 0.0
        %937 = vmatpush1.msra.mxu0 %v727
        %938 = vmatprep.subr.mxu0 0.0
        %939 = vmatpush1.msra.mxu0 0.0
        %940 = vmatprep.subr.mxu0 0.0
        %941 = vmatpush1.msra.mxu0 0.0
        %942 = vmatprep.subr.mxu0 0.0
        %943 = vmatpush1.msra.mxu0 0.0
        %944 = vmatprep.subr.mxu0 0.0
        %945 = vmatpush1.msra.mxu0 0.0
        %946 = vmatprep.subr.mxu0 0.0
        %947 = vmatpush1.msra.mxu0 0.0
        %948 = vmatprep.subr.mxu0 0.0
        %949 = vmatpush1.msra.mxu0 0.0
        %950 = vmatprep.subr.mxu0 0.0
        %951 = vmatpush1.msra.mxu0 0.0
        %952 = vmatprep.subr.mxu0 0.0
        %953 = vmatpush1.msra.mxu0 0.0
        %954 = vmatprep.subr.mxu0 0.0
        %955 = vmatpush1.msra.mxu0 0.0
        %956 = vmatprep.subr.mxu0 0.0
        %957 = vmatpush1.msra.mxu0 0.0
        %958 = vmatprep.subr.mxu0 0.0
        %959 = vmatpush1.msra.mxu0 0.0
        %960 = vmatprep.subr.mxu0 0.0
        %961 = vmatpush1.msra.mxu0 0.0
        %962 = vmatprep.subr.mxu0 0.0
        %963 = vmatpush1.msra.mxu0 0.0
        %964 = vmatprep.subr.mxu0 0.0
        %965 = vmatpush1.msra.mxu0 0.0
        %966 = vmatprep.subr.mxu0 0.0
        %967 = vmatpush1.msra.mxu0 0.0
        %968 = vmatprep.subr.mxu0 0.0
        %969 = vmatpush1.msra.mxu0 0.0
        %970 = vmatprep.mubr.f32.mxu0 0.0
        %971 = vmatmul.mubr.f32.gmra.mrb[0].mxu0 %v664
        %v972 = vpop.f32.mrb[0].mxu0
        %v973 = vadd.f32 %v741, %v972
        %v974 = vpop.f32.mrb[0].mxu0
        %975 = vmatprep.mubr.f32.mxu0 0.0
        %976 = vmatmul.mubr.f32.gmra.mrb[0].mxu0 %v665
        %v977 = vpop.f32.mrb[0].mxu0
        %v978 = vadd.f32 %v741, %v977
        %v979 = vpop.f32.mrb[0].mxu0
        %980 = vmatprep.mubr.f32.mxu0 0.0
        %981 = vmatmul.mubr.f32.gmra.mrb[0].mxu0 %v666
        %v982 = vpop.f32.mrb[0].mxu0
        %v983 = vadd.f32 %v741, %v982
        %v984 = vpop.f32.mrb[0].mxu0
        %985 = vmatprep.mubr.f32.mxu0 0.0
        %986 = vmatmul.mubr.f32.gmra.mrb[0].mxu0 %v667
        %v987 = vpop.f32.mrb[0].mxu0
        %v988 = vadd.f32 %v741, %v987
        %v989 = vpop.f32.mrb[0].mxu0
        %990 = vmatprep.mubr.f32.mxu0 0.0
        %991 = vmatmul.mubr.f32.gmra.mrb[0].mxu0 %v668
        %v992 = vpop.f32.mrb[0].mxu0
        %v993 = vadd.f32 %v741, %v992
        %v994 = vpop.f32.mrb[0].mxu0
        %995 = vmatprep.mubr.f32.mxu0 0.0
        %996 = vmatmul.mubr.f32.gmra.mrb[0].mxu0 %v669
        %v997 = vpop.f32.mrb[0].mxu0
        %v998 = vadd.f32 %v741, %v997
        %v999 = vpop.f32.mrb[0].mxu0
        %1000 = vmatprep.mubr.f32.mxu0 0.0
        %1001 = vmatmul.mubr.f32.gmra.mrb[0].mxu0 %v670
        %v1002 = vpop.f32.mrb[0].mxu0
        %v1003 = vadd.f32 %v741, %v1002
        %v1004 = vpop.f32.mrb[0].mxu0
        %1005 = vmatprep.mubr.f32.mxu0 0.0
        %1006 = vmatmul.mubr.f32.gmra.mrb[0].mxu0 %v671
        %v1007 = vpop.f32.mrb[0].mxu0
        %v1008 = vadd.f32 %v741, %v1007
        %v1009 = vpop.f32.mrb[0].mxu0
        %1010 = vmatprep.mubr.f32.mxu0 0.0
        %1011 = vmatmul.mubr.f32.gmra.mrb[0].mxu0 %v672
        %v1012 = vpop.f32.mrb[0].mxu0
        %v1013 = vadd.f32 %v741, %v1012
        %v1014 = vpop.f32.mrb[0].mxu0
        %1015 = vmatprep.mubr.f32.mxu0 0.0
        %1016 = vmatmul.mubr.f32.gmra.mrb[0].mxu0 %v673
        %v1017 = vpop.f32.mrb[0].mxu0
        %v1018 = vadd.f32 %v741, %v1017
        %v1019 = vpop.f32.mrb[0].mxu0
        %1020 = vmatprep.mubr.f32.mxu0 0.0
        %1021 = vmatmul.mubr.f32.gmra.mrb[0].mxu0 %v674
        %v1022 = vpop.f32.mrb[0].mxu0
        %v1023 = vadd.f32 %v741, %v1022
        %v1024 = vpop.f32.mrb[0].mxu0
        %1025 = vmatprep.mubr.f32.mxu0 0.0
        %1026 = vmatmul.mubr.f32.gmra.mrb[0].mxu0 %v675
        %v1027 = vpop.f32.mrb[0].mxu0
        %v1028 = vadd.f32 %v741, %v1027
        %v1029 = vpop.f32.mrb[0].mxu0
        %1030 = vmatprep.mubr.f32.mxu0 0.0
        %1031 = vmatmul.mubr.f32.gmra.mrb[0].mxu0 %v676
        %v1032 = vpop.f32.mrb[0].mxu0
        %v1033 = vadd.f32 %v741, %v1032
        %v1034 = vpop.f32.mrb[0].mxu0
        %1035 = vmatprep.mubr.f32.mxu0 0.0
        %1036 = vmatmul.mubr.f32.gmra.mrb[0].mxu0 %v677
        %v1037 = vpop.f32.mrb[0].mxu0
        %v1038 = vadd.f32 %v741, %v1037
        %v1039 = vpop.f32.mrb[0].mxu0
        %1040 = vmatprep.mubr.f32.mxu0 0.0
        %1041 = vmatmul.mubr.f32.gmra.mrb[0].mxu0 %v678
        %v1042 = vpop.f32.mrb[0].mxu0
        %v1043 = vadd.f32 %v741, %v1042
        %v1044 = vpop.f32.mrb[0].mxu0
        %1045 = vmatprep.mubr.f32.mxu0 0.0
        %1046 = vmatmul.mubr.f32.gmra.mrb[0].mxu0 %v679
        %v1047 = vpop.f32.mrb[0].mxu0
        %v1048 = vadd.f32 %v741, %v1047
        %v1049 = vpop.f32.mrb[0].mxu0
        %1050 = vdwg.mxu0
        %1051 = vst [vmem:[#allocation2] sm:$0xff] %v812
        %1052 = vst [vmem:[#allocation2 + $0x8] sm:$0xff] %v814
        %1053 = vst [vmem:[#allocation2 + $0x10] sm:$0xff] %v973
        %1054 = vst [vmem:[#allocation2 + $0x18] sm:$0xff] %v818
        %1055 = vst [vmem:[#allocation2 + $0x20] sm:$0xff] %v820
        %1056 = vst [vmem:[#allocation2 + $0x28] sm:$0xff] %v978
        %1057 = vst [vmem:[#allocation2 + $0x30] sm:$0xff] %v824
        %1058 = vst [vmem:[#allocation2 + $0x38] sm:$0xff] %v826
        %1059 = vst [vmem:[#allocation2 + $0x40] sm:$0xff] %v983
        %1060 = vst [vmem:[#allocation2 + $0x48] sm:$0xff] %v830
        %1061 = vst [vmem:[#allocation2 + $0x50] sm:$0xff] %v832
        %1062 = vst [vmem:[#allocation2 + $0x58] sm:$0xff] %v988
        %1063 = vst [vmem:[#allocation2 + $0x60] sm:$0xff] %v836
        %1064 = vst [vmem:[#allocation2 + $0x68] sm:$0xff] %v838
        %1065 = vst [vmem:[#allocation2 + $0x70] sm:$0xff] %v993
        %1066 = vst [vmem:[#allocation2 + $0x78] sm:$0xff] %v842
        %1067 = vst [vmem:[#allocation2 + $0x80] sm:$0xff] %v844
        %1068 = vst [vmem:[#allocation2 + $0x88] sm:$0xff] %v998
        %1069 = vst [vmem:[#allocation2 + $0x90] sm:$0xff] %v848
        %1070 = vst [vmem:[#allocation2 + $0x98] sm:$0xff] %v850
        %1071 = vst [vmem:[#allocation2 + $0xa0] sm:$0xff] %v1003
        %1072 = vst [vmem:[#allocation2 + $0xa8] sm:$0xff] %v854
        %1073 = vst [vmem:[#allocation2 + $0xb0] sm:$0xff] %v856
        %1074 = vst [vmem:[#allocation2 + $0xb8] sm:$0xff] %v1008
        %1075 = vst [vmem:[#allocation2 + $0xc0] sm:$0xff] %v860
        %1076 = vst [vmem:[#allocation2 + $0xc8] sm:$0xff] %v862
        %1077 = vst [vmem:[#allocation2 + $0xd0] sm:$0xff] %v1013
        %1078 = vst [vmem:[#allocation2 + $0xd8] sm:$0xff] %v866
        %1079 = vst [vmem:[#allocation2 + $0xe0] sm:$0xff] %v868
        %1080 = vst [vmem:[#allocation2 + $0xe8] sm:$0xff] %v1018
        %1081 = vst [vmem:[#allocation2 + $0xf0] sm:$0xff] %v872
        %1082 = vst [vmem:[#allocation2 + $0xf8] sm:$0xff] %v874
        %1083 = vst [vmem:[#allocation2 + $0x100] sm:$0xff] %v1023
        %1084 = vst [vmem:[#allocation2 + $0x108] sm:$0xff] %v878
        %1085 = vst [vmem:[#allocation2 + $0x110] sm:$0xff] %v880
        %1086 = vst [vmem:[#allocation2 + $0x118] sm:$0xff] %v1028
        %1087 = vst [vmem:[#allocation2 + $0x120] sm:$0xff] %v884
        %1088 = vst [vmem:[#allocation2 + $0x128] sm:$0xff] %v886
        %1089 = vst [vmem:[#allocation2 + $0x130] sm:$0xff] %v1033
        %1090 = vst [vmem:[#allocation2 + $0x138] sm:$0xff] %v890
        %1091 = vst [vmem:[#allocation2 + $0x140] sm:$0xff] %v892
        %1092 = vst [vmem:[#allocation2 + $0x148] sm:$0xff] %v1038
        %1093 = vst [vmem:[#allocation2 + $0x150] sm:$0xff] %v896
        %1094 = vst [vmem:[#allocation2 + $0x158] sm:$0xff] %v898
        %1095 = vst [vmem:[#allocation2 + $0x160] sm:$0xff] %v1043
        %1096 = vst [vmem:[#allocation2 + $0x168] sm:$0xff] %v902
        %1097 = vst [vmem:[#allocation2 + $0x170] sm:$0xff] %v904
        %1098 = vst [vmem:[#allocation2 + $0x178] sm:$0xff] %v1048
        %v1099 = vld [vmem:[%s5] sm:$0xff]
        %v1100 = vld [vmem:[%s5 + $0x8] sm:$0xff]
        %v1101 = vld [vmem:[%s6] sm:$0x1]
        %v1102 = vld [vmem:[#allocation2] sm:$0xff]
        %v1103 = vld [vmem:[#allocation2 + $0x18] sm:$0xff]
        %v1104 = vld [vmem:[#allocation2 + $0x30] sm:$0xff]
        %v1105 = vld [vmem:[#allocation2 + $0x48] sm:$0xff]
        %v1106 = vld [vmem:[#allocation2 + $0x60] sm:$0xff]
        %v1107 = vld [vmem:[#allocation2 + $0x78] sm:$0xff]
        %v1108 = vld [vmem:[#allocation2 + $0x90] sm:$0xff]
        %v1109 = vld [vmem:[#allocation2 + $0xa8] sm:$0xff]
        %v1110 = vld [vmem:[#allocation2 + $0xc0] sm:$0xff]
        %v1111 = vld [vmem:[#allocation2 + $0xd8] sm:$0xff]
        %v1112 = vld [vmem:[#allocation2 + $0xf0] sm:$0xff]
        %v1113 = vld [vmem:[#allocation2 + $0x108] sm:$0xff]
        %v1114 = vld [vmem:[#allocation2 + $0x120] sm:$0xff]
        %v1115 = vld [vmem:[#allocation2 + $0x138] sm:$0xff]
        %v1116 = vld [vmem:[#allocation2 + $0x150] sm:$0xff]
        %v1117 = vld [vmem:[#allocation2 + $0x168] sm:$0xff]
        %v1119 = vlaneseq
        %v1120 = vshrl.u32 %v1119, 7
        %v1121 = vsub.s32 0, %v1120
        %v1122 = vrot.slane %v1101, %v1121
        %v1125 = vsel %vm438, 0.0, 0
        %1127 = vmatprep.subr.mxu0 0.0
        %1128 = vmatpush1.msra.mxu0 %v1099
        %1129 = vmatprep.subr.mxu0 0.0
        %1130 = vmatpush1.msra.mxu0 %v1100
        %1131 = vmatprep.subr.mxu0 0.0
        %1132 = vmatpush1.msra.mxu0 0.0
        %1133 = vmatprep.subr.mxu0 0.0
        %1134 = vmatpush1.msra.mxu0 0.0
        %1135 = vmatprep.subr.mxu0 0.0
        %1136 = vmatpush1.msra.mxu0 0.0
        %1137 = vmatprep.subr.mxu0 0.0
        %1138 = vmatpush1.msra.mxu0 0.0
        %1139 = vmatprep.subr.mxu0 0.0
        %1140 = vmatpush1.msra.mxu0 0.0
        %1141 = vmatprep.subr.mxu0 0.0
        %1142 = vmatpush1.msra.mxu0 0.0
        %1143 = vmatprep.subr.mxu0 0.0
        %1144 = vmatpush1.msra.mxu0 0.0
        %1145 = vmatprep.subr.mxu0 0.0
        %1146 = vmatpush1.msra.mxu0 0.0
        %1147 = vmatprep.subr.mxu0 0.0
        %1148 = vmatpush1.msra.mxu0 0.0
        %1149 = vmatprep.subr.mxu0 0.0
        %1150 = vmatpush1.msra.mxu0 0.0
        %1151 = vmatprep.subr.mxu0 0.0
        %1152 = vmatpush1.msra.mxu0 0.0
        %1153 = vmatprep.subr.mxu0 0.0
        %1154 = vmatpush1.msra.mxu0 0.0
        %1155 = vmatprep.subr.mxu0 0.0
        %1156 = vmatpush1.msra.mxu0 0.0
        %1157 = vmatprep.subr.mxu0 0.0
        %1158 = vmatpush1.msra.mxu0 0.0
        %1159 = vmatprep.subr.mxu0 0.0
        %1160 = vmatpush1.msra.mxu0 0.0
        %1161 = vmatprep.subr.mxu0 0.0
        %1162 = vmatpush1.msra.mxu0 0.0
        %1163 = vmatprep.subr.mxu0 0.0
        %1164 = vmatpush1.msra.mxu0 0.0
        %1165 = vmatprep.subr.mxu0 0.0
        %1166 = vmatpush1.msra.mxu0 0.0
        %1167 = vmatprep.subr.mxu0 0.0
        %1168 = vmatpush1.msra.mxu0 0.0
        %1169 = vmatprep.subr.mxu0 0.0
        %1170 = vmatpush1.msra.mxu0 0.0
        %1171 = vmatprep.subr.mxu0 0.0
        %1172 = vmatpush1.msra.mxu0 0.0
        %1173 = vmatprep.subr.mxu0 0.0
        %1174 = vmatpush1.msra.mxu0 0.0
        %1175 = vmatprep.subr.mxu0 0.0
        %1176 = vmatpush1.msra.mxu0 0.0
        %1177 = vmatprep.subr.mxu0 0.0
        %1178 = vmatpush1.msra.mxu0 0.0
        %1179 = vmatprep.subr.mxu0 0.0
        %1180 = vmatpush1.msra.mxu0 0.0
        %1181 = vmatprep.subr.mxu0 0.0
        %1182 = vmatpush1.msra.mxu0 0.0
        %1183 = vmatprep.subr.mxu0 0.0
        %1184 = vmatpush1.msra.mxu0 0.0
        %1185 = vmatprep.subr.mxu0 0.0
        %1186 = vmatpush1.msra.mxu0 0.0
        %1187 = vmatprep.subr.mxu0 0.0
        %1188 = vmatpush1.msra.mxu0 0.0
        %1189 = vmatprep.subr.mxu0 0.0
        %1190 = vmatpush1.msra.mxu0 0.0
        %1191 = vmatprep.mubr.f32.mxu0 0.0
        %1192 = vmatmul.mubr.f32.gmra.mrb[0].mxu0 %v1125
        %v1193 = vpop.f32.mrb[0].mxu0
        %v1194 = vadd.f32 %v1122, %v1193
        %v1195 = vpop.f32.mrb[0].mxu0
        %1196 = vmatprep.mubr.f32.mxu0 0.0
        %1197 = vmatmul.mubr.f32.gmra.mrb[0].mxu0 %v1125
        %v1198 = vpop.f32.mrb[0].mxu0
        %v1199 = vadd.f32 %v1122, %v1198
        %v1200 = vpop.f32.mrb[0].mxu0
        %1201 = vmatprep.mubr.f32.mxu0 0.0
        %1202 = vmatmul.mubr.f32.gmra.mrb[0].mxu0 %v1125
        %v1203 = vpop.f32.mrb[0].mxu0
        %v1204 = vadd.f32 %v1122, %v1203
        %v1205 = vpop.f32.mrb[0].mxu0
        %1206 = vmatprep.mubr.f32.mxu0 0.0
        %1207 = vmatmul.mubr.f32.gmra.mrb[0].mxu0 %v1125
        %v1208 = vpop.f32.mrb[0].mxu0
        %v1209 = vadd.f32 %v1122, %v1208
        %v1210 = vpop.f32.mrb[0].mxu0
        %1211 = vmatprep.mubr.f32.mxu0 0.0
        %1212 = vmatmul.mubr.f32.gmra.mrb[0].mxu0 %v1125
        %v1213 = vpop.f32.mrb[0].mxu0
        %v1214 = vadd.f32 %v1122, %v1213
        %v1215 = vpop.f32.mrb[0].mxu0
        %1216 = vmatprep.mubr.f32.mxu0 0.0
        %1217 = vmatmul.mubr.f32.gmra.mrb[0].mxu0 %v1125
        %v1218 = vpop.f32.mrb[0].mxu0
        %v1219 = vadd.f32 %v1122, %v1218
        %v1220 = vpop.f32.mrb[0].mxu0
        %1221 = vmatprep.mubr.f32.mxu0 0.0
        %1222 = vmatmul.mubr.f32.gmra.mrb[0].mxu0 %v1125
        %v1223 = vpop.f32.mrb[0].mxu0
        %v1224 = vadd.f32 %v1122, %v1223
        %v1225 = vpop.f32.mrb[0].mxu0
        %1226 = vmatprep.mubr.f32.mxu0 0.0
        %1227 = vmatmul.mubr.f32.gmra.mrb[0].mxu0 %v1125
        %v1228 = vpop.f32.mrb[0].mxu0
        %v1229 = vadd.f32 %v1122, %v1228
        %v1230 = vpop.f32.mrb[0].mxu0
        %1231 = vmatprep.mubr.f32.mxu0 0.0
        %1232 = vmatmul.mubr.f32.gmra.mrb[0].mxu0 %v1125
        %v1233 = vpop.f32.mrb[0].mxu0
        %v1234 = vadd.f32 %v1122, %v1233
        %v1235 = vpop.f32.mrb[0].mxu0
        %1236 = vmatprep.mubr.f32.mxu0 0.0
        %1237 = vmatmul.mubr.f32.gmra.mrb[0].mxu0 %v1125
        %v1238 = vpop.f32.mrb[0].mxu0
        %v1239 = vadd.f32 %v1122, %v1238
        %v1240 = vpop.f32.mrb[0].mxu0
        %1241 = vmatprep.mubr.f32.mxu0 0.0
        %1242 = vmatmul.mubr.f32.gmra.mrb[0].mxu0 %v1125
        %v1243 = vpop.f32.mrb[0].mxu0
        %v1244 = vadd.f32 %v1122, %v1243
        %v1245 = vpop.f32.mrb[0].mxu0
        %1246 = vmatprep.mubr.f32.mxu0 0.0
        %1247 = vmatmul.mubr.f32.gmra.mrb[0].mxu0 %v1125
        %v1248 = vpop.f32.mrb[0].mxu0
        %v1249 = vadd.f32 %v1122, %v1248
        %v1250 = vpop.f32.mrb[0].mxu0
        %1251 = vmatprep.mubr.f32.mxu0 0.0
        %1252 = vmatmul.mubr.f32.gmra.mrb[0].mxu0 %v1125
        %v1253 = vpop.f32.mrb[0].mxu0
        %v1254 = vadd.f32 %v1122, %v1253
        %v1255 = vpop.f32.mrb[0].mxu0
        %1256 = vmatprep.mubr.f32.mxu0 0.0
        %1257 = vmatmul.mubr.f32.gmra.mrb[0].mxu0 %v1125
        %v1258 = vpop.f32.mrb[0].mxu0
        %v1259 = vadd.f32 %v1122, %v1258
        %v1260 = vpop.f32.mrb[0].mxu0
        %1261 = vmatprep.mubr.f32.mxu0 0.0
        %1262 = vmatmul.mubr.f32.gmra.mrb[0].mxu0 %v1125
        %v1263 = vpop.f32.mrb[0].mxu0
        %v1264 = vadd.f32 %v1122, %v1263
        %v1265 = vpop.f32.mrb[0].mxu0
        %1266 = vmatprep.mubr.f32.mxu0 0.0
        %1267 = vmatmul.mubr.f32.gmra.mrb[0].mxu0 %v1125
        %v1268 = vpop.f32.mrb[0].mxu0
        %v1269 = vadd.f32 %v1122, %v1268
        %v1270 = vpop.f32.mrb[0].mxu0
        %1271 = vdwg.mxu0
        %v1272 = vadd.f32 %v1102, %v1194
        %v1273 = vadd.f32 %v1103, %v1199
        %v1274 = vadd.f32 %v1104, %v1204
        %v1275 = vadd.f32 %v1105, %v1209
        %v1276 = vadd.f32 %v1106, %v1214
        %v1277 = vadd.f32 %v1107, %v1219
        %v1278 = vadd.f32 %v1108, %v1224
        %v1279 = vadd.f32 %v1109, %v1229
        %v1280 = vadd.f32 %v1110, %v1234
        %v1281 = vadd.f32 %v1111, %v1239
        %v1282 = vadd.f32 %v1112, %v1244
        %v1283 = vadd.f32 %v1113, %v1249
        %v1284 = vadd.f32 %v1114, %v1254
        %v1285 = vadd.f32 %v1115, %v1259
        %v1286 = vadd.f32 %v1116, %v1264
        %v1287 = vadd.f32 %v1117, %v1269
        %v1288 = vxor.u32 %v1272, 2147483648
        %v1289 = vxor.u32 %v1273, 2147483648
        %v1290 = vxor.u32 %v1274, 2147483648
        %v1291 = vxor.u32 %v1275, 2147483648
        %v1292 = vxor.u32 %v1276, 2147483648
        %v1293 = vxor.u32 %v1277, 2147483648
        %v1294 = vxor.u32 %v1278, 2147483648
        %v1295 = vxor.u32 %v1279, 2147483648
        %v1296 = vxor.u32 %v1280, 2147483648
        %v1297 = vxor.u32 %v1281, 2147483648
        %v1298 = vxor.u32 %v1282, 2147483648
        %v1299 = vxor.u32 %v1283, 2147483648
        %v1300 = vxor.u32 %v1284, 2147483648
        %v1301 = vxor.u32 %v1285, 2147483648
        %v1302 = vxor.u32 %v1286, 2147483648
        %v1303 = vxor.u32 %v1287, 2147483648
        %v1304 = vmul.f32 %v1288, 1.442695
        %v1305 = vpow.pop %v1304
        %v1306 = vmul.f32 %v1289, 1.442695
        %v1307 = vpow.pop %v1306
        %v1308 = vmul.f32 %v1290, 1.442695
        %v1309 = vpow.pop %v1308
        %v1310 = vmul.f32 %v1291, 1.442695
        %v1311 = vpow.pop %v1310
        %v1312 = vmul.f32 %v1292, 1.442695
        %v1313 = vpow.pop %v1312
        %v1314 = vmul.f32 %v1293, 1.442695
        %v1315 = vpow.pop %v1314
        %v1316 = vmul.f32 %v1294, 1.442695
        %v1317 = vpow.pop %v1316
        %v1318 = vmul.f32 %v1295, 1.442695
        %v1319 = vpow.pop %v1318
        %v1320 = vmul.f32 %v1296, 1.442695
        %v1321 = vpow.pop %v1320
        %v1322 = vmul.f32 %v1297, 1.442695
        %v1323 = vpow.pop %v1322
        %v1324 = vmul.f32 %v1298, 1.442695
        %v1325 = vpow.pop %v1324
        %v1326 = vmul.f32 %v1299, 1.442695
        %v1327 = vpow.pop %v1326
        %v1328 = vmul.f32 %v1300, 1.442695
        %v1329 = vpow.pop %v1328
        %v1330 = vmul.f32 %v1301, 1.442695
        %v1331 = vpow.pop %v1330
        %v1332 = vmul.f32 %v1302, 1.442695
        %v1333 = vpow.pop %v1332
        %v1334 = vmul.f32 %v1303, 1.442695
        %v1335 = vpow.pop %v1334
        %v1336 = vadd.f32 %v1305, 1.0
        %v1337 = vadd.f32 %v1307, 1.0
        %v1338 = vadd.f32 %v1309, 1.0
        %v1339 = vadd.f32 %v1311, 1.0
        %v1340 = vadd.f32 %v1313, 1.0
        %v1341 = vadd.f32 %v1315, 1.0
        %v1342 = vadd.f32 %v1317, 1.0
        %v1343 = vadd.f32 %v1319, 1.0
        %v1344 = vadd.f32 %v1321, 1.0
        %v1345 = vadd.f32 %v1323, 1.0
        %v1346 = vadd.f32 %v1325, 1.0
        %v1347 = vadd.f32 %v1327, 1.0
        %v1348 = vadd.f32 %v1329, 1.0
        %v1349 = vadd.f32 %v1331, 1.0
        %v1350 = vadd.f32 %v1333, 1.0
        %v1351 = vadd.f32 %v1335, 1.0
        %v1352 = vrcp.pop %v1336
        %v1353 = vmul.f32 1.0, %v1352
        %v1354 = vrcp.pop %v1337
        %v1355 = vmul.f32 1.0, %v1354
        %v1356 = vrcp.pop %v1338
        %v1357 = vmul.f32 1.0, %v1356
        %v1358 = vrcp.pop %v1339
        %v1359 = vmul.f32 1.0, %v1358
        %v1360 = vrcp.pop %v1340
        %v1361 = vmul.f32 1.0, %v1360
        %v1362 = vrcp.pop %v1341
        %v1363 = vmul.f32 1.0, %v1362
        %v1364 = vrcp.pop %v1342
        %v1365 = vmul.f32 1.0, %v1364
        %v1366 = vrcp.pop %v1343
        %v1367 = vmul.f32 1.0, %v1366
        %v1368 = vrcp.pop %v1344
        %v1369 = vmul.f32 1.0, %v1368
        %v1370 = vrcp.pop %v1345
        %v1371 = vmul.f32 1.0, %v1370
        %v1372 = vrcp.pop %v1346
        %v1373 = vmul.f32 1.0, %v1372
        %v1374 = vrcp.pop %v1347
        %v1375 = vmul.f32 1.0, %v1374
        %v1376 = vrcp.pop %v1348
        %v1377 = vmul.f32 1.0, %v1376
        %v1378 = vrcp.pop %v1349
        %v1379 = vmul.f32 1.0, %v1378
        %v1380 = vrcp.pop %v1350
        %v1381 = vmul.f32 1.0, %v1380
        %v1382 = vrcp.pop %v1351
        %v1383 = vmul.f32 1.0, %v1382
        %1400 = vrot.lane.b32.xlu0 %v1194, 96
        %v1401 = vpop.permute.xlu0 %1400
        %1402 = vrot.lane.b32.xlu0 %v1199, 96
        %v1403 = vpop.permute.xlu0 %1402
        %1404 = vrot.lane.b32.xlu0 %v1204, 96
        %v1405 = vpop.permute.xlu0 %1404
        %1406 = vrot.lane.b32.xlu0 %v1209, 96
        %v1407 = vpop.permute.xlu0 %1406
        %1408 = vrot.lane.b32.xlu0 %v1214, 96
        %v1409 = vpop.permute.xlu0 %1408
        %1410 = vrot.lane.b32.xlu0 %v1219, 96
        %v1411 = vpop.permute.xlu0 %1410
        %1412 = vrot.lane.b32.xlu0 %v1224, 96
        %v1413 = vpop.permute.xlu0 %1412
        %1414 = vrot.lane.b32.xlu0 %v1229, 96
        %v1415 = vpop.permute.xlu0 %1414
        %1416 = vrot.lane.b32.xlu0 %v1234, 96
        %v1417 = vpop.permute.xlu0 %1416
        %1418 = vrot.lane.b32.xlu0 %v1239, 96
        %v1419 = vpop.permute.xlu0 %1418
        %1420 = vrot.lane.b32.xlu0 %v1244, 96
        %v1421 = vpop.permute.xlu0 %1420
        %1422 = vrot.lane.b32.xlu0 %v1249, 96
        %v1423 = vpop.permute.xlu0 %1422
        %1424 = vrot.lane.b32.xlu0 %v1254, 96
        %v1425 = vpop.permute.xlu0 %1424
        %1426 = vrot.lane.b32.xlu0 %v1259, 96
        %v1427 = vpop.permute.xlu0 %1426
        %1428 = vrot.lane.b32.xlu0 %v1264, 96
        %v1429 = vpop.permute.xlu0 %1428
        %1430 = vrot.lane.b32.xlu0 %v1269, 96
        %v1431 = vpop.permute.xlu0 %1430
        %v1448 = vmul.f32 %v1353, %v1401
        %v1449 = vmul.f32 %v1355, %v1403
        %v1450 = vmul.f32 %v1357, %v1405
        %v1451 = vmul.f32 %v1359, %v1407
        %v1452 = vmul.f32 %v1361, %v1409
        %v1453 = vmul.f32 %v1363, %v1411
        %v1454 = vmul.f32 %v1365, %v1413
        %v1455 = vmul.f32 %v1367, %v1415
        %v1456 = vmul.f32 %v1369, %v1417
        %v1457 = vmul.f32 %v1371, %v1419
        %v1458 = vmul.f32 %v1373, %v1421
        %v1459 = vmul.f32 %v1375, %v1423
        %v1460 = vmul.f32 %v1377, %v1425
        %v1461 = vmul.f32 %v1379, %v1427
        %v1462 = vmul.f32 %v1381, %v1429
        %v1463 = vmul.f32 %v1383, %v1431
        %1480 = vrot.lane.b32.xlu0 %v1448, 32
        %v1481 = vpop.permute.xlu0 %1480
        %1482 = vrot.lane.b32.xlu0 %v1449, 32
        %v1483 = vpop.permute.xlu0 %1482
        %1484 = vrot.lane.b32.xlu0 %v1450, 32
        %v1485 = vpop.permute.xlu0 %1484
        %1486 = vrot.lane.b32.xlu0 %v1451, 32
        %v1487 = vpop.permute.xlu0 %1486
        %1488 = vrot.lane.b32.xlu0 %v1452, 32
        %v1489 = vpop.permute.xlu0 %1488
        %1490 = vrot.lane.b32.xlu0 %v1453, 32
        %v1491 = vpop.permute.xlu0 %1490
        %1492 = vrot.lane.b32.xlu0 %v1454, 32
        %v1493 = vpop.permute.xlu0 %1492
        %1494 = vrot.lane.b32.xlu0 %v1455, 32
        %v1495 = vpop.permute.xlu0 %1494
        %1496 = vrot.lane.b32.xlu0 %v1456, 32
        %v1497 = vpop.permute.xlu0 %1496
        %1498 = vrot.lane.b32.xlu0 %v1457, 32
        %v1499 = vpop.permute.xlu0 %1498
        %1500 = vrot.lane.b32.xlu0 %v1458, 32
        %v1501 = vpop.permute.xlu0 %1500
        %1502 = vrot.lane.b32.xlu0 %v1459, 32
        %v1503 = vpop.permute.xlu0 %1502
        %1504 = vrot.lane.b32.xlu0 %v1460, 32
        %v1505 = vpop.permute.xlu0 %1504
        %1506 = vrot.lane.b32.xlu0 %v1461, 32
        %v1507 = vpop.permute.xlu0 %1506
        %1508 = vrot.lane.b32.xlu0 %v1462, 32
        %v1509 = vpop.permute.xlu0 %1508
        %1510 = vrot.lane.b32.xlu0 %v1463, 32
        %v1511 = vpop.permute.xlu0 %1510
        %v1528 = vadd.f32 %v1102, %v1481
        %v1529 = vadd.f32 %v1103, %v1483
        %v1530 = vadd.f32 %v1104, %v1485
        %v1531 = vadd.f32 %v1105, %v1487
        %v1532 = vadd.f32 %v1106, %v1489
        %v1533 = vadd.f32 %v1107, %v1491
        %v1534 = vadd.f32 %v1108, %v1493
        %v1535 = vadd.f32 %v1109, %v1495
        %v1536 = vadd.f32 %v1110, %v1497
        %v1537 = vadd.f32 %v1111, %v1499
        %v1538 = vadd.f32 %v1112, %v1501
        %v1539 = vadd.f32 %v1113, %v1503
        %v1540 = vadd.f32 %v1114, %v1505
        %v1541 = vadd.f32 %v1115, %v1507
        %v1542 = vadd.f32 %v1116, %v1509
        %v1543 = vadd.f32 %v1117, %v1511
        %v1544 = vtanh.pop %v1528
        %v1545 = vtanh.pop %v1529
        %v1546 = vtanh.pop %v1530
        %v1547 = vtanh.pop %v1531
        %v1548 = vtanh.pop %v1532
        %v1549 = vtanh.pop %v1533
        %v1550 = vtanh.pop %v1534
        %v1551 = vtanh.pop %v1535
        %v1552 = vtanh.pop %v1536
        %v1553 = vtanh.pop %v1537
        %v1554 = vtanh.pop %v1538
        %v1555 = vtanh.pop %v1539
        %v1556 = vtanh.pop %v1540
        %v1557 = vtanh.pop %v1541
        %v1558 = vtanh.pop %v1542
        %v1559 = vtanh.pop %v1543
        %v1560 = vsub.f32 1.0, %v1353
        %v1561 = vsub.f32 1.0, %v1355
        %v1562 = vsub.f32 1.0, %v1357
        %v1563 = vsub.f32 1.0, %v1359
        %v1564 = vsub.f32 1.0, %v1361
        %v1565 = vsub.f32 1.0, %v1363
        %v1566 = vsub.f32 1.0, %v1365
        %v1567 = vsub.f32 1.0, %v1367
        %v1568 = vsub.f32 1.0, %v1369
        %v1569 = vsub.f32 1.0, %v1371
        %v1570 = vsub.f32 1.0, %v1373
        %v1571 = vsub.f32 1.0, %v1375
        %v1572 = vsub.f32 1.0, %v1377
        %v1573 = vsub.f32 1.0, %v1379
        %v1574 = vsub.f32 1.0, %v1381
        %v1575 = vsub.f32 1.0, %v1383
        %1592 = vrot.lane.b32.xlu0 %v1544, 112
        %v1593 = vpop.permute.xlu0 %1592
        %1594 = vrot.lane.b32.xlu0 %v1545, 112
        %v1595 = vpop.permute.xlu0 %1594
        %1596 = vrot.lane.b32.xlu0 %v1546, 112
        %v1597 = vpop.permute.xlu0 %1596
        %1598 = vrot.lane.b32.xlu0 %v1547, 112
        %v1599 = vpop.permute.xlu0 %1598
        %1600 = vrot.lane.b32.xlu0 %v1548, 112
        %v1601 = vpop.permute.xlu0 %1600
        %1602 = vrot.lane.b32.xlu0 %v1549, 112
        %v1603 = vpop.permute.xlu0 %1602
        %1604 = vrot.lane.b32.xlu0 %v1550, 112
        %v1605 = vpop.permute.xlu0 %1604
        %1606 = vrot.lane.b32.xlu0 %v1551, 112
        %v1607 = vpop.permute.xlu0 %1606
        %1608 = vrot.lane.b32.xlu0 %v1552, 112
        %v1609 = vpop.permute.xlu0 %1608
        %1610 = vrot.lane.b32.xlu0 %v1553, 112
        %v1611 = vpop.permute.xlu0 %1610
        %1612 = vrot.lane.b32.xlu0 %v1554, 112
        %v1613 = vpop.permute.xlu0 %1612
        %1614 = vrot.lane.b32.xlu0 %v1555, 112
        %v1615 = vpop.permute.xlu0 %1614
        %1616 = vrot.lane.b32.xlu0 %v1556, 112
        %v1617 = vpop.permute.xlu0 %1616
        %1618 = vrot.lane.b32.xlu0 %v1557, 112
        %v1619 = vpop.permute.xlu0 %1618
        %1620 = vrot.lane.b32.xlu0 %v1558, 112
        %v1621 = vpop.permute.xlu0 %1620
        %1622 = vrot.lane.b32.xlu0 %v1559, 112
        %v1623 = vpop.permute.xlu0 %1622
        %v1640 = vmul.f32 %v1560, %v1593
        %v1641 = vmul.f32 %v1561, %v1595
        %v1642 = vmul.f32 %v1562, %v1597
        %v1643 = vmul.f32 %v1563, %v1599
        %v1644 = vmul.f32 %v1564, %v1601
        %v1645 = vmul.f32 %v1565, %v1603
        %v1646 = vmul.f32 %v1566, %v1605
        %v1647 = vmul.f32 %v1567, %v1607
        %v1648 = vmul.f32 %v1568, %v1609
        %v1649 = vmul.f32 %v1569, %v1611
        %v1650 = vmul.f32 %v1570, %v1613
        %v1651 = vmul.f32 %v1571, %v1615
        %v1652 = vmul.f32 %v1572, %v1617
        %v1653 = vmul.f32 %v1573, %v1619
        %v1654 = vmul.f32 %v1574, %v1621
        %v1655 = vmul.f32 %v1575, %v1623
        %v1656 = vmul.f32 %v1353, 0.0
        %v1657 = vmul.f32 %v1355, 0.0
        %v1658 = vmul.f32 %v1357, 0.0
        %v1659 = vmul.f32 %v1359, 0.0
        %v1660 = vmul.f32 %v1361, 0.0
        %v1661 = vmul.f32 %v1363, 0.0
        %v1662 = vmul.f32 %v1365, 0.0
        %v1663 = vmul.f32 %v1367, 0.0
        %v1664 = vmul.f32 %v1369, 0.0
        %v1665 = vmul.f32 %v1371, 0.0
        %v1666 = vmul.f32 %v1373, 0.0
        %v1667 = vmul.f32 %v1375, 0.0
        %v1668 = vmul.f32 %v1377, 0.0
        %v1669 = vmul.f32 %v1379, 0.0
        %v1670 = vmul.f32 %v1381, 0.0
        %v1671 = vmul.f32 %v1383, 0.0
        %v1672 = vadd.f32 %v1640, %v1656
        %v1673 = vadd.f32 %v1641, %v1657
        %v1674 = vadd.f32 %v1642, %v1658
        %v1675 = vadd.f32 %v1643, %v1659
        %v1676 = vadd.f32 %v1644, %v1660
        %v1677 = vadd.f32 %v1645, %v1661
        %v1678 = vadd.f32 %v1646, %v1662
        %v1679 = vadd.f32 %v1647, %v1663
        %v1680 = vadd.f32 %v1648, %v1664
        %v1681 = vadd.f32 %v1649, %v1665
        %v1682 = vadd.f32 %v1650, %v1666
        %v1683 = vadd.f32 %v1651, %v1667
        %v1684 = vadd.f32 %v1652, %v1668
        %v1685 = vadd.f32 %v1653, %v1669
        %v1686 = vadd.f32 %v1654, %v1670
        %v1687 = vadd.f32 %v1655, %v1671
        %v1688 = vadd.f32 %v1672, 0.0
        %v1689 = vadd.f32 %v1673, 0.0
        %v1690 = vadd.f32 %v1674, 0.0
        %v1691 = vadd.f32 %v1675, 0.0
        %v1692 = vadd.f32 %v1676, 0.0
        %v1693 = vadd.f32 %v1677, 0.0
        %v1694 = vadd.f32 %v1678, 0.0
        %v1695 = vadd.f32 %v1679, 0.0
        %v1696 = vadd.f32 %v1680, 0.0
        %v1697 = vadd.f32 %v1681, 0.0
        %v1698 = vadd.f32 %v1682, 0.0
        %v1699 = vadd.f32 %v1683, 0.0
        %v1700 = vadd.f32 %v1684, 0.0
        %v1701 = vadd.f32 %v1685, 0.0
        %v1702 = vadd.f32 %v1686, 0.0
        %v1703 = vadd.f32 %v1687, 0.0
        %1720 = vrot.lane.b32.xlu0 %v1672, 112
        %v1721 = vpop.permute.xlu0 %1720
        %1722 = vrot.lane.b32.xlu0 %v1673, 112
        %v1723 = vpop.permute.xlu0 %1722
        %1724 = vrot.lane.b32.xlu0 %v1674, 112
        %v1725 = vpop.permute.xlu0 %1724
        %1726 = vrot.lane.b32.xlu0 %v1675, 112
        %v1727 = vpop.permute.xlu0 %1726
        %1728 = vrot.lane.b32.xlu0 %v1676, 112
        %v1729 = vpop.permute.xlu0 %1728
        %1730 = vrot.lane.b32.xlu0 %v1677, 112
        %v1731 = vpop.permute.xlu0 %1730
        %1732 = vrot.lane.b32.xlu0 %v1678, 112
        %v1733 = vpop.permute.xlu0 %1732
        %1734 = vrot.lane.b32.xlu0 %v1679, 112
        %v1735 = vpop.permute.xlu0 %1734
        %1736 = vrot.lane.b32.xlu0 %v1680, 112
        %v1737 = vpop.permute.xlu0 %1736
        %1738 = vrot.lane.b32.xlu0 %v1681, 112
        %v1739 = vpop.permute.xlu0 %1738
        %1740 = vrot.lane.b32.xlu0 %v1682, 112
        %v1741 = vpop.permute.xlu0 %1740
        %1742 = vrot.lane.b32.xlu0 %v1683, 112
        %v1743 = vpop.permute.xlu0 %1742
        %1744 = vrot.lane.b32.xlu0 %v1684, 112
        %v1745 = vpop.permute.xlu0 %1744
        %1746 = vrot.lane.b32.xlu0 %v1685, 112
        %v1747 = vpop.permute.xlu0 %1746
        %1748 = vrot.lane.b32.xlu0 %v1686, 112
        %v1749 = vpop.permute.xlu0 %1748
        %1750 = vrot.lane.b32.xlu0 %v1687, 112
        %v1751 = vpop.permute.xlu0 %1750
        %v1752 = vsel %vm438, %v1721, 0
        %v1754 = vsel %vm438, %v1723, 0
        %v1756 = vsel %vm438, %v1725, 0
        %v1758 = vsel %vm438, %v1727, 0
        %v1760 = vsel %vm438, %v1729, 0
        %v1762 = vsel %vm438, %v1731, 0
        %v1764 = vsel %vm438, %v1733, 0
        %v1766 = vsel %vm438, %v1735, 0
        %v1768 = vsel %vm438, %v1737, 0
        %v1770 = vsel %vm438, %v1739, 0
        %v1772 = vsel %vm438, %v1741, 0
        %v1774 = vsel %vm438, %v1743, 0
        %v1776 = vsel %vm438, %v1745, 0
        %v1778 = vsel %vm438, %v1747, 0
        %v1780 = vsel %vm438, %v1749, 0
        %v1782 = vsel %vm438, %v1751, 0
        %1784 = vmatprep.subr.mxu0 0.0
        %1785 = vmatpush1.msra.mxu0 %v1099
        %1786 = vmatprep.subr.mxu0 0.0
        %1787 = vmatpush1.msra.mxu0 %v1100
        %1788 = vmatprep.subr.mxu0 0.0
        %1789 = vmatpush1.msra.mxu0 0.0
        %1790 = vmatprep.subr.mxu0 0.0
        %1791 = vmatpush1.msra.mxu0 0.0
        %1792 = vmatprep.subr.mxu0 0.0
        %1793 = vmatpush1.msra.mxu0 0.0
        %1794 = vmatprep.subr.mxu0 0.0
        %1795 = vmatpush1.msra.mxu0 0.0
        %1796 = vmatprep.subr.mxu0 0.0
        %1797 = vmatpush1.msra.mxu0 0.0
        %1798 = vmatprep.subr.mxu0 0.0
        %1799 = vmatpush1.msra.mxu0 0.0
        %1800 = vmatprep.subr.mxu0 0.0
        %1801 = vmatpush1.msra.mxu0 0.0
        %1802 = vmatprep.subr.mxu0 0.0
        %1803 = vmatpush1.msra.mxu0 0.0
        %1804 = vmatprep.subr.mxu0 0.0
        %1805 = vmatpush1.msra.mxu0 0.0
        %1806 = vmatprep.subr.mxu0 0.0
        %1807 = vmatpush1.msra.mxu0 0.0
        %1808 = vmatprep.subr.mxu0 0.0
        %1809 = vmatpush1.msra.mxu0 0.0
        %1810 = vmatprep.subr.mxu0 0.0
        %1811 = vmatpush1.msra.mxu0 0.0
        %1812 = vmatprep.subr.mxu0 0.0
        %1813 = vmatpush1.msra.mxu0 0.0
        %1814 = vmatprep.subr.mxu0 0.0
        %1815 = vmatpush1.msra.mxu0 0.0
        %1816 = vmatprep.subr.mxu0 0.0
        %1817 = vmatpush1.msra.mxu0 0.0
        %1818 = vmatprep.subr.mxu0 0.0
        %1819 = vmatpush1.msra.mxu0 0.0
        %1820 = vmatprep.subr.mxu0 0.0
        %1821 = vmatpush1.msra.mxu0 0.0
        %1822 = vmatprep.subr.mxu0 0.0
        %1823 = vmatpush1.msra.mxu0 0.0
        %1824 = vmatprep.subr.mxu0 0.0
        %1825 = vmatpush1.msra.mxu0 0.0
        %1826 = vmatprep.subr.mxu0 0.0
        %1827 = vmatpush1.msra.mxu0 0.0
        %1828 = vmatprep.subr.mxu0 0.0
        %1829 = vmatpush1.msra.mxu0 0.0
        %1830 = vmatprep.subr.mxu0 0.0
        %1831 = vmatpush1.msra.mxu0 0.0
        %1832 = vmatprep.subr.mxu0 0.0
        %1833 = vmatpush1.msra.mxu0 0.0
        %1834 = vmatprep.subr.mxu0 0.0
        %1835 = vmatpush1.msra.mxu0 0.0
        %1836 = vmatprep.subr.mxu0 0.0
        %1837 = vmatpush1.msra.mxu0 0.0
        %1838 = vmatprep.subr.mxu0 0.0
        %1839 = vmatpush1.msra.mxu0 0.0
        %1840 = vmatprep.subr.mxu0 0.0
        %1841 = vmatpush1.msra.mxu0 0.0
        %1842 = vmatprep.subr.mxu0 0.0
        %1843 = vmatpush1.msra.mxu0 0.0
        %1844 = vmatprep.subr.mxu0 0.0
        %1845 = vmatpush1.msra.mxu0 0.0
        %1846 = vmatprep.subr.mxu0 0.0
        %1847 = vmatpush1.msra.mxu0 0.0
        %1848 = vmatprep.mubr.f32.mxu0 0.0
        %1849 = vmatmul.mubr.f32.gmra.mrb[0].mxu0 %v1752
        %v1850 = vpop.f32.mrb[0].mxu0
        %v1851 = vadd.f32 %v1122, %v1850
        %v1852 = vpop.f32.mrb[0].mxu0
        %1853 = vmatprep.mubr.f32.mxu0 0.0
        %1854 = vmatmul.mubr.f32.gmra.mrb[0].mxu0 %v1754
        %v1855 = vpop.f32.mrb[0].mxu0
        %v1856 = vadd.f32 %v1122, %v1855
        %v1857 = vpop.f32.mrb[0].mxu0
        %1858 = vmatprep.mubr.f32.mxu0 0.0
        %1859 = vmatmul.mubr.f32.gmra.mrb[0].mxu0 %v1756
        %v1860 = vpop.f32.mrb[0].mxu0
        %v1861 = vadd.f32 %v1122, %v1860
        %v1862 = vpop.f32.mrb[0].mxu0
        %1863 = vmatprep.mubr.f32.mxu0 0.0
        %1864 = vmatmul.mubr.f32.gmra.mrb[0].mxu0 %v1758
        %v1865 = vpop.f32.mrb[0].mxu0
        %v1866 = vadd.f32 %v1122, %v1865
        %v1867 = vpop.f32.mrb[0].mxu0
        %1868 = vmatprep.mubr.f32.mxu0 0.0
        %1869 = vmatmul.mubr.f32.gmra.mrb[0].mxu0 %v1760
        %v1870 = vpop.f32.mrb[0].mxu0
        %v1871 = vadd.f32 %v1122, %v1870
        %v1872 = vpop.f32.mrb[0].mxu0
        %1873 = vmatprep.mubr.f32.mxu0 0.0
        %1874 = vmatmul.mubr.f32.gmra.mrb[0].mxu0 %v1762
        %v1875 = vpop.f32.mrb[0].mxu0
        %v1876 = vadd.f32 %v1122, %v1875
        %v1877 = vpop.f32.mrb[0].mxu0
        %1878 = vmatprep.mubr.f32.mxu0 0.0
        %1879 = vmatmul.mubr.f32.gmra.mrb[0].mxu0 %v1764
        %v1880 = vpop.f32.mrb[0].mxu0
        %v1881 = vadd.f32 %v1122, %v1880
        %v1882 = vpop.f32.mrb[0].mxu0
        %1883 = vmatprep.mubr.f32.mxu0 0.0
        %1884 = vmatmul.mubr.f32.gmra.mrb[0].mxu0 %v1766
        %v1885 = vpop.f32.mrb[0].mxu0
        %v1886 = vadd.f32 %v1122, %v1885
        %v1887 = vpop.f32.mrb[0].mxu0
        %1888 = vmatprep.mubr.f32.mxu0 0.0
        %1889 = vmatmul.mubr.f32.gmra.mrb[0].mxu0 %v1768
        %v1890 = vpop.f32.mrb[0].mxu0
        %v1891 = vadd.f32 %v1122, %v1890
        %v1892 = vpop.f32.mrb[0].mxu0
        %1893 = vmatprep.mubr.f32.mxu0 0.0
        %1894 = vmatmul.mubr.f32.gmra.mrb[0].mxu0 %v1770
        %v1895 = vpop.f32.mrb[0].mxu0
        %v1896 = vadd.f32 %v1122, %v1895
        %v1897 = vpop.f32.mrb[0].mxu0
        %1898 = vmatprep.mubr.f32.mxu0 0.0
        %1899 = vmatmul.mubr.f32.gmra.mrb[0].mxu0 %v1772
        %v1900 = vpop.f32.mrb[0].mxu0
        %v1901 = vadd.f32 %v1122, %v1900
        %v1902 = vpop.f32.mrb[0].mxu0
        %1903 = vmatprep.mubr.f32.mxu0 0.0
        %1904 = vmatmul.mubr.f32.gmra.mrb[0].mxu0 %v1774
        %v1905 = vpop.f32.mrb[0].mxu0
        %v1906 = vadd.f32 %v1122, %v1905
        %v1907 = vpop.f32.mrb[0].mxu0
        %1908 = vmatprep.mubr.f32.mxu0 0.0
        %1909 = vmatmul.mubr.f32.gmra.mrb[0].mxu0 %v1776
        %v1910 = vpop.f32.mrb[0].mxu0
        %v1911 = vadd.f32 %v1122, %v1910
        %v1912 = vpop.f32.mrb[0].mxu0
        %1913 = vmatprep.mubr.f32.mxu0 0.0
        %1914 = vmatmul.mubr.f32.gmra.mrb[0].mxu0 %v1778
        %v1915 = vpop.f32.mrb[0].mxu0
        %v1916 = vadd.f32 %v1122, %v1915
        %v1917 = vpop.f32.mrb[0].mxu0
        %1918 = vmatprep.mubr.f32.mxu0 0.0
        %1919 = vmatmul.mubr.f32.gmra.mrb[0].mxu0 %v1780
        %v1920 = vpop.f32.mrb[0].mxu0
        %v1921 = vadd.f32 %v1122, %v1920
        %v1922 = vpop.f32.mrb[0].mxu0
        %1923 = vmatprep.mubr.f32.mxu0 0.0
        %1924 = vmatmul.mubr.f32.gmra.mrb[0].mxu0 %v1782
        %v1925 = vpop.f32.mrb[0].mxu0
        %v1926 = vadd.f32 %v1122, %v1925
        %v1927 = vpop.f32.mrb[0].mxu0
        %1928 = vdwg.mxu0
        %1945 = vrot.lane.b32.xlu0 %v1851, 48
        %v1946 = vpop.permute.xlu0 %1945
        %1947 = vrot.lane.b32.xlu0 %v1856, 48
        %v1948 = vpop.permute.xlu0 %1947
        %1949 = vrot.lane.b32.xlu0 %v1861, 48
        %v1950 = vpop.permute.xlu0 %1949
        %1951 = vrot.lane.b32.xlu0 %v1866, 48
        %v1952 = vpop.permute.xlu0 %1951
        %1953 = vrot.lane.b32.xlu0 %v1871, 48
        %v1954 = vpop.permute.xlu0 %1953
        %1955 = vrot.lane.b32.xlu0 %v1876, 48
        %v1956 = vpop.permute.xlu0 %1955
        %1957 = vrot.lane.b32.xlu0 %v1881, 48
        %v1958 = vpop.permute.xlu0 %1957
        %1959 = vrot.lane.b32.xlu0 %v1886, 48
        %v1960 = vpop.permute.xlu0 %1959
        %1961 = vrot.lane.b32.xlu0 %v1891, 48
        %v1962 = vpop.permute.xlu0 %1961
        %1963 = vrot.lane.b32.xlu0 %v1896, 48
        %v1964 = vpop.permute.xlu0 %1963
        %1965 = vrot.lane.b32.xlu0 %v1901, 48
        %v1966 = vpop.permute.xlu0 %1965
        %1967 = vrot.lane.b32.xlu0 %v1906, 48
        %v1968 = vpop.permute.xlu0 %1967
        %1969 = vrot.lane.b32.xlu0 %v1911, 48
        %v1970 = vpop.permute.xlu0 %1969
        %1971 = vrot.lane.b32.xlu0 %v1916, 48
        %v1972 = vpop.permute.xlu0 %1971
        %1973 = vrot.lane.b32.xlu0 %v1921, 48
        %v1974 = vpop.permute.xlu0 %1973
        %1975 = vrot.lane.b32.xlu0 %v1926, 48
        %v1976 = vpop.permute.xlu0 %1975
        %v1993 = vadd.f32 %v1102, %v1946
        %v1994 = vadd.f32 %v1103, %v1948
        %v1995 = vadd.f32 %v1104, %v1950
        %v1996 = vadd.f32 %v1105, %v1952
        %v1997 = vadd.f32 %v1106, %v1954
        %v1998 = vadd.f32 %v1107, %v1956
        %v1999 = vadd.f32 %v1108, %v1958
        %v2000 = vadd.f32 %v1109, %v1960
        %v2001 = vadd.f32 %v1110, %v1962
        %v2002 = vadd.f32 %v1111, %v1964
        %v2003 = vadd.f32 %v1112, %v1966
        %v2004 = vadd.f32 %v1113, %v1968
        %v2005 = vadd.f32 %v1114, %v1970
        %v2006 = vadd.f32 %v1115, %v1972
        %v2007 = vadd.f32 %v1116, %v1974
        %v2008 = vadd.f32 %v1117, %v1976
        %v2009 = vxor.u32 %v1993, 2147483648
        %v2010 = vxor.u32 %v1994, 2147483648
        %v2011 = vxor.u32 %v1995, 2147483648
        %v2012 = vxor.u32 %v1996, 2147483648
        %v2013 = vxor.u32 %v1997, 2147483648
        %v2014 = vxor.u32 %v1998, 2147483648
        %v2015 = vxor.u32 %v1999, 2147483648
        %v2016 = vxor.u32 %v2000, 2147483648
        %v2017 = vxor.u32 %v2001, 2147483648
        %v2018 = vxor.u32 %v2002, 2147483648
        %v2019 = vxor.u32 %v2003, 2147483648
        %v2020 = vxor.u32 %v2004, 2147483648
        %v2021 = vxor.u32 %v2005, 2147483648
        %v2022 = vxor.u32 %v2006, 2147483648
        %v2023 = vxor.u32 %v2007, 2147483648
        %v2024 = vxor.u32 %v2008, 2147483648
        %v2025 = vmul.f32 %v2009, 1.442695
        %v2026 = vpow.pop %v2025
        %v2027 = vmul.f32 %v2010, 1.442695
        %v2028 = vpow.pop %v2027
        %v2029 = vmul.f32 %v2011, 1.442695
        %v2030 = vpow.pop %v2029
        %v2031 = vmul.f32 %v2012, 1.442695
        %v2032 = vpow.pop %v2031
        %v2033 = vmul.f32 %v2013, 1.442695
        %v2034 = vpow.pop %v2033
        %v2035 = vmul.f32 %v2014, 1.442695
        %v2036 = vpow.pop %v2035
        %v2037 = vmul.f32 %v2015, 1.442695
        %v2038 = vpow.pop %v2037
        %v2039 = vmul.f32 %v2016, 1.442695
        %v2040 = vpow.pop %v2039
        %v2041 = vmul.f32 %v2017, 1.442695
        %v2042 = vpow.pop %v2041
        %v2043 = vmul.f32 %v2018, 1.442695
        %v2044 = vpow.pop %v2043
        %v2045 = vmul.f32 %v2019, 1.442695
        %v2046 = vpow.pop %v2045
        %v2047 = vmul.f32 %v2020, 1.442695
        %v2048 = vpow.pop %v2047
        %v2049 = vmul.f32 %v2021, 1.442695
        %v2050 = vpow.pop %v2049
        %v2051 = vmul.f32 %v2022, 1.442695
        %v2052 = vpow.pop %v2051
        %v2053 = vmul.f32 %v2023, 1.442695
        %v2054 = vpow.pop %v2053
        %v2055 = vmul.f32 %v2024, 1.442695
        %v2056 = vpow.pop %v2055
        %v2057 = vadd.f32 %v2026, 1.0
        %v2058 = vadd.f32 %v2028, 1.0
        %v2059 = vadd.f32 %v2030, 1.0
        %v2060 = vadd.f32 %v2032, 1.0
        %v2061 = vadd.f32 %v2034, 1.0
        %v2062 = vadd.f32 %v2036, 1.0
        %v2063 = vadd.f32 %v2038, 1.0
        %v2064 = vadd.f32 %v2040, 1.0
        %v2065 = vadd.f32 %v2042, 1.0
        %v2066 = vadd.f32 %v2044, 1.0
        %v2067 = vadd.f32 %v2046, 1.0
        %v2068 = vadd.f32 %v2048, 1.0
        %v2069 = vadd.f32 %v2050, 1.0
        %v2070 = vadd.f32 %v2052, 1.0
        %v2071 = vadd.f32 %v2054, 1.0
        %v2072 = vadd.f32 %v2056, 1.0
        %v2073 = vrcp.pop %v2057
        %v2074 = vmul.f32 1.0, %v2073
        %v2075 = vrcp.pop %v2058
        %v2076 = vmul.f32 1.0, %v2075
        %v2077 = vrcp.pop %v2059
        %v2078 = vmul.f32 1.0, %v2077
        %v2079 = vrcp.pop %v2060
        %v2080 = vmul.f32 1.0, %v2079
        %v2081 = vrcp.pop %v2061
        %v2082 = vmul.f32 1.0, %v2081
        %v2083 = vrcp.pop %v2062
        %v2084 = vmul.f32 1.0, %v2083
        %v2085 = vrcp.pop %v2063
        %v2086 = vmul.f32 1.0, %v2085
        %v2087 = vrcp.pop %v2064
        %v2088 = vmul.f32 1.0, %v2087
        %v2089 = vrcp.pop %v2065
        %v2090 = vmul.f32 1.0, %v2089
        %v2091 = vrcp.pop %v2066
        %v2092 = vmul.f32 1.0, %v2091
        %v2093 = vrcp.pop %v2067
        %v2094 = vmul.f32 1.0, %v2093
        %v2095 = vrcp.pop %v2068
        %v2096 = vmul.f32 1.0, %v2095
        %v2097 = vrcp.pop %v2069
        %v2098 = vmul.f32 1.0, %v2097
        %v2099 = vrcp.pop %v2070
        %v2100 = vmul.f32 1.0, %v2099
        %v2101 = vrcp.pop %v2071
        %v2102 = vmul.f32 1.0, %v2101
        %v2103 = vrcp.pop %v2072
        %v2104 = vmul.f32 1.0, %v2103
        %2105 = vrot.lane.b32.xlu0 %v1851, 16
        %v2106 = vpop.permute.xlu0 %2105
        %2107 = vrot.lane.b32.xlu0 %v1856, 16
        %v2108 = vpop.permute.xlu0 %2107
        %2109 = vrot.lane.b32.xlu0 %v1861, 16
        %v2110 = vpop.permute.xlu0 %2109
        %2111 = vrot.lane.b32.xlu0 %v1866, 16
        %v2112 = vpop.permute.xlu0 %2111
        %2113 = vrot.lane.b32.xlu0 %v1871, 16
        %v2114 = vpop.permute.xlu0 %2113
        %2115 = vrot.lane.b32.xlu0 %v1876, 16
        %v2116 = vpop.permute.xlu0 %2115
        %2117 = vrot.lane.b32.xlu0 %v1881, 16
        %v2118 = vpop.permute.xlu0 %2117
        %2119 = vrot.lane.b32.xlu0 %v1886, 16
        %v2120 = vpop.permute.xlu0 %2119
        %2121 = vrot.lane.b32.xlu0 %v1891, 16
        %v2122 = vpop.permute.xlu0 %2121
        %2123 = vrot.lane.b32.xlu0 %v1896, 16
        %v2124 = vpop.permute.xlu0 %2123
        %2125 = vrot.lane.b32.xlu0 %v1901, 16
        %v2126 = vpop.permute.xlu0 %2125
        %2127 = vrot.lane.b32.xlu0 %v1906, 16
        %v2128 = vpop.permute.xlu0 %2127
        %2129 = vrot.lane.b32.xlu0 %v1911, 16
        %v2130 = vpop.permute.xlu0 %2129
        %2131 = vrot.lane.b32.xlu0 %v1916, 16
        %v2132 = vpop.permute.xlu0 %2131
        %2133 = vrot.lane.b32.xlu0 %v1921, 16
        %v2134 = vpop.permute.xlu0 %2133
        %2135 = vrot.lane.b32.xlu0 %v1926, 16
        %v2136 = vpop.permute.xlu0 %2135
        %v2153 = vmul.f32 %v2074, %v2106
        %v2154 = vmul.f32 %v2076, %v2108
        %v2155 = vmul.f32 %v2078, %v2110
        %v2156 = vmul.f32 %v2080, %v2112
        %v2157 = vmul.f32 %v2082, %v2114
        %v2158 = vmul.f32 %v2084, %v2116
        %v2159 = vmul.f32 %v2086, %v2118
        %v2160 = vmul.f32 %v2088, %v2120
        %v2161 = vmul.f32 %v2090, %v2122
        %v2162 = vmul.f32 %v2092, %v2124
        %v2163 = vmul.f32 %v2094, %v2126
        %v2164 = vmul.f32 %v2096, %v2128
        %v2165 = vmul.f32 %v2098, %v2130
        %v2166 = vmul.f32 %v2100, %v2132
        %v2167 = vmul.f32 %v2102, %v2134
        %v2168 = vmul.f32 %v2104, %v2136
        %2185 = vrot.lane.b32.xlu0 %v2153, 32
        %v2186 = vpop.permute.xlu0 %2185
        %2187 = vrot.lane.b32.xlu0 %v2154, 32
        %v2188 = vpop.permute.xlu0 %2187
        %2189 = vrot.lane.b32.xlu0 %v2155, 32
        %v2190 = vpop.permute.xlu0 %2189
        %2191 = vrot.lane.b32.xlu0 %v2156, 32
        %v2192 = vpop.permute.xlu0 %2191
        %2193 = vrot.lane.b32.xlu0 %v2157, 32
        %v2194 = vpop.permute.xlu0 %2193
        %2195 = vrot.lane.b32.xlu0 %v2158, 32
        %v2196 = vpop.permute.xlu0 %2195
        %2197 = vrot.lane.b32.xlu0 %v2159, 32
        %v2198 = vpop.permute.xlu0 %2197
        %2199 = vrot.lane.b32.xlu0 %v2160, 32
        %v2200 = vpop.permute.xlu0 %2199
        %2201 = vrot.lane.b32.xlu0 %v2161, 32
        %v2202 = vpop.permute.xlu0 %2201
        %2203 = vrot.lane.b32.xlu0 %v2162, 32
        %v2204 = vpop.permute.xlu0 %2203
        %2205 = vrot.lane.b32.xlu0 %v2163, 32
        %v2206 = vpop.permute.xlu0 %2205
        %2207 = vrot.lane.b32.xlu0 %v2164, 32
        %v2208 = vpop.permute.xlu0 %2207
        %2209 = vrot.lane.b32.xlu0 %v2165, 32
        %v2210 = vpop.permute.xlu0 %2209
        %2211 = vrot.lane.b32.xlu0 %v2166, 32
        %v2212 = vpop.permute.xlu0 %2211
        %2213 = vrot.lane.b32.xlu0 %v2167, 32
        %v2214 = vpop.permute.xlu0 %2213
        %2215 = vrot.lane.b32.xlu0 %v2168, 32
        %v2216 = vpop.permute.xlu0 %2215
        %v2233 = vadd.f32 %v1102, %v2186
        %v2234 = vadd.f32 %v1103, %v2188
        %v2235 = vadd.f32 %v1104, %v2190
        %v2236 = vadd.f32 %v1105, %v2192
        %v2237 = vadd.f32 %v1106, %v2194
        %v2238 = vadd.f32 %v1107, %v2196
        %v2239 = vadd.f32 %v1108, %v2198
        %v2240 = vadd.f32 %v1109, %v2200
        %v2241 = vadd.f32 %v1110, %v2202
        %v2242 = vadd.f32 %v1111, %v2204
        %v2243 = vadd.f32 %v1112, %v2206
        %v2244 = vadd.f32 %v1113, %v2208
        %v2245 = vadd.f32 %v1114, %v2210
        %v2246 = vadd.f32 %v1115, %v2212
        %v2247 = vadd.f32 %v1116, %v2214
        %v2248 = vadd.f32 %v1117, %v2216
        %v2249 = vtanh.pop %v2233
        %v2250 = vtanh.pop %v2234
        %v2251 = vtanh.pop %v2235
        %v2252 = vtanh.pop %v2236
        %v2253 = vtanh.pop %v2237
        %v2254 = vtanh.pop %v2238
        %v2255 = vtanh.pop %v2239
        %v2256 = vtanh.pop %v2240
        %v2257 = vtanh.pop %v2241
        %v2258 = vtanh.pop %v2242
        %v2259 = vtanh.pop %v2243
        %v2260 = vtanh.pop %v2244
        %v2261 = vtanh.pop %v2245
        %v2262 = vtanh.pop %v2246
        %v2263 = vtanh.pop %v2247
        %v2264 = vtanh.pop %v2248
        %v2265 = vsub.f32 1.0, %v2074
        %v2266 = vsub.f32 1.0, %v2076
        %v2267 = vsub.f32 1.0, %v2078
        %v2268 = vsub.f32 1.0, %v2080
        %v2269 = vsub.f32 1.0, %v2082
        %v2270 = vsub.f32 1.0, %v2084
        %v2271 = vsub.f32 1.0, %v2086
        %v2272 = vsub.f32 1.0, %v2088
        %v2273 = vsub.f32 1.0, %v2090
        %v2274 = vsub.f32 1.0, %v2092
        %v2275 = vsub.f32 1.0, %v2094
        %v2276 = vsub.f32 1.0, %v2096
        %v2277 = vsub.f32 1.0, %v2098
        %v2278 = vsub.f32 1.0, %v2100
        %v2279 = vsub.f32 1.0, %v2102
        %v2280 = vsub.f32 1.0, %v2104
        %2297 = vrot.lane.b32.xlu0 %v2249, 112
        %v2298 = vpop.permute.xlu0 %2297
        %2299 = vrot.lane.b32.xlu0 %v2250, 112
        %v2300 = vpop.permute.xlu0 %2299
        %2301 = vrot.lane.b32.xlu0 %v2251, 112
        %v2302 = vpop.permute.xlu0 %2301
        %2303 = vrot.lane.b32.xlu0 %v2252, 112
        %v2304 = vpop.permute.xlu0 %2303
        %2305 = vrot.lane.b32.xlu0 %v2253, 112
        %v2306 = vpop.permute.xlu0 %2305
        %2307 = vrot.lane.b32.xlu0 %v2254, 112
        %v2308 = vpop.permute.xlu0 %2307
        %2309 = vrot.lane.b32.xlu0 %v2255, 112
        %v2310 = vpop.permute.xlu0 %2309
        %2311 = vrot.lane.b32.xlu0 %v2256, 112
        %v2312 = vpop.permute.xlu0 %2311
        %2313 = vrot.lane.b32.xlu0 %v2257, 112
        %v2314 = vpop.permute.xlu0 %2313
        %2315 = vrot.lane.b32.xlu0 %v2258, 112
        %v2316 = vpop.permute.xlu0 %2315
        %2317 = vrot.lane.b32.xlu0 %v2259, 112
        %v2318 = vpop.permute.xlu0 %2317
        %2319 = vrot.lane.b32.xlu0 %v2260, 112
        %v2320 = vpop.permute.xlu0 %2319
        %2321 = vrot.lane.b32.xlu0 %v2261, 112
        %v2322 = vpop.permute.xlu0 %2321
        %2323 = vrot.lane.b32.xlu0 %v2262, 112
        %v2324 = vpop.permute.xlu0 %2323
        %2325 = vrot.lane.b32.xlu0 %v2263, 112
        %v2326 = vpop.permute.xlu0 %2325
        %2327 = vrot.lane.b32.xlu0 %v2264, 112
        %v2328 = vpop.permute.xlu0 %2327
        %v2345 = vmul.f32 %v2265, %v2298
        %v2346 = vmul.f32 %v2266, %v2300
        %v2347 = vmul.f32 %v2267, %v2302
        %v2348 = vmul.f32 %v2268, %v2304
        %v2349 = vmul.f32 %v2269, %v2306
        %v2350 = vmul.f32 %v2270, %v2308
        %v2351 = vmul.f32 %v2271, %v2310
        %v2352 = vmul.f32 %v2272, %v2312
        %v2353 = vmul.f32 %v2273, %v2314
        %v2354 = vmul.f32 %v2274, %v2316
        %v2355 = vmul.f32 %v2275, %v2318
        %v2356 = vmul.f32 %v2276, %v2320
        %v2357 = vmul.f32 %v2277, %v2322
        %v2358 = vmul.f32 %v2278, %v2324
        %v2359 = vmul.f32 %v2279, %v2326
        %v2360 = vmul.f32 %v2280, %v2328
        %2361 = vrot.lane.b32.xlu0 %v1672, 48
        %v2362 = vpop.permute.xlu0 %2361
        %2363 = vrot.lane.b32.xlu0 %v1673, 48
        %v2364 = vpop.permute.xlu0 %2363
        %2365 = vrot.lane.b32.xlu0 %v1674, 48
        %v2366 = vpop.permute.xlu0 %2365
        %2367 = vrot.lane.b32.xlu0 %v1675, 48
        %v2368 = vpop.permute.xlu0 %2367
        %2369 = vrot.lane.b32.xlu0 %v1676, 48
        %v2370 = vpop.permute.xlu0 %2369
        %2371 = vrot.lane.b32.xlu0 %v1677, 48
        %v2372 = vpop.permute.xlu0 %2371
        %2373 = vrot.lane.b32.xlu0 %v1678, 48
        %v2374 = vpop.permute.xlu0 %2373
        %2375 = vrot.lane.b32.xlu0 %v1679, 48
        %v2376 = vpop.permute.xlu0 %2375
        %2377 = vrot.lane.b32.xlu0 %v1680, 48
        %v2378 = vpop.permute.xlu0 %2377
        %2379 = vrot.lane.b32.xlu0 %v1681, 48
        %v2380 = vpop.permute.xlu0 %2379
        %2381 = vrot.lane.b32.xlu0 %v1682, 48
        %v2382 = vpop.permute.xlu0 %2381
        %2383 = vrot.lane.b32.xlu0 %v1683, 48
        %v2384 = vpop.permute.xlu0 %2383
        %2385 = vrot.lane.b32.xlu0 %v1684, 48
        %v2386 = vpop.permute.xlu0 %2385
        %2387 = vrot.lane.b32.xlu0 %v1685, 48
        %v2388 = vpop.permute.xlu0 %2387
        %2389 = vrot.lane.b32.xlu0 %v1686, 48
        %v2390 = vpop.permute.xlu0 %2389
        %2391 = vrot.lane.b32.xlu0 %v1687, 48
        %v2392 = vpop.permute.xlu0 %2391
        %v2409 = vmul.f32 %v2074, %v2362
        %v2410 = vmul.f32 %v2076, %v2364
        %v2411 = vmul.f32 %v2078, %v2366
        %v2412 = vmul.f32 %v2080, %v2368
        %v2413 = vmul.f32 %v2082, %v2370
        %v2414 = vmul.f32 %v2084, %v2372
        %v2415 = vmul.f32 %v2086, %v2374
        %v2416 = vmul.f32 %v2088, %v2376
        %v2417 = vmul.f32 %v2090, %v2378
        %v2418 = vmul.f32 %v2092, %v2380
        %v2419 = vmul.f32 %v2094, %v2382
        %v2420 = vmul.f32 %v2096, %v2384
        %v2421 = vmul.f32 %v2098, %v2386
        %v2422 = vmul.f32 %v2100, %v2388
        %v2423 = vmul.f32 %v2102, %v2390
        %v2424 = vmul.f32 %v2104, %v2392
        %v2425 = vadd.f32 %v2345, %v2409
        %v2426 = vadd.f32 %v2346, %v2410
        %v2427 = vadd.f32 %v2347, %v2411
        %v2428 = vadd.f32 %v2348, %v2412
        %v2429 = vadd.f32 %v2349, %v2413
        %v2430 = vadd.f32 %v2350, %v2414
        %v2431 = vadd.f32 %v2351, %v2415
        %v2432 = vadd.f32 %v2352, %v2416
        %v2433 = vadd.f32 %v2353, %v2417
        %v2434 = vadd.f32 %v2354, %v2418
        %v2435 = vadd.f32 %v2355, %v2419
        %v2436 = vadd.f32 %v2356, %v2420
        %v2437 = vadd.f32 %v2357, %v2421
        %v2438 = vadd.f32 %v2358, %v2422
        %v2439 = vadd.f32 %v2359, %v2423
        %v2440 = vadd.f32 %v2360, %v2424
        %2457 = vrot.lane.b32.xlu0 %v2425, 80
        %v2458 = vpop.permute.xlu0 %2457
        %2459 = vrot.lane.b32.xlu0 %v2426, 80
        %v2460 = vpop.permute.xlu0 %2459
        %2461 = vrot.lane.b32.xlu0 %v2427, 80
        %v2462 = vpop.permute.xlu0 %2461
        %2463 = vrot.lane.b32.xlu0 %v2428, 80
        %v2464 = vpop.permute.xlu0 %2463
        %2465 = vrot.lane.b32.xlu0 %v2429, 80
        %v2466 = vpop.permute.xlu0 %2465
        %2467 = vrot.lane.b32.xlu0 %v2430, 80
        %v2468 = vpop.permute.xlu0 %2467
        %2469 = vrot.lane.b32.xlu0 %v2431, 80
        %v2470 = vpop.permute.xlu0 %2469
        %2471 = vrot.lane.b32.xlu0 %v2432, 80
        %v2472 = vpop.permute.xlu0 %2471
        %2473 = vrot.lane.b32.xlu0 %v2433, 80
        %v2474 = vpop.permute.xlu0 %2473
        %2475 = vrot.lane.b32.xlu0 %v2434, 80
        %v2476 = vpop.permute.xlu0 %2475
        %2477 = vrot.lane.b32.xlu0 %v2435, 80
        %v2478 = vpop.permute.xlu0 %2477
        %2479 = vrot.lane.b32.xlu0 %v2436, 80
        %v2480 = vpop.permute.xlu0 %2479
        %2481 = vrot.lane.b32.xlu0 %v2437, 80
        %v2482 = vpop.permute.xlu0 %2481
        %2483 = vrot.lane.b32.xlu0 %v2438, 80
        %v2484 = vpop.permute.xlu0 %2483
        %2485 = vrot.lane.b32.xlu0 %v2439, 80
        %v2486 = vpop.permute.xlu0 %2485
        %2487 = vrot.lane.b32.xlu0 %v2440, 80
        %v2488 = vpop.permute.xlu0 %2487
        %v2505 = vadd.f32 %v1688, %v2458
        %v2506 = vadd.f32 %v1689, %v2460
        %v2507 = vadd.f32 %v1690, %v2462
        %v2508 = vadd.f32 %v1691, %v2464
        %v2509 = vadd.f32 %v1692, %v2466
        %v2510 = vadd.f32 %v1693, %v2468
        %v2511 = vadd.f32 %v1694, %v2470
        %v2512 = vadd.f32 %v1695, %v2472
        %v2513 = vadd.f32 %v1696, %v2474
        %v2514 = vadd.f32 %v1697, %v2476
        %v2515 = vadd.f32 %v1698, %v2478
        %v2516 = vadd.f32 %v1699, %v2480
        %v2517 = vadd.f32 %v1700, %v2482
        %v2518 = vadd.f32 %v1701, %v2484
        %v2519 = vadd.f32 %v1702, %v2486
        %v2520 = vadd.f32 %v1703, %v2488
        %v2521 = vld [vmem:[#allocation2] sm:$0xff]
        %v2522 = vld [vmem:[#allocation2 + $0x8] sm:$0xff]
        %v2523 = vld [vmem:[#allocation2 + $0x18] sm:$0xff]
        %v2524 = vld [vmem:[#allocation2 + $0x20] sm:$0xff]
        %v2525 = vld [vmem:[#allocation2 + $0x30] sm:$0xff]
        %v2526 = vld [vmem:[#allocation2 + $0x38] sm:$0xff]
        %v2527 = vld [vmem:[#allocation2 + $0x48] sm:$0xff]
        %v2528 = vld [vmem:[#allocation2 + $0x50] sm:$0xff]
        %v2529 = vld [vmem:[#allocation2 + $0x60] sm:$0xff]
        %v2530 = vld [vmem:[#allocation2 + $0x68] sm:$0xff]
        %v2531 = vld [vmem:[#allocation2 + $0x78] sm:$0xff]
        %v2532 = vld [vmem:[#allocation2 + $0x80] sm:$0xff]
        %v2533 = vld [vmem:[#allocation2 + $0x90] sm:$0xff]
        %v2534 = vld [vmem:[#allocation2 + $0x98] sm:$0xff]
        %v2535 = vld [vmem:[#allocation2 + $0xa8] sm:$0xff]
        %v2536 = vld [vmem:[#allocation2 + $0xb0] sm:$0xff]
        %v2537 = vld [vmem:[#allocation2 + $0xc0] sm:$0xff]
        %v2538 = vld [vmem:[#allocation2 + $0xc8] sm:$0xff]
        %v2539 = vld [vmem:[#allocation2 + $0xd8] sm:$0xff]
        %v2540 = vld [vmem:[#allocation2 + $0xe0] sm:$0xff]
        %v2541 = vld [vmem:[#allocation2 + $0xf0] sm:$0xff]
        %v2542 = vld [vmem:[#allocation2 + $0xf8] sm:$0xff]
        %v2543 = vld [vmem:[#allocation2 + $0x108] sm:$0xff]
        %v2544 = vld [vmem:[#allocation2 + $0x110] sm:$0xff]
        %v2545 = vld [vmem:[#allocation2 + $0x120] sm:$0xff]
        %v2546 = vld [vmem:[#allocation2 + $0x128] sm:$0xff]
        %v2547 = vld [vmem:[#allocation2 + $0x138] sm:$0xff]
        %v2548 = vld [vmem:[#allocation2 + $0x140] sm:$0xff]
        %v2549 = vld [vmem:[#allocation2 + $0x150] sm:$0xff]
        %v2550 = vld [vmem:[#allocation2 + $0x158] sm:$0xff]
        %v2551 = vld [vmem:[#allocation2 + $0x168] sm:$0xff]
        %v2552 = vld [vmem:[#allocation2 + $0x170] sm:$0xff]
        %2553 = vrot.lane.b32.xlu0 %v2425, 64
        %v2554 = vpop.permute.xlu0 %2553
        %2555 = vrot.lane.b32.xlu0 %v2426, 64
        %v2556 = vpop.permute.xlu0 %2555
        %2557 = vrot.lane.b32.xlu0 %v2427, 64
        %v2558 = vpop.permute.xlu0 %2557
        %2559 = vrot.lane.b32.xlu0 %v2428, 64
        %v2560 = vpop.permute.xlu0 %2559
        %2561 = vrot.lane.b32.xlu0 %v2429, 64
        %v2562 = vpop.permute.xlu0 %2561
        %2563 = vrot.lane.b32.xlu0 %v2430, 64
        %v2564 = vpop.permute.xlu0 %2563
        %2565 = vrot.lane.b32.xlu0 %v2431, 64
        %v2566 = vpop.permute.xlu0 %2565
        %2567 = vrot.lane.b32.xlu0 %v2432, 64
        %v2568 = vpop.permute.xlu0 %2567
        %2569 = vrot.lane.b32.xlu0 %v2433, 64
        %v2570 = vpop.permute.xlu0 %2569
        %2571 = vrot.lane.b32.xlu0 %v2434, 64
        %v2572 = vpop.permute.xlu0 %2571
        %2573 = vrot.lane.b32.xlu0 %v2435, 64
        %v2574 = vpop.permute.xlu0 %2573
        %2575 = vrot.lane.b32.xlu0 %v2436, 64
        %v2576 = vpop.permute.xlu0 %2575
        %2577 = vrot.lane.b32.xlu0 %v2437, 64
        %v2578 = vpop.permute.xlu0 %2577
        %2579 = vrot.lane.b32.xlu0 %v2438, 64
        %v2580 = vpop.permute.xlu0 %2579
        %2581 = vrot.lane.b32.xlu0 %v2439, 64
        %v2582 = vpop.permute.xlu0 %2581
        %2583 = vrot.lane.b32.xlu0 %v2440, 64
        %v2584 = vpop.permute.xlu0 %2583
        %v2585 = vsel %vm438, %v2554, 0
        %v2587 = vsel %vm438, %v2556, 0
        %v2589 = vsel %vm438, %v2558, 0
        %v2591 = vsel %vm438, %v2560, 0
        %v2593 = vsel %vm438, %v2562, 0
        %v2595 = vsel %vm438, %v2564, 0
        %v2597 = vsel %vm438, %v2566, 0
        %v2599 = vsel %vm438, %v2568, 0
        %v2601 = vsel %vm438, %v2570, 0
        %v2603 = vsel %vm438, %v2572, 0
        %v2605 = vsel %vm438, %v2574, 0
        %v2607 = vsel %vm438, %v2576, 0
        %v2609 = vsel %vm438, %v2578, 0
        %v2611 = vsel %vm438, %v2580, 0
        %v2613 = vsel %vm438, %v2582, 0
        %v2615 = vsel %vm438, %v2584, 0
        %2617 = vmatprep.subr.mxu0 0.0
        %2618 = vmatpush1.msra.mxu0 %v1099
        %2619 = vmatprep.subr.mxu0 0.0
        %2620 = vmatpush1.msra.mxu0 %v1100
        %2621 = vmatprep.subr.mxu0 0.0
        %2622 = vmatpush1.msra.mxu0 0.0
        %2623 = vmatprep.subr.mxu0 0.0
        %2624 = vmatpush1.msra.mxu0 0.0
        %2625 = vmatprep.subr.mxu0 0.0
        %2626 = vmatpush1.msra.mxu0 0.0
        %2627 = vmatprep.subr.mxu0 0.0
        %2628 = vmatpush1.msra.mxu0 0.0
        %2629 = vmatprep.subr.mxu0 0.0
        %2630 = vmatpush1.msra.mxu0 0.0
        %2631 = vmatprep.subr.mxu0 0.0
        %2632 = vmatpush1.msra.mxu0 0.0
        %2633 = vmatprep.subr.mxu0 0.0
        %2634 = vmatpush1.msra.mxu0 0.0
        %2635 = vmatprep.subr.mxu0 0.0
        %2636 = vmatpush1.msra.mxu0 0.0
        %2637 = vmatprep.subr.mxu0 0.0
        %2638 = vmatpush1.msra.mxu0 0.0
        %2639 = vmatprep.subr.mxu0 0.0
        %2640 = vmatpush1.msra.mxu0 0.0
        %2641 = vmatprep.subr.mxu0 0.0
        %2642 = vmatpush1.msra.mxu0 0.0
        %2643 = vmatprep.subr.mxu0 0.0
        %2644 = vmatpush1.msra.mxu0 0.0
        %2645 = vmatprep.subr.mxu0 0.0
        %2646 = vmatpush1.msra.mxu0 0.0
        %2647 = vmatprep.subr.mxu0 0.0
        %2648 = vmatpush1.msra.mxu0 0.0
        %2649 = vmatprep.subr.mxu0 0.0
        %2650 = vmatpush1.msra.mxu0 0.0
        %2651 = vmatprep.subr.mxu0 0.0
        %2652 = vmatpush1.msra.mxu0 0.0
        %2653 = vmatprep.subr.mxu0 0.0
        %2654 = vmatpush1.msra.mxu0 0.0
        %2655 = vmatprep.subr.mxu0 0.0
        %2656 = vmatpush1.msra.mxu0 0.0
        %2657 = vmatprep.subr.mxu0 0.0
        %2658 = vmatpush1.msra.mxu0 0.0
        %2659 = vmatprep.subr.mxu0 0.0
        %2660 = vmatpush1.msra.mxu0 0.0
        %2661 = vmatprep.subr.mxu0 0.0
        %2662 = vmatpush1.msra.mxu0 0.0
        %2663 = vmatprep.subr.mxu0 0.0
        %2664 = vmatpush1.msra.mxu0 0.0
        %2665 = vmatprep.subr.mxu0 0.0
        %2666 = vmatpush1.msra.mxu0 0.0
        %2667 = vmatprep.subr.mxu0 0.0
        %2668 = vmatpush1.msra.mxu0 0.0
        %2669 = vmatprep.subr.mxu0 0.0
        %2670 = vmatpush1.msra.mxu0 0.0
        %2671 = vmatprep.subr.mxu0 0.0
        %2672 = vmatpush1.msra.mxu0 0.0
        %2673 = vmatprep.subr.mxu0 0.0
        %2674 = vmatpush1.msra.mxu0 0.0
        %2675 = vmatprep.subr.mxu0 0.0
        %2676 = vmatpush1.msra.mxu0 0.0
        %2677 = vmatprep.subr.mxu0 0.0
        %2678 = vmatpush1.msra.mxu0 0.0
        %2679 = vmatprep.subr.mxu0 0.0
        %2680 = vmatpush1.msra.mxu0 0.0
        %2681 = vmatprep.mubr.f32.mxu0 0.0
        %2682 = vmatmul.mubr.f32.gmra.mrb[0].mxu0 %v2585
        %v2683 = vpop.f32.mrb[0].mxu0
        %v2684 = vadd.f32 %v1122, %v2683
        %v2685 = vpop.f32.mrb[0].mxu0
        %2686 = vmatprep.mubr.f32.mxu0 0.0
        %2687 = vmatmul.mubr.f32.gmra.mrb[0].mxu0 %v2587
        %v2688 = vpop.f32.mrb[0].mxu0
        %v2689 = vadd.f32 %v1122, %v2688
        %v2690 = vpop.f32.mrb[0].mxu0
        %2691 = vmatprep.mubr.f32.mxu0 0.0
        %2692 = vmatmul.mubr.f32.gmra.mrb[0].mxu0 %v2589
        %v2693 = vpop.f32.mrb[0].mxu0
        %v2694 = vadd.f32 %v1122, %v2693
        %v2695 = vpop.f32.mrb[0].mxu0
        %2696 = vmatprep.mubr.f32.mxu0 0.0
        %2697 = vmatmul.mubr.f32.gmra.mrb[0].mxu0 %v2591
        %v2698 = vpop.f32.mrb[0].mxu0
        %v2699 = vadd.f32 %v1122, %v2698
        %v2700 = vpop.f32.mrb[0].mxu0
        %2701 = vmatprep.mubr.f32.mxu0 0.0
        %2702 = vmatmul.mubr.f32.gmra.mrb[0].mxu0 %v2593
        %v2703 = vpop.f32.mrb[0].mxu0
        %v2704 = vadd.f32 %v1122, %v2703
        %v2705 = vpop.f32.mrb[0].mxu0
        %2706 = vmatprep.mubr.f32.mxu0 0.0
        %2707 = vmatmul.mubr.f32.gmra.mrb[0].mxu0 %v2595
        %v2708 = vpop.f32.mrb[0].mxu0
        %v2709 = vadd.f32 %v1122, %v2708
        %v2710 = vpop.f32.mrb[0].mxu0
        %2711 = vmatprep.mubr.f32.mxu0 0.0
        %2712 = vmatmul.mubr.f32.gmra.mrb[0].mxu0 %v2597
        %v2713 = vpop.f32.mrb[0].mxu0
        %v2714 = vadd.f32 %v1122, %v2713
        %v2715 = vpop.f32.mrb[0].mxu0
        %2716 = vmatprep.mubr.f32.mxu0 0.0
        %2717 = vmatmul.mubr.f32.gmra.mrb[0].mxu0 %v2599
        %v2718 = vpop.f32.mrb[0].mxu0
        %v2719 = vadd.f32 %v1122, %v2718
        %v2720 = vpop.f32.mrb[0].mxu0
        %2721 = vmatprep.mubr.f32.mxu0 0.0
        %2722 = vmatmul.mubr.f32.gmra.mrb[0].mxu0 %v2601
        %v2723 = vpop.f32.mrb[0].mxu0
        %v2724 = vadd.f32 %v1122, %v2723
        %v2725 = vpop.f32.mrb[0].mxu0
        %2726 = vmatprep.mubr.f32.mxu0 0.0
        %2727 = vmatmul.mubr.f32.gmra.mrb[0].mxu0 %v2603
        %v2728 = vpop.f32.mrb[0].mxu0
        %v2729 = vadd.f32 %v1122, %v2728
        %v2730 = vpop.f32.mrb[0].mxu0
        %2731 = vmatprep.mubr.f32.mxu0 0.0
        %2732 = vmatmul.mubr.f32.gmra.mrb[0].mxu0 %v2605
        %v2733 = vpop.f32.mrb[0].mxu0
        %v2734 = vadd.f32 %v1122, %v2733
        %v2735 = vpop.f32.mrb[0].mxu0
        %2736 = vmatprep.mubr.f32.mxu0 0.0
        %2737 = vmatmul.mubr.f32.gmra.mrb[0].mxu0 %v2607
        %v2738 = vpop.f32.mrb[0].mxu0
        %v2739 = vadd.f32 %v1122, %v2738
        %v2740 = vpop.f32.mrb[0].mxu0
        %2741 = vmatprep.mubr.f32.mxu0 0.0
        %2742 = vmatmul.mubr.f32.gmra.mrb[0].mxu0 %v2609
        %v2743 = vpop.f32.mrb[0].mxu0
        %v2744 = vadd.f32 %v1122, %v2743
        %v2745 = vpop.f32.mrb[0].mxu0
        %2746 = vmatprep.mubr.f32.mxu0 0.0
        %2747 = vmatmul.mubr.f32.gmra.mrb[0].mxu0 %v2611
        %v2748 = vpop.f32.mrb[0].mxu0
        %v2749 = vadd.f32 %v1122, %v2748
        %v2750 = vpop.f32.mrb[0].mxu0
        %2751 = vmatprep.mubr.f32.mxu0 0.0
        %2752 = vmatmul.mubr.f32.gmra.mrb[0].mxu0 %v2613
        %v2753 = vpop.f32.mrb[0].mxu0
        %v2754 = vadd.f32 %v1122, %v2753
        %v2755 = vpop.f32.mrb[0].mxu0
        %2756 = vmatprep.mubr.f32.mxu0 0.0
        %2757 = vmatmul.mubr.f32.gmra.mrb[0].mxu0 %v2615
        %v2758 = vpop.f32.mrb[0].mxu0
        %v2759 = vadd.f32 %v1122, %v2758
        %v2760 = vpop.f32.mrb[0].mxu0
        %2761 = vdwg.mxu0
        %2778 = vrot.lane.b32.xlu0 %v2684, 96
        %v2779 = vpop.permute.xlu0 %2778
        %2780 = vrot.lane.b32.xlu0 %v2689, 96
        %v2781 = vpop.permute.xlu0 %2780
        %2782 = vrot.lane.b32.xlu0 %v2694, 96
        %v2783 = vpop.permute.xlu0 %2782
        %2784 = vrot.lane.b32.xlu0 %v2699, 96
        %v2785 = vpop.permute.xlu0 %2784
        %2786 = vrot.lane.b32.xlu0 %v2704, 96
        %v2787 = vpop.permute.xlu0 %2786
        %2788 = vrot.lane.b32.xlu0 %v2709, 96
        %v2789 = vpop.permute.xlu0 %2788
        %2790 = vrot.lane.b32.xlu0 %v2714, 96
        %v2791 = vpop.permute.xlu0 %2790
        %2792 = vrot.lane.b32.xlu0 %v2719, 96
        %v2793 = vpop.permute.xlu0 %2792
        %2794 = vrot.lane.b32.xlu0 %v2724, 96
        %v2795 = vpop.permute.xlu0 %2794
        %2796 = vrot.lane.b32.xlu0 %v2729, 96
        %v2797 = vpop.permute.xlu0 %2796
        %2798 = vrot.lane.b32.xlu0 %v2734, 96
        %v2799 = vpop.permute.xlu0 %2798
        %2800 = vrot.lane.b32.xlu0 %v2739, 96
        %v2801 = vpop.permute.xlu0 %2800
        %2802 = vrot.lane.b32.xlu0 %v2744, 96
        %v2803 = vpop.permute.xlu0 %2802
        %2804 = vrot.lane.b32.xlu0 %v2749, 96
        %v2805 = vpop.permute.xlu0 %2804
        %2806 = vrot.lane.b32.xlu0 %v2754, 96
        %v2807 = vpop.permute.xlu0 %2806
        %2808 = vrot.lane.b32.xlu0 %v2759, 96
        %v2809 = vpop.permute.xlu0 %2808
        %v2826 = vadd.f32 %v2521, %v2779
        %v2827 = vadd.f32 %v2523, %v2781
        %v2828 = vadd.f32 %v2525, %v2783
        %v2829 = vadd.f32 %v2527, %v2785
        %v2830 = vadd.f32 %v2529, %v2787
        %v2831 = vadd.f32 %v2531, %v2789
        %v2832 = vadd.f32 %v2533, %v2791
        %v2833 = vadd.f32 %v2535, %v2793
        %v2834 = vadd.f32 %v2537, %v2795
        %v2835 = vadd.f32 %v2539, %v2797
        %v2836 = vadd.f32 %v2541, %v2799
        %v2837 = vadd.f32 %v2543, %v2801
        %v2838 = vadd.f32 %v2545, %v2803
        %v2839 = vadd.f32 %v2547, %v2805
        %v2840 = vadd.f32 %v2549, %v2807
        %v2841 = vadd.f32 %v2551, %v2809
        %v2842 = vxor.u32 %v2826, 2147483648
        %v2843 = vxor.u32 %v2827, 2147483648
        %v2844 = vxor.u32 %v2828, 2147483648
        %v2845 = vxor.u32 %v2829, 2147483648
        %v2846 = vxor.u32 %v2830, 2147483648
        %v2847 = vxor.u32 %v2831, 2147483648
        %v2848 = vxor.u32 %v2832, 2147483648
        %v2849 = vxor.u32 %v2833, 2147483648
        %v2850 = vxor.u32 %v2834, 2147483648
        %v2851 = vxor.u32 %v2835, 2147483648
        %v2852 = vxor.u32 %v2836, 2147483648
        %v2853 = vxor.u32 %v2837, 2147483648
        %v2854 = vxor.u32 %v2838, 2147483648
        %v2855 = vxor.u32 %v2839, 2147483648
        %v2856 = vxor.u32 %v2840, 2147483648
        %v2857 = vxor.u32 %v2841, 2147483648
        %v2858 = vmul.f32 %v2842, 1.442695
        %v2859 = vpow.pop %v2858
        %v2860 = vmul.f32 %v2843, 1.442695
        %v2861 = vpow.pop %v2860
        %v2862 = vmul.f32 %v2844, 1.442695
        %v2863 = vpow.pop %v2862
        %v2864 = vmul.f32 %v2845, 1.442695
        %v2865 = vpow.pop %v2864
        %v2866 = vmul.f32 %v2846, 1.442695
        %v2867 = vpow.pop %v2866
        %v2868 = vmul.f32 %v2847, 1.442695
        %v2869 = vpow.pop %v2868
        %v2870 = vmul.f32 %v2848, 1.442695
        %v2871 = vpow.pop %v2870
        %v2872 = vmul.f32 %v2849, 1.442695
        %v2873 = vpow.pop %v2872
        %v2874 = vmul.f32 %v2850, 1.442695
        %v2875 = vpow.pop %v2874
        %v2876 = vmul.f32 %v2851, 1.442695
        %v2877 = vpow.pop %v2876
        %v2878 = vmul.f32 %v2852, 1.442695
        %v2879 = vpow.pop %v2878
        %v2880 = vmul.f32 %v2853, 1.442695
        %v2881 = vpow.pop %v2880
        %v2882 = vmul.f32 %v2854, 1.442695
        %v2883 = vpow.pop %v2882
        %v2884 = vmul.f32 %v2855, 1.442695
        %v2885 = vpow.pop %v2884
        %v2886 = vmul.f32 %v2856, 1.442695
        %v2887 = vpow.pop %v2886
        %v2888 = vmul.f32 %v2857, 1.442695
        %v2889 = vpow.pop %v2888
        %v2890 = vadd.f32 %v2859, 1.0
        %v2891 = vadd.f32 %v2861, 1.0
        %v2892 = vadd.f32 %v2863, 1.0
        %v2893 = vadd.f32 %v2865, 1.0
        %v2894 = vadd.f32 %v2867, 1.0
        %v2895 = vadd.f32 %v2869, 1.0
        %v2896 = vadd.f32 %v2871, 1.0
        %v2897 = vadd.f32 %v2873, 1.0
        %v2898 = vadd.f32 %v2875, 1.0
        %v2899 = vadd.f32 %v2877, 1.0
        %v2900 = vadd.f32 %v2879, 1.0
        %v2901 = vadd.f32 %v2881, 1.0
        %v2902 = vadd.f32 %v2883, 1.0
        %v2903 = vadd.f32 %v2885, 1.0
        %v2904 = vadd.f32 %v2887, 1.0
        %v2905 = vadd.f32 %v2889, 1.0
        %v2906 = vrcp.pop %v2890
        %v2907 = vmul.f32 1.0, %v2906
        %v2908 = vrcp.pop %v2891
        %v2909 = vmul.f32 1.0, %v2908
        %v2910 = vrcp.pop %v2892
        %v2911 = vmul.f32 1.0, %v2910
        %v2912 = vrcp.pop %v2893
        %v2913 = vmul.f32 1.0, %v2912
        %v2914 = vrcp.pop %v2894
        %v2915 = vmul.f32 1.0, %v2914
        %v2916 = vrcp.pop %v2895
        %v2917 = vmul.f32 1.0, %v2916
        %v2918 = vrcp.pop %v2896
        %v2919 = vmul.f32 1.0, %v2918
        %v2920 = vrcp.pop %v2897
        %v2921 = vmul.f32 1.0, %v2920
        %v2922 = vrcp.pop %v2898
        %v2923 = vmul.f32 1.0, %v2922
        %v2924 = vrcp.pop %v2899
        %v2925 = vmul.f32 1.0, %v2924
        %v2926 = vrcp.pop %v2900
        %v2927 = vmul.f32 1.0, %v2926
        %v2928 = vrcp.pop %v2901
        %v2929 = vmul.f32 1.0, %v2928
        %v2930 = vrcp.pop %v2902
        %v2931 = vmul.f32 1.0, %v2930
        %v2932 = vrcp.pop %v2903
        %v2933 = vmul.f32 1.0, %v2932
        %v2934 = vrcp.pop %v2904
        %v2935 = vmul.f32 1.0, %v2934
        %v2936 = vrcp.pop %v2905
        %v2937 = vmul.f32 1.0, %v2936
        %2938 = vrot.lane.b32.xlu0 %v2684, 64
        %v2939 = vpop.permute.xlu0 %2938
        %2940 = vrot.lane.b32.xlu0 %v2689, 64
        %v2941 = vpop.permute.xlu0 %2940
        %2942 = vrot.lane.b32.xlu0 %v2694, 64
        %v2943 = vpop.permute.xlu0 %2942
        %2944 = vrot.lane.b32.xlu0 %v2699, 64
        %v2945 = vpop.permute.xlu0 %2944
        %2946 = vrot.lane.b32.xlu0 %v2704, 64
        %v2947 = vpop.permute.xlu0 %2946
        %2948 = vrot.lane.b32.xlu0 %v2709, 64
        %v2949 = vpop.permute.xlu0 %2948
        %2950 = vrot.lane.b32.xlu0 %v2714, 64
        %v2951 = vpop.permute.xlu0 %2950
        %2952 = vrot.lane.b32.xlu0 %v2719, 64
        %v2953 = vpop.permute.xlu0 %2952
        %2954 = vrot.lane.b32.xlu0 %v2724, 64
        %v2955 = vpop.permute.xlu0 %2954
        %2956 = vrot.lane.b32.xlu0 %v2729, 64
        %v2957 = vpop.permute.xlu0 %2956
        %2958 = vrot.lane.b32.xlu0 %v2734, 64
        %v2959 = vpop.permute.xlu0 %2958
        %2960 = vrot.lane.b32.xlu0 %v2739, 64
        %v2961 = vpop.permute.xlu0 %2960
        %2962 = vrot.lane.b32.xlu0 %v2744, 64
        %v2963 = vpop.permute.xlu0 %2962
        %2964 = vrot.lane.b32.xlu0 %v2749, 64
        %v2965 = vpop.permute.xlu0 %2964
        %2966 = vrot.lane.b32.xlu0 %v2754, 64
        %v2967 = vpop.permute.xlu0 %2966
        %2968 = vrot.lane.b32.xlu0 %v2759, 64
        %v2969 = vpop.permute.xlu0 %2968
        %v2986 = vmul.f32 %v2907, %v2939
        %v2987 = vmul.f32 %v2909, %v2941
        %v2988 = vmul.f32 %v2911, %v2943
        %v2989 = vmul.f32 %v2913, %v2945
        %v2990 = vmul.f32 %v2915, %v2947
        %v2991 = vmul.f32 %v2917, %v2949
        %v2992 = vmul.f32 %v2919, %v2951
        %v2993 = vmul.f32 %v2921, %v2953
        %v2994 = vmul.f32 %v2923, %v2955
        %v2995 = vmul.f32 %v2925, %v2957
        %v2996 = vmul.f32 %v2927, %v2959
        %v2997 = vmul.f32 %v2929, %v2961
        %v2998 = vmul.f32 %v2931, %v2963
        %v2999 = vmul.f32 %v2933, %v2965
        %v3000 = vmul.f32 %v2935, %v2967
        %v3001 = vmul.f32 %v2937, %v2969
        %3018 = vrot.lane.b32.xlu0 %v2986, 32
        %v3019 = vpop.permute.xlu0 %3018
        %3020 = vrot.lane.b32.xlu0 %v2987, 32
        %v3021 = vpop.permute.xlu0 %3020
        %3022 = vrot.lane.b32.xlu0 %v2988, 32
        %v3023 = vpop.permute.xlu0 %3022
        %3024 = vrot.lane.b32.xlu0 %v2989, 32
        %v3025 = vpop.permute.xlu0 %3024
        %3026 = vrot.lane.b32.xlu0 %v2990, 32
        %v3027 = vpop.permute.xlu0 %3026
        %3028 = vrot.lane.b32.xlu0 %v2991, 32
        %v3029 = vpop.permute.xlu0 %3028
        %3030 = vrot.lane.b32.xlu0 %v2992, 32
        %v3031 = vpop.permute.xlu0 %3030
        %3032 = vrot.lane.b32.xlu0 %v2993, 32
        %v3033 = vpop.permute.xlu0 %3032
        %3034 = vrot.lane.b32.xlu0 %v2994, 32
        %v3035 = vpop.permute.xlu0 %3034
        %3036 = vrot.lane.b32.xlu0 %v2995, 32
        %v3037 = vpop.permute.xlu0 %3036
        %3038 = vrot.lane.b32.xlu0 %v2996, 32
        %v3039 = vpop.permute.xlu0 %3038
        %3040 = vrot.lane.b32.xlu0 %v2997, 32
        %v3041 = vpop.permute.xlu0 %3040
        %3042 = vrot.lane.b32.xlu0 %v2998, 32
        %v3043 = vpop.permute.xlu0 %3042
        %3044 = vrot.lane.b32.xlu0 %v2999, 32
        %v3045 = vpop.permute.xlu0 %3044
        %3046 = vrot.lane.b32.xlu0 %v3000, 32
        %v3047 = vpop.permute.xlu0 %3046
        %3048 = vrot.lane.b32.xlu0 %v3001, 32
        %v3049 = vpop.permute.xlu0 %3048
        %v3066 = vadd.f32 %v2522, %v3019
        %v3067 = vadd.f32 %v2524, %v3021
        %v3068 = vadd.f32 %v2526, %v3023
        %v3069 = vadd.f32 %v2528, %v3025
        %v3070 = vadd.f32 %v2530, %v3027
        %v3071 = vadd.f32 %v2532, %v3029
        %v3072 = vadd.f32 %v2534, %v3031
        %v3073 = vadd.f32 %v2536, %v3033
        %v3074 = vadd.f32 %v2538, %v3035
        %v3075 = vadd.f32 %v2540, %v3037
        %v3076 = vadd.f32 %v2542, %v3039
        %v3077 = vadd.f32 %v2544, %v3041
        %v3078 = vadd.f32 %v2546, %v3043
        %v3079 = vadd.f32 %v2548, %v3045
        %v3080 = vadd.f32 %v2550, %v3047
        %v3081 = vadd.f32 %v2552, %v3049
        %v3082 = vtanh.pop %v3066
        %v3083 = vtanh.pop %v3067
        %v3084 = vtanh.pop %v3068
        %v3085 = vtanh.pop %v3069
        %v3086 = vtanh.pop %v3070
        %v3087 = vtanh.pop %v3071
        %v3088 = vtanh.pop %v3072
        %v3089 = vtanh.pop %v3073
        %v3090 = vtanh.pop %v3074
        %v3091 = vtanh.pop %v3075
        %v3092 = vtanh.pop %v3076
        %v3093 = vtanh.pop %v3077
        %v3094 = vtanh.pop %v3078
        %v3095 = vtanh.pop %v3079
        %v3096 = vtanh.pop %v3080
        %v3097 = vtanh.pop %v3081
        %v3098 = vsub.f32 1.0, %v2907
        %v3099 = vsub.f32 1.0, %v2909
        %v3100 = vsub.f32 1.0, %v2911
        %v3101 = vsub.f32 1.0, %v2913
        %v3102 = vsub.f32 1.0, %v2915
        %v3103 = vsub.f32 1.0, %v2917
        %v3104 = vsub.f32 1.0, %v2919
        %v3105 = vsub.f32 1.0, %v2921
        %v3106 = vsub.f32 1.0, %v2923
        %v3107 = vsub.f32 1.0, %v2925
        %v3108 = vsub.f32 1.0, %v2927
        %v3109 = vsub.f32 1.0, %v2929
        %v3110 = vsub.f32 1.0, %v2931
        %v3111 = vsub.f32 1.0, %v2933
        %v3112 = vsub.f32 1.0, %v2935
        %v3113 = vsub.f32 1.0, %v2937
        %3130 = vrot.lane.b32.xlu0 %v3082, 112
        %v3131 = vpop.permute.xlu0 %3130
        %3132 = vrot.lane.b32.xlu0 %v3083, 112
        %v3133 = vpop.permute.xlu0 %3132
        %3134 = vrot.lane.b32.xlu0 %v3084, 112
        %v3135 = vpop.permute.xlu0 %3134
        %3136 = vrot.lane.b32.xlu0 %v3085, 112
        %v3137 = vpop.permute.xlu0 %3136
        %3138 = vrot.lane.b32.xlu0 %v3086, 112
        %v3139 = vpop.permute.xlu0 %3138
        %3140 = vrot.lane.b32.xlu0 %v3087, 112
        %v3141 = vpop.permute.xlu0 %3140
        %3142 = vrot.lane.b32.xlu0 %v3088, 112
        %v3143 = vpop.permute.xlu0 %3142
        %3144 = vrot.lane.b32.xlu0 %v3089, 112
        %v3145 = vpop.permute.xlu0 %3144
        %3146 = vrot.lane.b32.xlu0 %v3090, 112
        %v3147 = vpop.permute.xlu0 %3146
        %3148 = vrot.lane.b32.xlu0 %v3091, 112
        %v3149 = vpop.permute.xlu0 %3148
        %3150 = vrot.lane.b32.xlu0 %v3092, 112
        %v3151 = vpop.permute.xlu0 %3150
        %3152 = vrot.lane.b32.xlu0 %v3093, 112
        %v3153 = vpop.permute.xlu0 %3152
        %3154 = vrot.lane.b32.xlu0 %v3094, 112
        %v3155 = vpop.permute.xlu0 %3154
        %3156 = vrot.lane.b32.xlu0 %v3095, 112
        %v3157 = vpop.permute.xlu0 %3156
        %3158 = vrot.lane.b32.xlu0 %v3096, 112
        %v3159 = vpop.permute.xlu0 %3158
        %3160 = vrot.lane.b32.xlu0 %v3097, 112
        %v3161 = vpop.permute.xlu0 %3160
        %v3178 = vmul.f32 %v3098, %v3131
        %v3179 = vmul.f32 %v3099, %v3133
        %v3180 = vmul.f32 %v3100, %v3135
        %v3181 = vmul.f32 %v3101, %v3137
        %v3182 = vmul.f32 %v3102, %v3139
        %v3183 = vmul.f32 %v3103, %v3141
        %v3184 = vmul.f32 %v3104, %v3143
        %v3185 = vmul.f32 %v3105, %v3145
        %v3186 = vmul.f32 %v3106, %v3147
        %v3187 = vmul.f32 %v3107, %v3149
        %v3188 = vmul.f32 %v3108, %v3151
        %v3189 = vmul.f32 %v3109, %v3153
        %v3190 = vmul.f32 %v3110, %v3155
        %v3191 = vmul.f32 %v3111, %v3157
        %v3192 = vmul.f32 %v3112, %v3159
        %v3193 = vmul.f32 %v3113, %v3161
        %3194 = vrot.lane.b32.xlu0 %v2425, 48
        %v3195 = vpop.permute.xlu0 %3194
        %3196 = vrot.lane.b32.xlu0 %v2426, 48
        %v3197 = vpop.permute.xlu0 %3196
        %3198 = vrot.lane.b32.xlu0 %v2427, 48
        %v3199 = vpop.permute.xlu0 %3198
        %3200 = vrot.lane.b32.xlu0 %v2428, 48
        %v3201 = vpop.permute.xlu0 %3200
        %3202 = vrot.lane.b32.xlu0 %v2429, 48
        %v3203 = vpop.permute.xlu0 %3202
        %3204 = vrot.lane.b32.xlu0 %v2430, 48
        %v3205 = vpop.permute.xlu0 %3204
        %3206 = vrot.lane.b32.xlu0 %v2431, 48
        %v3207 = vpop.permute.xlu0 %3206
        %3208 = vrot.lane.b32.xlu0 %v2432, 48
        %v3209 = vpop.permute.xlu0 %3208
        %3210 = vrot.lane.b32.xlu0 %v2433, 48
        %v3211 = vpop.permute.xlu0 %3210
        %3212 = vrot.lane.b32.xlu0 %v2434, 48
        %v3213 = vpop.permute.xlu0 %3212
        %3214 = vrot.lane.b32.xlu0 %v2435, 48
        %v3215 = vpop.permute.xlu0 %3214
        %3216 = vrot.lane.b32.xlu0 %v2436, 48
        %v3217 = vpop.permute.xlu0 %3216
        %3218 = vrot.lane.b32.xlu0 %v2437, 48
        %v3219 = vpop.permute.xlu0 %3218
        %3220 = vrot.lane.b32.xlu0 %v2438, 48
        %v3221 = vpop.permute.xlu0 %3220
        %3222 = vrot.lane.b32.xlu0 %v2439, 48
        %v3223 = vpop.permute.xlu0 %3222
        %3224 = vrot.lane.b32.xlu0 %v2440, 48
        %v3225 = vpop.permute.xlu0 %3224
        %v3242 = vmul.f32 %v2907, %v3195
        %v3243 = vmul.f32 %v2909, %v3197
        %v3244 = vmul.f32 %v2911, %v3199
        %v3245 = vmul.f32 %v2913, %v3201
        %v3246 = vmul.f32 %v2915, %v3203
        %v3247 = vmul.f32 %v2917, %v3205
        %v3248 = vmul.f32 %v2919, %v3207
        %v3249 = vmul.f32 %v2921, %v3209
        %v3250 = vmul.f32 %v2923, %v3211
        %v3251 = vmul.f32 %v2925, %v3213
        %v3252 = vmul.f32 %v2927, %v3215
        %v3253 = vmul.f32 %v2929, %v3217
        %v3254 = vmul.f32 %v2931, %v3219
        %v3255 = vmul.f32 %v2933, %v3221
        %v3256 = vmul.f32 %v2935, %v3223
        %v3257 = vmul.f32 %v2937, %v3225
        %v3258 = vadd.f32 %v3178, %v3242
        %v3259 = vadd.f32 %v3179, %v3243
        %v3260 = vadd.f32 %v3180, %v3244
        %v3261 = vadd.f32 %v3181, %v3245
        %v3262 = vadd.f32 %v3182, %v3246
        %v3263 = vadd.f32 %v3183, %v3247
        %v3264 = vadd.f32 %v3184, %v3248
        %v3265 = vadd.f32 %v3185, %v3249
        %v3266 = vadd.f32 %v3186, %v3250
        %v3267 = vadd.f32 %v3187, %v3251
        %v3268 = vadd.f32 %v3188, %v3252
        %v3269 = vadd.f32 %v3189, %v3253
        %v3270 = vadd.f32 %v3190, %v3254
        %v3271 = vadd.f32 %v3191, %v3255
        %v3272 = vadd.f32 %v3192, %v3256
        %v3273 = vadd.f32 %v3193, %v3257
        %3290 = vrot.lane.b32.xlu0 %v3258, 32
        %v3291 = vpop.permute.xlu0 %3290
        %3292 = vrot.lane.b32.xlu0 %v3259, 32
        %v3293 = vpop.permute.xlu0 %3292
        %3294 = vrot.lane.b32.xlu0 %v3260, 32
        %v3295 = vpop.permute.xlu0 %3294
        %3296 = vrot.lane.b32.xlu0 %v3261, 32
        %v3297 = vpop.permute.xlu0 %3296
        %3298 = vrot.lane.b32.xlu0 %v3262, 32
        %v3299 = vpop.permute.xlu0 %3298
        %3300 = vrot.lane.b32.xlu0 %v3263, 32
        %v3301 = vpop.permute.xlu0 %3300
        %3302 = vrot.lane.b32.xlu0 %v3264, 32
        %v3303 = vpop.permute.xlu0 %3302
        %3304 = vrot.lane.b32.xlu0 %v3265, 32
        %v3305 = vpop.permute.xlu0 %3304
        %3306 = vrot.lane.b32.xlu0 %v3266, 32
        %v3307 = vpop.permute.xlu0 %3306
        %3308 = vrot.lane.b32.xlu0 %v3267, 32
        %v3309 = vpop.permute.xlu0 %3308
        %3310 = vrot.lane.b32.xlu0 %v3268, 32
        %v3311 = vpop.permute.xlu0 %3310
        %3312 = vrot.lane.b32.xlu0 %v3269, 32
        %v3313 = vpop.permute.xlu0 %3312
        %3314 = vrot.lane.b32.xlu0 %v3270, 32
        %v3315 = vpop.permute.xlu0 %3314
        %3316 = vrot.lane.b32.xlu0 %v3271, 32
        %v3317 = vpop.permute.xlu0 %3316
        %3318 = vrot.lane.b32.xlu0 %v3272, 32
        %v3319 = vpop.permute.xlu0 %3318
        %3320 = vrot.lane.b32.xlu0 %v3273, 32
        %v3321 = vpop.permute.xlu0 %3320
        %v3338 = vadd.f32 %v2505, %v3291
        %v3339 = vadd.f32 %v2506, %v3293
        %v3340 = vadd.f32 %v2507, %v3295
        %v3341 = vadd.f32 %v2508, %v3297
        %v3342 = vadd.f32 %v2509, %v3299
        %v3343 = vadd.f32 %v2510, %v3301
        %v3344 = vadd.f32 %v2511, %v3303
        %v3345 = vadd.f32 %v2512, %v3305
        %v3346 = vadd.f32 %v2513, %v3307
        %v3347 = vadd.f32 %v2514, %v3309
        %v3348 = vadd.f32 %v2515, %v3311
        %v3349 = vadd.f32 %v2516, %v3313
        %v3350 = vadd.f32 %v2517, %v3315
        %v3351 = vadd.f32 %v2518, %v3317
        %v3352 = vadd.f32 %v2519, %v3319
        %v3353 = vadd.f32 %v2520, %v3321
        %3354 = vrot.lane.b32.xlu0 %v3258, 16
        %v3355 = vpop.permute.xlu0 %3354
        %3356 = vrot.lane.b32.xlu0 %v3259, 16
        %v3357 = vpop.permute.xlu0 %3356
        %3358 = vrot.lane.b32.xlu0 %v3260, 16
        %v3359 = vpop.permute.xlu0 %3358
        %3360 = vrot.lane.b32.xlu0 %v3261, 16
        %v3361 = vpop.permute.xlu0 %3360
        %3362 = vrot.lane.b32.xlu0 %v3262, 16
        %v3363 = vpop.permute.xlu0 %3362
        %3364 = vrot.lane.b32.xlu0 %v3263, 16
        %v3365 = vpop.permute.xlu0 %3364
        %3366 = vrot.lane.b32.xlu0 %v3264, 16
        %v3367 = vpop.permute.xlu0 %3366
        %3368 = vrot.lane.b32.xlu0 %v3265, 16
        %v3369 = vpop.permute.xlu0 %3368
        %3370 = vrot.lane.b32.xlu0 %v3266, 16
        %v3371 = vpop.permute.xlu0 %3370
        %3372 = vrot.lane.b32.xlu0 %v3267, 16
        %v3373 = vpop.permute.xlu0 %3372
        %3374 = vrot.lane.b32.xlu0 %v3268, 16
        %v3375 = vpop.permute.xlu0 %3374
        %3376 = vrot.lane.b32.xlu0 %v3269, 16
        %v3377 = vpop.permute.xlu0 %3376
        %3378 = vrot.lane.b32.xlu0 %v3270, 16
        %v3379 = vpop.permute.xlu0 %3378
        %3380 = vrot.lane.b32.xlu0 %v3271, 16
        %v3381 = vpop.permute.xlu0 %3380
        %3382 = vrot.lane.b32.xlu0 %v3272, 16
        %v3383 = vpop.permute.xlu0 %3382
        %3384 = vrot.lane.b32.xlu0 %v3273, 16
        %v3385 = vpop.permute.xlu0 %3384
        %v3386 = vsel %vm438, %v3355, 0
        %v3388 = vsel %vm438, %v3357, 0
        %v3390 = vsel %vm438, %v3359, 0
        %v3392 = vsel %vm438, %v3361, 0
        %v3394 = vsel %vm438, %v3363, 0
        %v3396 = vsel %vm438, %v3365, 0
        %v3398 = vsel %vm438, %v3367, 0
        %v3400 = vsel %vm438, %v3369, 0
        %v3402 = vsel %vm438, %v3371, 0
        %v3404 = vsel %vm438, %v3373, 0
        %v3406 = vsel %vm438, %v3375, 0
        %v3408 = vsel %vm438, %v3377, 0
        %v3410 = vsel %vm438, %v3379, 0
        %v3412 = vsel %vm438, %v3381, 0
        %v3414 = vsel %vm438, %v3383, 0
        %v3416 = vsel %vm438, %v3385, 0
        %3418 = vmatprep.subr.mxu0 0.0
        %3419 = vmatpush1.msra.mxu0 %v1099
        %3420 = vmatprep.subr.mxu0 0.0
        %3421 = vmatpush1.msra.mxu0 %v1100
        %3422 = vmatprep.subr.mxu0 0.0
        %3423 = vmatpush1.msra.mxu0 0.0
        %3424 = vmatprep.subr.mxu0 0.0
        %3425 = vmatpush1.msra.mxu0 0.0
        %3426 = vmatprep.subr.mxu0 0.0
        %3427 = vmatpush1.msra.mxu0 0.0
        %3428 = vmatprep.subr.mxu0 0.0
        %3429 = vmatpush1.msra.mxu0 0.0
        %3430 = vmatprep.subr.mxu0 0.0
        %3431 = vmatpush1.msra.mxu0 0.0
        %3432 = vmatprep.subr.mxu0 0.0
        %3433 = vmatpush1.msra.mxu0 0.0
        %3434 = vmatprep.subr.mxu0 0.0
        %3435 = vmatpush1.msra.mxu0 0.0
        %3436 = vmatprep.subr.mxu0 0.0
        %3437 = vmatpush1.msra.mxu0 0.0
        %3438 = vmatprep.subr.mxu0 0.0
        %3439 = vmatpush1.msra.mxu0 0.0
        %3440 = vmatprep.subr.mxu0 0.0
        %3441 = vmatpush1.msra.mxu0 0.0
        %3442 = vmatprep.subr.mxu0 0.0
        %3443 = vmatpush1.msra.mxu0 0.0
        %3444 = vmatprep.subr.mxu0 0.0
        %3445 = vmatpush1.msra.mxu0 0.0
        %3446 = vmatprep.subr.mxu0 0.0
        %3447 = vmatpush1.msra.mxu0 0.0
        %3448 = vmatprep.subr.mxu0 0.0
        %3449 = vmatpush1.msra.mxu0 0.0
        %3450 = vmatprep.subr.mxu0 0.0
        %3451 = vmatpush1.msra.mxu0 0.0
        %3452 = vmatprep.subr.mxu0 0.0
        %3453 = vmatpush1.msra.mxu0 0.0
        %3454 = vmatprep.subr.mxu0 0.0
        %3455 = vmatpush1.msra.mxu0 0.0
        %3456 = vmatprep.subr.mxu0 0.0
        %3457 = vmatpush1.msra.mxu0 0.0
        %3458 = vmatprep.subr.mxu0 0.0
        %3459 = vmatpush1.msra.mxu0 0.0
        %3460 = vmatprep.subr.mxu0 0.0
        %3461 = vmatpush1.msra.mxu0 0.0
        %3462 = vmatprep.subr.mxu0 0.0
        %3463 = vmatpush1.msra.mxu0 0.0
        %3464 = vmatprep.subr.mxu0 0.0
        %3465 = vmatpush1.msra.mxu0 0.0
        %3466 = vmatprep.subr.mxu0 0.0
        %3467 = vmatpush1.msra.mxu0 0.0
        %3468 = vmatprep.subr.mxu0 0.0
        %3469 = vmatpush1.msra.mxu0 0.0
        %3470 = vmatprep.subr.mxu0 0.0
        %3471 = vmatpush1.msra.mxu0 0.0
        %3472 = vmatprep.subr.mxu0 0.0
        %3473 = vmatpush1.msra.mxu0 0.0
        %3474 = vmatprep.subr.mxu0 0.0
        %3475 = vmatpush1.msra.mxu0 0.0
        %3476 = vmatprep.subr.mxu0 0.0
        %3477 = vmatpush1.msra.mxu0 0.0
        %3478 = vmatprep.subr.mxu0 0.0
        %3479 = vmatpush1.msra.mxu0 0.0
        %3480 = vmatprep.subr.mxu0 0.0
        %3481 = vmatpush1.msra.mxu0 0.0
        %3482 = vmatprep.mubr.f32.mxu0 0.0
        %3483 = vmatmul.mubr.f32.gmra.mrb[0].mxu0 %v3386
        %v3484 = vpop.f32.mrb[0].mxu0
        %v3485 = vadd.f32 %v1122, %v3484
        %v3486 = vpop.f32.mrb[0].mxu0
        %3487 = vmatprep.mubr.f32.mxu0 0.0
        %3488 = vmatmul.mubr.f32.gmra.mrb[0].mxu0 %v3388
        %v3489 = vpop.f32.mrb[0].mxu0
        %v3490 = vadd.f32 %v1122, %v3489
        %v3491 = vpop.f32.mrb[0].mxu0
        %3492 = vmatprep.mubr.f32.mxu0 0.0
        %3493 = vmatmul.mubr.f32.gmra.mrb[0].mxu0 %v3390
        %v3494 = vpop.f32.mrb[0].mxu0
        %v3495 = vadd.f32 %v1122, %v3494
        %v3496 = vpop.f32.mrb[0].mxu0
        %3497 = vmatprep.mubr.f32.mxu0 0.0
        %3498 = vmatmul.mubr.f32.gmra.mrb[0].mxu0 %v3392
        %v3499 = vpop.f32.mrb[0].mxu0
        %v3500 = vadd.f32 %v1122, %v3499
        %v3501 = vpop.f32.mrb[0].mxu0
        %3502 = vmatprep.mubr.f32.mxu0 0.0
        %3503 = vmatmul.mubr.f32.gmra.mrb[0].mxu0 %v3394
        %v3504 = vpop.f32.mrb[0].mxu0
        %v3505 = vadd.f32 %v1122, %v3504
        %v3506 = vpop.f32.mrb[0].mxu0
        %3507 = vmatprep.mubr.f32.mxu0 0.0
        %3508 = vmatmul.mubr.f32.gmra.mrb[0].mxu0 %v3396
        %v3509 = vpop.f32.mrb[0].mxu0
        %v3510 = vadd.f32 %v1122, %v3509
        %v3511 = vpop.f32.mrb[0].mxu0
        %3512 = vmatprep.mubr.f32.mxu0 0.0
        %3513 = vmatmul.mubr.f32.gmra.mrb[0].mxu0 %v3398
        %v3514 = vpop.f32.mrb[0].mxu0
        %v3515 = vadd.f32 %v1122, %v3514
        %v3516 = vpop.f32.mrb[0].mxu0
        %3517 = vmatprep.mubr.f32.mxu0 0.0
        %3518 = vmatmul.mubr.f32.gmra.mrb[0].mxu0 %v3400
        %v3519 = vpop.f32.mrb[0].mxu0
        %v3520 = vadd.f32 %v1122, %v3519
        %v3521 = vpop.f32.mrb[0].mxu0
        %3522 = vmatprep.mubr.f32.mxu0 0.0
        %3523 = vmatmul.mubr.f32.gmra.mrb[0].mxu0 %v3402
        %v3524 = vpop.f32.mrb[0].mxu0
        %v3525 = vadd.f32 %v1122, %v3524
        %v3526 = vpop.f32.mrb[0].mxu0
        %3527 = vmatprep.mubr.f32.mxu0 0.0
        %3528 = vmatmul.mubr.f32.gmra.mrb[0].mxu0 %v3404
        %v3529 = vpop.f32.mrb[0].mxu0
        %v3530 = vadd.f32 %v1122, %v3529
        %v3531 = vpop.f32.mrb[0].mxu0
        %3532 = vmatprep.mubr.f32.mxu0 0.0
        %3533 = vmatmul.mubr.f32.gmra.mrb[0].mxu0 %v3406
        %v3534 = vpop.f32.mrb[0].mxu0
        %v3535 = vadd.f32 %v1122, %v3534
        %v3536 = vpop.f32.mrb[0].mxu0
        %3537 = vmatprep.mubr.f32.mxu0 0.0
        %3538 = vmatmul.mubr.f32.gmra.mrb[0].mxu0 %v3408
        %v3539 = vpop.f32.mrb[0].mxu0
        %v3540 = vadd.f32 %v1122, %v3539
        %v3541 = vpop.f32.mrb[0].mxu0
        %3542 = vmatprep.mubr.f32.mxu0 0.0
        %3543 = vmatmul.mubr.f32.gmra.mrb[0].mxu0 %v3410
        %v3544 = vpop.f32.mrb[0].mxu0
        %v3545 = vadd.f32 %v1122, %v3544
        %v3546 = vpop.f32.mrb[0].mxu0
        %3547 = vmatprep.mubr.f32.mxu0 0.0
        %3548 = vmatmul.mubr.f32.gmra.mrb[0].mxu0 %v3412
        %v3549 = vpop.f32.mrb[0].mxu0
        %v3550 = vadd.f32 %v1122, %v3549
        %v3551 = vpop.f32.mrb[0].mxu0
        %3552 = vmatprep.mubr.f32.mxu0 0.0
        %3553 = vmatmul.mubr.f32.gmra.mrb[0].mxu0 %v3414
        %v3554 = vpop.f32.mrb[0].mxu0
        %v3555 = vadd.f32 %v1122, %v3554
        %v3556 = vpop.f32.mrb[0].mxu0
        %3557 = vmatprep.mubr.f32.mxu0 0.0
        %3558 = vmatmul.mubr.f32.gmra.mrb[0].mxu0 %v3416
        %v3559 = vpop.f32.mrb[0].mxu0
        %v3560 = vadd.f32 %v1122, %v3559
        %v3561 = vpop.f32.mrb[0].mxu0
        %3562 = vdwg.mxu0
        %3579 = vrot.lane.b32.xlu0 %v3485, 16
        %v3580 = vpop.permute.xlu0 %3579
        %3581 = vrot.lane.b32.xlu0 %v3490, 16
        %v3582 = vpop.permute.xlu0 %3581
        %3583 = vrot.lane.b32.xlu0 %v3495, 16
        %v3584 = vpop.permute.xlu0 %3583
        %3585 = vrot.lane.b32.xlu0 %v3500, 16
        %v3586 = vpop.permute.xlu0 %3585
        %3587 = vrot.lane.b32.xlu0 %v3505, 16
        %v3588 = vpop.permute.xlu0 %3587
        %3589 = vrot.lane.b32.xlu0 %v3510, 16
        %v3590 = vpop.permute.xlu0 %3589
        %3591 = vrot.lane.b32.xlu0 %v3515, 16
        %v3592 = vpop.permute.xlu0 %3591
        %3593 = vrot.lane.b32.xlu0 %v3520, 16
        %v3594 = vpop.permute.xlu0 %3593
        %3595 = vrot.lane.b32.xlu0 %v3525, 16
        %v3596 = vpop.permute.xlu0 %3595
        %3597 = vrot.lane.b32.xlu0 %v3530, 16
        %v3598 = vpop.permute.xlu0 %3597
        %3599 = vrot.lane.b32.xlu0 %v3535, 16
        %v3600 = vpop.permute.xlu0 %3599
        %3601 = vrot.lane.b32.xlu0 %v3540, 16
        %v3602 = vpop.permute.xlu0 %3601
        %3603 = vrot.lane.b32.xlu0 %v3545, 16
        %v3604 = vpop.permute.xlu0 %3603
        %3605 = vrot.lane.b32.xlu0 %v3550, 16
        %v3606 = vpop.permute.xlu0 %3605
        %3607 = vrot.lane.b32.xlu0 %v3555, 16
        %v3608 = vpop.permute.xlu0 %3607
        %3609 = vrot.lane.b32.xlu0 %v3560, 16
        %v3610 = vpop.permute.xlu0 %3609
        %v3627 = vadd.f32 %v2522, %v3580
        %v3628 = vadd.f32 %v2524, %v3582
        %v3629 = vadd.f32 %v2526, %v3584
        %v3630 = vadd.f32 %v2528, %v3586
        %v3631 = vadd.f32 %v2530, %v3588
        %v3632 = vadd.f32 %v2532, %v3590
        %v3633 = vadd.f32 %v2534, %v3592
        %v3634 = vadd.f32 %v2536, %v3594
        %v3635 = vadd.f32 %v2538, %v3596
        %v3636 = vadd.f32 %v2540, %v3598
        %v3637 = vadd.f32 %v2542, %v3600
        %v3638 = vadd.f32 %v2544, %v3602
        %v3639 = vadd.f32 %v2546, %v3604
        %v3640 = vadd.f32 %v2548, %v3606
        %v3641 = vadd.f32 %v2550, %v3608
        %v3642 = vadd.f32 %v2552, %v3610
        %v3643 = vxor.u32 %v3627, 2147483648
        %v3644 = vxor.u32 %v3628, 2147483648
        %v3645 = vxor.u32 %v3629, 2147483648
        %v3646 = vxor.u32 %v3630, 2147483648
        %v3647 = vxor.u32 %v3631, 2147483648
        %v3648 = vxor.u32 %v3632, 2147483648
        %v3649 = vxor.u32 %v3633, 2147483648
        %v3650 = vxor.u32 %v3634, 2147483648
        %v3651 = vxor.u32 %v3635, 2147483648
        %v3652 = vxor.u32 %v3636, 2147483648
        %v3653 = vxor.u32 %v3637, 2147483648
        %v3654 = vxor.u32 %v3638, 2147483648
        %v3655 = vxor.u32 %v3639, 2147483648
        %v3656 = vxor.u32 %v3640, 2147483648
        %v3657 = vxor.u32 %v3641, 2147483648
        %v3658 = vxor.u32 %v3642, 2147483648
        %v3659 = vmul.f32 %v3643, 1.442695
        %v3660 = vpow.pop %v3659
        %v3661 = vmul.f32 %v3644, 1.442695
        %v3662 = vpow.pop %v3661
        %v3663 = vmul.f32 %v3645, 1.442695
        %v3664 = vpow.pop %v3663
        %v3665 = vmul.f32 %v3646, 1.442695
        %v3666 = vpow.pop %v3665
        %v3667 = vmul.f32 %v3647, 1.442695
        %v3668 = vpow.pop %v3667
        %v3669 = vmul.f32 %v3648, 1.442695
        %v3670 = vpow.pop %v3669
        %v3671 = vmul.f32 %v3649, 1.442695
        %v3672 = vpow.pop %v3671
        %v3673 = vmul.f32 %v3650, 1.442695
        %v3674 = vpow.pop %v3673
        %v3675 = vmul.f32 %v3651, 1.442695
        %v3676 = vpow.pop %v3675
        %v3677 = vmul.f32 %v3652, 1.442695
        %v3678 = vpow.pop %v3677
        %v3679 = vmul.f32 %v3653, 1.442695
        %v3680 = vpow.pop %v3679
        %v3681 = vmul.f32 %v3654, 1.442695
        %v3682 = vpow.pop %v3681
        %v3683 = vmul.f32 %v3655, 1.442695
        %v3684 = vpow.pop %v3683
        %v3685 = vmul.f32 %v3656, 1.442695
        %v3686 = vpow.pop %v3685
        %v3687 = vmul.f32 %v3657, 1.442695
        %v3688 = vpow.pop %v3687
        %v3689 = vmul.f32 %v3658, 1.442695
        %v3690 = vpow.pop %v3689
        %v3691 = vadd.f32 %v3660, 1.0
        %v3692 = vadd.f32 %v3662, 1.0
        %v3693 = vadd.f32 %v3664, 1.0
        %v3694 = vadd.f32 %v3666, 1.0
        %v3695 = vadd.f32 %v3668, 1.0
        %v3696 = vadd.f32 %v3670, 1.0
        %v3697 = vadd.f32 %v3672, 1.0
        %v3698 = vadd.f32 %v3674, 1.0
        %v3699 = vadd.f32 %v3676, 1.0
        %v3700 = vadd.f32 %v3678, 1.0
        %v3701 = vadd.f32 %v3680, 1.0
        %v3702 = vadd.f32 %v3682, 1.0
        %v3703 = vadd.f32 %v3684, 1.0
        %v3704 = vadd.f32 %v3686, 1.0
        %v3705 = vadd.f32 %v3688, 1.0
        %v3706 = vadd.f32 %v3690, 1.0
        %v3707 = vrcp.pop %v3691
        %v3708 = vmul.f32 1.0, %v3707
        %v3709 = vrcp.pop %v3692
        %v3710 = vmul.f32 1.0, %v3709
        %v3711 = vrcp.pop %v3693
        %v3712 = vmul.f32 1.0, %v3711
        %v3713 = vrcp.pop %v3694
        %v3714 = vmul.f32 1.0, %v3713
        %v3715 = vrcp.pop %v3695
        %v3716 = vmul.f32 1.0, %v3715
        %v3717 = vrcp.pop %v3696
        %v3718 = vmul.f32 1.0, %v3717
        %v3719 = vrcp.pop %v3697
        %v3720 = vmul.f32 1.0, %v3719
        %v3721 = vrcp.pop %v3698
        %v3722 = vmul.f32 1.0, %v3721
        %v3723 = vrcp.pop %v3699
        %v3724 = vmul.f32 1.0, %v3723
        %v3725 = vrcp.pop %v3700
        %v3726 = vmul.f32 1.0, %v3725
        %v3727 = vrcp.pop %v3701
        %v3728 = vmul.f32 1.0, %v3727
        %v3729 = vrcp.pop %v3702
        %v3730 = vmul.f32 1.0, %v3729
        %v3731 = vrcp.pop %v3703
        %v3732 = vmul.f32 1.0, %v3731
        %v3733 = vrcp.pop %v3704
        %v3734 = vmul.f32 1.0, %v3733
        %v3735 = vrcp.pop %v3705
        %v3736 = vmul.f32 1.0, %v3735
        %v3737 = vrcp.pop %v3706
        %v3738 = vmul.f32 1.0, %v3737
        %3739 = vrot.lane.b32.xlu0 %v3485, 112
        %v3740 = vpop.permute.xlu0 %3739
        %3741 = vrot.lane.b32.xlu0 %v3490, 112
        %v3742 = vpop.permute.xlu0 %3741
        %3743 = vrot.lane.b32.xlu0 %v3495, 112
        %v3744 = vpop.permute.xlu0 %3743
        %3745 = vrot.lane.b32.xlu0 %v3500, 112
        %v3746 = vpop.permute.xlu0 %3745
        %3747 = vrot.lane.b32.xlu0 %v3505, 112
        %v3748 = vpop.permute.xlu0 %3747
        %3749 = vrot.lane.b32.xlu0 %v3510, 112
        %v3750 = vpop.permute.xlu0 %3749
        %3751 = vrot.lane.b32.xlu0 %v3515, 112
        %v3752 = vpop.permute.xlu0 %3751
        %3753 = vrot.lane.b32.xlu0 %v3520, 112
        %v3754 = vpop.permute.xlu0 %3753
        %3755 = vrot.lane.b32.xlu0 %v3525, 112
        %v3756 = vpop.permute.xlu0 %3755
        %3757 = vrot.lane.b32.xlu0 %v3530, 112
        %v3758 = vpop.permute.xlu0 %3757
        %3759 = vrot.lane.b32.xlu0 %v3535, 112
        %v3760 = vpop.permute.xlu0 %3759
        %3761 = vrot.lane.b32.xlu0 %v3540, 112
        %v3762 = vpop.permute.xlu0 %3761
        %3763 = vrot.lane.b32.xlu0 %v3545, 112
        %v3764 = vpop.permute.xlu0 %3763
        %3765 = vrot.lane.b32.xlu0 %v3550, 112
        %v3766 = vpop.permute.xlu0 %3765
        %3767 = vrot.lane.b32.xlu0 %v3555, 112
        %v3768 = vpop.permute.xlu0 %3767
        %3769 = vrot.lane.b32.xlu0 %v3560, 112
        %v3770 = vpop.permute.xlu0 %3769
        %v3787 = vmul.f32 %v3708, %v3740
        %v3788 = vmul.f32 %v3710, %v3742
        %v3789 = vmul.f32 %v3712, %v3744
        %v3790 = vmul.f32 %v3714, %v3746
        %v3791 = vmul.f32 %v3716, %v3748
        %v3792 = vmul.f32 %v3718, %v3750
        %v3793 = vmul.f32 %v3720, %v3752
        %v3794 = vmul.f32 %v3722, %v3754
        %v3795 = vmul.f32 %v3724, %v3756
        %v3796 = vmul.f32 %v3726, %v3758
        %v3797 = vmul.f32 %v3728, %v3760
        %v3798 = vmul.f32 %v3730, %v3762
        %v3799 = vmul.f32 %v3732, %v3764
        %v3800 = vmul.f32 %v3734, %v3766
        %v3801 = vmul.f32 %v3736, %v3768
        %v3802 = vmul.f32 %v3738, %v3770
        %3819 = vrot.lane.b32.xlu0 %v3787, 32
        %v3820 = vpop.permute.xlu0 %3819
        %3821 = vrot.lane.b32.xlu0 %v3788, 32
        %v3822 = vpop.permute.xlu0 %3821
        %3823 = vrot.lane.b32.xlu0 %v3789, 32
        %v3824 = vpop.permute.xlu0 %3823
        %3825 = vrot.lane.b32.xlu0 %v3790, 32
        %v3826 = vpop.permute.xlu0 %3825
        %3827 = vrot.lane.b32.xlu0 %v3791, 32
        %v3828 = vpop.permute.xlu0 %3827
        %3829 = vrot.lane.b32.xlu0 %v3792, 32
        %v3830 = vpop.permute.xlu0 %3829
        %3831 = vrot.lane.b32.xlu0 %v3793, 32
        %v3832 = vpop.permute.xlu0 %3831
        %3833 = vrot.lane.b32.xlu0 %v3794, 32
        %v3834 = vpop.permute.xlu0 %3833
        %3835 = vrot.lane.b32.xlu0 %v3795, 32
        %v3836 = vpop.permute.xlu0 %3835
        %3837 = vrot.lane.b32.xlu0 %v3796, 32
        %v3838 = vpop.permute.xlu0 %3837
        %3839 = vrot.lane.b32.xlu0 %v3797, 32
        %v3840 = vpop.permute.xlu0 %3839
        %3841 = vrot.lane.b32.xlu0 %v3798, 32
        %v3842 = vpop.permute.xlu0 %3841
        %3843 = vrot.lane.b32.xlu0 %v3799, 32
        %v3844 = vpop.permute.xlu0 %3843
        %3845 = vrot.lane.b32.xlu0 %v3800, 32
        %v3846 = vpop.permute.xlu0 %3845
        %3847 = vrot.lane.b32.xlu0 %v3801, 32
        %v3848 = vpop.permute.xlu0 %3847
        %3849 = vrot.lane.b32.xlu0 %v3802, 32
        %v3850 = vpop.permute.xlu0 %3849
        %v3867 = vadd.f32 %v2522, %v3820
        %v3868 = vadd.f32 %v2524, %v3822
        %v3869 = vadd.f32 %v2526, %v3824
        %v3870 = vadd.f32 %v2528, %v3826
        %v3871 = vadd.f32 %v2530, %v3828
        %v3872 = vadd.f32 %v2532, %v3830
        %v3873 = vadd.f32 %v2534, %v3832
        %v3874 = vadd.f32 %v2536, %v3834
        %v3875 = vadd.f32 %v2538, %v3836
        %v3876 = vadd.f32 %v2540, %v3838
        %v3877 = vadd.f32 %v2542, %v3840
        %v3878 = vadd.f32 %v2544, %v3842
        %v3879 = vadd.f32 %v2546, %v3844
        %v3880 = vadd.f32 %v2548, %v3846
        %v3881 = vadd.f32 %v2550, %v3848
        %v3882 = vadd.f32 %v2552, %v3850
        %v3883 = vtanh.pop %v3867
        %v3884 = vtanh.pop %v3868
        %v3885 = vtanh.pop %v3869
        %v3886 = vtanh.pop %v3870
        %v3887 = vtanh.pop %v3871
        %v3888 = vtanh.pop %v3872
        %v3889 = vtanh.pop %v3873
        %v3890 = vtanh.pop %v3874
        %v3891 = vtanh.pop %v3875
        %v3892 = vtanh.pop %v3876
        %v3893 = vtanh.pop %v3877
        %v3894 = vtanh.pop %v3878
        %v3895 = vtanh.pop %v3879
        %v3896 = vtanh.pop %v3880
        %v3897 = vtanh.pop %v3881
        %v3898 = vtanh.pop %v3882
        %v3899 = vsub.f32 1.0, %v3708
        %v3900 = vsub.f32 1.0, %v3710
        %v3901 = vsub.f32 1.0, %v3712
        %v3902 = vsub.f32 1.0, %v3714
        %v3903 = vsub.f32 1.0, %v3716
        %v3904 = vsub.f32 1.0, %v3718
        %v3905 = vsub.f32 1.0, %v3720
        %v3906 = vsub.f32 1.0, %v3722
        %v3907 = vsub.f32 1.0, %v3724
        %v3908 = vsub.f32 1.0, %v3726
        %v3909 = vsub.f32 1.0, %v3728
        %v3910 = vsub.f32 1.0, %v3730
        %v3911 = vsub.f32 1.0, %v3732
        %v3912 = vsub.f32 1.0, %v3734
        %v3913 = vsub.f32 1.0, %v3736
        %v3914 = vsub.f32 1.0, %v3738
        %3931 = vrot.lane.b32.xlu0 %v3883, 112
        %v3932 = vpop.permute.xlu0 %3931
        %3933 = vrot.lane.b32.xlu0 %v3884, 112
        %v3934 = vpop.permute.xlu0 %3933
        %3935 = vrot.lane.b32.xlu0 %v3885, 112
        %v3936 = vpop.permute.xlu0 %3935
        %3937 = vrot.lane.b32.xlu0 %v3886, 112
        %v3938 = vpop.permute.xlu0 %3937
        %3939 = vrot.lane.b32.xlu0 %v3887, 112
        %v3940 = vpop.permute.xlu0 %3939
        %3941 = vrot.lane.b32.xlu0 %v3888, 112
        %v3942 = vpop.permute.xlu0 %3941
        %3943 = vrot.lane.b32.xlu0 %v3889, 112
        %v3944 = vpop.permute.xlu0 %3943
        %3945 = vrot.lane.b32.xlu0 %v3890, 112
        %v3946 = vpop.permute.xlu0 %3945
        %3947 = vrot.lane.b32.xlu0 %v3891, 112
        %v3948 = vpop.permute.xlu0 %3947
        %3949 = vrot.lane.b32.xlu0 %v3892, 112
        %v3950 = vpop.permute.xlu0 %3949
        %3951 = vrot.lane.b32.xlu0 %v3893, 112
        %v3952 = vpop.permute.xlu0 %3951
        %3953 = vrot.lane.b32.xlu0 %v3894, 112
        %v3954 = vpop.permute.xlu0 %3953
        %3955 = vrot.lane.b32.xlu0 %v3895, 112
        %v3956 = vpop.permute.xlu0 %3955
        %3957 = vrot.lane.b32.xlu0 %v3896, 112
        %v3958 = vpop.permute.xlu0 %3957
        %3959 = vrot.lane.b32.xlu0 %v3897, 112
        %v3960 = vpop.permute.xlu0 %3959
        %3961 = vrot.lane.b32.xlu0 %v3898, 112
        %v3962 = vpop.permute.xlu0 %3961
        %v3979 = vmul.f32 %v3899, %v3932
        %v3980 = vmul.f32 %v3900, %v3934
        %v3981 = vmul.f32 %v3901, %v3936
        %v3982 = vmul.f32 %v3902, %v3938
        %v3983 = vmul.f32 %v3903, %v3940
        %v3984 = vmul.f32 %v3904, %v3942
        %v3985 = vmul.f32 %v3905, %v3944
        %v3986 = vmul.f32 %v3906, %v3946
        %v3987 = vmul.f32 %v3907, %v3948
        %v3988 = vmul.f32 %v3908, %v3950
        %v3989 = vmul.f32 %v3909, %v3952
        %v3990 = vmul.f32 %v3910, %v3954
        %v3991 = vmul.f32 %v3911, %v3956
        %v3992 = vmul.f32 %v3912, %v3958
        %v3993 = vmul.f32 %v3913, %v3960
        %v3994 = vmul.f32 %v3914, %v3962
        %3995 = vrot.lane.b32.xlu0 %v3258, 48
        %v3996 = vpop.permute.xlu0 %3995
        %3997 = vrot.lane.b32.xlu0 %v3259, 48
        %v3998 = vpop.permute.xlu0 %3997
        %3999 = vrot.lane.b32.xlu0 %v3260, 48
        %v4000 = vpop.permute.xlu0 %3999
        %4001 = vrot.lane.b32.xlu0 %v3261, 48
        %v4002 = vpop.permute.xlu0 %4001
        %4003 = vrot.lane.b32.xlu0 %v3262, 48
        %v4004 = vpop.permute.xlu0 %4003
        %4005 = vrot.lane.b32.xlu0 %v3263, 48
        %v4006 = vpop.permute.xlu0 %4005
        %4007 = vrot.lane.b32.xlu0 %v3264, 48
        %v4008 = vpop.permute.xlu0 %4007
        %4009 = vrot.lane.b32.xlu0 %v3265, 48
        %v4010 = vpop.permute.xlu0 %4009
        %4011 = vrot.lane.b32.xlu0 %v3266, 48
        %v4012 = vpop.permute.xlu0 %4011
        %4013 = vrot.lane.b32.xlu0 %v3267, 48
        %v4014 = vpop.permute.xlu0 %4013
        %4015 = vrot.lane.b32.xlu0 %v3268, 48
        %v4016 = vpop.permute.xlu0 %4015
        %4017 = vrot.lane.b32.xlu0 %v3269, 48
        %v4018 = vpop.permute.xlu0 %4017
        %4019 = vrot.lane.b32.xlu0 %v3270, 48
        %v4020 = vpop.permute.xlu0 %4019
        %4021 = vrot.lane.b32.xlu0 %v3271, 48
        %v4022 = vpop.permute.xlu0 %4021
        %4023 = vrot.lane.b32.xlu0 %v3272, 48
        %v4024 = vpop.permute.xlu0 %4023
        %4025 = vrot.lane.b32.xlu0 %v3273, 48
        %v4026 = vpop.permute.xlu0 %4025
        %v4043 = vmul.f32 %v3708, %v3996
        %v4044 = vmul.f32 %v3710, %v3998
        %v4045 = vmul.f32 %v3712, %v4000
        %v4046 = vmul.f32 %v3714, %v4002
        %v4047 = vmul.f32 %v3716, %v4004
        %v4048 = vmul.f32 %v3718, %v4006
        %v4049 = vmul.f32 %v3720, %v4008
        %v4050 = vmul.f32 %v3722, %v4010
        %v4051 = vmul.f32 %v3724, %v4012
        %v4052 = vmul.f32 %v3726, %v4014
        %v4053 = vmul.f32 %v3728, %v4016
        %v4054 = vmul.f32 %v3730, %v4018
        %v4055 = vmul.f32 %v3732, %v4020
        %v4056 = vmul.f32 %v3734, %v4022
        %v4057 = vmul.f32 %v3736, %v4024
        %v4058 = vmul.f32 %v3738, %v4026
        %v4059 = vadd.f32 %v3979, %v4043
        %v4060 = vadd.f32 %v3980, %v4044
        %v4061 = vadd.f32 %v3981, %v4045
        %v4062 = vadd.f32 %v3982, %v4046
        %v4063 = vadd.f32 %v3983, %v4047
        %v4064 = vadd.f32 %v3984, %v4048
        %v4065 = vadd.f32 %v3985, %v4049
        %v4066 = vadd.f32 %v3986, %v4050
        %v4067 = vadd.f32 %v3987, %v4051
        %v4068 = vadd.f32 %v3988, %v4052
        %v4069 = vadd.f32 %v3989, %v4053
        %v4070 = vadd.f32 %v3990, %v4054
        %v4071 = vadd.f32 %v3991, %v4055
        %v4072 = vadd.f32 %v3992, %v4056
        %v4073 = vadd.f32 %v3993, %v4057
        %v4074 = vadd.f32 %v3994, %v4058
        %4091 = vrot.lane.b32.xlu0 %v4059, 112
        %v4092 = vpop.permute.xlu0 %4091
        %4093 = vrot.lane.b32.xlu0 %v4060, 112
        %v4094 = vpop.permute.xlu0 %4093
        %4095 = vrot.lane.b32.xlu0 %v4061, 112
        %v4096 = vpop.permute.xlu0 %4095
        %4097 = vrot.lane.b32.xlu0 %v4062, 112
        %v4098 = vpop.permute.xlu0 %4097
        %4099 = vrot.lane.b32.xlu0 %v4063, 112
        %v4100 = vpop.permute.xlu0 %4099
        %4101 = vrot.lane.b32.xlu0 %v4064, 112
        %v4102 = vpop.permute.xlu0 %4101
        %4103 = vrot.lane.b32.xlu0 %v4065, 112
        %v4104 = vpop.permute.xlu0 %4103
        %4105 = vrot.lane.b32.xlu0 %v4066, 112
        %v4106 = vpop.permute.xlu0 %4105
        %4107 = vrot.lane.b32.xlu0 %v4067, 112
        %v4108 = vpop.permute.xlu0 %4107
        %4109 = vrot.lane.b32.xlu0 %v4068, 112
        %v4110 = vpop.permute.xlu0 %4109
        %4111 = vrot.lane.b32.xlu0 %v4069, 112
        %v4112 = vpop.permute.xlu0 %4111
        %4113 = vrot.lane.b32.xlu0 %v4070, 112
        %v4114 = vpop.permute.xlu0 %4113
        %4115 = vrot.lane.b32.xlu0 %v4071, 112
        %v4116 = vpop.permute.xlu0 %4115
        %4117 = vrot.lane.b32.xlu0 %v4072, 112
        %v4118 = vpop.permute.xlu0 %4117
        %4119 = vrot.lane.b32.xlu0 %v4073, 112
        %v4120 = vpop.permute.xlu0 %4119
        %4121 = vrot.lane.b32.xlu0 %v4074, 112
        %v4122 = vpop.permute.xlu0 %4121
        %v4139 = vadd.f32 %v3338, %v4092
        %v4140 = vadd.f32 %v3339, %v4094
        %v4141 = vadd.f32 %v3340, %v4096
        %v4142 = vadd.f32 %v3341, %v4098
        %v4143 = vadd.f32 %v3342, %v4100
        %v4144 = vadd.f32 %v3343, %v4102
        %v4145 = vadd.f32 %v3344, %v4104
        %v4146 = vadd.f32 %v3345, %v4106
        %v4147 = vadd.f32 %v3346, %v4108
        %v4148 = vadd.f32 %v3347, %v4110
        %v4149 = vadd.f32 %v3348, %v4112
        %v4150 = vadd.f32 %v3349, %v4114
        %v4151 = vadd.f32 %v3350, %v4116
        %v4152 = vadd.f32 %v3351, %v4118
        %v4153 = vadd.f32 %v3352, %v4120
        %v4154 = vadd.f32 %v3353, %v4122
        %4155 = vrot.lane.b32.xlu0 %v4059, 96
        %v4156 = vpop.permute.xlu0 %4155
        %4157 = vrot.lane.b32.xlu0 %v4060, 96
        %v4158 = vpop.permute.xlu0 %4157
        %4159 = vrot.lane.b32.xlu0 %v4061, 96
        %v4160 = vpop.permute.xlu0 %4159
        %4161 = vrot.lane.b32.xlu0 %v4062, 96
        %v4162 = vpop.permute.xlu0 %4161
        %4163 = vrot.lane.b32.xlu0 %v4063, 96
        %v4164 = vpop.permute.xlu0 %4163
        %4165 = vrot.lane.b32.xlu0 %v4064, 96
        %v4166 = vpop.permute.xlu0 %4165
        %4167 = vrot.lane.b32.xlu0 %v4065, 96
        %v4168 = vpop.permute.xlu0 %4167
        %4169 = vrot.lane.b32.xlu0 %v4066, 96
        %v4170 = vpop.permute.xlu0 %4169
        %4171 = vrot.lane.b32.xlu0 %v4067, 96
        %v4172 = vpop.permute.xlu0 %4171
        %4173 = vrot.lane.b32.xlu0 %v4068, 96
        %v4174 = vpop.permute.xlu0 %4173
        %4175 = vrot.lane.b32.xlu0 %v4069, 96
        %v4176 = vpop.permute.xlu0 %4175
        %4177 = vrot.lane.b32.xlu0 %v4070, 96
        %v4178 = vpop.permute.xlu0 %4177
        %4179 = vrot.lane.b32.xlu0 %v4071, 96
        %v4180 = vpop.permute.xlu0 %4179
        %4181 = vrot.lane.b32.xlu0 %v4072, 96
        %v4182 = vpop.permute.xlu0 %4181
        %4183 = vrot.lane.b32.xlu0 %v4073, 96
        %v4184 = vpop.permute.xlu0 %4183
        %4185 = vrot.lane.b32.xlu0 %v4074, 96
        %v4186 = vpop.permute.xlu0 %4185
        %v4187 = vsel %vm438, %v4156, 0
        %v4189 = vsel %vm438, %v4158, 0
        %v4191 = vsel %vm438, %v4160, 0
        %v4193 = vsel %vm438, %v4162, 0
        %v4195 = vsel %vm438, %v4164, 0
        %v4197 = vsel %vm438, %v4166, 0
        %v4199 = vsel %vm438, %v4168, 0
        %v4201 = vsel %vm438, %v4170, 0
        %v4203 = vsel %vm438, %v4172, 0
        %v4205 = vsel %vm438, %v4174, 0
        %v4207 = vsel %vm438, %v4176, 0
        %v4209 = vsel %vm438, %v4178, 0
        %v4211 = vsel %vm438, %v4180, 0
        %v4213 = vsel %vm438, %v4182, 0
        %v4215 = vsel %vm438, %v4184, 0
        %v4217 = vsel %vm438, %v4186, 0
        %4219 = vmatprep.subr.mxu0 0.0
        %4220 = vmatpush1.msra.mxu0 %v1099
        %4221 = vmatprep.subr.mxu0 0.0
        %4222 = vmatpush1.msra.mxu0 %v1100
        %4223 = vmatprep.subr.mxu0 0.0
        %4224 = vmatpush1.msra.mxu0 0.0
        %4225 = vmatprep.subr.mxu0 0.0
        %4226 = vmatpush1.msra.mxu0 0.0
        %4227 = vmatprep.subr.mxu0 0.0
        %4228 = vmatpush1.msra.mxu0 0.0
        %4229 = vmatprep.subr.mxu0 0.0
        %4230 = vmatpush1.msra.mxu0 0.0
        %4231 = vmatprep.subr.mxu0 0.0
        %4232 = vmatpush1.msra.mxu0 0.0
        %4233 = vmatprep.subr.mxu0 0.0
        %4234 = vmatpush1.msra.mxu0 0.0
        %4235 = vmatprep.subr.mxu0 0.0
        %4236 = vmatpush1.msra.mxu0 0.0
        %4237 = vmatprep.subr.mxu0 0.0
        %4238 = vmatpush1.msra.mxu0 0.0
        %4239 = vmatprep.subr.mxu0 0.0
        %4240 = vmatpush1.msra.mxu0 0.0
        %4241 = vmatprep.subr.mxu0 0.0
        %4242 = vmatpush1.msra.mxu0 0.0
        %4243 = vmatprep.subr.mxu0 0.0
        %4244 = vmatpush1.msra.mxu0 0.0
        %4245 = vmatprep.subr.mxu0 0.0
        %4246 = vmatpush1.msra.mxu0 0.0
        %4247 = vmatprep.subr.mxu0 0.0
        %4248 = vmatpush1.msra.mxu0 0.0
        %4249 = vmatprep.subr.mxu0 0.0
        %4250 = vmatpush1.msra.mxu0 0.0
        %4251 = vmatprep.subr.mxu0 0.0
        %4252 = vmatpush1.msra.mxu0 0.0
        %4253 = vmatprep.subr.mxu0 0.0
        %4254 = vmatpush1.msra.mxu0 0.0
        %4255 = vmatprep.subr.mxu0 0.0
        %4256 = vmatpush1.msra.mxu0 0.0
        %4257 = vmatprep.subr.mxu0 0.0
        %4258 = vmatpush1.msra.mxu0 0.0
        %4259 = vmatprep.subr.mxu0 0.0
        %4260 = vmatpush1.msra.mxu0 0.0
        %4261 = vmatprep.subr.mxu0 0.0
        %4262 = vmatpush1.msra.mxu0 0.0
        %4263 = vmatprep.subr.mxu0 0.0
        %4264 = vmatpush1.msra.mxu0 0.0
        %4265 = vmatprep.subr.mxu0 0.0
        %4266 = vmatpush1.msra.mxu0 0.0
        %4267 = vmatprep.subr.mxu0 0.0
        %4268 = vmatpush1.msra.mxu0 0.0
        %4269 = vmatprep.subr.mxu0 0.0
        %4270 = vmatpush1.msra.mxu0 0.0
        %4271 = vmatprep.subr.mxu0 0.0
        %4272 = vmatpush1.msra.mxu0 0.0
        %4273 = vmatprep.subr.mxu0 0.0
        %4274 = vmatpush1.msra.mxu0 0.0
        %4275 = vmatprep.subr.mxu0 0.0
        %4276 = vmatpush1.msra.mxu0 0.0
        %4277 = vmatprep.subr.mxu0 0.0
        %4278 = vmatpush1.msra.mxu0 0.0
        %4279 = vmatprep.subr.mxu0 0.0
        %4280 = vmatpush1.msra.mxu0 0.0
        %4281 = vmatprep.subr.mxu0 0.0
        %4282 = vmatpush1.msra.mxu0 0.0
        %4283 = vmatprep.mubr.f32.mxu0 0.0
        %4284 = vmatmul.mubr.f32.gmra.mrb[0].mxu0 %v4187
        %v4285 = vpop.f32.mrb[0].mxu0
        %v4286 = vadd.f32 %v1122, %v4285
        %v4287 = vpop.f32.mrb[0].mxu0
        %4288 = vmatprep.mubr.f32.mxu0 0.0
        %4289 = vmatmul.mubr.f32.gmra.mrb[0].mxu0 %v4189
        %v4290 = vpop.f32.mrb[0].mxu0
        %v4291 = vadd.f32 %v1122, %v4290
        %v4292 = vpop.f32.mrb[0].mxu0
        %4293 = vmatprep.mubr.f32.mxu0 0.0
        %4294 = vmatmul.mubr.f32.gmra.mrb[0].mxu0 %v4191
        %v4295 = vpop.f32.mrb[0].mxu0
        %v4296 = vadd.f32 %v1122, %v4295
        %v4297 = vpop.f32.mrb[0].mxu0
        %4298 = vmatprep.mubr.f32.mxu0 0.0
        %4299 = vmatmul.mubr.f32.gmra.mrb[0].mxu0 %v4193
        %v4300 = vpop.f32.mrb[0].mxu0
        %v4301 = vadd.f32 %v1122, %v4300
        %v4302 = vpop.f32.mrb[0].mxu0
        %4303 = vmatprep.mubr.f32.mxu0 0.0
        %4304 = vmatmul.mubr.f32.gmra.mrb[0].mxu0 %v4195
        %v4305 = vpop.f32.mrb[0].mxu0
        %v4306 = vadd.f32 %v1122, %v4305
        %v4307 = vpop.f32.mrb[0].mxu0
        %4308 = vmatprep.mubr.f32.mxu0 0.0
        %4309 = vmatmul.mubr.f32.gmra.mrb[0].mxu0 %v4197
        %v4310 = vpop.f32.mrb[0].mxu0
        %v4311 = vadd.f32 %v1122, %v4310
        %v4312 = vpop.f32.mrb[0].mxu0
        %4313 = vmatprep.mubr.f32.mxu0 0.0
        %4314 = vmatmul.mubr.f32.gmra.mrb[0].mxu0 %v4199
        %v4315 = vpop.f32.mrb[0].mxu0
        %v4316 = vadd.f32 %v1122, %v4315
        %v4317 = vpop.f32.mrb[0].mxu0
        %4318 = vmatprep.mubr.f32.mxu0 0.0
        %4319 = vmatmul.mubr.f32.gmra.mrb[0].mxu0 %v4201
        %v4320 = vpop.f32.mrb[0].mxu0
        %v4321 = vadd.f32 %v1122, %v4320
        %v4322 = vpop.f32.mrb[0].mxu0
        %4323 = vmatprep.mubr.f32.mxu0 0.0
        %4324 = vmatmul.mubr.f32.gmra.mrb[0].mxu0 %v4203
        %v4325 = vpop.f32.mrb[0].mxu0
        %v4326 = vadd.f32 %v1122, %v4325
        %v4327 = vpop.f32.mrb[0].mxu0
        %4328 = vmatprep.mubr.f32.mxu0 0.0
        %4329 = vmatmul.mubr.f32.gmra.mrb[0].mxu0 %v4205
        %v4330 = vpop.f32.mrb[0].mxu0
        %v4331 = vadd.f32 %v1122, %v4330
        %v4332 = vpop.f32.mrb[0].mxu0
        %4333 = vmatprep.mubr.f32.mxu0 0.0
        %4334 = vmatmul.mubr.f32.gmra.mrb[0].mxu0 %v4207
        %v4335 = vpop.f32.mrb[0].mxu0
        %v4336 = vadd.f32 %v1122, %v4335
        %v4337 = vpop.f32.mrb[0].mxu0
        %4338 = vmatprep.mubr.f32.mxu0 0.0
        %4339 = vmatmul.mubr.f32.gmra.mrb[0].mxu0 %v4209
        %v4340 = vpop.f32.mrb[0].mxu0
        %v4341 = vadd.f32 %v1122, %v4340
        %v4342 = vpop.f32.mrb[0].mxu0
        %4343 = vmatprep.mubr.f32.mxu0 0.0
        %4344 = vmatmul.mubr.f32.gmra.mrb[0].mxu0 %v4211
        %v4345 = vpop.f32.mrb[0].mxu0
        %v4346 = vadd.f32 %v1122, %v4345
        %v4347 = vpop.f32.mrb[0].mxu0
        %4348 = vmatprep.mubr.f32.mxu0 0.0
        %4349 = vmatmul.mubr.f32.gmra.mrb[0].mxu0 %v4213
        %v4350 = vpop.f32.mrb[0].mxu0
        %v4351 = vadd.f32 %v1122, %v4350
        %v4352 = vpop.f32.mrb[0].mxu0
        %4353 = vmatprep.mubr.f32.mxu0 0.0
        %4354 = vmatmul.mubr.f32.gmra.mrb[0].mxu0 %v4215
        %v4355 = vpop.f32.mrb[0].mxu0
        %v4356 = vadd.f32 %v1122, %v4355
        %v4357 = vpop.f32.mrb[0].mxu0
        %4358 = vmatprep.mubr.f32.mxu0 0.0
        %4359 = vmatmul.mubr.f32.gmra.mrb[0].mxu0 %v4217
        %v4360 = vpop.f32.mrb[0].mxu0
        %v4361 = vadd.f32 %v1122, %v4360
        %v4362 = vpop.f32.mrb[0].mxu0
        %4363 = vdwg.mxu0
        %4380 = vrot.lane.b32.xlu0 %v4286, 64
        %v4381 = vpop.permute.xlu0 %4380
        %4382 = vrot.lane.b32.xlu0 %v4291, 64
        %v4383 = vpop.permute.xlu0 %4382
        %4384 = vrot.lane.b32.xlu0 %v4296, 64
        %v4385 = vpop.permute.xlu0 %4384
        %4386 = vrot.lane.b32.xlu0 %v4301, 64
        %v4387 = vpop.permute.xlu0 %4386
        %4388 = vrot.lane.b32.xlu0 %v4306, 64
        %v4389 = vpop.permute.xlu0 %4388
        %4390 = vrot.lane.b32.xlu0 %v4311, 64
        %v4391 = vpop.permute.xlu0 %4390
        %4392 = vrot.lane.b32.xlu0 %v4316, 64
        %v4393 = vpop.permute.xlu0 %4392
        %4394 = vrot.lane.b32.xlu0 %v4321, 64
        %v4395 = vpop.permute.xlu0 %4394
        %4396 = vrot.lane.b32.xlu0 %v4326, 64
        %v4397 = vpop.permute.xlu0 %4396
        %4398 = vrot.lane.b32.xlu0 %v4331, 64
        %v4399 = vpop.permute.xlu0 %4398
        %4400 = vrot.lane.b32.xlu0 %v4336, 64
        %v4401 = vpop.permute.xlu0 %4400
        %4402 = vrot.lane.b32.xlu0 %v4341, 64
        %v4403 = vpop.permute.xlu0 %4402
        %4404 = vrot.lane.b32.xlu0 %v4346, 64
        %v4405 = vpop.permute.xlu0 %4404
        %4406 = vrot.lane.b32.xlu0 %v4351, 64
        %v4407 = vpop.permute.xlu0 %4406
        %4408 = vrot.lane.b32.xlu0 %v4356, 64
        %v4409 = vpop.permute.xlu0 %4408
        %4410 = vrot.lane.b32.xlu0 %v4361, 64
        %v4411 = vpop.permute.xlu0 %4410
        %v4428 = vadd.f32 %v2522, %v4381
        %v4429 = vadd.f32 %v2524, %v4383
        %v4430 = vadd.f32 %v2526, %v4385
        %v4431 = vadd.f32 %v2528, %v4387
        %v4432 = vadd.f32 %v2530, %v4389
        %v4433 = vadd.f32 %v2532, %v4391
        %v4434 = vadd.f32 %v2534, %v4393
        %v4435 = vadd.f32 %v2536, %v4395
        %v4436 = vadd.f32 %v2538, %v4397
        %v4437 = vadd.f32 %v2540, %v4399
        %v4438 = vadd.f32 %v2542, %v4401
        %v4439 = vadd.f32 %v2544, %v4403
        %v4440 = vadd.f32 %v2546, %v4405
        %v4441 = vadd.f32 %v2548, %v4407
        %v4442 = vadd.f32 %v2550, %v4409
        %v4443 = vadd.f32 %v2552, %v4411
        %v4444 = vxor.u32 %v4428, 2147483648
        %v4445 = vxor.u32 %v4429, 2147483648
        %v4446 = vxor.u32 %v4430, 2147483648
        %v4447 = vxor.u32 %v4431, 2147483648
        %v4448 = vxor.u32 %v4432, 2147483648
        %v4449 = vxor.u32 %v4433, 2147483648
        %v4450 = vxor.u32 %v4434, 2147483648
        %v4451 = vxor.u32 %v4435, 2147483648
        %v4452 = vxor.u32 %v4436, 2147483648
        %v4453 = vxor.u32 %v4437, 2147483648
        %v4454 = vxor.u32 %v4438, 2147483648
        %v4455 = vxor.u32 %v4439, 2147483648
        %v4456 = vxor.u32 %v4440, 2147483648
        %v4457 = vxor.u32 %v4441, 2147483648
        %v4458 = vxor.u32 %v4442, 2147483648
        %v4459 = vxor.u32 %v4443, 2147483648
        %v4460 = vmul.f32 %v4444, 1.442695
        %v4461 = vpow.pop %v4460
        %v4462 = vmul.f32 %v4445, 1.442695
        %v4463 = vpow.pop %v4462
        %v4464 = vmul.f32 %v4446, 1.442695
        %v4465 = vpow.pop %v4464
        %v4466 = vmul.f32 %v4447, 1.442695
        %v4467 = vpow.pop %v4466
        %v4468 = vmul.f32 %v4448, 1.442695
        %v4469 = vpow.pop %v4468
        %v4470 = vmul.f32 %v4449, 1.442695
        %v4471 = vpow.pop %v4470
        %v4472 = vmul.f32 %v4450, 1.442695
        %v4473 = vpow.pop %v4472
        %v4474 = vmul.f32 %v4451, 1.442695
        %v4475 = vpow.pop %v4474
        %v4476 = vmul.f32 %v4452, 1.442695
        %v4477 = vpow.pop %v4476
        %v4478 = vmul.f32 %v4453, 1.442695
        %v4479 = vpow.pop %v4478
        %v4480 = vmul.f32 %v4454, 1.442695
        %v4481 = vpow.pop %v4480
        %v4482 = vmul.f32 %v4455, 1.442695
        %v4483 = vpow.pop %v4482
        %v4484 = vmul.f32 %v4456, 1.442695
        %v4485 = vpow.pop %v4484
        %v4486 = vmul.f32 %v4457, 1.442695
        %v4487 = vpow.pop %v4486
        %v4488 = vmul.f32 %v4458, 1.442695
        %v4489 = vpow.pop %v4488
        %v4490 = vmul.f32 %v4459, 1.442695
        %v4491 = vpow.pop %v4490
        %v4492 = vadd.f32 %v4461, 1.0
        %v4493 = vadd.f32 %v4463, 1.0
        %v4494 = vadd.f32 %v4465, 1.0
        %v4495 = vadd.f32 %v4467, 1.0
        %v4496 = vadd.f32 %v4469, 1.0
        %v4497 = vadd.f32 %v4471, 1.0
        %v4498 = vadd.f32 %v4473, 1.0
        %v4499 = vadd.f32 %v4475, 1.0
        %v4500 = vadd.f32 %v4477, 1.0
        %v4501 = vadd.f32 %v4479, 1.0
        %v4502 = vadd.f32 %v4481, 1.0
        %v4503 = vadd.f32 %v4483, 1.0
        %v4504 = vadd.f32 %v4485, 1.0
        %v4505 = vadd.f32 %v4487, 1.0
        %v4506 = vadd.f32 %v4489, 1.0
        %v4507 = vadd.f32 %v4491, 1.0
        %v4508 = vrcp.pop %v4492
        %v4509 = vmul.f32 1.0, %v4508
        %v4510 = vrcp.pop %v4493
        %v4511 = vmul.f32 1.0, %v4510
        %v4512 = vrcp.pop %v4494
        %v4513 = vmul.f32 1.0, %v4512
        %v4514 = vrcp.pop %v4495
        %v4515 = vmul.f32 1.0, %v4514
        %v4516 = vrcp.pop %v4496
        %v4517 = vmul.f32 1.0, %v4516
        %v4518 = vrcp.pop %v4497
        %v4519 = vmul.f32 1.0, %v4518
        %v4520 = vrcp.pop %v4498
        %v4521 = vmul.f32 1.0, %v4520
        %v4522 = vrcp.pop %v4499
        %v4523 = vmul.f32 1.0, %v4522
        %v4524 = vrcp.pop %v4500
        %v4525 = vmul.f32 1.0, %v4524
        %v4526 = vrcp.pop %v4501
        %v4527 = vmul.f32 1.0, %v4526
        %v4528 = vrcp.pop %v4502
        %v4529 = vmul.f32 1.0, %v4528
        %v4530 = vrcp.pop %v4503
        %v4531 = vmul.f32 1.0, %v4530
        %v4532 = vrcp.pop %v4504
        %v4533 = vmul.f32 1.0, %v4532
        %v4534 = vrcp.pop %v4505
        %v4535 = vmul.f32 1.0, %v4534
        %v4536 = vrcp.pop %v4506
        %v4537 = vmul.f32 1.0, %v4536
        %v4538 = vrcp.pop %v4507
        %v4539 = vmul.f32 1.0, %v4538
        %4540 = vrot.lane.b32.xlu0 %v4286, 32
        %v4541 = vpop.permute.xlu0 %4540
        %4542 = vrot.lane.b32.xlu0 %v4291, 32
        %v4543 = vpop.permute.xlu0 %4542
        %4544 = vrot.lane.b32.xlu0 %v4296, 32
        %v4545 = vpop.permute.xlu0 %4544
        %4546 = vrot.lane.b32.xlu0 %v4301, 32
        %v4547 = vpop.permute.xlu0 %4546
        %4548 = vrot.lane.b32.xlu0 %v4306, 32
        %v4549 = vpop.permute.xlu0 %4548
        %4550 = vrot.lane.b32.xlu0 %v4311, 32
        %v4551 = vpop.permute.xlu0 %4550
        %4552 = vrot.lane.b32.xlu0 %v4316, 32
        %v4553 = vpop.permute.xlu0 %4552
        %4554 = vrot.lane.b32.xlu0 %v4321, 32
        %v4555 = vpop.permute.xlu0 %4554
        %4556 = vrot.lane.b32.xlu0 %v4326, 32
        %v4557 = vpop.permute.xlu0 %4556
        %4558 = vrot.lane.b32.xlu0 %v4331, 32
        %v4559 = vpop.permute.xlu0 %4558
        %4560 = vrot.lane.b32.xlu0 %v4336, 32
        %v4561 = vpop.permute.xlu0 %4560
        %4562 = vrot.lane.b32.xlu0 %v4341, 32
        %v4563 = vpop.permute.xlu0 %4562
        %4564 = vrot.lane.b32.xlu0 %v4346, 32
        %v4565 = vpop.permute.xlu0 %4564
        %4566 = vrot.lane.b32.xlu0 %v4351, 32
        %v4567 = vpop.permute.xlu0 %4566
        %4568 = vrot.lane.b32.xlu0 %v4356, 32
        %v4569 = vpop.permute.xlu0 %4568
        %4570 = vrot.lane.b32.xlu0 %v4361, 32
        %v4571 = vpop.permute.xlu0 %4570
        %v4588 = vmul.f32 %v4509, %v4541
        %v4589 = vmul.f32 %v4511, %v4543
        %v4590 = vmul.f32 %v4513, %v4545
        %v4591 = vmul.f32 %v4515, %v4547
        %v4592 = vmul.f32 %v4517, %v4549
        %v4593 = vmul.f32 %v4519, %v4551
        %v4594 = vmul.f32 %v4521, %v4553
        %v4595 = vmul.f32 %v4523, %v4555
        %v4596 = vmul.f32 %v4525, %v4557
        %v4597 = vmul.f32 %v4527, %v4559
        %v4598 = vmul.f32 %v4529, %v4561
        %v4599 = vmul.f32 %v4531, %v4563
        %v4600 = vmul.f32 %v4533, %v4565
        %v4601 = vmul.f32 %v4535, %v4567
        %v4602 = vmul.f32 %v4537, %v4569
        %v4603 = vmul.f32 %v4539, %v4571
        %4620 = vrot.lane.b32.xlu0 %v4588, 32
        %v4621 = vpop.permute.xlu0 %4620
        %4622 = vrot.lane.b32.xlu0 %v4589, 32
        %v4623 = vpop.permute.xlu0 %4622
        %4624 = vrot.lane.b32.xlu0 %v4590, 32
        %v4625 = vpop.permute.xlu0 %4624
        %4626 = vrot.lane.b32.xlu0 %v4591, 32
        %v4627 = vpop.permute.xlu0 %4626
        %4628 = vrot.lane.b32.xlu0 %v4592, 32
        %v4629 = vpop.permute.xlu0 %4628
        %4630 = vrot.lane.b32.xlu0 %v4593, 32
        %v4631 = vpop.permute.xlu0 %4630
        %4632 = vrot.lane.b32.xlu0 %v4594, 32
        %v4633 = vpop.permute.xlu0 %4632
        %4634 = vrot.lane.b32.xlu0 %v4595, 32
        %v4635 = vpop.permute.xlu0 %4634
        %4636 = vrot.lane.b32.xlu0 %v4596, 32
        %v4637 = vpop.permute.xlu0 %4636
        %4638 = vrot.lane.b32.xlu0 %v4597, 32
        %v4639 = vpop.permute.xlu0 %4638
        %4640 = vrot.lane.b32.xlu0 %v4598, 32
        %v4641 = vpop.permute.xlu0 %4640
        %4642 = vrot.lane.b32.xlu0 %v4599, 32
        %v4643 = vpop.permute.xlu0 %4642
        %4644 = vrot.lane.b32.xlu0 %v4600, 32
        %v4645 = vpop.permute.xlu0 %4644
        %4646 = vrot.lane.b32.xlu0 %v4601, 32
        %v4647 = vpop.permute.xlu0 %4646
        %4648 = vrot.lane.b32.xlu0 %v4602, 32
        %v4649 = vpop.permute.xlu0 %4648
        %4650 = vrot.lane.b32.xlu0 %v4603, 32
        %v4651 = vpop.permute.xlu0 %4650
        %v4668 = vadd.f32 %v2522, %v4621
        %v4669 = vadd.f32 %v2524, %v4623
        %v4670 = vadd.f32 %v2526, %v4625
        %v4671 = vadd.f32 %v2528, %v4627
        %v4672 = vadd.f32 %v2530, %v4629
        %v4673 = vadd.f32 %v2532, %v4631
        %v4674 = vadd.f32 %v2534, %v4633
        %v4675 = vadd.f32 %v2536, %v4635
        %v4676 = vadd.f32 %v2538, %v4637
        %v4677 = vadd.f32 %v2540, %v4639
        %v4678 = vadd.f32 %v2542, %v4641
        %v4679 = vadd.f32 %v2544, %v4643
        %v4680 = vadd.f32 %v2546, %v4645
        %v4681 = vadd.f32 %v2548, %v4647
        %v4682 = vadd.f32 %v2550, %v4649
        %v4683 = vadd.f32 %v2552, %v4651
        %v4684 = vtanh.pop %v4668
        %v4685 = vtanh.pop %v4669
        %v4686 = vtanh.pop %v4670
        %v4687 = vtanh.pop %v4671
        %v4688 = vtanh.pop %v4672
        %v4689 = vtanh.pop %v4673
        %v4690 = vtanh.pop %v4674
        %v4691 = vtanh.pop %v4675
        %v4692 = vtanh.pop %v4676
        %v4693 = vtanh.pop %v4677
        %v4694 = vtanh.pop %v4678
        %v4695 = vtanh.pop %v4679
        %v4696 = vtanh.pop %v4680
        %v4697 = vtanh.pop %v4681
        %v4698 = vtanh.pop %v4682
        %v4699 = vtanh.pop %v4683
        %v4700 = vsub.f32 1.0, %v4509
        %v4701 = vsub.f32 1.0, %v4511
        %v4702 = vsub.f32 1.0, %v4513
        %v4703 = vsub.f32 1.0, %v4515
        %v4704 = vsub.f32 1.0, %v4517
        %v4705 = vsub.f32 1.0, %v4519
        %v4706 = vsub.f32 1.0, %v4521
        %v4707 = vsub.f32 1.0, %v4523
        %v4708 = vsub.f32 1.0, %v4525
        %v4709 = vsub.f32 1.0, %v4527
        %v4710 = vsub.f32 1.0, %v4529
        %v4711 = vsub.f32 1.0, %v4531
        %v4712 = vsub.f32 1.0, %v4533
        %v4713 = vsub.f32 1.0, %v4535
        %v4714 = vsub.f32 1.0, %v4537
        %v4715 = vsub.f32 1.0, %v4539
        %4732 = vrot.lane.b32.xlu0 %v4684, 112
        %v4733 = vpop.permute.xlu0 %4732
        %4734 = vrot.lane.b32.xlu0 %v4685, 112
        %v4735 = vpop.permute.xlu0 %4734
        %4736 = vrot.lane.b32.xlu0 %v4686, 112
        %v4737 = vpop.permute.xlu0 %4736
        %4738 = vrot.lane.b32.xlu0 %v4687, 112
        %v4739 = vpop.permute.xlu0 %4738
        %4740 = vrot.lane.b32.xlu0 %v4688, 112
        %v4741 = vpop.permute.xlu0 %4740
        %4742 = vrot.lane.b32.xlu0 %v4689, 112
        %v4743 = vpop.permute.xlu0 %4742
        %4744 = vrot.lane.b32.xlu0 %v4690, 112
        %v4745 = vpop.permute.xlu0 %4744
        %4746 = vrot.lane.b32.xlu0 %v4691, 112
        %v4747 = vpop.permute.xlu0 %4746
        %4748 = vrot.lane.b32.xlu0 %v4692, 112
        %v4749 = vpop.permute.xlu0 %4748
        %4750 = vrot.lane.b32.xlu0 %v4693, 112
        %v4751 = vpop.permute.xlu0 %4750
        %4752 = vrot.lane.b32.xlu0 %v4694, 112
        %v4753 = vpop.permute.xlu0 %4752
        %4754 = vrot.lane.b32.xlu0 %v4695, 112
        %v4755 = vpop.permute.xlu0 %4754
        %4756 = vrot.lane.b32.xlu0 %v4696, 112
        %v4757 = vpop.permute.xlu0 %4756
        %4758 = vrot.lane.b32.xlu0 %v4697, 112
        %v4759 = vpop.permute.xlu0 %4758
        %4760 = vrot.lane.b32.xlu0 %v4698, 112
        %v4761 = vpop.permute.xlu0 %4760
        %4762 = vrot.lane.b32.xlu0 %v4699, 112
        %v4763 = vpop.permute.xlu0 %4762
        %v4780 = vmul.f32 %v4700, %v4733
        %v4781 = vmul.f32 %v4701, %v4735
        %v4782 = vmul.f32 %v4702, %v4737
        %v4783 = vmul.f32 %v4703, %v4739
        %v4784 = vmul.f32 %v4704, %v4741
        %v4785 = vmul.f32 %v4705, %v4743
        %v4786 = vmul.f32 %v4706, %v4745
        %v4787 = vmul.f32 %v4707, %v4747
        %v4788 = vmul.f32 %v4708, %v4749
        %v4789 = vmul.f32 %v4709, %v4751
        %v4790 = vmul.f32 %v4710, %v4753
        %v4791 = vmul.f32 %v4711, %v4755
        %v4792 = vmul.f32 %v4712, %v4757
        %v4793 = vmul.f32 %v4713, %v4759
        %v4794 = vmul.f32 %v4714, %v4761
        %v4795 = vmul.f32 %v4715, %v4763
        %4796 = vrot.lane.b32.xlu0 %v4059, 48
        %v4797 = vpop.permute.xlu0 %4796
        %4798 = vrot.lane.b32.xlu0 %v4060, 48
        %v4799 = vpop.permute.xlu0 %4798
        %4800 = vrot.lane.b32.xlu0 %v4061, 48
        %v4801 = vpop.permute.xlu0 %4800
        %4802 = vrot.lane.b32.xlu0 %v4062, 48
        %v4803 = vpop.permute.xlu0 %4802
        %4804 = vrot.lane.b32.xlu0 %v4063, 48
        %v4805 = vpop.permute.xlu0 %4804
        %4806 = vrot.lane.b32.xlu0 %v4064, 48
        %v4807 = vpop.permute.xlu0 %4806
        %4808 = vrot.lane.b32.xlu0 %v4065, 48
        %v4809 = vpop.permute.xlu0 %4808
        %4810 = vrot.lane.b32.xlu0 %v4066, 48
        %v4811 = vpop.permute.xlu0 %4810
        %4812 = vrot.lane.b32.xlu0 %v4067, 48
        %v4813 = vpop.permute.xlu0 %4812
        %4814 = vrot.lane.b32.xlu0 %v4068, 48
        %v4815 = vpop.permute.xlu0 %4814
        %4816 = vrot.lane.b32.xlu0 %v4069, 48
        %v4817 = vpop.permute.xlu0 %4816
        %4818 = vrot.lane.b32.xlu0 %v4070, 48
        %v4819 = vpop.permute.xlu0 %4818
        %4820 = vrot.lane.b32.xlu0 %v4071, 48
        %v4821 = vpop.permute.xlu0 %4820
        %4822 = vrot.lane.b32.xlu0 %v4072, 48
        %v4823 = vpop.permute.xlu0 %4822
        %4824 = vrot.lane.b32.xlu0 %v4073, 48
        %v4825 = vpop.permute.xlu0 %4824
        %4826 = vrot.lane.b32.xlu0 %v4074, 48
        %v4827 = vpop.permute.xlu0 %4826
        %v4844 = vmul.f32 %v4509, %v4797
        %v4845 = vmul.f32 %v4511, %v4799
        %v4846 = vmul.f32 %v4513, %v4801
        %v4847 = vmul.f32 %v4515, %v4803
        %v4848 = vmul.f32 %v4517, %v4805
        %v4849 = vmul.f32 %v4519, %v4807
        %v4850 = vmul.f32 %v4521, %v4809
        %v4851 = vmul.f32 %v4523, %v4811
        %v4852 = vmul.f32 %v4525, %v4813
        %v4853 = vmul.f32 %v4527, %v4815
        %v4854 = vmul.f32 %v4529, %v4817
        %v4855 = vmul.f32 %v4531, %v4819
        %v4856 = vmul.f32 %v4533, %v4821
        %v4857 = vmul.f32 %v4535, %v4823
        %v4858 = vmul.f32 %v4537, %v4825
        %v4859 = vmul.f32 %v4539, %v4827
        %v4860 = vadd.f32 %v4780, %v4844
        %v4861 = vadd.f32 %v4781, %v4845
        %v4862 = vadd.f32 %v4782, %v4846
        %v4863 = vadd.f32 %v4783, %v4847
        %v4864 = vadd.f32 %v4784, %v4848
        %v4865 = vadd.f32 %v4785, %v4849
        %v4866 = vadd.f32 %v4786, %v4850
        %v4867 = vadd.f32 %v4787, %v4851
        %v4868 = vadd.f32 %v4788, %v4852
        %v4869 = vadd.f32 %v4789, %v4853
        %v4870 = vadd.f32 %v4790, %v4854
        %v4871 = vadd.f32 %v4791, %v4855
        %v4872 = vadd.f32 %v4792, %v4856
        %v4873 = vadd.f32 %v4793, %v4857
        %v4874 = vadd.f32 %v4794, %v4858
        %v4875 = vadd.f32 %v4795, %v4859
        %4892 = vrot.lane.b32.xlu0 %v4860, 64
        %v4893 = vpop.permute.xlu0 %4892
        %4894 = vrot.lane.b32.xlu0 %v4861, 64
        %v4895 = vpop.permute.xlu0 %4894
        %4896 = vrot.lane.b32.xlu0 %v4862, 64
        %v4897 = vpop.permute.xlu0 %4896
        %4898 = vrot.lane.b32.xlu0 %v4863, 64
        %v4899 = vpop.permute.xlu0 %4898
        %4900 = vrot.lane.b32.xlu0 %v4864, 64
        %v4901 = vpop.permute.xlu0 %4900
        %4902 = vrot.lane.b32.xlu0 %v4865, 64
        %v4903 = vpop.permute.xlu0 %4902
        %4904 = vrot.lane.b32.xlu0 %v4866, 64
        %v4905 = vpop.permute.xlu0 %4904
        %4906 = vrot.lane.b32.xlu0 %v4867, 64
        %v4907 = vpop.permute.xlu0 %4906
        %4908 = vrot.lane.b32.xlu0 %v4868, 64
        %v4909 = vpop.permute.xlu0 %4908
        %4910 = vrot.lane.b32.xlu0 %v4869, 64
        %v4911 = vpop.permute.xlu0 %4910
        %4912 = vrot.lane.b32.xlu0 %v4870, 64
        %v4913 = vpop.permute.xlu0 %4912
        %4914 = vrot.lane.b32.xlu0 %v4871, 64
        %v4915 = vpop.permute.xlu0 %4914
        %4916 = vrot.lane.b32.xlu0 %v4872, 64
        %v4917 = vpop.permute.xlu0 %4916
        %4918 = vrot.lane.b32.xlu0 %v4873, 64
        %v4919 = vpop.permute.xlu0 %4918
        %4920 = vrot.lane.b32.xlu0 %v4874, 64
        %v4921 = vpop.permute.xlu0 %4920
        %4922 = vrot.lane.b32.xlu0 %v4875, 64
        %v4923 = vpop.permute.xlu0 %4922
        %v4940 = vadd.f32 %v4139, %v4893
        %v4941 = vadd.f32 %v4140, %v4895
        %v4942 = vadd.f32 %v4141, %v4897
        %v4943 = vadd.f32 %v4142, %v4899
        %v4944 = vadd.f32 %v4143, %v4901
        %v4945 = vadd.f32 %v4144, %v4903
        %v4946 = vadd.f32 %v4145, %v4905
        %v4947 = vadd.f32 %v4146, %v4907
        %v4948 = vadd.f32 %v4147, %v4909
        %v4949 = vadd.f32 %v4148, %v4911
        %v4950 = vadd.f32 %v4149, %v4913
        %v4951 = vadd.f32 %v4150, %v4915
        %v4952 = vadd.f32 %v4151, %v4917
        %v4953 = vadd.f32 %v4152, %v4919
        %v4954 = vadd.f32 %v4153, %v4921
        %v4955 = vadd.f32 %v4154, %v4923
        %v4956 = vld [vmem:[#allocation2 + $0x8] sm:$0xff]
        %v4957 = vld [vmem:[#allocation2 + $0x10] sm:$0xff]
        %v4958 = vld [vmem:[#allocation2 + $0x20] sm:$0xff]
        %v4959 = vld [vmem:[#allocation2 + $0x28] sm:$0xff]
        %v4960 = vld [vmem:[#allocation2 + $0x38] sm:$0xff]
        %v4961 = vld [vmem:[#allocation2 + $0x40] sm:$0xff]
        %v4962 = vld [vmem:[#allocation2 + $0x50] sm:$0xff]
        %v4963 = vld [vmem:[#allocation2 + $0x58] sm:$0xff]
        %v4964 = vld [vmem:[#allocation2 + $0x68] sm:$0xff]
        %v4965 = vld [vmem:[#allocation2 + $0x70] sm:$0xff]
        %v4966 = vld [vmem:[#allocation2 + $0x80] sm:$0xff]
        %v4967 = vld [vmem:[#allocation2 + $0x88] sm:$0xff]
        %v4968 = vld [vmem:[#allocation2 + $0x98] sm:$0xff]
        %v4969 = vld [vmem:[#allocation2 + $0xa0] sm:$0xff]
        %v4970 = vld [vmem:[#allocation2 + $0xb0] sm:$0xff]
        %v4971 = vld [vmem:[#allocation2 + $0xb8] sm:$0xff]
        %v4972 = vld [vmem:[#allocation2 + $0xc8] sm:$0xff]
        %v4973 = vld [vmem:[#allocation2 + $0xd0] sm:$0xff]
        %v4974 = vld [vmem:[#allocation2 + $0xe0] sm:$0xff]
        %v4975 = vld [vmem:[#allocation2 + $0xe8] sm:$0xff]
        %v4976 = vld [vmem:[#allocation2 + $0xf8] sm:$0xff]
        %v4977 = vld [vmem:[#allocation2 + $0x100] sm:$0xff]
        %v4978 = vld [vmem:[#allocation2 + $0x110] sm:$0xff]
        %v4979 = vld [vmem:[#allocation2 + $0x118] sm:$0xff]
        %v4980 = vld [vmem:[#allocation2 + $0x128] sm:$0xff]
        %v4981 = vld [vmem:[#allocation2 + $0x130] sm:$0xff]
        %v4982 = vld [vmem:[#allocation2 + $0x140] sm:$0xff]
        %v4983 = vld [vmem:[#allocation2 + $0x148] sm:$0xff]
        %v4984 = vld [vmem:[#allocation2 + $0x158] sm:$0xff]
        %v4985 = vld [vmem:[#allocation2 + $0x160] sm:$0xff]
        %v4986 = vld [vmem:[#allocation2 + $0x170] sm:$0xff]
        %v4987 = vld [vmem:[#allocation2 + $0x178] sm:$0xff]
        %4988 = vrot.lane.b32.xlu0 %v4860, 48
        %v4989 = vpop.permute.xlu0 %4988
        %4990 = vrot.lane.b32.xlu0 %v4861, 48
        %v4991 = vpop.permute.xlu0 %4990
        %4992 = vrot.lane.b32.xlu0 %v4862, 48
        %v4993 = vpop.permute.xlu0 %4992
        %4994 = vrot.lane.b32.xlu0 %v4863, 48
        %v4995 = vpop.permute.xlu0 %4994
        %4996 = vrot.lane.b32.xlu0 %v4864, 48
        %v4997 = vpop.permute.xlu0 %4996
        %4998 = vrot.lane.b32.xlu0 %v4865, 48
        %v4999 = vpop.permute.xlu0 %4998
        %5000 = vrot.lane.b32.xlu0 %v4866, 48
        %v5001 = vpop.permute.xlu0 %5000
        %5002 = vrot.lane.b32.xlu0 %v4867, 48
        %v5003 = vpop.permute.xlu0 %5002
        %5004 = vrot.lane.b32.xlu0 %v4868, 48
        %v5005 = vpop.permute.xlu0 %5004
        %5006 = vrot.lane.b32.xlu0 %v4869, 48
        %v5007 = vpop.permute.xlu0 %5006
        %5008 = vrot.lane.b32.xlu0 %v4870, 48
        %v5009 = vpop.permute.xlu0 %5008
        %5010 = vrot.lane.b32.xlu0 %v4871, 48
        %v5011 = vpop.permute.xlu0 %5010
        %5012 = vrot.lane.b32.xlu0 %v4872, 48
        %v5013 = vpop.permute.xlu0 %5012
        %5014 = vrot.lane.b32.xlu0 %v4873, 48
        %v5015 = vpop.permute.xlu0 %5014
        %5016 = vrot.lane.b32.xlu0 %v4874, 48
        %v5017 = vpop.permute.xlu0 %5016
        %5018 = vrot.lane.b32.xlu0 %v4875, 48
        %v5019 = vpop.permute.xlu0 %5018
        %v5020 = vsel %vm438, %v4989, 0
        %v5022 = vsel %vm438, %v4991, 0
        %v5024 = vsel %vm438, %v4993, 0
        %v5026 = vsel %vm438, %v4995, 0
        %v5028 = vsel %vm438, %v4997, 0
        %v5030 = vsel %vm438, %v4999, 0
        %v5032 = vsel %vm438, %v5001, 0
        %v5034 = vsel %vm438, %v5003, 0
        %v5036 = vsel %vm438, %v5005, 0
        %v5038 = vsel %vm438, %v5007, 0
        %v5040 = vsel %vm438, %v5009, 0
        %v5042 = vsel %vm438, %v5011, 0
        %v5044 = vsel %vm438, %v5013, 0
        %v5046 = vsel %vm438, %v5015, 0
        %v5048 = vsel %vm438, %v5017, 0
        %v5050 = vsel %vm438, %v5019, 0
        %5052 = vmatprep.subr.mxu0 0.0
        %5053 = vmatpush1.msra.mxu0 %v1099
        %5054 = vmatprep.subr.mxu0 0.0
        %5055 = vmatpush1.msra.mxu0 %v1100
        %5056 = vmatprep.subr.mxu0 0.0
        %5057 = vmatpush1.msra.mxu0 0.0
        %5058 = vmatprep.subr.mxu0 0.0
        %5059 = vmatpush1.msra.mxu0 0.0
        %5060 = vmatprep.subr.mxu0 0.0
        %5061 = vmatpush1.msra.mxu0 0.0
        %5062 = vmatprep.subr.mxu0 0.0
        %5063 = vmatpush1.msra.mxu0 0.0
        %5064 = vmatprep.subr.mxu0 0.0
        %5065 = vmatpush1.msra.mxu0 0.0
        %5066 = vmatprep.subr.mxu0 0.0
        %5067 = vmatpush1.msra.mxu0 0.0
        %5068 = vmatprep.subr.mxu0 0.0
        %5069 = vmatpush1.msra.mxu0 0.0
        %5070 = vmatprep.subr.mxu0 0.0
        %5071 = vmatpush1.msra.mxu0 0.0
        %5072 = vmatprep.subr.mxu0 0.0
        %5073 = vmatpush1.msra.mxu0 0.0
        %5074 = vmatprep.subr.mxu0 0.0
        %5075 = vmatpush1.msra.mxu0 0.0
        %5076 = vmatprep.subr.mxu0 0.0
        %5077 = vmatpush1.msra.mxu0 0.0
        %5078 = vmatprep.subr.mxu0 0.0
        %5079 = vmatpush1.msra.mxu0 0.0
        %5080 = vmatprep.subr.mxu0 0.0
        %5081 = vmatpush1.msra.mxu0 0.0
        %5082 = vmatprep.subr.mxu0 0.0
        %5083 = vmatpush1.msra.mxu0 0.0
        %5084 = vmatprep.subr.mxu0 0.0
        %5085 = vmatpush1.msra.mxu0 0.0
        %5086 = vmatprep.subr.mxu0 0.0
        %5087 = vmatpush1.msra.mxu0 0.0
        %5088 = vmatprep.subr.mxu0 0.0
        %5089 = vmatpush1.msra.mxu0 0.0
        %5090 = vmatprep.subr.mxu0 0.0
        %5091 = vmatpush1.msra.mxu0 0.0
        %5092 = vmatprep.subr.mxu0 0.0
        %5093 = vmatpush1.msra.mxu0 0.0
        %5094 = vmatprep.subr.mxu0 0.0
        %5095 = vmatpush1.msra.mxu0 0.0
        %5096 = vmatprep.subr.mxu0 0.0
        %5097 = vmatpush1.msra.mxu0 0.0
        %5098 = vmatprep.subr.mxu0 0.0
        %5099 = vmatpush1.msra.mxu0 0.0
        %5100 = vmatprep.subr.mxu0 0.0
        %5101 = vmatpush1.msra.mxu0 0.0
        %5102 = vmatprep.subr.mxu0 0.0
        %5103 = vmatpush1.msra.mxu0 0.0
        %5104 = vmatprep.subr.mxu0 0.0
        %5105 = vmatpush1.msra.mxu0 0.0
        %5106 = vmatprep.subr.mxu0 0.0
        %5107 = vmatpush1.msra.mxu0 0.0
        %5108 = vmatprep.subr.mxu0 0.0
        %5109 = vmatpush1.msra.mxu0 0.0
        %5110 = vmatprep.subr.mxu0 0.0
        %5111 = vmatpush1.msra.mxu0 0.0
        %5112 = vmatprep.subr.mxu0 0.0
        %5113 = vmatpush1.msra.mxu0 0.0
        %5114 = vmatprep.subr.mxu0 0.0
        %5115 = vmatpush1.msra.mxu0 0.0
        %5116 = vmatprep.mubr.f32.mxu0 0.0
        %5117 = vmatmul.mubr.f32.gmra.mrb[0].mxu0 %v5020
        %v5118 = vpop.f32.mrb[0].mxu0
        %v5119 = vadd.f32 %v1122, %v5118
        %v5120 = vpop.f32.mrb[0].mxu0
        %5121 = vmatprep.mubr.f32.mxu0 0.0
        %5122 = vmatmul.mubr.f32.gmra.mrb[0].mxu0 %v5022
        %v5123 = vpop.f32.mrb[0].mxu0
        %v5124 = vadd.f32 %v1122, %v5123
        %v5125 = vpop.f32.mrb[0].mxu0
        %5126 = vmatprep.mubr.f32.mxu0 0.0
        %5127 = vmatmul.mubr.f32.gmra.mrb[0].mxu0 %v5024
        %v5128 = vpop.f32.mrb[0].mxu0
        %v5129 = vadd.f32 %v1122, %v5128
        %v5130 = vpop.f32.mrb[0].mxu0
        %5131 = vmatprep.mubr.f32.mxu0 0.0
        %5132 = vmatmul.mubr.f32.gmra.mrb[0].mxu0 %v5026
        %v5133 = vpop.f32.mrb[0].mxu0
        %v5134 = vadd.f32 %v1122, %v5133
        %v5135 = vpop.f32.mrb[0].mxu0
        %5136 = vmatprep.mubr.f32.mxu0 0.0
        %5137 = vmatmul.mubr.f32.gmra.mrb[0].mxu0 %v5028
        %v5138 = vpop.f32.mrb[0].mxu0
        %v5139 = vadd.f32 %v1122, %v5138
        %v5140 = vpop.f32.mrb[0].mxu0
        %5141 = vmatprep.mubr.f32.mxu0 0.0
        %5142 = vmatmul.mubr.f32.gmra.mrb[0].mxu0 %v5030
        %v5143 = vpop.f32.mrb[0].mxu0
        %v5144 = vadd.f32 %v1122, %v5143
        %v5145 = vpop.f32.mrb[0].mxu0
        %5146 = vmatprep.mubr.f32.mxu0 0.0
        %5147 = vmatmul.mubr.f32.gmra.mrb[0].mxu0 %v5032
        %v5148 = vpop.f32.mrb[0].mxu0
        %v5149 = vadd.f32 %v1122, %v5148
        %v5150 = vpop.f32.mrb[0].mxu0
        %5151 = vmatprep.mubr.f32.mxu0 0.0
        %5152 = vmatmul.mubr.f32.gmra.mrb[0].mxu0 %v5034
        %v5153 = vpop.f32.mrb[0].mxu0
        %v5154 = vadd.f32 %v1122, %v5153
        %v5155 = vpop.f32.mrb[0].mxu0
        %5156 = vmatprep.mubr.f32.mxu0 0.0
        %5157 = vmatmul.mubr.f32.gmra.mrb[0].mxu0 %v5036
        %v5158 = vpop.f32.mrb[0].mxu0
        %v5159 = vadd.f32 %v1122, %v5158
        %v5160 = vpop.f32.mrb[0].mxu0
        %5161 = vmatprep.mubr.f32.mxu0 0.0
        %5162 = vmatmul.mubr.f32.gmra.mrb[0].mxu0 %v5038
        %v5163 = vpop.f32.mrb[0].mxu0
        %v5164 = vadd.f32 %v1122, %v5163
        %v5165 = vpop.f32.mrb[0].mxu0
        %5166 = vmatprep.mubr.f32.mxu0 0.0
        %5167 = vmatmul.mubr.f32.gmra.mrb[0].mxu0 %v5040
        %v5168 = vpop.f32.mrb[0].mxu0
        %v5169 = vadd.f32 %v1122, %v5168
        %v5170 = vpop.f32.mrb[0].mxu0
        %5171 = vmatprep.mubr.f32.mxu0 0.0
        %5172 = vmatmul.mubr.f32.gmra.mrb[0].mxu0 %v5042
        %v5173 = vpop.f32.mrb[0].mxu0
        %v5174 = vadd.f32 %v1122, %v5173
        %v5175 = vpop.f32.mrb[0].mxu0
        %5176 = vmatprep.mubr.f32.mxu0 0.0
        %5177 = vmatmul.mubr.f32.gmra.mrb[0].mxu0 %v5044
        %v5178 = vpop.f32.mrb[0].mxu0
        %v5179 = vadd.f32 %v1122, %v5178
        %v5180 = vpop.f32.mrb[0].mxu0
        %5181 = vmatprep.mubr.f32.mxu0 0.0
        %5182 = vmatmul.mubr.f32.gmra.mrb[0].mxu0 %v5046
        %v5183 = vpop.f32.mrb[0].mxu0
        %v5184 = vadd.f32 %v1122, %v5183
        %v5185 = vpop.f32.mrb[0].mxu0
        %5186 = vmatprep.mubr.f32.mxu0 0.0
        %5187 = vmatmul.mubr.f32.gmra.mrb[0].mxu0 %v5048
        %v5188 = vpop.f32.mrb[0].mxu0
        %v5189 = vadd.f32 %v1122, %v5188
        %v5190 = vpop.f32.mrb[0].mxu0
        %5191 = vmatprep.mubr.f32.mxu0 0.0
        %5192 = vmatmul.mubr.f32.gmra.mrb[0].mxu0 %v5050
        %v5193 = vpop.f32.mrb[0].mxu0
        %v5194 = vadd.f32 %v1122, %v5193
        %v5195 = vpop.f32.mrb[0].mxu0
        %5196 = vdwg.mxu0
        %5213 = vrot.lane.b32.xlu0 %v5119, 112
        %v5214 = vpop.permute.xlu0 %5213
        %5215 = vrot.lane.b32.xlu0 %v5124, 112
        %v5216 = vpop.permute.xlu0 %5215
        %5217 = vrot.lane.b32.xlu0 %v5129, 112
        %v5218 = vpop.permute.xlu0 %5217
        %5219 = vrot.lane.b32.xlu0 %v5134, 112
        %v5220 = vpop.permute.xlu0 %5219
        %5221 = vrot.lane.b32.xlu0 %v5139, 112
        %v5222 = vpop.permute.xlu0 %5221
        %5223 = vrot.lane.b32.xlu0 %v5144, 112
        %v5224 = vpop.permute.xlu0 %5223
        %5225 = vrot.lane.b32.xlu0 %v5149, 112
        %v5226 = vpop.permute.xlu0 %5225
        %5227 = vrot.lane.b32.xlu0 %v5154, 112
        %v5228 = vpop.permute.xlu0 %5227
        %5229 = vrot.lane.b32.xlu0 %v5159, 112
        %v5230 = vpop.permute.xlu0 %5229
        %5231 = vrot.lane.b32.xlu0 %v5164, 112
        %v5232 = vpop.permute.xlu0 %5231
        %5233 = vrot.lane.b32.xlu0 %v5169, 112
        %v5234 = vpop.permute.xlu0 %5233
        %5235 = vrot.lane.b32.xlu0 %v5174, 112
        %v5236 = vpop.permute.xlu0 %5235
        %5237 = vrot.lane.b32.xlu0 %v5179, 112
        %v5238 = vpop.permute.xlu0 %5237
        %5239 = vrot.lane.b32.xlu0 %v5184, 112
        %v5240 = vpop.permute.xlu0 %5239
        %5241 = vrot.lane.b32.xlu0 %v5189, 112
        %v5242 = vpop.permute.xlu0 %5241
        %5243 = vrot.lane.b32.xlu0 %v5194, 112
        %v5244 = vpop.permute.xlu0 %5243
        %v5261 = vadd.f32 %v4956, %v5214
        %v5262 = vadd.f32 %v4958, %v5216
        %v5263 = vadd.f32 %v4960, %v5218
        %v5264 = vadd.f32 %v4962, %v5220
        %v5265 = vadd.f32 %v4964, %v5222
        %v5266 = vadd.f32 %v4966, %v5224
        %v5267 = vadd.f32 %v4968, %v5226
        %v5268 = vadd.f32 %v4970, %v5228
        %v5269 = vadd.f32 %v4972, %v5230
        %v5270 = vadd.f32 %v4974, %v5232
        %v5271 = vadd.f32 %v4976, %v5234
        %v5272 = vadd.f32 %v4978, %v5236
        %v5273 = vadd.f32 %v4980, %v5238
        %v5274 = vadd.f32 %v4982, %v5240
        %v5275 = vadd.f32 %v4984, %v5242
        %v5276 = vadd.f32 %v4986, %v5244
        %v5277 = vxor.u32 %v5261, 2147483648
        %v5278 = vxor.u32 %v5262, 2147483648
        %v5279 = vxor.u32 %v5263, 2147483648
        %v5280 = vxor.u32 %v5264, 2147483648
        %v5281 = vxor.u32 %v5265, 2147483648
        %v5282 = vxor.u32 %v5266, 2147483648
        %v5283 = vxor.u32 %v5267, 2147483648
        %v5284 = vxor.u32 %v5268, 2147483648
        %v5285 = vxor.u32 %v5269, 2147483648
        %v5286 = vxor.u32 %v5270, 2147483648
        %v5287 = vxor.u32 %v5271, 2147483648
        %v5288 = vxor.u32 %v5272, 2147483648
        %v5289 = vxor.u32 %v5273, 2147483648
        %v5290 = vxor.u32 %v5274, 2147483648
        %v5291 = vxor.u32 %v5275, 2147483648
        %v5292 = vxor.u32 %v5276, 2147483648
        %v5293 = vmul.f32 %v5277, 1.442695
        %v5294 = vpow.pop %v5293
        %v5295 = vmul.f32 %v5278, 1.442695
        %v5296 = vpow.pop %v5295
        %v5297 = vmul.f32 %v5279, 1.442695
        %v5298 = vpow.pop %v5297
        %v5299 = vmul.f32 %v5280, 1.442695
        %v5300 = vpow.pop %v5299
        %v5301 = vmul.f32 %v5281, 1.442695
        %v5302 = vpow.pop %v5301
        %v5303 = vmul.f32 %v5282, 1.442695
        %v5304 = vpow.pop %v5303
        %v5305 = vmul.f32 %v5283, 1.442695
        %v5306 = vpow.pop %v5305
        %v5307 = vmul.f32 %v5284, 1.442695
        %v5308 = vpow.pop %v5307
        %v5309 = vmul.f32 %v5285, 1.442695
        %v5310 = vpow.pop %v5309
        %v5311 = vmul.f32 %v5286, 1.442695
        %v5312 = vpow.pop %v5311
        %v5313 = vmul.f32 %v5287, 1.442695
        %v5314 = vpow.pop %v5313
        %v5315 = vmul.f32 %v5288, 1.442695
        %v5316 = vpow.pop %v5315
        %v5317 = vmul.f32 %v5289, 1.442695
        %v5318 = vpow.pop %v5317
        %v5319 = vmul.f32 %v5290, 1.442695
        %v5320 = vpow.pop %v5319
        %v5321 = vmul.f32 %v5291, 1.442695
        %v5322 = vpow.pop %v5321
        %v5323 = vmul.f32 %v5292, 1.442695
        %v5324 = vpow.pop %v5323
        %v5325 = vadd.f32 %v5294, 1.0
        %v5326 = vadd.f32 %v5296, 1.0
        %v5327 = vadd.f32 %v5298, 1.0
        %v5328 = vadd.f32 %v5300, 1.0
        %v5329 = vadd.f32 %v5302, 1.0
        %v5330 = vadd.f32 %v5304, 1.0
        %v5331 = vadd.f32 %v5306, 1.0
        %v5332 = vadd.f32 %v5308, 1.0
        %v5333 = vadd.f32 %v5310, 1.0
        %v5334 = vadd.f32 %v5312, 1.0
        %v5335 = vadd.f32 %v5314, 1.0
        %v5336 = vadd.f32 %v5316, 1.0
        %v5337 = vadd.f32 %v5318, 1.0
        %v5338 = vadd.f32 %v5320, 1.0
        %v5339 = vadd.f32 %v5322, 1.0
        %v5340 = vadd.f32 %v5324, 1.0
        %v5341 = vrcp.pop %v5325
        %v5342 = vmul.f32 1.0, %v5341
        %v5343 = vrcp.pop %v5326
        %v5344 = vmul.f32 1.0, %v5343
        %v5345 = vrcp.pop %v5327
        %v5346 = vmul.f32 1.0, %v5345
        %v5347 = vrcp.pop %v5328
        %v5348 = vmul.f32 1.0, %v5347
        %v5349 = vrcp.pop %v5329
        %v5350 = vmul.f32 1.0, %v5349
        %v5351 = vrcp.pop %v5330
        %v5352 = vmul.f32 1.0, %v5351
        %v5353 = vrcp.pop %v5331
        %v5354 = vmul.f32 1.0, %v5353
        %v5355 = vrcp.pop %v5332
        %v5356 = vmul.f32 1.0, %v5355
        %v5357 = vrcp.pop %v5333
        %v5358 = vmul.f32 1.0, %v5357
        %v5359 = vrcp.pop %v5334
        %v5360 = vmul.f32 1.0, %v5359
        %v5361 = vrcp.pop %v5335
        %v5362 = vmul.f32 1.0, %v5361
        %v5363 = vrcp.pop %v5336
        %v5364 = vmul.f32 1.0, %v5363
        %v5365 = vrcp.pop %v5337
        %v5366 = vmul.f32 1.0, %v5365
        %v5367 = vrcp.pop %v5338
        %v5368 = vmul.f32 1.0, %v5367
        %v5369 = vrcp.pop %v5339
        %v5370 = vmul.f32 1.0, %v5369
        %v5371 = vrcp.pop %v5340
        %v5372 = vmul.f32 1.0, %v5371
        %v5373 = vadd.f32 %v4957, %v5214
        %v5374 = vadd.f32 %v4959, %v5216
        %v5375 = vadd.f32 %v4961, %v5218
        %v5376 = vadd.f32 %v4963, %v5220
        %v5377 = vadd.f32 %v4965, %v5222
        %v5378 = vadd.f32 %v4967, %v5224
        %v5379 = vadd.f32 %v4969, %v5226
        %v5380 = vadd.f32 %v4971, %v5228
        %v5381 = vadd.f32 %v4973, %v5230
        %v5382 = vadd.f32 %v4975, %v5232
        %v5383 = vadd.f32 %v4977, %v5234
        %v5384 = vadd.f32 %v4979, %v5236
        %v5385 = vadd.f32 %v4981, %v5238
        %v5386 = vadd.f32 %v4983, %v5240
        %v5387 = vadd.f32 %v4985, %v5242
        %v5388 = vadd.f32 %v4987, %v5244
        %v5389 = vxor.u32 %v5373, 2147483648
        %v5390 = vxor.u32 %v5374, 2147483648
        %v5391 = vxor.u32 %v5375, 2147483648
        %v5392 = vxor.u32 %v5376, 2147483648
        %v5393 = vxor.u32 %v5377, 2147483648
        %v5394 = vxor.u32 %v5378, 2147483648
        %v5395 = vxor.u32 %v5379, 2147483648
        %v5396 = vxor.u32 %v5380, 2147483648
        %v5397 = vxor.u32 %v5381, 2147483648
        %v5398 = vxor.u32 %v5382, 2147483648
        %v5399 = vxor.u32 %v5383, 2147483648
        %v5400 = vxor.u32 %v5384, 2147483648
        %v5401 = vxor.u32 %v5385, 2147483648
        %v5402 = vxor.u32 %v5386, 2147483648
        %v5403 = vxor.u32 %v5387, 2147483648
        %v5404 = vxor.u32 %v5388, 2147483648
        %v5405 = vmul.f32 %v5389, 1.442695
        %v5406 = vpow.pop %v5405
        %v5407 = vmul.f32 %v5390, 1.442695
        %v5408 = vpow.pop %v5407
        %v5409 = vmul.f32 %v5391, 1.442695
        %v5410 = vpow.pop %v5409
        %v5411 = vmul.f32 %v5392, 1.442695
        %v5412 = vpow.pop %v5411
        %v5413 = vmul.f32 %v5393, 1.442695
        %v5414 = vpow.pop %v5413
        %v5415 = vmul.f32 %v5394, 1.442695
        %v5416 = vpow.pop %v5415
        %v5417 = vmul.f32 %v5395, 1.442695
        %v5418 = vpow.pop %v5417
        %v5419 = vmul.f32 %v5396, 1.442695
        %v5420 = vpow.pop %v5419
        %v5421 = vmul.f32 %v5397, 1.442695
        %v5422 = vpow.pop %v5421
        %v5423 = vmul.f32 %v5398, 1.442695
        %v5424 = vpow.pop %v5423
        %v5425 = vmul.f32 %v5399, 1.442695
        %v5426 = vpow.pop %v5425
        %v5427 = vmul.f32 %v5400, 1.442695
        %v5428 = vpow.pop %v5427
        %v5429 = vmul.f32 %v5401, 1.442695
        %v5430 = vpow.pop %v5429
        %v5431 = vmul.f32 %v5402, 1.442695
        %v5432 = vpow.pop %v5431
        %v5433 = vmul.f32 %v5403, 1.442695
        %v5434 = vpow.pop %v5433
        %v5435 = vmul.f32 %v5404, 1.442695
        %v5436 = vpow.pop %v5435
        %v5437 = vadd.f32 %v5406, 1.0
        %v5438 = vadd.f32 %v5408, 1.0
        %v5439 = vadd.f32 %v5410, 1.0
        %v5440 = vadd.f32 %v5412, 1.0
        %v5441 = vadd.f32 %v5414, 1.0
        %v5442 = vadd.f32 %v5416, 1.0
        %v5443 = vadd.f32 %v5418, 1.0
        %v5444 = vadd.f32 %v5420, 1.0
        %v5445 = vadd.f32 %v5422, 1.0
        %v5446 = vadd.f32 %v5424, 1.0
        %v5447 = vadd.f32 %v5426, 1.0
        %v5448 = vadd.f32 %v5428, 1.0
        %v5449 = vadd.f32 %v5430, 1.0
        %v5450 = vadd.f32 %v5432, 1.0
        %v5451 = vadd.f32 %v5434, 1.0
        %v5452 = vadd.f32 %v5436, 1.0
        %v5453 = vrcp.pop %v5437
        %v5454 = vmul.f32 1.0, %v5453
        %v5455 = vrcp.pop %v5438
        %v5456 = vmul.f32 1.0, %v5455
        %v5457 = vrcp.pop %v5439
        %v5458 = vmul.f32 1.0, %v5457
        %v5459 = vrcp.pop %v5440
        %v5460 = vmul.f32 1.0, %v5459
        %v5461 = vrcp.pop %v5441
        %v5462 = vmul.f32 1.0, %v5461
        %v5463 = vrcp.pop %v5442
        %v5464 = vmul.f32 1.0, %v5463
        %v5465 = vrcp.pop %v5443
        %v5466 = vmul.f32 1.0, %v5465
        %v5467 = vrcp.pop %v5444
        %v5468 = vmul.f32 1.0, %v5467
        %v5469 = vrcp.pop %v5445
        %v5470 = vmul.f32 1.0, %v5469
        %v5471 = vrcp.pop %v5446
        %v5472 = vmul.f32 1.0, %v5471
        %v5473 = vrcp.pop %v5447
        %v5474 = vmul.f32 1.0, %v5473
        %v5475 = vrcp.pop %v5448
        %v5476 = vmul.f32 1.0, %v5475
        %v5477 = vrcp.pop %v5449
        %v5478 = vmul.f32 1.0, %v5477
        %v5479 = vrcp.pop %v5450
        %v5480 = vmul.f32 1.0, %v5479
        %v5481 = vrcp.pop %v5451
        %v5482 = vmul.f32 1.0, %v5481
        %v5483 = vrcp.pop %v5452
        %v5484 = vmul.f32 1.0, %v5483
        %5485 = vrot.lane.b32.xlu0 %v5119, 80
        %v5486 = vpop.permute.xlu0 %5485
        %5487 = vrot.lane.b32.xlu0 %v5124, 80
        %v5488 = vpop.permute.xlu0 %5487
        %5489 = vrot.lane.b32.xlu0 %v5129, 80
        %v5490 = vpop.permute.xlu0 %5489
        %5491 = vrot.lane.b32.xlu0 %v5134, 80
        %v5492 = vpop.permute.xlu0 %5491
        %5493 = vrot.lane.b32.xlu0 %v5139, 80
        %v5494 = vpop.permute.xlu0 %5493
        %5495 = vrot.lane.b32.xlu0 %v5144, 80
        %v5496 = vpop.permute.xlu0 %5495
        %5497 = vrot.lane.b32.xlu0 %v5149, 80
        %v5498 = vpop.permute.xlu0 %5497
        %5499 = vrot.lane.b32.xlu0 %v5154, 80
        %v5500 = vpop.permute.xlu0 %5499
        %5501 = vrot.lane.b32.xlu0 %v5159, 80
        %v5502 = vpop.permute.xlu0 %5501
        %5503 = vrot.lane.b32.xlu0 %v5164, 80
        %v5504 = vpop.permute.xlu0 %5503
        %5505 = vrot.lane.b32.xlu0 %v5169, 80
        %v5506 = vpop.permute.xlu0 %5505
        %5507 = vrot.lane.b32.xlu0 %v5174, 80
        %v5508 = vpop.permute.xlu0 %5507
        %5509 = vrot.lane.b32.xlu0 %v5179, 80
        %v5510 = vpop.permute.xlu0 %5509
        %5511 = vrot.lane.b32.xlu0 %v5184, 80
        %v5512 = vpop.permute.xlu0 %5511
        %5513 = vrot.lane.b32.xlu0 %v5189, 80
        %v5514 = vpop.permute.xlu0 %5513
        %5515 = vrot.lane.b32.xlu0 %v5194, 80
        %v5516 = vpop.permute.xlu0 %5515
        %v5533 = vmul.f32 %v5342, %v5486
        %v5534 = vmul.f32 %v5344, %v5488
        %v5535 = vmul.f32 %v5346, %v5490
        %v5536 = vmul.f32 %v5348, %v5492
        %v5537 = vmul.f32 %v5350, %v5494
        %v5538 = vmul.f32 %v5352, %v5496
        %v5539 = vmul.f32 %v5354, %v5498
        %v5540 = vmul.f32 %v5356, %v5500
        %v5541 = vmul.f32 %v5358, %v5502
        %v5542 = vmul.f32 %v5360, %v5504
        %v5543 = vmul.f32 %v5362, %v5506
        %v5544 = vmul.f32 %v5364, %v5508
        %v5545 = vmul.f32 %v5366, %v5510
        %v5546 = vmul.f32 %v5368, %v5512
        %v5547 = vmul.f32 %v5370, %v5514
        %v5548 = vmul.f32 %v5372, %v5516
        %5565 = vrot.lane.b32.xlu0 %v5533, 32
        %v5566 = vpop.permute.xlu0 %5565
        %5567 = vrot.lane.b32.xlu0 %v5534, 32
        %v5568 = vpop.permute.xlu0 %5567
        %5569 = vrot.lane.b32.xlu0 %v5535, 32
        %v5570 = vpop.permute.xlu0 %5569
        %5571 = vrot.lane.b32.xlu0 %v5536, 32
        %v5572 = vpop.permute.xlu0 %5571
        %5573 = vrot.lane.b32.xlu0 %v5537, 32
        %v5574 = vpop.permute.xlu0 %5573
        %5575 = vrot.lane.b32.xlu0 %v5538, 32
        %v5576 = vpop.permute.xlu0 %5575
        %5577 = vrot.lane.b32.xlu0 %v5539, 32
        %v5578 = vpop.permute.xlu0 %5577
        %5579 = vrot.lane.b32.xlu0 %v5540, 32
        %v5580 = vpop.permute.xlu0 %5579
        %5581 = vrot.lane.b32.xlu0 %v5541, 32
        %v5582 = vpop.permute.xlu0 %5581
        %5583 = vrot.lane.b32.xlu0 %v5542, 32
        %v5584 = vpop.permute.xlu0 %5583
        %5585 = vrot.lane.b32.xlu0 %v5543, 32
        %v5586 = vpop.permute.xlu0 %5585
        %5587 = vrot.lane.b32.xlu0 %v5544, 32
        %v5588 = vpop.permute.xlu0 %5587
        %5589 = vrot.lane.b32.xlu0 %v5545, 32
        %v5590 = vpop.permute.xlu0 %5589
        %5591 = vrot.lane.b32.xlu0 %v5546, 32
        %v5592 = vpop.permute.xlu0 %5591
        %5593 = vrot.lane.b32.xlu0 %v5547, 32
        %v5594 = vpop.permute.xlu0 %5593
        %5595 = vrot.lane.b32.xlu0 %v5548, 32
        %v5596 = vpop.permute.xlu0 %5595
        %v5613 = vadd.f32 %v4957, %v5566
        %v5614 = vadd.f32 %v4959, %v5568
        %v5615 = vadd.f32 %v4961, %v5570
        %v5616 = vadd.f32 %v4963, %v5572
        %v5617 = vadd.f32 %v4965, %v5574
        %v5618 = vadd.f32 %v4967, %v5576
        %v5619 = vadd.f32 %v4969, %v5578
        %v5620 = vadd.f32 %v4971, %v5580
        %v5621 = vadd.f32 %v4973, %v5582
        %v5622 = vadd.f32 %v4975, %v5584
        %v5623 = vadd.f32 %v4977, %v5586
        %v5624 = vadd.f32 %v4979, %v5588
        %v5625 = vadd.f32 %v4981, %v5590
        %v5626 = vadd.f32 %v4983, %v5592
        %v5627 = vadd.f32 %v4985, %v5594
        %v5628 = vadd.f32 %v4987, %v5596
        %v5629 = vtanh.pop %v5613
        %v5630 = vtanh.pop %v5614
        %v5631 = vtanh.pop %v5615
        %v5632 = vtanh.pop %v5616
        %v5633 = vtanh.pop %v5617
        %v5634 = vtanh.pop %v5618
        %v5635 = vtanh.pop %v5619
        %v5636 = vtanh.pop %v5620
        %v5637 = vtanh.pop %v5621
        %v5638 = vtanh.pop %v5622
        %v5639 = vtanh.pop %v5623
        %v5640 = vtanh.pop %v5624
        %v5641 = vtanh.pop %v5625
        %v5642 = vtanh.pop %v5626
        %v5643 = vtanh.pop %v5627
        %v5644 = vtanh.pop %v5628
        %v5645 = vsub.f32 1.0, %v5454
        %v5646 = vsub.f32 1.0, %v5456
        %v5647 = vsub.f32 1.0, %v5458
        %v5648 = vsub.f32 1.0, %v5460
        %v5649 = vsub.f32 1.0, %v5462
        %v5650 = vsub.f32 1.0, %v5464
        %v5651 = vsub.f32 1.0, %v5466
        %v5652 = vsub.f32 1.0, %v5468
        %v5653 = vsub.f32 1.0, %v5470
        %v5654 = vsub.f32 1.0, %v5472
        %v5655 = vsub.f32 1.0, %v5474
        %v5656 = vsub.f32 1.0, %v5476
        %v5657 = vsub.f32 1.0, %v5478
        %v5658 = vsub.f32 1.0, %v5480
        %v5659 = vsub.f32 1.0, %v5482
        %v5660 = vsub.f32 1.0, %v5484
        %5677 = vrot.lane.b32.xlu0 %v5629, 112
        %v5678 = vpop.permute.xlu0 %5677
        %5679 = vrot.lane.b32.xlu0 %v5630, 112
        %v5680 = vpop.permute.xlu0 %5679
        %5681 = vrot.lane.b32.xlu0 %v5631, 112
        %v5682 = vpop.permute.xlu0 %5681
        %5683 = vrot.lane.b32.xlu0 %v5632, 112
        %v5684 = vpop.permute.xlu0 %5683
        %5685 = vrot.lane.b32.xlu0 %v5633, 112
        %v5686 = vpop.permute.xlu0 %5685
        %5687 = vrot.lane.b32.xlu0 %v5634, 112
        %v5688 = vpop.permute.xlu0 %5687
        %5689 = vrot.lane.b32.xlu0 %v5635, 112
        %v5690 = vpop.permute.xlu0 %5689
        %5691 = vrot.lane.b32.xlu0 %v5636, 112
        %v5692 = vpop.permute.xlu0 %5691
        %5693 = vrot.lane.b32.xlu0 %v5637, 112
        %v5694 = vpop.permute.xlu0 %5693
        %5695 = vrot.lane.b32.xlu0 %v5638, 112
        %v5696 = vpop.permute.xlu0 %5695
        %5697 = vrot.lane.b32.xlu0 %v5639, 112
        %v5698 = vpop.permute.xlu0 %5697
        %5699 = vrot.lane.b32.xlu0 %v5640, 112
        %v5700 = vpop.permute.xlu0 %5699
        %5701 = vrot.lane.b32.xlu0 %v5641, 112
        %v5702 = vpop.permute.xlu0 %5701
        %5703 = vrot.lane.b32.xlu0 %v5642, 112
        %v5704 = vpop.permute.xlu0 %5703
        %5705 = vrot.lane.b32.xlu0 %v5643, 112
        %v5706 = vpop.permute.xlu0 %5705
        %5707 = vrot.lane.b32.xlu0 %v5644, 112
        %v5708 = vpop.permute.xlu0 %5707
        %v5725 = vmul.f32 %v5645, %v5678
        %v5726 = vmul.f32 %v5646, %v5680
        %v5727 = vmul.f32 %v5647, %v5682
        %v5728 = vmul.f32 %v5648, %v5684
        %v5729 = vmul.f32 %v5649, %v5686
        %v5730 = vmul.f32 %v5650, %v5688
        %v5731 = vmul.f32 %v5651, %v5690
        %v5732 = vmul.f32 %v5652, %v5692
        %v5733 = vmul.f32 %v5653, %v5694
        %v5734 = vmul.f32 %v5654, %v5696
        %v5735 = vmul.f32 %v5655, %v5698
        %v5736 = vmul.f32 %v5656, %v5700
        %v5737 = vmul.f32 %v5657, %v5702
        %v5738 = vmul.f32 %v5658, %v5704
        %v5739 = vmul.f32 %v5659, %v5706
        %v5740 = vmul.f32 %v5660, %v5708
        %v5757 = vmul.f32 %v5454, %v4989
        %v5758 = vmul.f32 %v5456, %v4991
        %v5759 = vmul.f32 %v5458, %v4993
        %v5760 = vmul.f32 %v5460, %v4995
        %v5761 = vmul.f32 %v5462, %v4997
        %v5762 = vmul.f32 %v5464, %v4999
        %v5763 = vmul.f32 %v5466, %v5001
        %v5764 = vmul.f32 %v5468, %v5003
        %v5765 = vmul.f32 %v5470, %v5005
        %v5766 = vmul.f32 %v5472, %v5007
        %v5767 = vmul.f32 %v5474, %v5009
        %v5768 = vmul.f32 %v5476, %v5011
        %v5769 = vmul.f32 %v5478, %v5013
        %v5770 = vmul.f32 %v5480, %v5015
        %v5771 = vmul.f32 %v5482, %v5017
        %v5772 = vmul.f32 %v5484, %v5019
        %v5773 = vadd.f32 %v5725, %v5757
        %v5774 = vadd.f32 %v5726, %v5758
        %v5775 = vadd.f32 %v5727, %v5759
        %v5776 = vadd.f32 %v5728, %v5760
        %v5777 = vadd.f32 %v5729, %v5761
        %v5778 = vadd.f32 %v5730, %v5762
        %v5779 = vadd.f32 %v5731, %v5763
        %v5780 = vadd.f32 %v5732, %v5764
        %v5781 = vadd.f32 %v5733, %v5765
        %v5782 = vadd.f32 %v5734, %v5766
        %v5783 = vadd.f32 %v5735, %v5767
        %v5784 = vadd.f32 %v5736, %v5768
        %v5785 = vadd.f32 %v5737, %v5769
        %v5786 = vadd.f32 %v5738, %v5770
        %v5787 = vadd.f32 %v5739, %v5771
        %v5788 = vadd.f32 %v5740, %v5772
        %5805 = vrot.lane.b32.xlu0 %v5773, 16
        %v5806 = vpop.permute.xlu0 %5805
        %5807 = vrot.lane.b32.xlu0 %v5774, 16
        %v5808 = vpop.permute.xlu0 %5807
        %5809 = vrot.lane.b32.xlu0 %v5775, 16
        %v5810 = vpop.permute.xlu0 %5809
        %5811 = vrot.lane.b32.xlu0 %v5776, 16
        %v5812 = vpop.permute.xlu0 %5811
        %5813 = vrot.lane.b32.xlu0 %v5777, 16
        %v5814 = vpop.permute.xlu0 %5813
        %5815 = vrot.lane.b32.xlu0 %v5778, 16
        %v5816 = vpop.permute.xlu0 %5815
        %5817 = vrot.lane.b32.xlu0 %v5779, 16
        %v5818 = vpop.permute.xlu0 %5817
        %5819 = vrot.lane.b32.xlu0 %v5780, 16
        %v5820 = vpop.permute.xlu0 %5819
        %5821 = vrot.lane.b32.xlu0 %v5781, 16
        %v5822 = vpop.permute.xlu0 %5821
        %5823 = vrot.lane.b32.xlu0 %v5782, 16
        %v5824 = vpop.permute.xlu0 %5823
        %5825 = vrot.lane.b32.xlu0 %v5783, 16
        %v5826 = vpop.permute.xlu0 %5825
        %5827 = vrot.lane.b32.xlu0 %v5784, 16
        %v5828 = vpop.permute.xlu0 %5827
        %5829 = vrot.lane.b32.xlu0 %v5785, 16
        %v5830 = vpop.permute.xlu0 %5829
        %5831 = vrot.lane.b32.xlu0 %v5786, 16
        %v5832 = vpop.permute.xlu0 %5831
        %5833 = vrot.lane.b32.xlu0 %v5787, 16
        %v5834 = vpop.permute.xlu0 %5833
        %5835 = vrot.lane.b32.xlu0 %v5788, 16
        %v5836 = vpop.permute.xlu0 %5835
        %v5853 = vadd.f32 %v4940, %v5806
        %v5854 = vadd.f32 %v4941, %v5808
        %v5855 = vadd.f32 %v4942, %v5810
        %v5856 = vadd.f32 %v4943, %v5812
        %v5857 = vadd.f32 %v4944, %v5814
        %v5858 = vadd.f32 %v4945, %v5816
        %v5859 = vadd.f32 %v4946, %v5818
        %v5860 = vadd.f32 %v4947, %v5820
        %v5861 = vadd.f32 %v4948, %v5822
        %v5862 = vadd.f32 %v4949, %v5824
        %v5863 = vadd.f32 %v4950, %v5826
        %v5864 = vadd.f32 %v4951, %v5828
        %v5865 = vadd.f32 %v4952, %v5830
        %v5866 = vadd.f32 %v4953, %v5832
        %v5867 = vadd.f32 %v4954, %v5834
        %v5868 = vadd.f32 %v4955, %v5836
        %v5869 = vsel %vm438, %v5773, 0
        %v5871 = vsel %vm438, %v5774, 0
        %v5873 = vsel %vm438, %v5775, 0
        %v5875 = vsel %vm438, %v5776, 0
        %v5877 = vsel %vm438, %v5777, 0
        %v5879 = vsel %vm438, %v5778, 0
        %v5881 = vsel %vm438, %v5779, 0
        %v5883 = vsel %vm438, %v5780, 0
        %v5885 = vsel %vm438, %v5781, 0
        %v5887 = vsel %vm438, %v5782, 0
        %v5889 = vsel %vm438, %v5783, 0
        %v5891 = vsel %vm438, %v5784, 0
        %v5893 = vsel %vm438, %v5785, 0
        %v5895 = vsel %vm438, %v5786, 0
        %v5897 = vsel %vm438, %v5787, 0
        %v5899 = vsel %vm438, %v5788, 0
        %5901 = vmatprep.subr.mxu0 0.0
        %5902 = vmatpush1.msra.mxu0 %v1099
        %5903 = vmatprep.subr.mxu0 0.0
        %5904 = vmatpush1.msra.mxu0 %v1100
        %5905 = vmatprep.subr.mxu0 0.0
        %5906 = vmatpush1.msra.mxu0 0.0
        %5907 = vmatprep.subr.mxu0 0.0
        %5908 = vmatpush1.msra.mxu0 0.0
        %5909 = vmatprep.subr.mxu0 0.0
        %5910 = vmatpush1.msra.mxu0 0.0
        %5911 = vmatprep.subr.mxu0 0.0
        %5912 = vmatpush1.msra.mxu0 0.0
        %5913 = vmatprep.subr.mxu0 0.0
        %5914 = vmatpush1.msra.mxu0 0.0
        %5915 = vmatprep.subr.mxu0 0.0
        %5916 = vmatpush1.msra.mxu0 0.0
        %5917 = vmatprep.subr.mxu0 0.0
        %5918 = vmatpush1.msra.mxu0 0.0
        %5919 = vmatprep.subr.mxu0 0.0
        %5920 = vmatpush1.msra.mxu0 0.0
        %5921 = vmatprep.subr.mxu0 0.0
        %5922 = vmatpush1.msra.mxu0 0.0
        %5923 = vmatprep.subr.mxu0 0.0
        %5924 = vmatpush1.msra.mxu0 0.0
        %5925 = vmatprep.subr.mxu0 0.0
        %5926 = vmatpush1.msra.mxu0 0.0
        %5927 = vmatprep.subr.mxu0 0.0
        %5928 = vmatpush1.msra.mxu0 0.0
        %5929 = vmatprep.subr.mxu0 0.0
        %5930 = vmatpush1.msra.mxu0 0.0
        %5931 = vmatprep.subr.mxu0 0.0
        %5932 = vmatpush1.msra.mxu0 0.0
        %5933 = vmatprep.subr.mxu0 0.0
        %5934 = vmatpush1.msra.mxu0 0.0
        %5935 = vmatprep.subr.mxu0 0.0
        %5936 = vmatpush1.msra.mxu0 0.0
        %5937 = vmatprep.subr.mxu0 0.0
        %5938 = vmatpush1.msra.mxu0 0.0
        %5939 = vmatprep.subr.mxu0 0.0
        %5940 = vmatpush1.msra.mxu0 0.0
        %5941 = vmatprep.subr.mxu0 0.0
        %5942 = vmatpush1.msra.mxu0 0.0
        %5943 = vmatprep.subr.mxu0 0.0
        %5944 = vmatpush1.msra.mxu0 0.0
        %5945 = vmatprep.subr.mxu0 0.0
        %5946 = vmatpush1.msra.mxu0 0.0
        %5947 = vmatprep.subr.mxu0 0.0
        %5948 = vmatpush1.msra.mxu0 0.0
        %5949 = vmatprep.subr.mxu0 0.0
        %5950 = vmatpush1.msra.mxu0 0.0
        %5951 = vmatprep.subr.mxu0 0.0
        %5952 = vmatpush1.msra.mxu0 0.0
        %5953 = vmatprep.subr.mxu0 0.0
        %5954 = vmatpush1.msra.mxu0 0.0
        %5955 = vmatprep.subr.mxu0 0.0
        %5956 = vmatpush1.msra.mxu0 0.0
        %5957 = vmatprep.subr.mxu0 0.0
        %5958 = vmatpush1.msra.mxu0 0.0
        %5959 = vmatprep.subr.mxu0 0.0
        %5960 = vmatpush1.msra.mxu0 0.0
        %5961 = vmatprep.subr.mxu0 0.0
        %5962 = vmatpush1.msra.mxu0 0.0
        %5963 = vmatprep.subr.mxu0 0.0
        %5964 = vmatpush1.msra.mxu0 0.0
        %5965 = vmatprep.mubr.f32.mxu0 0.0
        %5966 = vmatmul.mubr.f32.gmra.mrb[0].mxu0 %v5869
        %v5967 = vpop.f32.mrb[0].mxu0
        %v5968 = vadd.f32 %v1122, %v5967
        %v5969 = vpop.f32.mrb[0].mxu0
        %5970 = vmatprep.mubr.f32.mxu0 0.0
        %5971 = vmatmul.mubr.f32.gmra.mrb[0].mxu0 %v5871
        %v5972 = vpop.f32.mrb[0].mxu0
        %v5973 = vadd.f32 %v1122, %v5972
        %v5974 = vpop.f32.mrb[0].mxu0
        %5975 = vmatprep.mubr.f32.mxu0 0.0
        %5976 = vmatmul.mubr.f32.gmra.mrb[0].mxu0 %v5873
        %v5977 = vpop.f32.mrb[0].mxu0
        %v5978 = vadd.f32 %v1122, %v5977
        %v5979 = vpop.f32.mrb[0].mxu0
        %5980 = vmatprep.mubr.f32.mxu0 0.0
        %5981 = vmatmul.mubr.f32.gmra.mrb[0].mxu0 %v5875
        %v5982 = vpop.f32.mrb[0].mxu0
        %v5983 = vadd.f32 %v1122, %v5982
        %v5984 = vpop.f32.mrb[0].mxu0
        %5985 = vmatprep.mubr.f32.mxu0 0.0
        %5986 = vmatmul.mubr.f32.gmra.mrb[0].mxu0 %v5877
        %v5987 = vpop.f32.mrb[0].mxu0
        %v5988 = vadd.f32 %v1122, %v5987
        %v5989 = vpop.f32.mrb[0].mxu0
        %5990 = vmatprep.mubr.f32.mxu0 0.0
        %5991 = vmatmul.mubr.f32.gmra.mrb[0].mxu0 %v5879
        %v5992 = vpop.f32.mrb[0].mxu0
        %v5993 = vadd.f32 %v1122, %v5992
        %v5994 = vpop.f32.mrb[0].mxu0
        %5995 = vmatprep.mubr.f32.mxu0 0.0
        %5996 = vmatmul.mubr.f32.gmra.mrb[0].mxu0 %v5881
        %v5997 = vpop.f32.mrb[0].mxu0
        %v5998 = vadd.f32 %v1122, %v5997
        %v5999 = vpop.f32.mrb[0].mxu0
        %6000 = vmatprep.mubr.f32.mxu0 0.0
        %6001 = vmatmul.mubr.f32.gmra.mrb[0].mxu0 %v5883
        %v6002 = vpop.f32.mrb[0].mxu0
        %v6003 = vadd.f32 %v1122, %v6002
        %v6004 = vpop.f32.mrb[0].mxu0
        %6005 = vmatprep.mubr.f32.mxu0 0.0
        %6006 = vmatmul.mubr.f32.gmra.mrb[0].mxu0 %v5885
        %v6007 = vpop.f32.mrb[0].mxu0
        %v6008 = vadd.f32 %v1122, %v6007
        %v6009 = vpop.f32.mrb[0].mxu0
        %6010 = vmatprep.mubr.f32.mxu0 0.0
        %6011 = vmatmul.mubr.f32.gmra.mrb[0].mxu0 %v5887
        %v6012 = vpop.f32.mrb[0].mxu0
        %v6013 = vadd.f32 %v1122, %v6012
        %v6014 = vpop.f32.mrb[0].mxu0
        %6015 = vmatprep.mubr.f32.mxu0 0.0
        %6016 = vmatmul.mubr.f32.gmra.mrb[0].mxu0 %v5889
        %v6017 = vpop.f32.mrb[0].mxu0
        %v6018 = vadd.f32 %v1122, %v6017
        %v6019 = vpop.f32.mrb[0].mxu0
        %6020 = vmatprep.mubr.f32.mxu0 0.0
        %6021 = vmatmul.mubr.f32.gmra.mrb[0].mxu0 %v5891
        %v6022 = vpop.f32.mrb[0].mxu0
        %v6023 = vadd.f32 %v1122, %v6022
        %v6024 = vpop.f32.mrb[0].mxu0
        %6025 = vmatprep.mubr.f32.mxu0 0.0
        %6026 = vmatmul.mubr.f32.gmra.mrb[0].mxu0 %v5893
        %v6027 = vpop.f32.mrb[0].mxu0
        %v6028 = vadd.f32 %v1122, %v6027
        %v6029 = vpop.f32.mrb[0].mxu0
        %6030 = vmatprep.mubr.f32.mxu0 0.0
        %6031 = vmatmul.mubr.f32.gmra.mrb[0].mxu0 %v5895
        %v6032 = vpop.f32.mrb[0].mxu0
        %v6033 = vadd.f32 %v1122, %v6032
        %v6034 = vpop.f32.mrb[0].mxu0
        %6035 = vmatprep.mubr.f32.mxu0 0.0
        %6036 = vmatmul.mubr.f32.gmra.mrb[0].mxu0 %v5897
        %v6037 = vpop.f32.mrb[0].mxu0
        %v6038 = vadd.f32 %v1122, %v6037
        %v6039 = vpop.f32.mrb[0].mxu0
        %6040 = vmatprep.mubr.f32.mxu0 0.0
        %6041 = vmatmul.mubr.f32.gmra.mrb[0].mxu0 %v5899
        %v6042 = vpop.f32.mrb[0].mxu0
        %v6043 = vadd.f32 %v1122, %v6042
        %v6044 = vpop.f32.mrb[0].mxu0
        %6045 = vdwg.mxu0
        %6062 = vrot.lane.b32.xlu0 %v5968, 32
        %v6063 = vpop.permute.xlu0 %6062
        %6064 = vrot.lane.b32.xlu0 %v5973, 32
        %v6065 = vpop.permute.xlu0 %6064
        %6066 = vrot.lane.b32.xlu0 %v5978, 32
        %v6067 = vpop.permute.xlu0 %6066
        %6068 = vrot.lane.b32.xlu0 %v5983, 32
        %v6069 = vpop.permute.xlu0 %6068
        %6070 = vrot.lane.b32.xlu0 %v5988, 32
        %v6071 = vpop.permute.xlu0 %6070
        %6072 = vrot.lane.b32.xlu0 %v5993, 32
        %v6073 = vpop.permute.xlu0 %6072
        %6074 = vrot.lane.b32.xlu0 %v5998, 32
        %v6075 = vpop.permute.xlu0 %6074
        %6076 = vrot.lane.b32.xlu0 %v6003, 32
        %v6077 = vpop.permute.xlu0 %6076
        %6078 = vrot.lane.b32.xlu0 %v6008, 32
        %v6079 = vpop.permute.xlu0 %6078
        %6080 = vrot.lane.b32.xlu0 %v6013, 32
        %v6081 = vpop.permute.xlu0 %6080
        %6082 = vrot.lane.b32.xlu0 %v6018, 32
        %v6083 = vpop.permute.xlu0 %6082
        %6084 = vrot.lane.b32.xlu0 %v6023, 32
        %v6085 = vpop.permute.xlu0 %6084
        %6086 = vrot.lane.b32.xlu0 %v6028, 32
        %v6087 = vpop.permute.xlu0 %6086
        %6088 = vrot.lane.b32.xlu0 %v6033, 32
        %v6089 = vpop.permute.xlu0 %6088
        %6090 = vrot.lane.b32.xlu0 %v6038, 32
        %v6091 = vpop.permute.xlu0 %6090
        %6092 = vrot.lane.b32.xlu0 %v6043, 32
        %v6093 = vpop.permute.xlu0 %6092
        %v6110 = vadd.f32 %v4957, %v6063
        %v6111 = vadd.f32 %v4959, %v6065
        %v6112 = vadd.f32 %v4961, %v6067
        %v6113 = vadd.f32 %v4963, %v6069
        %v6114 = vadd.f32 %v4965, %v6071
        %v6115 = vadd.f32 %v4967, %v6073
        %v6116 = vadd.f32 %v4969, %v6075
        %v6117 = vadd.f32 %v4971, %v6077
        %v6118 = vadd.f32 %v4973, %v6079
        %v6119 = vadd.f32 %v4975, %v6081
        %v6120 = vadd.f32 %v4977, %v6083
        %v6121 = vadd.f32 %v4979, %v6085
        %v6122 = vadd.f32 %v4981, %v6087
        %v6123 = vadd.f32 %v4983, %v6089
        %v6124 = vadd.f32 %v4985, %v6091
        %v6125 = vadd.f32 %v4987, %v6093
        %v6126 = vxor.u32 %v6110, 2147483648
        %v6127 = vxor.u32 %v6111, 2147483648
        %v6128 = vxor.u32 %v6112, 2147483648
        %v6129 = vxor.u32 %v6113, 2147483648
        %v6130 = vxor.u32 %v6114, 2147483648
        %v6131 = vxor.u32 %v6115, 2147483648
        %v6132 = vxor.u32 %v6116, 2147483648
        %v6133 = vxor.u32 %v6117, 2147483648
        %v6134 = vxor.u32 %v6118, 2147483648
        %v6135 = vxor.u32 %v6119, 2147483648
        %v6136 = vxor.u32 %v6120, 2147483648
        %v6137 = vxor.u32 %v6121, 2147483648
        %v6138 = vxor.u32 %v6122, 2147483648
        %v6139 = vxor.u32 %v6123, 2147483648
        %v6140 = vxor.u32 %v6124, 2147483648
        %v6141 = vxor.u32 %v6125, 2147483648
        %v6142 = vmul.f32 %v6126, 1.442695
        %v6143 = vpow.pop %v6142
        %v6144 = vmul.f32 %v6127, 1.442695
        %v6145 = vpow.pop %v6144
        %v6146 = vmul.f32 %v6128, 1.442695
        %v6147 = vpow.pop %v6146
        %v6148 = vmul.f32 %v6129, 1.442695
        %v6149 = vpow.pop %v6148
        %v6150 = vmul.f32 %v6130, 1.442695
        %v6151 = vpow.pop %v6150
        %v6152 = vmul.f32 %v6131, 1.442695
        %v6153 = vpow.pop %v6152
        %v6154 = vmul.f32 %v6132, 1.442695
        %v6155 = vpow.pop %v6154
        %v6156 = vmul.f32 %v6133, 1.442695
        %v6157 = vpow.pop %v6156
        %v6158 = vmul.f32 %v6134, 1.442695
        %v6159 = vpow.pop %v6158
        %v6160 = vmul.f32 %v6135, 1.442695
        %v6161 = vpow.pop %v6160
        %v6162 = vmul.f32 %v6136, 1.442695
        %v6163 = vpow.pop %v6162
        %v6164 = vmul.f32 %v6137, 1.442695
        %v6165 = vpow.pop %v6164
        %v6166 = vmul.f32 %v6138, 1.442695
        %v6167 = vpow.pop %v6166
        %v6168 = vmul.f32 %v6139, 1.442695
        %v6169 = vpow.pop %v6168
        %v6170 = vmul.f32 %v6140, 1.442695
        %v6171 = vpow.pop %v6170
        %v6172 = vmul.f32 %v6141, 1.442695
        %v6173 = vpow.pop %v6172
        %v6174 = vadd.f32 %v6143, 1.0
        %v6175 = vadd.f32 %v6145, 1.0
        %v6176 = vadd.f32 %v6147, 1.0
        %v6177 = vadd.f32 %v6149, 1.0
        %v6178 = vadd.f32 %v6151, 1.0
        %v6179 = vadd.f32 %v6153, 1.0
        %v6180 = vadd.f32 %v6155, 1.0
        %v6181 = vadd.f32 %v6157, 1.0
        %v6182 = vadd.f32 %v6159, 1.0
        %v6183 = vadd.f32 %v6161, 1.0
        %v6184 = vadd.f32 %v6163, 1.0
        %v6185 = vadd.f32 %v6165, 1.0
        %v6186 = vadd.f32 %v6167, 1.0
        %v6187 = vadd.f32 %v6169, 1.0
        %v6188 = vadd.f32 %v6171, 1.0
        %v6189 = vadd.f32 %v6173, 1.0
        %v6190 = vrcp.pop %v6174
        %v6191 = vmul.f32 1.0, %v6190
        %v6192 = vrcp.pop %v6175
        %v6193 = vmul.f32 1.0, %v6192
        %v6194 = vrcp.pop %v6176
        %v6195 = vmul.f32 1.0, %v6194
        %v6196 = vrcp.pop %v6177
        %v6197 = vmul.f32 1.0, %v6196
        %v6198 = vrcp.pop %v6178
        %v6199 = vmul.f32 1.0, %v6198
        %v6200 = vrcp.pop %v6179
        %v6201 = vmul.f32 1.0, %v6200
        %v6202 = vrcp.pop %v6180
        %v6203 = vmul.f32 1.0, %v6202
        %v6204 = vrcp.pop %v6181
        %v6205 = vmul.f32 1.0, %v6204
        %v6206 = vrcp.pop %v6182
        %v6207 = vmul.f32 1.0, %v6206
        %v6208 = vrcp.pop %v6183
        %v6209 = vmul.f32 1.0, %v6208
        %v6210 = vrcp.pop %v6184
        %v6211 = vmul.f32 1.0, %v6210
        %v6212 = vrcp.pop %v6185
        %v6213 = vmul.f32 1.0, %v6212
        %v6214 = vrcp.pop %v6186
        %v6215 = vmul.f32 1.0, %v6214
        %v6216 = vrcp.pop %v6187
        %v6217 = vmul.f32 1.0, %v6216
        %v6218 = vrcp.pop %v6188
        %v6219 = vmul.f32 1.0, %v6218
        %v6220 = vrcp.pop %v6189
        %v6221 = vmul.f32 1.0, %v6220
        %v6222 = vmul.f32 %v6191, %v5968
        %v6223 = vmul.f32 %v6193, %v5973
        %v6224 = vmul.f32 %v6195, %v5978
        %v6225 = vmul.f32 %v6197, %v5983
        %v6226 = vmul.f32 %v6199, %v5988
        %v6227 = vmul.f32 %v6201, %v5993
        %v6228 = vmul.f32 %v6203, %v5998
        %v6229 = vmul.f32 %v6205, %v6003
        %v6230 = vmul.f32 %v6207, %v6008
        %v6231 = vmul.f32 %v6209, %v6013
        %v6232 = vmul.f32 %v6211, %v6018
        %v6233 = vmul.f32 %v6213, %v6023
        %v6234 = vmul.f32 %v6215, %v6028
        %v6235 = vmul.f32 %v6217, %v6033
        %v6236 = vmul.f32 %v6219, %v6038
        %v6237 = vmul.f32 %v6221, %v6043
        %6254 = vrot.lane.b32.xlu0 %v6222, 32
        %v6255 = vpop.permute.xlu0 %6254
        %6256 = vrot.lane.b32.xlu0 %v6223, 32
        %v6257 = vpop.permute.xlu0 %6256
        %6258 = vrot.lane.b32.xlu0 %v6224, 32
        %v6259 = vpop.permute.xlu0 %6258
        %6260 = vrot.lane.b32.xlu0 %v6225, 32
        %v6261 = vpop.permute.xlu0 %6260
        %6262 = vrot.lane.b32.xlu0 %v6226, 32
        %v6263 = vpop.permute.xlu0 %6262
        %6264 = vrot.lane.b32.xlu0 %v6227, 32
        %v6265 = vpop.permute.xlu0 %6264
        %6266 = vrot.lane.b32.xlu0 %v6228, 32
        %v6267 = vpop.permute.xlu0 %6266
        %6268 = vrot.lane.b32.xlu0 %v6229, 32
        %v6269 = vpop.permute.xlu0 %6268
        %6270 = vrot.lane.b32.xlu0 %v6230, 32
        %v6271 = vpop.permute.xlu0 %6270
        %6272 = vrot.lane.b32.xlu0 %v6231, 32
        %v6273 = vpop.permute.xlu0 %6272
        %6274 = vrot.lane.b32.xlu0 %v6232, 32
        %v6275 = vpop.permute.xlu0 %6274
        %6276 = vrot.lane.b32.xlu0 %v6233, 32
        %v6277 = vpop.permute.xlu0 %6276
        %6278 = vrot.lane.b32.xlu0 %v6234, 32
        %v6279 = vpop.permute.xlu0 %6278
        %6280 = vrot.lane.b32.xlu0 %v6235, 32
        %v6281 = vpop.permute.xlu0 %6280
        %6282 = vrot.lane.b32.xlu0 %v6236, 32
        %v6283 = vpop.permute.xlu0 %6282
        %6284 = vrot.lane.b32.xlu0 %v6237, 32
        %v6285 = vpop.permute.xlu0 %6284
        %v6302 = vadd.f32 %v4957, %v6255
        %v6303 = vadd.f32 %v4959, %v6257
        %v6304 = vadd.f32 %v4961, %v6259
        %v6305 = vadd.f32 %v4963, %v6261
        %v6306 = vadd.f32 %v4965, %v6263
        %v6307 = vadd.f32 %v4967, %v6265
        %v6308 = vadd.f32 %v4969, %v6267
        %v6309 = vadd.f32 %v4971, %v6269
        %v6310 = vadd.f32 %v4973, %v6271
        %v6311 = vadd.f32 %v4975, %v6273
        %v6312 = vadd.f32 %v4977, %v6275
        %v6313 = vadd.f32 %v4979, %v6277
        %v6314 = vadd.f32 %v4981, %v6279
        %v6315 = vadd.f32 %v4983, %v6281
        %v6316 = vadd.f32 %v4985, %v6283
        %v6317 = vadd.f32 %v4987, %v6285
        %v6318 = vtanh.pop %v6302
        %v6319 = vtanh.pop %v6303
        %v6320 = vtanh.pop %v6304
        %v6321 = vtanh.pop %v6305
        %v6322 = vtanh.pop %v6306
        %v6323 = vtanh.pop %v6307
        %v6324 = vtanh.pop %v6308
        %v6325 = vtanh.pop %v6309
        %v6326 = vtanh.pop %v6310
        %v6327 = vtanh.pop %v6311
        %v6328 = vtanh.pop %v6312
        %v6329 = vtanh.pop %v6313
        %v6330 = vtanh.pop %v6314
        %v6331 = vtanh.pop %v6315
        %v6332 = vtanh.pop %v6316
        %v6333 = vtanh.pop %v6317
        %v6334 = vsub.f32 1.0, %v6191
        %v6335 = vsub.f32 1.0, %v6193
        %v6336 = vsub.f32 1.0, %v6195
        %v6337 = vsub.f32 1.0, %v6197
        %v6338 = vsub.f32 1.0, %v6199
        %v6339 = vsub.f32 1.0, %v6201
        %v6340 = vsub.f32 1.0, %v6203
        %v6341 = vsub.f32 1.0, %v6205
        %v6342 = vsub.f32 1.0, %v6207
        %v6343 = vsub.f32 1.0, %v6209
        %v6344 = vsub.f32 1.0, %v6211
        %v6345 = vsub.f32 1.0, %v6213
        %v6346 = vsub.f32 1.0, %v6215
        %v6347 = vsub.f32 1.0, %v6217
        %v6348 = vsub.f32 1.0, %v6219
        %v6349 = vsub.f32 1.0, %v6221
        %6366 = vrot.lane.b32.xlu0 %v6318, 112
        %v6367 = vpop.permute.xlu0 %6366
        %6368 = vrot.lane.b32.xlu0 %v6319, 112
        %v6369 = vpop.permute.xlu0 %6368
        %6370 = vrot.lane.b32.xlu0 %v6320, 112
        %v6371 = vpop.permute.xlu0 %6370
        %6372 = vrot.lane.b32.xlu0 %v6321, 112
        %v6373 = vpop.permute.xlu0 %6372
        %6374 = vrot.lane.b32.xlu0 %v6322, 112
        %v6375 = vpop.permute.xlu0 %6374
        %6376 = vrot.lane.b32.xlu0 %v6323, 112
        %v6377 = vpop.permute.xlu0 %6376
        %6378 = vrot.lane.b32.xlu0 %v6324, 112
        %v6379 = vpop.permute.xlu0 %6378
        %6380 = vrot.lane.b32.xlu0 %v6325, 112
        %v6381 = vpop.permute.xlu0 %6380
        %6382 = vrot.lane.b32.xlu0 %v6326, 112
        %v6383 = vpop.permute.xlu0 %6382
        %6384 = vrot.lane.b32.xlu0 %v6327, 112
        %v6385 = vpop.permute.xlu0 %6384
        %6386 = vrot.lane.b32.xlu0 %v6328, 112
        %v6387 = vpop.permute.xlu0 %6386
        %6388 = vrot.lane.b32.xlu0 %v6329, 112
        %v6389 = vpop.permute.xlu0 %6388
        %6390 = vrot.lane.b32.xlu0 %v6330, 112
        %v6391 = vpop.permute.xlu0 %6390
        %6392 = vrot.lane.b32.xlu0 %v6331, 112
        %v6393 = vpop.permute.xlu0 %6392
        %6394 = vrot.lane.b32.xlu0 %v6332, 112
        %v6395 = vpop.permute.xlu0 %6394
        %6396 = vrot.lane.b32.xlu0 %v6333, 112
        %v6397 = vpop.permute.xlu0 %6396
        %v6414 = vmul.f32 %v6334, %v6367
        %v6415 = vmul.f32 %v6335, %v6369
        %v6416 = vmul.f32 %v6336, %v6371
        %v6417 = vmul.f32 %v6337, %v6373
        %v6418 = vmul.f32 %v6338, %v6375
        %v6419 = vmul.f32 %v6339, %v6377
        %v6420 = vmul.f32 %v6340, %v6379
        %v6421 = vmul.f32 %v6341, %v6381
        %v6422 = vmul.f32 %v6342, %v6383
        %v6423 = vmul.f32 %v6343, %v6385
        %v6424 = vmul.f32 %v6344, %v6387
        %v6425 = vmul.f32 %v6345, %v6389
        %v6426 = vmul.f32 %v6346, %v6391
        %v6427 = vmul.f32 %v6347, %v6393
        %v6428 = vmul.f32 %v6348, %v6395
        %v6429 = vmul.f32 %v6349, %v6397
        %6430 = vrot.lane.b32.xlu0 %v5773, 48
        %v6431 = vpop.permute.xlu0 %6430
        %6432 = vrot.lane.b32.xlu0 %v5774, 48
        %v6433 = vpop.permute.xlu0 %6432
        %6434 = vrot.lane.b32.xlu0 %v5775, 48
        %v6435 = vpop.permute.xlu0 %6434
        %6436 = vrot.lane.b32.xlu0 %v5776, 48
        %v6437 = vpop.permute.xlu0 %6436
        %6438 = vrot.lane.b32.xlu0 %v5777, 48
        %v6439 = vpop.permute.xlu0 %6438
        %6440 = vrot.lane.b32.xlu0 %v5778, 48
        %v6441 = vpop.permute.xlu0 %6440
        %6442 = vrot.lane.b32.xlu0 %v5779, 48
        %v6443 = vpop.permute.xlu0 %6442
        %6444 = vrot.lane.b32.xlu0 %v5780, 48
        %v6445 = vpop.permute.xlu0 %6444
        %6446 = vrot.lane.b32.xlu0 %v5781, 48
        %v6447 = vpop.permute.xlu0 %6446
        %6448 = vrot.lane.b32.xlu0 %v5782, 48
        %v6449 = vpop.permute.xlu0 %6448
        %6450 = vrot.lane.b32.xlu0 %v5783, 48
        %v6451 = vpop.permute.xlu0 %6450
        %6452 = vrot.lane.b32.xlu0 %v5784, 48
        %v6453 = vpop.permute.xlu0 %6452
        %6454 = vrot.lane.b32.xlu0 %v5785, 48
        %v6455 = vpop.permute.xlu0 %6454
        %6456 = vrot.lane.b32.xlu0 %v5786, 48
        %v6457 = vpop.permute.xlu0 %6456
        %6458 = vrot.lane.b32.xlu0 %v5787, 48
        %v6459 = vpop.permute.xlu0 %6458
        %6460 = vrot.lane.b32.xlu0 %v5788, 48
        %v6461 = vpop.permute.xlu0 %6460
        %v6478 = vmul.f32 %v6191, %v6431
        %v6479 = vmul.f32 %v6193, %v6433
        %v6480 = vmul.f32 %v6195, %v6435
        %v6481 = vmul.f32 %v6197, %v6437
        %v6482 = vmul.f32 %v6199, %v6439
        %v6483 = vmul.f32 %v6201, %v6441
        %v6484 = vmul.f32 %v6203, %v6443
        %v6485 = vmul.f32 %v6205, %v6445
        %v6486 = vmul.f32 %v6207, %v6447
        %v6487 = vmul.f32 %v6209, %v6449
        %v6488 = vmul.f32 %v6211, %v6451
        %v6489 = vmul.f32 %v6213, %v6453
        %v6490 = vmul.f32 %v6215, %v6455
        %v6491 = vmul.f32 %v6217, %v6457
        %v6492 = vmul.f32 %v6219, %v6459
        %v6493 = vmul.f32 %v6221, %v6461
        %v6494 = vadd.f32 %v6414, %v6478
        %v6495 = vadd.f32 %v6415, %v6479
        %v6496 = vadd.f32 %v6416, %v6480
        %v6497 = vadd.f32 %v6417, %v6481
        %v6498 = vadd.f32 %v6418, %v6482
        %v6499 = vadd.f32 %v6419, %v6483
        %v6500 = vadd.f32 %v6420, %v6484
        %v6501 = vadd.f32 %v6421, %v6485
        %v6502 = vadd.f32 %v6422, %v6486
        %v6503 = vadd.f32 %v6423, %v6487
        %v6504 = vadd.f32 %v6424, %v6488
        %v6505 = vadd.f32 %v6425, %v6489
        %v6506 = vadd.f32 %v6426, %v6490
        %v6507 = vadd.f32 %v6427, %v6491
        %v6508 = vadd.f32 %v6428, %v6492
        %v6509 = vadd.f32 %v6429, %v6493
        %6526 = vrot.lane.b32.xlu0 %v6494, 96
        %v6527 = vpop.permute.xlu0 %6526
        %6528 = vrot.lane.b32.xlu0 %v6495, 96
        %v6529 = vpop.permute.xlu0 %6528
        %6530 = vrot.lane.b32.xlu0 %v6496, 96
        %v6531 = vpop.permute.xlu0 %6530
        %6532 = vrot.lane.b32.xlu0 %v6497, 96
        %v6533 = vpop.permute.xlu0 %6532
        %6534 = vrot.lane.b32.xlu0 %v6498, 96
        %v6535 = vpop.permute.xlu0 %6534
        %6536 = vrot.lane.b32.xlu0 %v6499, 96
        %v6537 = vpop.permute.xlu0 %6536
        %6538 = vrot.lane.b32.xlu0 %v6500, 96
        %v6539 = vpop.permute.xlu0 %6538
        %6540 = vrot.lane.b32.xlu0 %v6501, 96
        %v6541 = vpop.permute.xlu0 %6540
        %6542 = vrot.lane.b32.xlu0 %v6502, 96
        %v6543 = vpop.permute.xlu0 %6542
        %6544 = vrot.lane.b32.xlu0 %v6503, 96
        %v6545 = vpop.permute.xlu0 %6544
        %6546 = vrot.lane.b32.xlu0 %v6504, 96
        %v6547 = vpop.permute.xlu0 %6546
        %6548 = vrot.lane.b32.xlu0 %v6505, 96
        %v6549 = vpop.permute.xlu0 %6548
        %6550 = vrot.lane.b32.xlu0 %v6506, 96
        %v6551 = vpop.permute.xlu0 %6550
        %6552 = vrot.lane.b32.xlu0 %v6507, 96
        %v6553 = vpop.permute.xlu0 %6552
        %6554 = vrot.lane.b32.xlu0 %v6508, 96
        %v6555 = vpop.permute.xlu0 %6554
        %6556 = vrot.lane.b32.xlu0 %v6509, 96
        %v6557 = vpop.permute.xlu0 %6556
        %v6574 = vadd.f32 %v5853, %v6527
        %v6575 = vadd.f32 %v5854, %v6529
        %v6576 = vadd.f32 %v5855, %v6531
        %v6577 = vadd.f32 %v5856, %v6533
        %v6578 = vadd.f32 %v5857, %v6535
        %v6579 = vadd.f32 %v5858, %v6537
        %v6580 = vadd.f32 %v5859, %v6539
        %v6581 = vadd.f32 %v5860, %v6541
        %v6582 = vadd.f32 %v5861, %v6543
        %v6583 = vadd.f32 %v5862, %v6545
        %v6584 = vadd.f32 %v5863, %v6547
        %v6585 = vadd.f32 %v5864, %v6549
        %v6586 = vadd.f32 %v5865, %v6551
        %v6587 = vadd.f32 %v5866, %v6553
        %v6588 = vadd.f32 %v5867, %v6555
        %v6589 = vadd.f32 %v5868, %v6557
        %6590 = vrot.lane.b32.xlu0 %v6494, 80
        %v6591 = vpop.permute.xlu0 %6590
        %6592 = vrot.lane.b32.xlu0 %v6495, 80
        %v6593 = vpop.permute.xlu0 %6592
        %6594 = vrot.lane.b32.xlu0 %v6496, 80
        %v6595 = vpop.permute.xlu0 %6594
        %6596 = vrot.lane.b32.xlu0 %v6497, 80
        %v6597 = vpop.permute.xlu0 %6596
        %6598 = vrot.lane.b32.xlu0 %v6498, 80
        %v6599 = vpop.permute.xlu0 %6598
        %6600 = vrot.lane.b32.xlu0 %v6499, 80
        %v6601 = vpop.permute.xlu0 %6600
        %6602 = vrot.lane.b32.xlu0 %v6500, 80
        %v6603 = vpop.permute.xlu0 %6602
        %6604 = vrot.lane.b32.xlu0 %v6501, 80
        %v6605 = vpop.permute.xlu0 %6604
        %6606 = vrot.lane.b32.xlu0 %v6502, 80
        %v6607 = vpop.permute.xlu0 %6606
        %6608 = vrot.lane.b32.xlu0 %v6503, 80
        %v6609 = vpop.permute.xlu0 %6608
        %6610 = vrot.lane.b32.xlu0 %v6504, 80
        %v6611 = vpop.permute.xlu0 %6610
        %6612 = vrot.lane.b32.xlu0 %v6505, 80
        %v6613 = vpop.permute.xlu0 %6612
        %6614 = vrot.lane.b32.xlu0 %v6506, 80
        %v6615 = vpop.permute.xlu0 %6614
        %6616 = vrot.lane.b32.xlu0 %v6507, 80
        %v6617 = vpop.permute.xlu0 %6616
        %6618 = vrot.lane.b32.xlu0 %v6508, 80
        %v6619 = vpop.permute.xlu0 %6618
        %6620 = vrot.lane.b32.xlu0 %v6509, 80
        %v6621 = vpop.permute.xlu0 %6620
        %v6622 = vsel %vm438, %v6591, 0
        %v6624 = vsel %vm438, %v6593, 0
        %v6626 = vsel %vm438, %v6595, 0
        %v6628 = vsel %vm438, %v6597, 0
        %v6630 = vsel %vm438, %v6599, 0
        %v6632 = vsel %vm438, %v6601, 0
        %v6634 = vsel %vm438, %v6603, 0
        %v6636 = vsel %vm438, %v6605, 0
        %v6638 = vsel %vm438, %v6607, 0
        %v6640 = vsel %vm438, %v6609, 0
        %v6642 = vsel %vm438, %v6611, 0
        %v6644 = vsel %vm438, %v6613, 0
        %v6646 = vsel %vm438, %v6615, 0
        %v6648 = vsel %vm438, %v6617, 0
        %v6650 = vsel %vm438, %v6619, 0
        %v6652 = vsel %vm438, %v6621, 0
        %6654 = vmatprep.subr.mxu0 0.0
        %6655 = vmatpush1.msra.mxu0 %v1099
        %6656 = vmatprep.subr.mxu0 0.0
        %6657 = vmatpush1.msra.mxu0 %v1100
        %6658 = vmatprep.subr.mxu0 0.0
        %6659 = vmatpush1.msra.mxu0 0.0
        %6660 = vmatprep.subr.mxu0 0.0
        %6661 = vmatpush1.msra.mxu0 0.0
        %6662 = vmatprep.subr.mxu0 0.0
        %6663 = vmatpush1.msra.mxu0 0.0
        %6664 = vmatprep.subr.mxu0 0.0
        %6665 = vmatpush1.msra.mxu0 0.0
        %6666 = vmatprep.subr.mxu0 0.0
        %6667 = vmatpush1.msra.mxu0 0.0
        %6668 = vmatprep.subr.mxu0 0.0
        %6669 = vmatpush1.msra.mxu0 0.0
        %6670 = vmatprep.subr.mxu0 0.0
        %6671 = vmatpush1.msra.mxu0 0.0
        %6672 = vmatprep.subr.mxu0 0.0
        %6673 = vmatpush1.msra.mxu0 0.0
        %6674 = vmatprep.subr.mxu0 0.0
        %6675 = vmatpush1.msra.mxu0 0.0
        %6676 = vmatprep.subr.mxu0 0.0
        %6677 = vmatpush1.msra.mxu0 0.0
        %6678 = vmatprep.subr.mxu0 0.0
        %6679 = vmatpush1.msra.mxu0 0.0
        %6680 = vmatprep.subr.mxu0 0.0
        %6681 = vmatpush1.msra.mxu0 0.0
        %6682 = vmatprep.subr.mxu0 0.0
        %6683 = vmatpush1.msra.mxu0 0.0
        %6684 = vmatprep.subr.mxu0 0.0
        %6685 = vmatpush1.msra.mxu0 0.0
        %6686 = vmatprep.subr.mxu0 0.0
        %6687 = vmatpush1.msra.mxu0 0.0
        %6688 = vmatprep.subr.mxu0 0.0
        %6689 = vmatpush1.msra.mxu0 0.0
        %6690 = vmatprep.subr.mxu0 0.0
        %6691 = vmatpush1.msra.mxu0 0.0
        %6692 = vmatprep.subr.mxu0 0.0
        %6693 = vmatpush1.msra.mxu0 0.0
        %6694 = vmatprep.subr.mxu0 0.0
        %6695 = vmatpush1.msra.mxu0 0.0
        %6696 = vmatprep.subr.mxu0 0.0
        %6697 = vmatpush1.msra.mxu0 0.0
        %6698 = vmatprep.subr.mxu0 0.0
        %6699 = vmatpush1.msra.mxu0 0.0
        %6700 = vmatprep.subr.mxu0 0.0
        %6701 = vmatpush1.msra.mxu0 0.0
        %6702 = vmatprep.subr.mxu0 0.0
        %6703 = vmatpush1.msra.mxu0 0.0
        %6704 = vmatprep.subr.mxu0 0.0
        %6705 = vmatpush1.msra.mxu0 0.0
        %6706 = vmatprep.subr.mxu0 0.0
        %6707 = vmatpush1.msra.mxu0 0.0
        %6708 = vmatprep.subr.mxu0 0.0
        %6709 = vmatpush1.msra.mxu0 0.0
        %6710 = vmatprep.subr.mxu0 0.0
        %6711 = vmatpush1.msra.mxu0 0.0
        %6712 = vmatprep.subr.mxu0 0.0
        %6713 = vmatpush1.msra.mxu0 0.0
        %6714 = vmatprep.subr.mxu0 0.0
        %6715 = vmatpush1.msra.mxu0 0.0
        %6716 = vmatprep.subr.mxu0 0.0
        %6717 = vmatpush1.msra.mxu0 0.0
        %6718 = vmatprep.mubr.f32.mxu0 0.0
        %6719 = vmatmul.mubr.f32.gmra.mrb[0].mxu0 %v6622
        %v6720 = vpop.f32.mrb[0].mxu0
        %v6721 = vadd.f32 %v1122, %v6720
        %v6722 = vpop.f32.mrb[0].mxu0
        %6723 = vmatprep.mubr.f32.mxu0 0.0
        %6724 = vmatmul.mubr.f32.gmra.mrb[0].mxu0 %v6624
        %v6725 = vpop.f32.mrb[0].mxu0
        %v6726 = vadd.f32 %v1122, %v6725
        %v6727 = vpop.f32.mrb[0].mxu0
        %6728 = vmatprep.mubr.f32.mxu0 0.0
        %6729 = vmatmul.mubr.f32.gmra.mrb[0].mxu0 %v6626
        %v6730 = vpop.f32.mrb[0].mxu0
        %v6731 = vadd.f32 %v1122, %v6730
        %v6732 = vpop.f32.mrb[0].mxu0
        %6733 = vmatprep.mubr.f32.mxu0 0.0
        %6734 = vmatmul.mubr.f32.gmra.mrb[0].mxu0 %v6628
        %v6735 = vpop.f32.mrb[0].mxu0
        %v6736 = vadd.f32 %v1122, %v6735
        %v6737 = vpop.f32.mrb[0].mxu0
        %6738 = vmatprep.mubr.f32.mxu0 0.0
        %6739 = vmatmul.mubr.f32.gmra.mrb[0].mxu0 %v6630
        %v6740 = vpop.f32.mrb[0].mxu0
        %v6741 = vadd.f32 %v1122, %v6740
        %v6742 = vpop.f32.mrb[0].mxu0
        %6743 = vmatprep.mubr.f32.mxu0 0.0
        %6744 = vmatmul.mubr.f32.gmra.mrb[0].mxu0 %v6632
        %v6745 = vpop.f32.mrb[0].mxu0
        %v6746 = vadd.f32 %v1122, %v6745
        %v6747 = vpop.f32.mrb[0].mxu0
        %6748 = vmatprep.mubr.f32.mxu0 0.0
        %6749 = vmatmul.mubr.f32.gmra.mrb[0].mxu0 %v6634
        %v6750 = vpop.f32.mrb[0].mxu0
        %v6751 = vadd.f32 %v1122, %v6750
        %v6752 = vpop.f32.mrb[0].mxu0
        %6753 = vmatprep.mubr.f32.mxu0 0.0
        %6754 = vmatmul.mubr.f32.gmra.mrb[0].mxu0 %v6636
        %v6755 = vpop.f32.mrb[0].mxu0
        %v6756 = vadd.f32 %v1122, %v6755
        %v6757 = vpop.f32.mrb[0].mxu0
        %6758 = vmatprep.mubr.f32.mxu0 0.0
        %6759 = vmatmul.mubr.f32.gmra.mrb[0].mxu0 %v6638
        %v6760 = vpop.f32.mrb[0].mxu0
        %v6761 = vadd.f32 %v1122, %v6760
        %v6762 = vpop.f32.mrb[0].mxu0
        %6763 = vmatprep.mubr.f32.mxu0 0.0
        %6764 = vmatmul.mubr.f32.gmra.mrb[0].mxu0 %v6640
        %v6765 = vpop.f32.mrb[0].mxu0
        %v6766 = vadd.f32 %v1122, %v6765
        %v6767 = vpop.f32.mrb[0].mxu0
        %6768 = vmatprep.mubr.f32.mxu0 0.0
        %6769 = vmatmul.mubr.f32.gmra.mrb[0].mxu0 %v6642
        %v6770 = vpop.f32.mrb[0].mxu0
        %v6771 = vadd.f32 %v1122, %v6770
        %v6772 = vpop.f32.mrb[0].mxu0
        %6773 = vmatprep.mubr.f32.mxu0 0.0
        %6774 = vmatmul.mubr.f32.gmra.mrb[0].mxu0 %v6644
        %v6775 = vpop.f32.mrb[0].mxu0
        %v6776 = vadd.f32 %v1122, %v6775
        %v6777 = vpop.f32.mrb[0].mxu0
        %6778 = vmatprep.mubr.f32.mxu0 0.0
        %6779 = vmatmul.mubr.f32.gmra.mrb[0].mxu0 %v6646
        %v6780 = vpop.f32.mrb[0].mxu0
        %v6781 = vadd.f32 %v1122, %v6780
        %v6782 = vpop.f32.mrb[0].mxu0
        %6783 = vmatprep.mubr.f32.mxu0 0.0
        %6784 = vmatmul.mubr.f32.gmra.mrb[0].mxu0 %v6648
        %v6785 = vpop.f32.mrb[0].mxu0
        %v6786 = vadd.f32 %v1122, %v6785
        %v6787 = vpop.f32.mrb[0].mxu0
        %6788 = vmatprep.mubr.f32.mxu0 0.0
        %6789 = vmatmul.mubr.f32.gmra.mrb[0].mxu0 %v6650
        %v6790 = vpop.f32.mrb[0].mxu0
        %v6791 = vadd.f32 %v1122, %v6790
        %v6792 = vpop.f32.mrb[0].mxu0
        %6793 = vmatprep.mubr.f32.mxu0 0.0
        %6794 = vmatmul.mubr.f32.gmra.mrb[0].mxu0 %v6652
        %v6795 = vpop.f32.mrb[0].mxu0
        %v6796 = vadd.f32 %v1122, %v6795
        %v6797 = vpop.f32.mrb[0].mxu0
        %6798 = vdwg.mxu0
        %6815 = vrot.lane.b32.xlu0 %v6721, 80
        %v6816 = vpop.permute.xlu0 %6815
        %6817 = vrot.lane.b32.xlu0 %v6726, 80
        %v6818 = vpop.permute.xlu0 %6817
        %6819 = vrot.lane.b32.xlu0 %v6731, 80
        %v6820 = vpop.permute.xlu0 %6819
        %6821 = vrot.lane.b32.xlu0 %v6736, 80
        %v6822 = vpop.permute.xlu0 %6821
        %6823 = vrot.lane.b32.xlu0 %v6741, 80
        %v6824 = vpop.permute.xlu0 %6823
        %6825 = vrot.lane.b32.xlu0 %v6746, 80
        %v6826 = vpop.permute.xlu0 %6825
        %6827 = vrot.lane.b32.xlu0 %v6751, 80
        %v6828 = vpop.permute.xlu0 %6827
        %6829 = vrot.lane.b32.xlu0 %v6756, 80
        %v6830 = vpop.permute.xlu0 %6829
        %6831 = vrot.lane.b32.xlu0 %v6761, 80
        %v6832 = vpop.permute.xlu0 %6831
        %6833 = vrot.lane.b32.xlu0 %v6766, 80
        %v6834 = vpop.permute.xlu0 %6833
        %6835 = vrot.lane.b32.xlu0 %v6771, 80
        %v6836 = vpop.permute.xlu0 %6835
        %6837 = vrot.lane.b32.xlu0 %v6776, 80
        %v6838 = vpop.permute.xlu0 %6837
        %6839 = vrot.lane.b32.xlu0 %v6781, 80
        %v6840 = vpop.permute.xlu0 %6839
        %6841 = vrot.lane.b32.xlu0 %v6786, 80
        %v6842 = vpop.permute.xlu0 %6841
        %6843 = vrot.lane.b32.xlu0 %v6791, 80
        %v6844 = vpop.permute.xlu0 %6843
        %6845 = vrot.lane.b32.xlu0 %v6796, 80
        %v6846 = vpop.permute.xlu0 %6845
        %v6863 = vadd.f32 %v4957, %v6816
        %v6864 = vadd.f32 %v4959, %v6818
        %v6865 = vadd.f32 %v4961, %v6820
        %v6866 = vadd.f32 %v4963, %v6822
        %v6867 = vadd.f32 %v4965, %v6824
        %v6868 = vadd.f32 %v4967, %v6826
        %v6869 = vadd.f32 %v4969, %v6828
        %v6870 = vadd.f32 %v4971, %v6830
        %v6871 = vadd.f32 %v4973, %v6832
        %v6872 = vadd.f32 %v4975, %v6834
        %v6873 = vadd.f32 %v4977, %v6836
        %v6874 = vadd.f32 %v4979, %v6838
        %v6875 = vadd.f32 %v4981, %v6840
        %v6876 = vadd.f32 %v4983, %v6842
        %v6877 = vadd.f32 %v4985, %v6844
        %v6878 = vadd.f32 %v4987, %v6846
        %v6879 = vxor.u32 %v6863, 2147483648
        %v6880 = vxor.u32 %v6864, 2147483648
        %v6881 = vxor.u32 %v6865, 2147483648
        %v6882 = vxor.u32 %v6866, 2147483648
        %v6883 = vxor.u32 %v6867, 2147483648
        %v6884 = vxor.u32 %v6868, 2147483648
        %v6885 = vxor.u32 %v6869, 2147483648
        %v6886 = vxor.u32 %v6870, 2147483648
        %v6887 = vxor.u32 %v6871, 2147483648
        %v6888 = vxor.u32 %v6872, 2147483648
        %v6889 = vxor.u32 %v6873, 2147483648
        %v6890 = vxor.u32 %v6874, 2147483648
        %v6891 = vxor.u32 %v6875, 2147483648
        %v6892 = vxor.u32 %v6876, 2147483648
        %v6893 = vxor.u32 %v6877, 2147483648
        %v6894 = vxor.u32 %v6878, 2147483648
        %v6895 = vmul.f32 %v6879, 1.442695
        %v6896 = vpow.pop %v6895
        %v6897 = vmul.f32 %v6880, 1.442695
        %v6898 = vpow.pop %v6897
        %v6899 = vmul.f32 %v6881, 1.442695
        %v6900 = vpow.pop %v6899
        %v6901 = vmul.f32 %v6882, 1.442695
        %v6902 = vpow.pop %v6901
        %v6903 = vmul.f32 %v6883, 1.442695
        %v6904 = vpow.pop %v6903
        %v6905 = vmul.f32 %v6884, 1.442695
        %v6906 = vpow.pop %v6905
        %v6907 = vmul.f32 %v6885, 1.442695
        %v6908 = vpow.pop %v6907
        %v6909 = vmul.f32 %v6886, 1.442695
        %v6910 = vpow.pop %v6909
        %v6911 = vmul.f32 %v6887, 1.442695
        %v6912 = vpow.pop %v6911
        %v6913 = vmul.f32 %v6888, 1.442695
        %v6914 = vpow.pop %v6913
        %v6915 = vmul.f32 %v6889, 1.442695
        %v6916 = vpow.pop %v6915
        %v6917 = vmul.f32 %v6890, 1.442695
        %v6918 = vpow.pop %v6917
        %v6919 = vmul.f32 %v6891, 1.442695
        %v6920 = vpow.pop %v6919
        %v6921 = vmul.f32 %v6892, 1.442695
        %v6922 = vpow.pop %v6921
        %v6923 = vmul.f32 %v6893, 1.442695
        %v6924 = vpow.pop %v6923
        %v6925 = vmul.f32 %v6894, 1.442695
        %v6926 = vpow.pop %v6925
        %v6927 = vadd.f32 %v6896, 1.0
        %v6928 = vadd.f32 %v6898, 1.0
        %v6929 = vadd.f32 %v6900, 1.0
        %v6930 = vadd.f32 %v6902, 1.0
        %v6931 = vadd.f32 %v6904, 1.0
        %v6932 = vadd.f32 %v6906, 1.0
        %v6933 = vadd.f32 %v6908, 1.0
        %v6934 = vadd.f32 %v6910, 1.0
        %v6935 = vadd.f32 %v6912, 1.0
        %v6936 = vadd.f32 %v6914, 1.0
        %v6937 = vadd.f32 %v6916, 1.0
        %v6938 = vadd.f32 %v6918, 1.0
        %v6939 = vadd.f32 %v6920, 1.0
        %v6940 = vadd.f32 %v6922, 1.0
        %v6941 = vadd.f32 %v6924, 1.0
        %v6942 = vadd.f32 %v6926, 1.0
        %v6943 = vrcp.pop %v6927
        %v6944 = vmul.f32 1.0, %v6943
        %v6945 = vrcp.pop %v6928
        %v6946 = vmul.f32 1.0, %v6945
        %v6947 = vrcp.pop %v6929
        %v6948 = vmul.f32 1.0, %v6947
        %v6949 = vrcp.pop %v6930
        %v6950 = vmul.f32 1.0, %v6949
        %v6951 = vrcp.pop %v6931
        %v6952 = vmul.f32 1.0, %v6951
        %v6953 = vrcp.pop %v6932
        %v6954 = vmul.f32 1.0, %v6953
        %v6955 = vrcp.pop %v6933
        %v6956 = vmul.f32 1.0, %v6955
        %v6957 = vrcp.pop %v6934
        %v6958 = vmul.f32 1.0, %v6957
        %v6959 = vrcp.pop %v6935
        %v6960 = vmul.f32 1.0, %v6959
        %v6961 = vrcp.pop %v6936
        %v6962 = vmul.f32 1.0, %v6961
        %v6963 = vrcp.pop %v6937
        %v6964 = vmul.f32 1.0, %v6963
        %v6965 = vrcp.pop %v6938
        %v6966 = vmul.f32 1.0, %v6965
        %v6967 = vrcp.pop %v6939
        %v6968 = vmul.f32 1.0, %v6967
        %v6969 = vrcp.pop %v6940
        %v6970 = vmul.f32 1.0, %v6969
        %v6971 = vrcp.pop %v6941
        %v6972 = vmul.f32 1.0, %v6971
        %v6973 = vrcp.pop %v6942
        %v6974 = vmul.f32 1.0, %v6973
        %6975 = vrot.lane.b32.xlu0 %v6721, 48
        %v6976 = vpop.permute.xlu0 %6975
        %6977 = vrot.lane.b32.xlu0 %v6726, 48
        %v6978 = vpop.permute.xlu0 %6977
        %6979 = vrot.lane.b32.xlu0 %v6731, 48
        %v6980 = vpop.permute.xlu0 %6979
        %6981 = vrot.lane.b32.xlu0 %v6736, 48
        %v6982 = vpop.permute.xlu0 %6981
        %6983 = vrot.lane.b32.xlu0 %v6741, 48
        %v6984 = vpop.permute.xlu0 %6983
        %6985 = vrot.lane.b32.xlu0 %v6746, 48
        %v6986 = vpop.permute.xlu0 %6985
        %6987 = vrot.lane.b32.xlu0 %v6751, 48
        %v6988 = vpop.permute.xlu0 %6987
        %6989 = vrot.lane.b32.xlu0 %v6756, 48
        %v6990 = vpop.permute.xlu0 %6989
        %6991 = vrot.lane.b32.xlu0 %v6761, 48
        %v6992 = vpop.permute.xlu0 %6991
        %6993 = vrot.lane.b32.xlu0 %v6766, 48
        %v6994 = vpop.permute.xlu0 %6993
        %6995 = vrot.lane.b32.xlu0 %v6771, 48
        %v6996 = vpop.permute.xlu0 %6995
        %6997 = vrot.lane.b32.xlu0 %v6776, 48
        %v6998 = vpop.permute.xlu0 %6997
        %6999 = vrot.lane.b32.xlu0 %v6781, 48
        %v7000 = vpop.permute.xlu0 %6999
        %7001 = vrot.lane.b32.xlu0 %v6786, 48
        %v7002 = vpop.permute.xlu0 %7001
        %7003 = vrot.lane.b32.xlu0 %v6791, 48
        %v7004 = vpop.permute.xlu0 %7003
        %7005 = vrot.lane.b32.xlu0 %v6796, 48
        %v7006 = vpop.permute.xlu0 %7005
        %v7023 = vmul.f32 %v6944, %v6976
        %v7024 = vmul.f32 %v6946, %v6978
        %v7025 = vmul.f32 %v6948, %v6980
        %v7026 = vmul.f32 %v6950, %v6982
        %v7027 = vmul.f32 %v6952, %v6984
        %v7028 = vmul.f32 %v6954, %v6986
        %v7029 = vmul.f32 %v6956, %v6988
        %v7030 = vmul.f32 %v6958, %v6990
        %v7031 = vmul.f32 %v6960, %v6992
        %v7032 = vmul.f32 %v6962, %v6994
        %v7033 = vmul.f32 %v6964, %v6996
        %v7034 = vmul.f32 %v6966, %v6998
        %v7035 = vmul.f32 %v6968, %v7000
        %v7036 = vmul.f32 %v6970, %v7002
        %v7037 = vmul.f32 %v6972, %v7004
        %v7038 = vmul.f32 %v6974, %v7006
        %7055 = vrot.lane.b32.xlu0 %v7023, 32
        %v7056 = vpop.permute.xlu0 %7055
        %7057 = vrot.lane.b32.xlu0 %v7024, 32
        %v7058 = vpop.permute.xlu0 %7057
        %7059 = vrot.lane.b32.xlu0 %v7025, 32
        %v7060 = vpop.permute.xlu0 %7059
        %7061 = vrot.lane.b32.xlu0 %v7026, 32
        %v7062 = vpop.permute.xlu0 %7061
        %7063 = vrot.lane.b32.xlu0 %v7027, 32
        %v7064 = vpop.permute.xlu0 %7063
        %7065 = vrot.lane.b32.xlu0 %v7028, 32
        %v7066 = vpop.permute.xlu0 %7065
        %7067 = vrot.lane.b32.xlu0 %v7029, 32
        %v7068 = vpop.permute.xlu0 %7067
        %7069 = vrot.lane.b32.xlu0 %v7030, 32
        %v7070 = vpop.permute.xlu0 %7069
        %7071 = vrot.lane.b32.xlu0 %v7031, 32
        %v7072 = vpop.permute.xlu0 %7071
        %7073 = vrot.lane.b32.xlu0 %v7032, 32
        %v7074 = vpop.permute.xlu0 %7073
        %7075 = vrot.lane.b32.xlu0 %v7033, 32
        %v7076 = vpop.permute.xlu0 %7075
        %7077 = vrot.lane.b32.xlu0 %v7034, 32
        %v7078 = vpop.permute.xlu0 %7077
        %7079 = vrot.lane.b32.xlu0 %v7035, 32
        %v7080 = vpop.permute.xlu0 %7079
        %7081 = vrot.lane.b32.xlu0 %v7036, 32
        %v7082 = vpop.permute.xlu0 %7081
        %7083 = vrot.lane.b32.xlu0 %v7037, 32
        %v7084 = vpop.permute.xlu0 %7083
        %7085 = vrot.lane.b32.xlu0 %v7038, 32
        %v7086 = vpop.permute.xlu0 %7085
        %v7103 = vadd.f32 %v4957, %v7056
        %v7104 = vadd.f32 %v4959, %v7058
        %v7105 = vadd.f32 %v4961, %v7060
        %v7106 = vadd.f32 %v4963, %v7062
        %v7107 = vadd.f32 %v4965, %v7064
        %v7108 = vadd.f32 %v4967, %v7066
        %v7109 = vadd.f32 %v4969, %v7068
        %v7110 = vadd.f32 %v4971, %v7070
        %v7111 = vadd.f32 %v4973, %v7072
        %v7112 = vadd.f32 %v4975, %v7074
        %v7113 = vadd.f32 %v4977, %v7076
        %v7114 = vadd.f32 %v4979, %v7078
        %v7115 = vadd.f32 %v4981, %v7080
        %v7116 = vadd.f32 %v4983, %v7082
        %v7117 = vadd.f32 %v4985, %v7084
        %v7118 = vadd.f32 %v4987, %v7086
        %v7119 = vtanh.pop %v7103
        %v7120 = vtanh.pop %v7104
        %v7121 = vtanh.pop %v7105
        %v7122 = vtanh.pop %v7106
        %v7123 = vtanh.pop %v7107
        %v7124 = vtanh.pop %v7108
        %v7125 = vtanh.pop %v7109
        %v7126 = vtanh.pop %v7110
        %v7127 = vtanh.pop %v7111
        %v7128 = vtanh.pop %v7112
        %v7129 = vtanh.pop %v7113
        %v7130 = vtanh.pop %v7114
        %v7131 = vtanh.pop %v7115
        %v7132 = vtanh.pop %v7116
        %v7133 = vtanh.pop %v7117
        %v7134 = vtanh.pop %v7118
        %v7135 = vsub.f32 1.0, %v6944
        %v7136 = vsub.f32 1.0, %v6946
        %v7137 = vsub.f32 1.0, %v6948
        %v7138 = vsub.f32 1.0, %v6950
        %v7139 = vsub.f32 1.0, %v6952
        %v7140 = vsub.f32 1.0, %v6954
        %v7141 = vsub.f32 1.0, %v6956
        %v7142 = vsub.f32 1.0, %v6958
        %v7143 = vsub.f32 1.0, %v6960
        %v7144 = vsub.f32 1.0, %v6962
        %v7145 = vsub.f32 1.0, %v6964
        %v7146 = vsub.f32 1.0, %v6966
        %v7147 = vsub.f32 1.0, %v6968
        %v7148 = vsub.f32 1.0, %v6970
        %v7149 = vsub.f32 1.0, %v6972
        %v7150 = vsub.f32 1.0, %v6974
        %7167 = vrot.lane.b32.xlu0 %v7119, 112
        %v7168 = vpop.permute.xlu0 %7167
        %7169 = vrot.lane.b32.xlu0 %v7120, 112
        %v7170 = vpop.permute.xlu0 %7169
        %7171 = vrot.lane.b32.xlu0 %v7121, 112
        %v7172 = vpop.permute.xlu0 %7171
        %7173 = vrot.lane.b32.xlu0 %v7122, 112
        %v7174 = vpop.permute.xlu0 %7173
        %7175 = vrot.lane.b32.xlu0 %v7123, 112
        %v7176 = vpop.permute.xlu0 %7175
        %7177 = vrot.lane.b32.xlu0 %v7124, 112
        %v7178 = vpop.permute.xlu0 %7177
        %7179 = vrot.lane.b32.xlu0 %v7125, 112
        %v7180 = vpop.permute.xlu0 %7179
        %7181 = vrot.lane.b32.xlu0 %v7126, 112
        %v7182 = vpop.permute.xlu0 %7181
        %7183 = vrot.lane.b32.xlu0 %v7127, 112
        %v7184 = vpop.permute.xlu0 %7183
        %7185 = vrot.lane.b32.xlu0 %v7128, 112
        %v7186 = vpop.permute.xlu0 %7185
        %7187 = vrot.lane.b32.xlu0 %v7129, 112
        %v7188 = vpop.permute.xlu0 %7187
        %7189 = vrot.lane.b32.xlu0 %v7130, 112
        %v7190 = vpop.permute.xlu0 %7189
        %7191 = vrot.lane.b32.xlu0 %v7131, 112
        %v7192 = vpop.permute.xlu0 %7191
        %7193 = vrot.lane.b32.xlu0 %v7132, 112
        %v7194 = vpop.permute.xlu0 %7193
        %7195 = vrot.lane.b32.xlu0 %v7133, 112
        %v7196 = vpop.permute.xlu0 %7195
        %7197 = vrot.lane.b32.xlu0 %v7134, 112
        %v7198 = vpop.permute.xlu0 %7197
        %v7215 = vmul.f32 %v7135, %v7168
        %v7216 = vmul.f32 %v7136, %v7170
        %v7217 = vmul.f32 %v7137, %v7172
        %v7218 = vmul.f32 %v7138, %v7174
        %v7219 = vmul.f32 %v7139, %v7176
        %v7220 = vmul.f32 %v7140, %v7178
        %v7221 = vmul.f32 %v7141, %v7180
        %v7222 = vmul.f32 %v7142, %v7182
        %v7223 = vmul.f32 %v7143, %v7184
        %v7224 = vmul.f32 %v7144, %v7186
        %v7225 = vmul.f32 %v7145, %v7188
        %v7226 = vmul.f32 %v7146, %v7190
        %v7227 = vmul.f32 %v7147, %v7192
        %v7228 = vmul.f32 %v7148, %v7194
        %v7229 = vmul.f32 %v7149, %v7196
        %v7230 = vmul.f32 %v7150, %v7198
        %7231 = vrot.lane.b32.xlu0 %v6494, 48
        %v7232 = vpop.permute.xlu0 %7231
        %7233 = vrot.lane.b32.xlu0 %v6495, 48
        %v7234 = vpop.permute.xlu0 %7233
        %7235 = vrot.lane.b32.xlu0 %v6496, 48
        %v7236 = vpop.permute.xlu0 %7235
        %7237 = vrot.lane.b32.xlu0 %v6497, 48
        %v7238 = vpop.permute.xlu0 %7237
        %7239 = vrot.lane.b32.xlu0 %v6498, 48
        %v7240 = vpop.permute.xlu0 %7239
        %7241 = vrot.lane.b32.xlu0 %v6499, 48
        %v7242 = vpop.permute.xlu0 %7241
        %7243 = vrot.lane.b32.xlu0 %v6500, 48
        %v7244 = vpop.permute.xlu0 %7243
        %7245 = vrot.lane.b32.xlu0 %v6501, 48
        %v7246 = vpop.permute.xlu0 %7245
        %7247 = vrot.lane.b32.xlu0 %v6502, 48
        %v7248 = vpop.permute.xlu0 %7247
        %7249 = vrot.lane.b32.xlu0 %v6503, 48
        %v7250 = vpop.permute.xlu0 %7249
        %7251 = vrot.lane.b32.xlu0 %v6504, 48
        %v7252 = vpop.permute.xlu0 %7251
        %7253 = vrot.lane.b32.xlu0 %v6505, 48
        %v7254 = vpop.permute.xlu0 %7253
        %7255 = vrot.lane.b32.xlu0 %v6506, 48
        %v7256 = vpop.permute.xlu0 %7255
        %7257 = vrot.lane.b32.xlu0 %v6507, 48
        %v7258 = vpop.permute.xlu0 %7257
        %7259 = vrot.lane.b32.xlu0 %v6508, 48
        %v7260 = vpop.permute.xlu0 %7259
        %7261 = vrot.lane.b32.xlu0 %v6509, 48
        %v7262 = vpop.permute.xlu0 %7261
        %v7279 = vmul.f32 %v6944, %v7232
        %v7280 = vmul.f32 %v6946, %v7234
        %v7281 = vmul.f32 %v6948, %v7236
        %v7282 = vmul.f32 %v6950, %v7238
        %v7283 = vmul.f32 %v6952, %v7240
        %v7284 = vmul.f32 %v6954, %v7242
        %v7285 = vmul.f32 %v6956, %v7244
        %v7286 = vmul.f32 %v6958, %v7246
        %v7287 = vmul.f32 %v6960, %v7248
        %v7288 = vmul.f32 %v6962, %v7250
        %v7289 = vmul.f32 %v6964, %v7252
        %v7290 = vmul.f32 %v6966, %v7254
        %v7291 = vmul.f32 %v6968, %v7256
        %v7292 = vmul.f32 %v6970, %v7258
        %v7293 = vmul.f32 %v6972, %v7260
        %v7294 = vmul.f32 %v6974, %v7262
        %v7295 = vadd.f32 %v7215, %v7279
        %v7296 = vadd.f32 %v7216, %v7280
        %v7297 = vadd.f32 %v7217, %v7281
        %v7298 = vadd.f32 %v7218, %v7282
        %v7299 = vadd.f32 %v7219, %v7283
        %v7300 = vadd.f32 %v7220, %v7284
        %v7301 = vadd.f32 %v7221, %v7285
        %v7302 = vadd.f32 %v7222, %v7286
        %v7303 = vadd.f32 %v7223, %v7287
        %v7304 = vadd.f32 %v7224, %v7288
        %v7305 = vadd.f32 %v7225, %v7289
        %v7306 = vadd.f32 %v7226, %v7290
        %v7307 = vadd.f32 %v7227, %v7291
        %v7308 = vadd.f32 %v7228, %v7292
        %v7309 = vadd.f32 %v7229, %v7293
        %v7310 = vadd.f32 %v7230, %v7294
        %7327 = vrot.lane.b32.xlu0 %v7295, 48
        %v7328 = vpop.permute.xlu0 %7327
        %7329 = vrot.lane.b32.xlu0 %v7296, 48
        %v7330 = vpop.permute.xlu0 %7329
        %7331 = vrot.lane.b32.xlu0 %v7297, 48
        %v7332 = vpop.permute.xlu0 %7331
        %7333 = vrot.lane.b32.xlu0 %v7298, 48
        %v7334 = vpop.permute.xlu0 %7333
        %7335 = vrot.lane.b32.xlu0 %v7299, 48
        %v7336 = vpop.permute.xlu0 %7335
        %7337 = vrot.lane.b32.xlu0 %v7300, 48
        %v7338 = vpop.permute.xlu0 %7337
        %7339 = vrot.lane.b32.xlu0 %v7301, 48
        %v7340 = vpop.permute.xlu0 %7339
        %7341 = vrot.lane.b32.xlu0 %v7302, 48
        %v7342 = vpop.permute.xlu0 %7341
        %7343 = vrot.lane.b32.xlu0 %v7303, 48
        %v7344 = vpop.permute.xlu0 %7343
        %7345 = vrot.lane.b32.xlu0 %v7304, 48
        %v7346 = vpop.permute.xlu0 %7345
        %7347 = vrot.lane.b32.xlu0 %v7305, 48
        %v7348 = vpop.permute.xlu0 %7347
        %7349 = vrot.lane.b32.xlu0 %v7306, 48
        %v7350 = vpop.permute.xlu0 %7349
        %7351 = vrot.lane.b32.xlu0 %v7307, 48
        %v7352 = vpop.permute.xlu0 %7351
        %7353 = vrot.lane.b32.xlu0 %v7308, 48
        %v7354 = vpop.permute.xlu0 %7353
        %7355 = vrot.lane.b32.xlu0 %v7309, 48
        %v7356 = vpop.permute.xlu0 %7355
        %7357 = vrot.lane.b32.xlu0 %v7310, 48
        %v7358 = vpop.permute.xlu0 %7357
        %v7375 = vadd.f32 %v6574, %v7328
        %v7376 = vadd.f32 %v6575, %v7330
        %v7377 = vadd.f32 %v6576, %v7332
        %v7378 = vadd.f32 %v6577, %v7334
        %v7379 = vadd.f32 %v6578, %v7336
        %v7380 = vadd.f32 %v6579, %v7338
        %v7381 = vadd.f32 %v6580, %v7340
        %v7382 = vadd.f32 %v6581, %v7342
        %v7383 = vadd.f32 %v6582, %v7344
        %v7384 = vadd.f32 %v6583, %v7346
        %v7385 = vadd.f32 %v6584, %v7348
        %v7386 = vadd.f32 %v6585, %v7350
        %v7387 = vadd.f32 %v6586, %v7352
        %v7388 = vadd.f32 %v6587, %v7354
        %v7389 = vadd.f32 %v6588, %v7356
        %v7390 = vadd.f32 %v6589, %v7358
        %v7391 = vmul.f32 %v7375, 0.125
        %v7392 = vmul.f32 %v7376, 0.125
        %v7393 = vmul.f32 %v7377, 0.125
        %v7394 = vmul.f32 %v7378, 0.125
        %v7395 = vmul.f32 %v7379, 0.125
        %v7396 = vmul.f32 %v7380, 0.125
        %v7397 = vmul.f32 %v7381, 0.125
        %v7398 = vmul.f32 %v7382, 0.125
        %v7399 = vmul.f32 %v7383, 0.125
        %v7400 = vmul.f32 %v7384, 0.125
        %v7401 = vmul.f32 %v7385, 0.125
        %v7402 = vmul.f32 %v7386, 0.125
        %v7403 = vmul.f32 %v7387, 0.125
        %v7404 = vmul.f32 %v7388, 0.125
        %v7405 = vmul.f32 %v7389, 0.125
        %v7406 = vmul.f32 %v7390, 0.125
        %v7407 = vld [vmem:[%s7] sm:$0xff]
        %v7408 = vld [vmem:[%s7 + $0x8] sm:$0xff]
        %v7409 = vld [vmem:[%s8] sm:$0x1]
        %v7411 = vlaneseq
        %v7412 = vshrl.u32 %v7411, 7
        %v7413 = vsub.s32 0, %v7412
        %v7414 = vrot.slane %v7409, %v7413
        %7432 = vrot.lane.b32.xlu0 %v7391, 112
        %v7433 = vpop.permute.xlu0 %7432
        %7434 = vrot.lane.b32.xlu0 %v7392, 112
        %v7435 = vpop.permute.xlu0 %7434
        %7436 = vrot.lane.b32.xlu0 %v7393, 112
        %v7437 = vpop.permute.xlu0 %7436
        %7438 = vrot.lane.b32.xlu0 %v7394, 112
        %v7439 = vpop.permute.xlu0 %7438
        %7440 = vrot.lane.b32.xlu0 %v7395, 112
        %v7441 = vpop.permute.xlu0 %7440
        %7442 = vrot.lane.b32.xlu0 %v7396, 112
        %v7443 = vpop.permute.xlu0 %7442
        %7444 = vrot.lane.b32.xlu0 %v7397, 112
        %v7445 = vpop.permute.xlu0 %7444
        %7446 = vrot.lane.b32.xlu0 %v7398, 112
        %v7447 = vpop.permute.xlu0 %7446
        %7448 = vrot.lane.b32.xlu0 %v7399, 112
        %v7449 = vpop.permute.xlu0 %7448
        %7450 = vrot.lane.b32.xlu0 %v7400, 112
        %v7451 = vpop.permute.xlu0 %7450
        %7452 = vrot.lane.b32.xlu0 %v7401, 112
        %v7453 = vpop.permute.xlu0 %7452
        %7454 = vrot.lane.b32.xlu0 %v7402, 112
        %v7455 = vpop.permute.xlu0 %7454
        %7456 = vrot.lane.b32.xlu0 %v7403, 112
        %v7457 = vpop.permute.xlu0 %7456
        %7458 = vrot.lane.b32.xlu0 %v7404, 112
        %v7459 = vpop.permute.xlu0 %7458
        %7460 = vrot.lane.b32.xlu0 %v7405, 112
        %v7461 = vpop.permute.xlu0 %7460
        %7462 = vrot.lane.b32.xlu0 %v7406, 112
        %v7463 = vpop.permute.xlu0 %7462
        %v7464 = vsel %vm438, %v7433, 0
        %v7466 = vsel %vm438, %v7435, 0
        %v7468 = vsel %vm438, %v7437, 0
        %v7470 = vsel %vm438, %v7439, 0
        %v7472 = vsel %vm438, %v7441, 0
        %v7474 = vsel %vm438, %v7443, 0
        %v7476 = vsel %vm438, %v7445, 0
        %v7478 = vsel %vm438, %v7447, 0
        %v7480 = vsel %vm438, %v7449, 0
        %v7482 = vsel %vm438, %v7451, 0
        %v7484 = vsel %vm438, %v7453, 0
        %v7486 = vsel %vm438, %v7455, 0
        %v7488 = vsel %vm438, %v7457, 0
        %v7490 = vsel %vm438, %v7459, 0
        %v7492 = vsel %vm438, %v7461, 0
        %v7494 = vsel %vm438, %v7463, 0
        %7496 = vmatprep.subr.mxu0 0.0
        %7497 = vmatpush1.msra.mxu0 %v7407
        %7498 = vmatprep.subr.mxu0 0.0
        %7499 = vmatpush1.msra.mxu0 %v7408
        %7500 = vmatprep.subr.mxu0 0.0
        %7501 = vmatpush1.msra.mxu0 0.0
        %7502 = vmatprep.subr.mxu0 0.0
        %7503 = vmatpush1.msra.mxu0 0.0
        %7504 = vmatprep.subr.mxu0 0.0
        %7505 = vmatpush1.msra.mxu0 0.0
        %7506 = vmatprep.subr.mxu0 0.0
        %7507 = vmatpush1.msra.mxu0 0.0
        %7508 = vmatprep.subr.mxu0 0.0
        %7509 = vmatpush1.msra.mxu0 0.0
        %7510 = vmatprep.subr.mxu0 0.0
        %7511 = vmatpush1.msra.mxu0 0.0
        %7512 = vmatprep.subr.mxu0 0.0
        %7513 = vmatpush1.msra.mxu0 0.0
        %7514 = vmatprep.subr.mxu0 0.0
        %7515 = vmatpush1.msra.mxu0 0.0
        %7516 = vmatprep.subr.mxu0 0.0
        %7517 = vmatpush1.msra.mxu0 0.0
        %7518 = vmatprep.subr.mxu0 0.0
        %7519 = vmatpush1.msra.mxu0 0.0
        %7520 = vmatprep.subr.mxu0 0.0
        %7521 = vmatpush1.msra.mxu0 0.0
        %7522 = vmatprep.subr.mxu0 0.0
        %7523 = vmatpush1.msra.mxu0 0.0
        %7524 = vmatprep.subr.mxu0 0.0
        %7525 = vmatpush1.msra.mxu0 0.0
        %7526 = vmatprep.subr.mxu0 0.0
        %7527 = vmatpush1.msra.mxu0 0.0
        %7528 = vmatprep.subr.mxu0 0.0
        %7529 = vmatpush1.msra.mxu0 0.0
        %7530 = vmatprep.subr.mxu0 0.0
        %7531 = vmatpush1.msra.mxu0 0.0
        %7532 = vmatprep.subr.mxu0 0.0
        %7533 = vmatpush1.msra.mxu0 0.0
        %7534 = vmatprep.subr.mxu0 0.0
        %7535 = vmatpush1.msra.mxu0 0.0
        %7536 = vmatprep.subr.mxu0 0.0
        %7537 = vmatpush1.msra.mxu0 0.0
        %7538 = vmatprep.subr.mxu0 0.0
        %7539 = vmatpush1.msra.mxu0 0.0
        %7540 = vmatprep.subr.mxu0 0.0
        %7541 = vmatpush1.msra.mxu0 0.0
        %7542 = vmatprep.subr.mxu0 0.0
        %7543 = vmatpush1.msra.mxu0 0.0
        %7544 = vmatprep.subr.mxu0 0.0
        %7545 = vmatpush1.msra.mxu0 0.0
        %7546 = vmatprep.subr.mxu0 0.0
        %7547 = vmatpush1.msra.mxu0 0.0
        %7548 = vmatprep.subr.mxu0 0.0
        %7549 = vmatpush1.msra.mxu0 0.0
        %7550 = vmatprep.subr.mxu0 0.0
        %7551 = vmatpush1.msra.mxu0 0.0
        %7552 = vmatprep.subr.mxu0 0.0
        %7553 = vmatpush1.msra.mxu0 0.0
        %7554 = vmatprep.subr.mxu0 0.0
        %7555 = vmatpush1.msra.mxu0 0.0
        %7556 = vmatprep.subr.mxu0 0.0
        %7557 = vmatpush1.msra.mxu0 0.0
        %7558 = vmatprep.subr.mxu0 0.0
        %7559 = vmatpush1.msra.mxu0 0.0
        %7560 = vmatprep.mubr.f32.mxu0 0.0
        %7561 = vmatmul.mubr.f32.gmra.mrb[0].mxu0 %v7464
        %v7562 = vpop.f32.mrb[0].mxu0
        %v7563 = vadd.f32 %v7414, %v7562
        %v7564 = vpop.f32.mrb[0].mxu0
        %7565 = vmatprep.mubr.f32.mxu0 0.0
        %7566 = vmatmul.mubr.f32.gmra.mrb[0].mxu0 %v7466
        %v7567 = vpop.f32.mrb[0].mxu0
        %v7568 = vadd.f32 %v7414, %v7567
        %v7569 = vpop.f32.mrb[0].mxu0
        %7570 = vmatprep.mubr.f32.mxu0 0.0
        %7571 = vmatmul.mubr.f32.gmra.mrb[0].mxu0 %v7468
        %v7572 = vpop.f32.mrb[0].mxu0
        %v7573 = vadd.f32 %v7414, %v7572
        %v7574 = vpop.f32.mrb[0].mxu0
        %7575 = vmatprep.mubr.f32.mxu0 0.0
        %7576 = vmatmul.mubr.f32.gmra.mrb[0].mxu0 %v7470
        %v7577 = vpop.f32.mrb[0].mxu0
        %v7578 = vadd.f32 %v7414, %v7577
        %v7579 = vpop.f32.mrb[0].mxu0
        %7580 = vmatprep.mubr.f32.mxu0 0.0
        %7581 = vmatmul.mubr.f32.gmra.mrb[0].mxu0 %v7472
        %v7582 = vpop.f32.mrb[0].mxu0
        %v7583 = vadd.f32 %v7414, %v7582
        %v7584 = vpop.f32.mrb[0].mxu0
        %7585 = vmatprep.mubr.f32.mxu0 0.0
        %7586 = vmatmul.mubr.f32.gmra.mrb[0].mxu0 %v7474
        %v7587 = vpop.f32.mrb[0].mxu0
        %v7588 = vadd.f32 %v7414, %v7587
        %v7589 = vpop.f32.mrb[0].mxu0
        %7590 = vmatprep.mubr.f32.mxu0 0.0
        %7591 = vmatmul.mubr.f32.gmra.mrb[0].mxu0 %v7476
        %v7592 = vpop.f32.mrb[0].mxu0
        %v7593 = vadd.f32 %v7414, %v7592
        %v7594 = vpop.f32.mrb[0].mxu0
        %7595 = vmatprep.mubr.f32.mxu0 0.0
        %7596 = vmatmul.mubr.f32.gmra.mrb[0].mxu0 %v7478
        %v7597 = vpop.f32.mrb[0].mxu0
        %v7598 = vadd.f32 %v7414, %v7597
        %v7599 = vpop.f32.mrb[0].mxu0
        %7600 = vmatprep.mubr.f32.mxu0 0.0
        %7601 = vmatmul.mubr.f32.gmra.mrb[0].mxu0 %v7480
        %v7602 = vpop.f32.mrb[0].mxu0
        %v7603 = vadd.f32 %v7414, %v7602
        %v7604 = vpop.f32.mrb[0].mxu0
        %7605 = vmatprep.mubr.f32.mxu0 0.0
        %7606 = vmatmul.mubr.f32.gmra.mrb[0].mxu0 %v7482
        %v7607 = vpop.f32.mrb[0].mxu0
        %v7608 = vadd.f32 %v7414, %v7607
        %v7609 = vpop.f32.mrb[0].mxu0
        %7610 = vmatprep.mubr.f32.mxu0 0.0
        %7611 = vmatmul.mubr.f32.gmra.mrb[0].mxu0 %v7484
        %v7612 = vpop.f32.mrb[0].mxu0
        %v7613 = vadd.f32 %v7414, %v7612
        %v7614 = vpop.f32.mrb[0].mxu0
        %7615 = vmatprep.mubr.f32.mxu0 0.0
        %7616 = vmatmul.mubr.f32.gmra.mrb[0].mxu0 %v7486
        %v7617 = vpop.f32.mrb[0].mxu0
        %v7618 = vadd.f32 %v7414, %v7617
        %v7619 = vpop.f32.mrb[0].mxu0
        %7620 = vmatprep.mubr.f32.mxu0 0.0
        %7621 = vmatmul.mubr.f32.gmra.mrb[0].mxu0 %v7488
        %v7622 = vpop.f32.mrb[0].mxu0
        %v7623 = vadd.f32 %v7414, %v7622
        %v7624 = vpop.f32.mrb[0].mxu0
        %7625 = vmatprep.mubr.f32.mxu0 0.0
        %7626 = vmatmul.mubr.f32.gmra.mrb[0].mxu0 %v7490
        %v7627 = vpop.f32.mrb[0].mxu0
        %v7628 = vadd.f32 %v7414, %v7627
        %v7629 = vpop.f32.mrb[0].mxu0
        %7630 = vmatprep.mubr.f32.mxu0 0.0
        %7631 = vmatmul.mubr.f32.gmra.mrb[0].mxu0 %v7492
        %v7632 = vpop.f32.mrb[0].mxu0
        %v7633 = vadd.f32 %v7414, %v7632
        %v7634 = vpop.f32.mrb[0].mxu0
        %7635 = vmatprep.mubr.f32.mxu0 0.0
        %7636 = vmatmul.mubr.f32.gmra.mrb[0].mxu0 %v7494
        %v7637 = vpop.f32.mrb[0].mxu0
        %v7638 = vadd.f32 %v7414, %v7637
        %v7639 = vpop.f32.mrb[0].mxu0
        %7640 = vdwg.mxu0
        %v7641 = vmax.f32 %v7563, 0.0
        %v7642 = vmax.f32 %v7568, 0.0
        %v7643 = vmax.f32 %v7573, 0.0
        %v7644 = vmax.f32 %v7578, 0.0
        %v7645 = vmax.f32 %v7583, 0.0
        %v7646 = vmax.f32 %v7588, 0.0
        %v7647 = vmax.f32 %v7593, 0.0
        %v7648 = vmax.f32 %v7598, 0.0
        %v7649 = vmax.f32 %v7603, 0.0
        %v7650 = vmax.f32 %v7608, 0.0
        %v7651 = vmax.f32 %v7613, 0.0
        %v7652 = vmax.f32 %v7618, 0.0
        %v7653 = vmax.f32 %v7623, 0.0
        %v7654 = vmax.f32 %v7628, 0.0
        %v7655 = vmax.f32 %v7633, 0.0
        %v7656 = vmax.f32 %v7638, 0.0
        %v7657 = vld [vmem:[%s9] sm:$0x1]
        %v7659 = vlaneseq
        %v7660 = vshrl.u32 %v7659, 7
        %v7661 = vsub.s32 0, %v7660
        %v7662 = vrot.slane %v7657, %v7661
        %v7664 = vmul.f32 %v7641, %v7662
        %v7665 = vmul.f32 %v7642, %v7662
        %v7666 = vmul.f32 %v7643, %v7662
        %v7667 = vmul.f32 %v7644, %v7662
        %v7668 = vmul.f32 %v7645, %v7662
        %v7669 = vmul.f32 %v7646, %v7662
        %v7670 = vmul.f32 %v7647, %v7662
        %v7671 = vmul.f32 %v7648, %v7662
        %v7672 = vmul.f32 %v7649, %v7662
        %v7673 = vmul.f32 %v7650, %v7662
        %v7674 = vmul.f32 %v7651, %v7662
        %v7675 = vmul.f32 %v7652, %v7662
        %v7676 = vmul.f32 %v7653, %v7662
        %v7677 = vmul.f32 %v7654, %v7662
        %v7678 = vmul.f32 %v7655, %v7662
        %v7679 = vmul.f32 %v7656, %v7662
        %v7680 = vsel %vm438, %v7664, 0.0
        %7681 = vadd.xlane.f32.xlu0 %v7680
        %v7682 = vpop.xlane.xlu0 %7681
        %v7683 = vsel %vm438, %v7665, 0.0
        %7684 = vadd.xlane.f32.xlu0 %v7683
        %v7685 = vpop.xlane.xlu0 %7684
        %v7686 = vsel %vm438, %v7666, 0.0
        %7687 = vadd.xlane.f32.xlu0 %v7686
        %v7688 = vpop.xlane.xlu0 %7687
        %v7689 = vsel %vm438, %v7667, 0.0
        %7690 = vadd.xlane.f32.xlu0 %v7689
        %v7691 = vpop.xlane.xlu0 %7690
        %v7692 = vsel %vm438, %v7668, 0.0
        %7693 = vadd.xlane.f32.xlu0 %v7692
        %v7694 = vpop.xlane.xlu0 %7693
        %v7695 = vsel %vm438, %v7669, 0.0
        %7696 = vadd.xlane.f32.xlu0 %v7695
        %v7697 = vpop.xlane.xlu0 %7696
        %v7698 = vsel %vm438, %v7670, 0.0
        %7699 = vadd.xlane.f32.xlu0 %v7698
        %v7700 = vpop.xlane.xlu0 %7699
        %v7701 = vsel %vm438, %v7671, 0.0
        %7702 = vadd.xlane.f32.xlu0 %v7701
        %v7703 = vpop.xlane.xlu0 %7702
        %v7704 = vsel %vm438, %v7672, 0.0
        %7705 = vadd.xlane.f32.xlu0 %v7704
        %v7706 = vpop.xlane.xlu0 %7705
        %v7707 = vsel %vm438, %v7673, 0.0
        %7708 = vadd.xlane.f32.xlu0 %v7707
        %v7709 = vpop.xlane.xlu0 %7708
        %v7710 = vsel %vm438, %v7674, 0.0
        %7711 = vadd.xlane.f32.xlu0 %v7710
        %v7712 = vpop.xlane.xlu0 %7711
        %v7713 = vsel %vm438, %v7675, 0.0
        %7714 = vadd.xlane.f32.xlu0 %v7713
        %v7715 = vpop.xlane.xlu0 %7714
        %v7716 = vsel %vm438, %v7676, 0.0
        %7717 = vadd.xlane.f32.xlu0 %v7716
        %v7718 = vpop.xlane.xlu0 %7717
        %v7719 = vsel %vm438, %v7677, 0.0
        %7720 = vadd.xlane.f32.xlu0 %v7719
        %v7721 = vpop.xlane.xlu0 %7720
        %v7722 = vsel %vm438, %v7678, 0.0
        %7723 = vadd.xlane.f32.xlu0 %v7722
        %v7724 = vpop.xlane.xlu0 %7723
        %v7725 = vsel %vm438, %v7679, 0.0
        %7726 = vadd.xlane.f32.xlu0 %v7725
        %v7727 = vpop.xlane.xlu0 %7726
        %s7728 = sld [smem:[#allocation3]]
        %v7729 = vstv %s7728
        %v7730 = vadd.f32 %v7682, %v7729
        %v7731 = vadd.f32 %v7685, %v7729
        %v7732 = vadd.f32 %v7688, %v7729
        %v7733 = vadd.f32 %v7691, %v7729
        %v7734 = vadd.f32 %v7694, %v7729
        %v7735 = vadd.f32 %v7697, %v7729
        %v7736 = vadd.f32 %v7700, %v7729
        %v7737 = vadd.f32 %v7703, %v7729
        %v7738 = vadd.f32 %v7706, %v7729
        %v7739 = vadd.f32 %v7709, %v7729
        %v7740 = vadd.f32 %v7712, %v7729
        %v7741 = vadd.f32 %v7715, %v7729
        %v7742 = vadd.f32 %v7718, %v7729
        %v7743 = vadd.f32 %v7721, %v7729
        %v7744 = vadd.f32 %v7724, %v7729
        %v7745 = vadd.f32 %v7727, %v7729
        %v7746 = vxor.u32 %v7730, 2147483648
        %v7747 = vxor.u32 %v7731, 2147483648
        %v7748 = vxor.u32 %v7732, 2147483648
        %v7749 = vxor.u32 %v7733, 2147483648
        %v7750 = vxor.u32 %v7734, 2147483648
        %v7751 = vxor.u32 %v7735, 2147483648
        %v7752 = vxor.u32 %v7736, 2147483648
        %v7753 = vxor.u32 %v7737, 2147483648
        %v7754 = vxor.u32 %v7738, 2147483648
        %v7755 = vxor.u32 %v7739, 2147483648
        %v7756 = vxor.u32 %v7740, 2147483648
        %v7757 = vxor.u32 %v7741, 2147483648
        %v7758 = vxor.u32 %v7742, 2147483648
        %v7759 = vxor.u32 %v7743, 2147483648
        %v7760 = vxor.u32 %v7744, 2147483648
        %v7761 = vxor.u32 %v7745, 2147483648
        %v7762 = vmul.f32 %v7746, 1.442695
        %v7763 = vpow.pop %v7762
        %v7764 = vmul.f32 %v7747, 1.442695
        %v7765 = vpow.pop %v7764
        %v7766 = vmul.f32 %v7748, 1.442695
        %v7767 = vpow.pop %v7766
        %v7768 = vmul.f32 %v7749, 1.442695
        %v7769 = vpow.pop %v7768
        %v7770 = vmul.f32 %v7750, 1.442695
        %v7771 = vpow.pop %v7770
        %v7772 = vmul.f32 %v7751, 1.442695
        %v7773 = vpow.pop %v7772
        %v7774 = vmul.f32 %v7752, 1.442695
        %v7775 = vpow.pop %v7774
        %v7776 = vmul.f32 %v7753, 1.442695
        %v7777 = vpow.pop %v7776
        %v7778 = vmul.f32 %v7754, 1.442695
        %v7779 = vpow.pop %v7778
        %v7780 = vmul.f32 %v7755, 1.442695
        %v7781 = vpow.pop %v7780
        %v7782 = vmul.f32 %v7756, 1.442695
        %v7783 = vpow.pop %v7782
        %v7784 = vmul.f32 %v7757, 1.442695
        %v7785 = vpow.pop %v7784
        %v7786 = vmul.f32 %v7758, 1.442695
        %v7787 = vpow.pop %v7786
        %v7788 = vmul.f32 %v7759, 1.442695
        %v7789 = vpow.pop %v7788
        %v7790 = vmul.f32 %v7760, 1.442695
        %v7791 = vpow.pop %v7790
        %v7792 = vmul.f32 %v7761, 1.442695
        %v7793 = vpow.pop %v7792
        %v7794 = vadd.f32 %v7763, 1.0
        %v7795 = vadd.f32 %v7765, 1.0
        %v7796 = vadd.f32 %v7767, 1.0
        %v7797 = vadd.f32 %v7769, 1.0
        %v7798 = vadd.f32 %v7771, 1.0
        %v7799 = vadd.f32 %v7773, 1.0
        %v7800 = vadd.f32 %v7775, 1.0
        %v7801 = vadd.f32 %v7777, 1.0
        %v7802 = vadd.f32 %v7779, 1.0
        %v7803 = vadd.f32 %v7781, 1.0
        %v7804 = vadd.f32 %v7783, 1.0
        %v7805 = vadd.f32 %v7785, 1.0
        %v7806 = vadd.f32 %v7787, 1.0
        %v7807 = vadd.f32 %v7789, 1.0
        %v7808 = vadd.f32 %v7791, 1.0
        %v7809 = vadd.f32 %v7793, 1.0
        %v7810 = vrcp.pop %v7794
        %v7811 = vmul.f32 1.0, %v7810
        %v7812 = vrcp.pop %v7795
        %v7813 = vmul.f32 1.0, %v7812
        %v7814 = vrcp.pop %v7796
        %v7815 = vmul.f32 1.0, %v7814
        %v7816 = vrcp.pop %v7797
        %v7817 = vmul.f32 1.0, %v7816
        %v7818 = vrcp.pop %v7798
        %v7819 = vmul.f32 1.0, %v7818
        %v7820 = vrcp.pop %v7799
        %v7821 = vmul.f32 1.0, %v7820
        %v7822 = vrcp.pop %v7800
        %v7823 = vmul.f32 1.0, %v7822
        %v7824 = vrcp.pop %v7801
        %v7825 = vmul.f32 1.0, %v7824
        %v7826 = vrcp.pop %v7802
        %v7827 = vmul.f32 1.0, %v7826
        %v7828 = vrcp.pop %v7803
        %v7829 = vmul.f32 1.0, %v7828
        %v7830 = vrcp.pop %v7804
        %v7831 = vmul.f32 1.0, %v7830
        %v7832 = vrcp.pop %v7805
        %v7833 = vmul.f32 1.0, %v7832
        %v7834 = vrcp.pop %v7806
        %v7835 = vmul.f32 1.0, %v7834
        %v7836 = vrcp.pop %v7807
        %v7837 = vmul.f32 1.0, %v7836
        %v7838 = vrcp.pop %v7808
        %v7839 = vmul.f32 1.0, %v7838
        %v7840 = vrcp.pop %v7809
        %v7841 = vmul.f32 1.0, %v7840
        %vm7842 = vcmask 7168
        %7843 = vst.msk [vmem:[%s404] sm:$0xff] %vm7842, %v7811
        %7844 = vst.msk [vmem:[%s404 + $0x8] sm:$0xff] %vm7842, %v7813
        %7845 = vst.msk [vmem:[%s404 + $0x10] sm:$0xff] %vm7842, %v7815
        %7846 = vst.msk [vmem:[%s404 + $0x18] sm:$0xff] %vm7842, %v7817
        %7847 = vst.msk [vmem:[%s404 + $0x20] sm:$0xff] %vm7842, %v7819
        %7848 = vst.msk [vmem:[%s404 + $0x28] sm:$0xff] %vm7842, %v7821
        %7849 = vst.msk [vmem:[%s404 + $0x30] sm:$0xff] %vm7842, %v7823
        %7850 = vst.msk [vmem:[%s404 + $0x38] sm:$0xff] %vm7842, %v7825
        %7851 = vst.msk [vmem:[%s404 + $0x40] sm:$0xff] %vm7842, %v7827
        %7852 = vst.msk [vmem:[%s404 + $0x48] sm:$0xff] %vm7842, %v7829
        %7853 = vst.msk [vmem:[%s404 + $0x50] sm:$0xff] %vm7842, %v7831
        %7854 = vst.msk [vmem:[%s404 + $0x58] sm:$0xff] %vm7842, %v7833
        %7855 = vst.msk [vmem:[%s404 + $0x60] sm:$0xff] %vm7842, %v7835
        %7856 = vst.msk [vmem:[%s404 + $0x68] sm:$0xff] %vm7842, %v7837
        %7857 = vst.msk [vmem:[%s404 + $0x70] sm:$0xff] %vm7842, %v7839
        %7858 = vst.msk [vmem:[%s404 + $0x78] sm:$0xff] %vm7842, %v7841
        %s7859 = smul.u32 16, %s24
        %p7860 = scmp.lt.s32.totalorder %s7859, 31
        %s7861 = scalar_select %p7860, %s7859, 31
        %s7862 = smul.addr %s7861, 8
        %s7863 = scalar_lea.vmem %s11, %s7862
        // Predicated region
        $region69: #{tpu_custom_call.1} parent=63 // pred_check
          %p7864 = pneg %p278
        $region70: #{tpu_custom_call.1} parent=63 // pred_check_branch
          %7866 = sbr.rel (%p7864) target = $region72
        $region71: #{tpu_custom_call.1} parent=63 // pred_region
          %s7867 = smul.u32 16, %s24
        $region72: #{tpu_custom_call.1} parent=63 // pred_fallthru
          _
      $region64: #{tpu_custom_call.1} parent=5 // pred_fallthru
        _
      %p7868 = scmp.le.s32.totalorder 2, %s19
      // Predicated region
      $region73: #{tpu_custom_call.1} parent=5 // pred_check
        %p7869 = pneg %p7868
      $region74: #{tpu_custom_call.1} parent=5 // pred_check_branch
        %7871 = sbr.rel (%p7869) target = $region76
      $region75: #{tpu_custom_call.1} parent=5 // pred_region
        %s7872 = ssub.s32 %s19, 2
        // Predicated region
        $region77: #{tpu_custom_call.1} parent=75 // pred_check
          %p7873 = pneg %p284
        $region78: #{tpu_custom_call.1} parent=75 // pred_check_branch
          %7875 = sbr.rel (%p7873) target = $region80
        $region79: #{tpu_custom_call.1} parent=75 // pred_region
          %s7876 = smul.u32 16, %s25
          %p7877 = scmp.lt.s32.totalorder %s7876, 31
          %s7878 = scalar_select %p7877, %s7876, 31
          %s7879 = smul.addr %s7878, 8
          %s7880 = scalar_lea.vmem %s11, %s7879
        $region80: #{tpu_custom_call.1} parent=75 // pred_fallthru
          _
      $region76: #{tpu_custom_call.1} parent=5 // pred_fallthru
        _
    $region6: #{tpu_custom_call.1} parent=1 // loop_footer
      %s23 = sadd.s32 1, %s19
    $region7: #{tpu_custom_call.1} parent=1 // loop_footer_branch
      %18 = sbr.rel target = $region3
    $region8: #{tpu_custom_call.1} parent=1 // loop_exit
      _
    %7881 = vsyncpa [#allocation5], 1
    %s7882 = scalar_lea.sflag [#allocation5], 1
    %7883 = vsyncpa %s7882, 1

</llo_original>
